<compile_context>
chip_gen: v5e
topology: v5e:2x2
jax: 0.10.0
libtpu: 0.0.40
codegen_flags: <defaults>
</compile_context>

<pallas_src>
import jax
import jax.numpy as jnp
from jax.experimental import pallas as pl
from jax.experimental.pallas import tpu as pltpu

IN_CH_PER_BRANCH = 512
HID_CH = 512
MAX_TS = 512          # spatial (lane) tile size


# ----------------------------- Pallas kernel -------------------------------

def _regressor_kernel(x1_ref, x2_ref, x3_ref,
                      wa1_ref, wa2_ref, wa3_ref, ba_ref,
                      wb_ref, bb_ref, wc_ref, bc_ref,
                      o_ref):
    """Fused 1x1-conv MLP on a (512, TS) channel-major pixel tile -> (1, TS)."""
    # In-kernel f32 -> bf16 cast (cheap VPU work, avoids a wrapper HBM pass).
    x1 = x1_ref[...].astype(jnp.bfloat16)
    x2 = x2_ref[...].astype(jnp.bfloat16)
    x3 = x3_ref[...].astype(jnp.bfloat16)

    # convA (1536->512), split across the three concatenated branches.
    # bf16 MXU matmuls with f32 accumulation: h = Wa^T @ [x1;x2;x3].
    h = jnp.dot(wa1_ref[...], x1, preferred_element_type=jnp.float32)
    h += jnp.dot(wa2_ref[...], x2, preferred_element_type=jnp.float32)
    h += jnp.dot(wa3_ref[...], x3, preferred_element_type=jnp.float32)
    h = jnp.maximum(h + ba_ref[...], 0.0)                     # bias + ReLU (f32)

    # convB (512->512) + ReLU
    h = jnp.dot(wb_ref[...], h.astype(jnp.bfloat16),
                preferred_element_type=jnp.float32)
    h = jnp.maximum(h + bb_ref[...], 0.0)

    # Dropout(p=0.5): eval/inference-mode identity.
    # TODO(synk): training-mode dropout (Bernoulli mask via pltpu PRNG) omitted.

    # convC (512->1): degenerate M=1 matmul done as VPU broadcast-multiply +
    # cross-sublane reduce (XLU slot, off the MXU critical path).
    y = jnp.sum(h * wc_ref[...], axis=0, keepdims=True) + bc_ref[...]
    o_ref[...] = jnp.tanh(y)                                   # (1, TS), lane-dense


def _round_up(x, m):
    return (x + m - 1) // m * m


def _run_regressor(x1, x2, x3, kparams, max_ts=MAX_TS):
    """x1/x2/x3: (N, 512, S) channel-major pixel slabs -> (N, 1, S) f32."""
    n, c, s = x1.shape
    if s <= max_ts:
        ts, s_pad = s, s                   # single full-extent spatial block
    else:
        ts = max_ts
        s_pad = _round_up(s, ts)
    if s_pad != s:
        pad = ((0, 0), (0, 0), (0, s_pad - s))
        x1 = jnp.pad(x1, pad)
        x2 = jnp.pad(x2, pad)
        x3 = jnp.pad(x3, pad)

    wa1, wa2, wa3, ba, wb, bb, wc, bc = kparams

    x_spec = pl.BlockSpec((None, c, ts), lambda b, si: (b, 0, si))
    w_spec = pl.BlockSpec((HID_CH, IN_CH_PER_BRANCH), lambda b, si: (0, 0))
    bvec_spec = pl.BlockSpec((HID_CH, 1), lambda b, si: (0, 0))
    scal_spec = pl.BlockSpec((1, 1), lambda b, si: (0, 0))

    out = pl.pallas_call(
        _regressor_kernel,
        out_shape=jax.ShapeDtypeStruct((n, 1, s_pad), jnp.float32),
        grid_spec=pltpu.PrefetchScalarGridSpec(
            num_scalar_prefetch=0,
            grid=(n, s_pad // ts),
            in_specs=[x_spec, x_spec, x_spec,
                      w_spec, w_spec, w_spec, bvec_spec,
                      w_spec, bvec_spec,
                      bvec_spec, scal_spec],
            out_specs=pl.BlockSpec((None, 1, ts), lambda b, si: (b, 0, si)),
        ),
        compiler_params=pltpu.CompilerParams(
            dimension_semantics=("parallel", "parallel"),
            vmem_limit_bytes=32 << 20,
        ),
    )(x1, x2, x3, wa1, wa2, wa3, ba, wb, bb, wc, bc)
    return out[:, :, :s]


# ----------------------------- Module wrapper -------------------------------

class LocalRegressorPallas:
    """JAX/Pallas port of Local_Regressor (regressor head only)."""

    IN_CH = 3 * IN_CH_PER_BRANCH   # 1536

    def __init__(self, reg_num, key):
        self.reg_num = reg_num
        self.params = []         # f32 params (reference / "master" copy)
        self.kernel_params = []  # transposed bf16 matmul weights + f32 biases
        for i in range(reg_num):
            k = jax.random.fold_in(key, i)
            ka, kb, kc, kba, kbb, kbc = jax.random.split(k, 6)
            sa = (1.0 / self.IN_CH) ** 0.5
            sb = (1.0 / HID_CH) ** 0.5
            wa = jax.random.uniform(ka, (self.IN_CH, HID_CH), jnp.float32, -sa, sa)
            wb = jax.random.uniform(kb, (HID_CH, HID_CH), jnp.float32, -sb, sb)
            wc = jax.random.uniform(kc, (HID_CH, 1), jnp.float32, -sb, sb)
            ba = jax.random.uniform(kba, (1, HID_CH), jnp.float32, -sa, sa)
            bb = jax.random.uniform(kbb, (1, HID_CH), jnp.float32, -sb, sb)
            bc = jax.random.uniform(kbc, (1, 1), jnp.float32, -sb, sb)
            self.params.append((wa, ba, wb, bb, wc, bc))

            kp = (jnp.asarray(wa[:IN_CH_PER_BRANCH].T, jnp.bfloat16),
                  jnp.asarray(wa[IN_CH_PER_BRANCH:2 * IN_CH_PER_BRANCH].T,
                              jnp.bfloat16),
                  jnp.asarray(wa[2 * IN_CH_PER_BRANCH:].T, jnp.bfloat16),
                  ba.reshape(HID_CH, 1),
                  jnp.asarray(wb.T, jnp.bfloat16),
                  bb.reshape(HID_CH, 1),
                  wc,                    # (512, 1) f32 column for the reduce
                  bc)
            self.kernel_params.append(kp)

    def forward(self, phase, **kwargs):
        if phase == 'test':
            x_1_1, x_1_2, x_2, idx = (kwargs['x_1_1'], kwargs['x_1_2'],
                                      kwargs['x_2'], kwargs['idx'])
            n, c, h, w = x_1_1.shape
            assert c == IN_CH_PER_BRANCH
            s = h * w
            # Contiguous reshapes only — no transpose, no cast, no concat.
            x1 = x_1_1.reshape(n, c, s)
            x2 = x_1_2.reshape(n, c, s)
            x3 = x_2.reshape(n, c, s)
            y = _run_regressor(x1, x2, x3, self.kernel_params[idx])  # (N,1,S)
            return y.reshape(n, 1, h, w)                             # (N,1,H,W)
        # TODO(synk): 'train'/'extraction' phases require the pretrained
        # bn_vgg16 encoder; not reproducible in a self-contained script.
        raise NotImplementedError(f"phase {phase!r} not supported")


# ----------------------------- reference check ------------------------------

def _reference(x_1_1, x_1_2, x_2, params):
    wa, ba, wb, bb, wc, bc = params
    x_nchw = jnp.concatenate([x_1_1, x_1_2, x_2], axis=1)
    n, c, h, w = x_nchw.shape
    x2d = jnp.transpose(x_nchw, (0, 2, 3, 1)).reshape(n * h * w, c)
    hdn = jnp.maximum(x2d @ wa + ba, 0.0)
    hdn = jnp.maximum(hdn @ wb + bb, 0.0)
    y = jnp.tanh(hdn @ wc + bc)
    return jnp.transpose(y.reshape(n, h, w, 1), (0, 3, 1, 2))


if __name__ == "__main__":
    key = jax.random.PRNGKey(0)
    model = LocalRegressorPallas(reg_num=2, key=key)

    def make_inputs(seed, n, hgt, wid):
        k1, k2, k3 = jax.random.split(jax.random.PRNGKey(seed), 3)
        shp = (n, IN_CH_PER_BRANCH, hgt, wid)
        return (jax.random.normal(k1, shp, jnp.float32),
                jax.random.normal(k2, shp, jnp.float32),
                jax.random.normal(k3, shp, jnp.float32))

    # Case 1: tiny spatial map (S=4, single full-extent block), regressor 0.
    x_1_1, x_1_2, x_2 = make_inputs(0, 2, 2, 2)
    out = model.forward('test', x_1_1=x_1_1, x_1_2=x_1_2, x_2=x_2, idx=0)
    out = jax.block_until_ready(out)
    assert out.shape == (2, 1, 2, 2), out.shape
    ref = _reference(x_1_1, x_1_2, x_2, model.params[0])
    assert jnp.max(jnp.abs(out - ref)) < 2e-2, float(jnp.max(jnp.abs(out - ref)))

    # Case 2: larger map (S=576 -> TS=512, 2 spatial tiles, padded lanes,
    # 2x2 grid exercising weight pinning across grid iterations), regressor 1.
    x_1_1, x_1_2, x_2 = make_inputs(1, 2, 24, 24)
    out = model.forward('test', x_1_1=x_1_1, x_1_2=x_1_2, x_2=x_2, idx=1)
    out = jax.block_until_ready(out)
    assert out.shape == (2, 1, 24, 24), out.shape
    ref = _reference(x_1_1, x_1_2, x_2, model.params[1])
    assert jnp.max(jnp.abs(out - ref)) < 2e-2, float(jnp.max(jnp.abs(out - ref)))

    print("KERNEL_OK")
</pallas_src>

<mosaic_0001>
module attributes {stable_mosaic.version = 11 : i64} {
  func.func @_regressor_kernel(%arg0: i32, %arg1: i32, %arg2: memref<1x512x4xf32, #tpu.memory_space<vmem>>, %arg3: memref<1x512x4xf32, #tpu.memory_space<vmem>>, %arg4: memref<1x512x4xf32, #tpu.memory_space<vmem>>, %arg5: memref<512x512xbf16, #tpu.memory_space<vmem>>, %arg6: memref<512x512xbf16, #tpu.memory_space<vmem>>, %arg7: memref<512x512xbf16, #tpu.memory_space<vmem>>, %arg8: memref<512x1xf32, #tpu.memory_space<vmem>>, %arg9: memref<512x512xbf16, #tpu.memory_space<vmem>>, %arg10: memref<512x1xf32, #tpu.memory_space<vmem>>, %arg11: memref<512x1xf32, #tpu.memory_space<vmem>>, %arg12: memref<1x1xf32, #tpu.memory_space<vmem>>, %arg13: memref<1x1x4xf32, #tpu.memory_space<vmem>>) attributes {dimension_semantics = [#tpu.dimension_semantics<parallel>, #tpu.dimension_semantics<parallel>], iteration_bounds = array<i64: 2, 1>, scalar_prefetch = 0 : i64, scratch_operands = 0 : i64, tpu.core_type = #tpu.core_type<tc>, window_params = [{transform_indices = @transform_0, window_bounds = array<i64: 1, 512, 4>}, {transform_indices = @transform_1, window_bounds = array<i64: 1, 512, 4>}, {transform_indices = @transform_2, window_bounds = array<i64: 1, 512, 4>}, {pipeline_mode = #tpu.pipeline_mode<synchronous>, transform_indices = @transform_3, window_bounds = array<i64: 512, 512>}, {pipeline_mode = #tpu.pipeline_mode<synchronous>, transform_indices = @transform_4, window_bounds = array<i64: 512, 512>}, {pipeline_mode = #tpu.pipeline_mode<synchronous>, transform_indices = @transform_5, window_bounds = array<i64: 512, 512>}, {pipeline_mode = #tpu.pipeline_mode<synchronous>, transform_indices = @transform_6, window_bounds = array<i64: 512, 1>}, {pipeline_mode = #tpu.pipeline_mode<synchronous>, transform_indices = @transform_7, window_bounds = array<i64: 512, 512>}, {pipeline_mode = #tpu.pipeline_mode<synchronous>, transform_indices = @transform_8, window_bounds = array<i64: 512, 1>}, {pipeline_mode = #tpu.pipeline_mode<synchronous>, transform_indices = @transform_9, window_bounds = array<i64: 512, 1>}, {pipeline_mode = #tpu.pipeline_mode<synchronous>, transform_indices = @transform_10, window_bounds = array<i64: 1, 1>}, {transform_indices = @transform_11, window_bounds = array<i64: 1, 1, 4>}]} {
    %c0 = arith.constant 0 : index
    %c0_0 = arith.constant 0 : index
    %c0_1 = arith.constant 0 : index
    %0 = vector.load %arg2[%c0, %c0_0, %c0_1] : memref<1x512x4xf32, #tpu.memory_space<vmem>>, vector<1x512x4xf32>
    %1 = vector.shape_cast %0 : vector<1x512x4xf32> to vector<512x4xf32>
    %2 = arith.truncf %1 : vector<512x4xf32> to vector<512x4xbf16>
    %c0_2 = arith.constant 0 : index
    %c0_3 = arith.constant 0 : index
    %c0_4 = arith.constant 0 : index
    %3 = vector.load %arg3[%c0_2, %c0_3, %c0_4] : memref<1x512x4xf32, #tpu.memory_space<vmem>>, vector<1x512x4xf32>
    %4 = vector.shape_cast %3 : vector<1x512x4xf32> to vector<512x4xf32>
    %5 = arith.truncf %4 : vector<512x4xf32> to vector<512x4xbf16>
    %c0_5 = arith.constant 0 : index
    %c0_6 = arith.constant 0 : index
    %c0_7 = arith.constant 0 : index
    %6 = vector.load %arg4[%c0_5, %c0_6, %c0_7] : memref<1x512x4xf32, #tpu.memory_space<vmem>>, vector<1x512x4xf32>
    %7 = vector.shape_cast %6 : vector<1x512x4xf32> to vector<512x4xf32>
    %8 = arith.truncf %7 : vector<512x4xf32> to vector<512x4xbf16>
    %c0_8 = arith.constant 0 : index
    %c0_9 = arith.constant 0 : index
    %9 = vector.load %arg5[%c0_8, %c0_9] : memref<512x512xbf16, #tpu.memory_space<vmem>>, vector<512x512xbf16>
    %cst = arith.constant dense<0.000000e+00> : vector<512x4xf32>
    %10 = tpu.matmul %9, %2, %cst {dimension_numbers = #tpu.dot_dimension_numbers<[1], [0], [0], [1], [0, 0, 1, 1], [], []>} : vector<512x512xbf16>, vector<512x4xbf16>, vector<512x4xf32> -> vector<512x4xf32>
    %c0_10 = arith.constant 0 : index
    %c0_11 = arith.constant 0 : index
    %11 = vector.load %arg6[%c0_10, %c0_11] : memref<512x512xbf16, #tpu.memory_space<vmem>>, vector<512x512xbf16>
    %cst_12 = arith.constant dense<0.000000e+00> : vector<512x4xf32>
    %12 = tpu.matmul %11, %5, %cst_12 {dimension_numbers = #tpu.dot_dimension_numbers<[1], [0], [0], [1], [0, 0, 1, 1], [], []>} : vector<512x512xbf16>, vector<512x4xbf16>, vector<512x4xf32> -> vector<512x4xf32>
    %13 = arith.addf %10, %12 : vector<512x4xf32>
    %c0_13 = arith.constant 0 : index
    %c0_14 = arith.constant 0 : index
    %14 = vector.load %arg7[%c0_13, %c0_14] : memref<512x512xbf16, #tpu.memory_space<vmem>>, vector<512x512xbf16>
    %cst_15 = arith.constant dense<0.000000e+00> : vector<512x4xf32>
    %15 = tpu.matmul %14, %8, %cst_15 {dimension_numbers = #tpu.dot_dimension_numbers<[1], [0], [0], [1], [0, 0, 1, 1], [], []>} : vector<512x512xbf16>, vector<512x4xbf16>, vector<512x4xf32> -> vector<512x4xf32>
    %16 = arith.addf %13, %15 : vector<512x4xf32>
    %c0_16 = arith.constant 0 : index
    %c0_17 = arith.constant 0 : index
    %17 = vector.load %arg8[%c0_16, %c0_17] : memref<512x1xf32, #tpu.memory_space<vmem>>, vector<512x1xf32>
    %18 = vector.broadcast %17 : vector<512x1xf32> to vector<512x4xf32>
    %19 = arith.addf %16, %18 : vector<512x4xf32>
    %cst_18 = arith.constant 0.000000e+00 : f32
    %20 = vector.broadcast %cst_18 : f32 to vector<512x4xf32>
    %21 = arith.maximumf %19, %20 : vector<512x4xf32>
    %c0_19 = arith.constant 0 : index
    %c0_20 = arith.constant 0 : index
    %22 = vector.load %arg9[%c0_19, %c0_20] : memref<512x512xbf16, #tpu.memory_space<vmem>>, vector<512x512xbf16>
    %23 = arith.truncf %21 : vector<512x4xf32> to vector<512x4xbf16>
    %cst_21 = arith.constant dense<0.000000e+00> : vector<512x4xf32>
    %24 = tpu.matmul %22, %23, %cst_21 {dimension_numbers = #tpu.dot_dimension_numbers<[1], [0], [0], [1], [0, 0, 1, 1], [], []>} : vector<512x512xbf16>, vector<512x4xbf16>, vector<512x4xf32> -> vector<512x4xf32>
    %c0_22 = arith.constant 0 : index
    %c0_23 = arith.constant 0 : index
    %25 = vector.load %arg10[%c0_22, %c0_23] : memref<512x1xf32, #tpu.memory_space<vmem>>, vector<512x1xf32>
    %26 = vector.broadcast %25 : vector<512x1xf32> to vector<512x4xf32>
    %27 = arith.addf %24, %26 : vector<512x4xf32>
    %cst_24 = arith.constant 0.000000e+00 : f32
    %28 = vector.broadcast %cst_24 : f32 to vector<512x4xf32>
    %29 = arith.maximumf %27, %28 : vector<512x4xf32>
    %c0_25 = arith.constant 0 : index
    %c0_26 = arith.constant 0 : index
    %30 = vector.load %arg11[%c0_25, %c0_26] : memref<512x1xf32, #tpu.memory_space<vmem>>, vector<512x1xf32>
    %31 = vector.broadcast %30 : vector<512x1xf32> to vector<512x4xf32>
    %32 = arith.mulf %29, %31 : vector<512x4xf32>
    %cst_27 = arith.constant dense<0.000000e+00> : vector<4xf32>
    %33 = vector.multi_reduction <add>, %32, %cst_27 [0] : vector<512x4xf32> to vector<4xf32>
    %34 = vector.shape_cast %33 : vector<4xf32> to vector<1x4xf32>
    %c0_28 = arith.constant 0 : index
    %c0_29 = arith.constant 0 : index
    %35 = vector.load %arg12[%c0_28, %c0_29] : memref<1x1xf32, #tpu.memory_space<vmem>>, vector<1x1xf32>
    %36 = vector.broadcast %35 : vector<1x1xf32> to vector<1x4xf32>
    %37 = arith.addf %34, %36 : vector<1x4xf32>
    %38 = math.tanh %37 : vector<1x4xf32>
    %c0_30 = arith.constant 0 : index
    %c0_31 = arith.constant 0 : index
    %c0_32 = arith.constant 0 : index
    %39 = vector.load %arg13[%c0_30, %c0_31, %c0_32] : memref<1x1x4xf32, #tpu.memory_space<vmem>>, vector<1x1x4xf32>
    %40 = vector.shape_cast %39 : vector<1x1x4xf32> to vector<1x4xf32>
    %41 = vector.shape_cast %38 : vector<1x4xf32> to vector<1x1x4xf32>
    tpu.vector_store %arg13[%c0_30, %c0_31, %c0_32], %41 {strides = array<i32>} : memref<1x1x4xf32, #tpu.memory_space<vmem>>, vector<1x1x4xf32>,
    return
  }
  func.func @transform_0(%arg0: i32, %arg1: i32) -> (i32, i32, i32) {
    %c0_i32 = arith.constant 0 : i32
    %c0_i32_0 = arith.constant 0 : i32
    return %arg0, %c0_i32, %arg1 : i32, i32, i32
  }
  func.func @transform_1(%arg0: i32, %arg1: i32) -> (i32, i32, i32) {
    %c0_i32 = arith.constant 0 : i32
    %c0_i32_0 = arith.constant 0 : i32
    return %arg0, %c0_i32, %arg1 : i32, i32, i32
  }
  func.func @transform_2(%arg0: i32, %arg1: i32) -> (i32, i32, i32) {
    %c0_i32 = arith.constant 0 : i32
    %c0_i32_0 = arith.constant 0 : i32
    return %arg0, %c0_i32, %arg1 : i32, i32, i32
  }
  func.func @transform_3(%arg0: i32, %arg1: i32) -> (i32, i32) {
    %c0_i32 = arith.constant 0 : i32
    %c0_i32_0 = arith.constant 0 : i32
    %c0_i32_1 = arith.constant 0 : i32
    return %c0_i32, %c0_i32_0 : i32, i32
  }
  func.func @transform_4(%arg0: i32, %arg1: i32) -> (i32, i32) {
    %c0_i32 = arith.constant 0 : i32
    %c0_i32_0 = arith.constant 0 : i32
    %c0_i32_1 = arith.constant 0 : i32
    return %c0_i32, %c0_i32_0 : i32, i32
  }
  func.func @transform_5(%arg0: i32, %arg1: i32) -> (i32, i32) {
    %c0_i32 = arith.constant 0 : i32
    %c0_i32_0 = arith.constant 0 : i32
    %c0_i32_1 = arith.constant 0 : i32
    return %c0_i32, %c0_i32_0 : i32, i32
  }
  func.func @transform_6(%arg0: i32, %arg1: i32) -> (i32, i32) {
    %c0_i32 = arith.constant 0 : i32
    %c0_i32_0 = arith.constant 0 : i32
    %c0_i32_1 = arith.constant 0 : i32
    return %c0_i32, %c0_i32_0 : i32, i32
  }
  func.func @transform_7(%arg0: i32, %arg1: i32) -> (i32, i32) {
    %c0_i32 = arith.constant 0 : i32
    %c0_i32_0 = arith.constant 0 : i32
    %c0_i32_1 = arith.constant 0 : i32
    return %c0_i32, %c0_i32_0 : i32, i32
  }
  func.func @transform_8(%arg0: i32, %arg1: i32) -> (i32, i32) {
    %c0_i32 = arith.constant 0 : i32
    %c0_i32_0 = arith.constant 0 : i32
    %c0_i32_1 = arith.constant 0 : i32
    return %c0_i32, %c0_i32_0 : i32, i32
  }
  func.func @transform_9(%arg0: i32, %arg1: i32) -> (i32, i32) {
    %c0_i32 = arith.constant 0 : i32
    %c0_i32_0 = arith.constant 0 : i32
    %c0_i32_1 = arith.constant 0 : i32
    return %c0_i32, %c0_i32_0 : i32, i32
  }
  func.func @transform_10(%arg0: i32, %arg1: i32) -> (i32, i32) {
    %c0_i32 = arith.constant 0 : i32
    %c0_i32_0 = arith.constant 0 : i32
    %c0_i32_1 = arith.constant 0 : i32
    return %c0_i32, %c0_i32_0 : i32, i32
  }
  func.func @transform_11(%arg0: i32, %arg1: i32) -> (i32, i32, i32) {
    %c0_i32 = arith.constant 0 : i32
    %c0_i32_0 = arith.constant 0 : i32
    return %arg0, %c0_i32, %arg1 : i32, i32, i32
  }
}

</mosaic_0001>

<llo_original>
// kernel: tpu_custom_call.1
$region0: #{tpu_custom_call.1}
  #allocation0 [shape = 'u32[]', space=smem, size = 0x4, offset = 0x4, fixed_abs, tag = 'smem constant byte address 0x4 - core index']
  #allocation1 [shape = 'u32[72,128]{1,0:T(1,128)}', space=vmem, size = 0x9000, scoped, tag = 'internal scratch']
  #allocation2 [shape = 'f32[1,1]{1,0:T(1,128)S(1)}', space=vmem, size = 0x200, scoped, tag = 'scoped memory for tpu_custom_call.1']
  %s0 = inlined_call_operand.vmem [shape: f32[2,512,4], index: 0, kind: input, shape index: {}]
  %s1 = inlined_call_operand.vmem [shape: f32[2,512,4], index: 1, kind: input, shape index: {}]
  %s2 = inlined_call_operand.vmem [shape: f32[2,512,4], index: 2, kind: input, shape index: {}]
  %s3 = inlined_call_operand.vmem [shape: bf16[512,512], index: 3, kind: input, shape index: {}]
  %s4 = inlined_call_operand.vmem [shape: bf16[512,512], index: 4, kind: input, shape index: {}]
  %s5 = inlined_call_operand.vmem [shape: bf16[512,512], index: 5, kind: input, shape index: {}]
  %s6 = inlined_call_operand.vmem [shape: f32[512,1], index: 6, kind: input, shape index: {}]
  %s7 = inlined_call_operand.vmem [shape: bf16[512,512], index: 7, kind: input, shape index: {}]
  %s8 = inlined_call_operand.vmem [shape: f32[512,1], index: 8, kind: input, shape index: {}]
  %s9 = inlined_call_operand.vmem [shape: f32[512,1], index: 9, kind: input, shape index: {}]
  %s10 = inlined_call_operand.<no memory space> [shape: f32[1,1], index: 10, kind: input, shape index: {}]
  %s11 = inlined_call_operand.hbm [shape: f32[2,1,4], index: 11, kind: output, shape index: {}]
  %s12 = sld [smem:[#allocation0]]
  $region77: #{tpu_custom_call.1} parent=0
    _
  %s14 = ssub.s32 1, %s12
  %s15 = scalar_select 0, %s14, %s12
  %v16 = vstv %s10
  %17 = vst [vmem:[#allocation2] sm:$0x1] %v16
  $region1: #{tpu_custom_call.1} parent=0
    #allocation3 [shape = 'u8[1024]{0}', space=vmem, size = 0x400, scoped, tag = 'output window, operand 0']
    #allocation4 [shape = 's32[2]{0}', space=sflag, size = 0x8, scoped, tag = 'scoped memory for tpu_custom_call.1']
    %18 = vsyncpa [#allocation4], 0
    %s19 = scalar_lea.sflag [#allocation4], 1
    %20 = vsyncpa %s19, 0
    loop: start=0, step=1, limit=4
    $region2: #{tpu_custom_call.1} parent=1 // loop_pre_header
      _
    $region3: #{tpu_custom_call.1} parent=1 // loop_header
      %s22 = sphi 0, %s26
      %p23 = scmp.ge.s32.totalorder %s22, 4
      %s29 = sphi 0, %s41
      %s30 = sphi 0, %s37
      %s31 = sphi 0, %s29
      %s32 = sphi 0, %s30
      %s33 = sphi 0, %s31
      %s34 = sphi 0, %s32
      %s46 = sphi 0, %s48
      %s49 = sphi 0, %s46
      %s50 = sphi 0, %s49
      %s66 = sphi 0, %s50
      %s74 = sphi 0, %s76
      %s77 = sphi 0, %s74
      %s78 = sphi 0, %s77
      %s94 = sphi 0, %s78
      %s102 = sphi 0, %s104
      %s105 = sphi 0, %s102
      %s106 = sphi 0, %s105
      %s122 = sphi 0, %s106
      %s126 = sphi 0, %s126
      %s128 = sphi 0, %s126
      %s129 = sphi 0, %s128
      %s143 = sphi 0, %s129
      %s147 = sphi 0, %s147
      %s149 = sphi 0, %s147
      %s150 = sphi 0, %s149
      %s164 = sphi 0, %s150
      %s168 = sphi 0, %s168
      %s170 = sphi 0, %s168
      %s171 = sphi 0, %s170
      %s185 = sphi 0, %s171
      %s189 = sphi 0, %s189
      %s191 = sphi 0, %s189
      %s192 = sphi 0, %s191
      %s206 = sphi 0, %s192
      %s210 = sphi 0, %s210
      %s212 = sphi 0, %s210
      %s213 = sphi 0, %s212
      %s227 = sphi 0, %s213
      %s231 = sphi 0, %s231
      %s233 = sphi 0, %s231
      %s234 = sphi 0, %s233
      %s248 = sphi 0, %s234
      %s252 = sphi 0, %s252
      %s254 = sphi 0, %s252
      %s255 = sphi 0, %s254
      %s269 = sphi 0, %s255
      %s273 = sphi 0, %s273
      %s275 = sphi 0, %s273
      %s276 = sphi 0, %s275
      %s290 = sphi 0, %s276
      %s298 = sphi 0, %s300
      %s301 = sphi 0, %s298
      %s302 = sphi 0, %s301
      %s318 = sphi 0, %s302
    $region4: #{tpu_custom_call.1} parent=1 // loop_header_branch
      %25 = sbr.rel (%p23) target = $region8
    $region5: #{tpu_custom_call.1} parent=1 // loop_body
      %s27 = ssub.s32 %s22, 1
      %s28 = ssub.s32 %s22, 2
      %s35 = sadd.s32 1, %s30
      %p36 = scmp.ge.s32.totalorder %s35, 1
      %s37 = scalar_select %p36, 0, %s35
      %s38 = sadd.s32 1, %s29
      %s39 = scalar_select %p36, %s38, %s29
      %p40 = scmp.ge.s32.totalorder %s39, 2
      %s41 = scalar_select %p40, 0, %s39
      %s42 = ssub.s32 %s29, %s41
      %s43 = ssub.s32 %s30, %s37
      %s44 = sor.u32 %s42, %s43
      %p45 = scmp.eq.s32.totalorder %s44, 0
      %s47 = sadd.s32 %s46, 1
      %s48 = scalar_select %p45, %s46, %s47
      %p51 = pneg %p45
      %p52 = scmp.eq.s32.totalorder %s22, 1
      %p53 = por %p51, %p52
      %p54 = scmp.ne.s32.totalorder %s46, %s49
      %p55 = scmp.eq.s32.totalorder %s22, 0
      %p56 = por %p54, %p55
      %p57 = scmp.ne.s32.totalorder %s46, %s49
      %p58 = scmp.eq.s32.totalorder %s27, 1
      %p59 = por %p57, %p58
      %p60 = scmp.ne.s32.totalorder %s49, %s50
      %p61 = scmp.eq.s32.totalorder %s27, 0
      %p62 = por %p60, %p61
      %p63 = scmp.ne.s32.totalorder %s49, %s50
      %p64 = scmp.eq.s32.totalorder %s28, 1
      %p65 = por %p63, %p64
      %p67 = scmp.ne.s32.totalorder %s50, %s66
      %p68 = scmp.eq.s32.totalorder %s28, 0
      %p69 = por %p67, %p68
      %s70 = ssub.s32 %s29, %s41
      %s71 = ssub.s32 %s30, %s37
      %s72 = sor.u32 %s70, %s71
      %p73 = scmp.eq.s32.totalorder %s72, 0
      %s75 = sadd.s32 %s74, 1
      %s76 = scalar_select %p73, %s74, %s75
      %p79 = pneg %p73
      %p80 = scmp.eq.s32.totalorder %s22, 1
      %p81 = por %p79, %p80
      %p82 = scmp.ne.s32.totalorder %s74, %s77
      %p83 = scmp.eq.s32.totalorder %s22, 0
      %p84 = por %p82, %p83
      %p85 = scmp.ne.s32.totalorder %s74, %s77
      %p86 = scmp.eq.s32.totalorder %s27, 1
      %p87 = por %p85, %p86
      %p88 = scmp.ne.s32.totalorder %s77, %s78
      %p89 = scmp.eq.s32.totalorder %s27, 0
      %p90 = por %p88, %p89
      %p91 = scmp.ne.s32.totalorder %s77, %s78
      %p92 = scmp.eq.s32.totalorder %s28, 1
      %p93 = por %p91, %p92
      %p95 = scmp.ne.s32.totalorder %s78, %s94
      %p96 = scmp.eq.s32.totalorder %s28, 0
      %p97 = por %p95, %p96
      %s98 = ssub.s32 %s29, %s41
      %s99 = ssub.s32 %s30, %s37
      %s100 = sor.u32 %s98, %s99
      %p101 = scmp.eq.s32.totalorder %s100, 0
      %s103 = sadd.s32 %s102, 1
      %s104 = scalar_select %p101, %s102, %s103
      %p107 = pneg %p101
      %p108 = scmp.eq.s32.totalorder %s22, 1
      %p109 = por %p107, %p108
      %p110 = scmp.ne.s32.totalorder %s102, %s105
      %p111 = scmp.eq.s32.totalorder %s22, 0
      %p112 = por %p110, %p111
      %p113 = scmp.ne.s32.totalorder %s102, %s105
      %p114 = scmp.eq.s32.totalorder %s27, 1
      %p115 = por %p113, %p114
      %p116 = scmp.ne.s32.totalorder %s105, %s106
      %p117 = scmp.eq.s32.totalorder %s27, 0
      %p118 = por %p116, %p117
      %p119 = scmp.ne.s32.totalorder %s105, %s106
      %p120 = scmp.eq.s32.totalorder %s28, 1
      %p121 = por %p119, %p120
      %p123 = scmp.ne.s32.totalorder %s106, %s122
      %p124 = scmp.eq.s32.totalorder %s28, 0
      %p125 = por %p123, %p124
      %s127 = sadd.s32 %s126, 1
      %p130 = scmp.eq.s32.totalorder %s22, 1
      %p131 = scmp.ne.s32.totalorder %s126, %s128
      %p132 = scmp.eq.s32.totalorder %s22, 0
      %p133 = por %p131, %p132
      %p134 = scmp.ne.s32.totalorder %s126, %s128
      %p135 = scmp.eq.s32.totalorder %s27, 1
      %p136 = por %p134, %p135
      %p137 = scmp.ne.s32.totalorder %s128, %s129
      %p138 = scmp.eq.s32.totalorder %s27, 0
      %p139 = por %p137, %p138
      %p140 = scmp.ne.s32.totalorder %s128, %s129
      %p141 = scmp.eq.s32.totalorder %s28, 1
      %p142 = por %p140, %p141
      %p144 = scmp.ne.s32.totalorder %s129, %s143
      %p145 = scmp.eq.s32.totalorder %s28, 0
      %p146 = por %p144, %p145
      %s148 = sadd.s32 %s147, 1
      %p151 = scmp.eq.s32.totalorder %s22, 1
      %p152 = scmp.ne.s32.totalorder %s147, %s149
      %p153 = scmp.eq.s32.totalorder %s22, 0
      %p154 = por %p152, %p153
      %p155 = scmp.ne.s32.totalorder %s147, %s149
      %p156 = scmp.eq.s32.totalorder %s27, 1
      %p157 = por %p155, %p156
      %p158 = scmp.ne.s32.totalorder %s149, %s150
      %p159 = scmp.eq.s32.totalorder %s27, 0
      %p160 = por %p158, %p159
      %p161 = scmp.ne.s32.totalorder %s149, %s150
      %p162 = scmp.eq.s32.totalorder %s28, 1
      %p163 = por %p161, %p162
      %p165 = scmp.ne.s32.totalorder %s150, %s164
      %p166 = scmp.eq.s32.totalorder %s28, 0
      %p167 = por %p165, %p166
      %s169 = sadd.s32 %s168, 1
      %p172 = scmp.eq.s32.totalorder %s22, 1
      %p173 = scmp.ne.s32.totalorder %s168, %s170
      %p174 = scmp.eq.s32.totalorder %s22, 0
      %p175 = por %p173, %p174
      %p176 = scmp.ne.s32.totalorder %s168, %s170
      %p177 = scmp.eq.s32.totalorder %s27, 1
      %p178 = por %p176, %p177
      %p179 = scmp.ne.s32.totalorder %s170, %s171
      %p180 = scmp.eq.s32.totalorder %s27, 0
      %p181 = por %p179, %p180
      %p182 = scmp.ne.s32.totalorder %s170, %s171
      %p183 = scmp.eq.s32.totalorder %s28, 1
      %p184 = por %p182, %p183
      %p186 = scmp.ne.s32.totalorder %s171, %s185
      %p187 = scmp.eq.s32.totalorder %s28, 0
      %p188 = por %p186, %p187
      %s190 = sadd.s32 %s189, 1
      %p193 = scmp.eq.s32.totalorder %s22, 1
      %p194 = scmp.ne.s32.totalorder %s189, %s191
      %p195 = scmp.eq.s32.totalorder %s22, 0
      %p196 = por %p194, %p195
      %p197 = scmp.ne.s32.totalorder %s189, %s191
      %p198 = scmp.eq.s32.totalorder %s27, 1
      %p199 = por %p197, %p198
      %p200 = scmp.ne.s32.totalorder %s191, %s192
      %p201 = scmp.eq.s32.totalorder %s27, 0
      %p202 = por %p200, %p201
      %p203 = scmp.ne.s32.totalorder %s191, %s192
      %p204 = scmp.eq.s32.totalorder %s28, 1
      %p205 = por %p203, %p204
      %p207 = scmp.ne.s32.totalorder %s192, %s206
      %p208 = scmp.eq.s32.totalorder %s28, 0
      %p209 = por %p207, %p208
      %s211 = sadd.s32 %s210, 1
      %p214 = scmp.eq.s32.totalorder %s22, 1
      %p215 = scmp.ne.s32.totalorder %s210, %s212
      %p216 = scmp.eq.s32.totalorder %s22, 0
      %p217 = por %p215, %p216
      %p218 = scmp.ne.s32.totalorder %s210, %s212
      %p219 = scmp.eq.s32.totalorder %s27, 1
      %p220 = por %p218, %p219
      %p221 = scmp.ne.s32.totalorder %s212, %s213
      %p222 = scmp.eq.s32.totalorder %s27, 0
      %p223 = por %p221, %p222
      %p224 = scmp.ne.s32.totalorder %s212, %s213
      %p225 = scmp.eq.s32.totalorder %s28, 1
      %p226 = por %p224, %p225
      %p228 = scmp.ne.s32.totalorder %s213, %s227
      %p229 = scmp.eq.s32.totalorder %s28, 0
      %p230 = por %p228, %p229
      %s232 = sadd.s32 %s231, 1
      %p235 = scmp.eq.s32.totalorder %s22, 1
      %p236 = scmp.ne.s32.totalorder %s231, %s233
      %p237 = scmp.eq.s32.totalorder %s22, 0
      %p238 = por %p236, %p237
      %p239 = scmp.ne.s32.totalorder %s231, %s233
      %p240 = scmp.eq.s32.totalorder %s27, 1
      %p241 = por %p239, %p240
      %p242 = scmp.ne.s32.totalorder %s233, %s234
      %p243 = scmp.eq.s32.totalorder %s27, 0
      %p244 = por %p242, %p243
      %p245 = scmp.ne.s32.totalorder %s233, %s234
      %p246 = scmp.eq.s32.totalorder %s28, 1
      %p247 = por %p245, %p246
      %p249 = scmp.ne.s32.totalorder %s234, %s248
      %p250 = scmp.eq.s32.totalorder %s28, 0
      %p251 = por %p249, %p250
      %s253 = sadd.s32 %s252, 1
      %p256 = scmp.eq.s32.totalorder %s22, 1
      %p257 = scmp.ne.s32.totalorder %s252, %s254
      %p258 = scmp.eq.s32.totalorder %s22, 0
      %p259 = por %p257, %p258
      %p260 = scmp.ne.s32.totalorder %s252, %s254
      %p261 = scmp.eq.s32.totalorder %s27, 1
      %p262 = por %p260, %p261
      %p263 = scmp.ne.s32.totalorder %s254, %s255
      %p264 = scmp.eq.s32.totalorder %s27, 0
      %p265 = por %p263, %p264
      %p266 = scmp.ne.s32.totalorder %s254, %s255
      %p267 = scmp.eq.s32.totalorder %s28, 1
      %p268 = por %p266, %p267
      %p270 = scmp.ne.s32.totalorder %s255, %s269
      %p271 = scmp.eq.s32.totalorder %s28, 0
      %p272 = por %p270, %p271
      %s274 = sadd.s32 %s273, 1
      %p277 = scmp.eq.s32.totalorder %s22, 1
      %p278 = scmp.ne.s32.totalorder %s273, %s275
      %p279 = scmp.eq.s32.totalorder %s22, 0
      %p280 = por %p278, %p279
      %p281 = scmp.ne.s32.totalorder %s273, %s275
      %p282 = scmp.eq.s32.totalorder %s27, 1
      %p283 = por %p281, %p282
      %p284 = scmp.ne.s32.totalorder %s275, %s276
      %p285 = scmp.eq.s32.totalorder %s27, 0
      %p286 = por %p284, %p285
      %p287 = scmp.ne.s32.totalorder %s275, %s276
      %p288 = scmp.eq.s32.totalorder %s28, 1
      %p289 = por %p287, %p288
      %p291 = scmp.ne.s32.totalorder %s276, %s290
      %p292 = scmp.eq.s32.totalorder %s28, 0
      %p293 = por %p291, %p292
      %s294 = ssub.s32 %s29, %s41
      %s295 = ssub.s32 %s30, %s37
      %s296 = sor.u32 %s294, %s295
      %p297 = scmp.eq.s32.totalorder %s296, 0
      %s299 = sadd.s32 %s298, 1
      %s300 = scalar_select %p297, %s298, %s299
      %p303 = pneg %p297
      %p304 = scmp.eq.s32.totalorder %s22, 1
      %p305 = por %p303, %p304
      %p306 = scmp.ne.s32.totalorder %s298, %s301
      %p307 = scmp.eq.s32.totalorder %s22, 0
      %p308 = por %p306, %p307
      %p309 = scmp.ne.s32.totalorder %s298, %s301
      %p310 = scmp.eq.s32.totalorder %s27, 1
      %p311 = por %p309, %p310
      %p312 = scmp.ne.s32.totalorder %s301, %s302
      %p313 = scmp.eq.s32.totalorder %s27, 0
      %p314 = por %p312, %p313
      %p315 = scmp.ne.s32.totalorder %s301, %s302
      %p316 = scmp.eq.s32.totalorder %s28, 1
      %p317 = por %p315, %p316
      %p319 = scmp.ne.s32.totalorder %s302, %s318
      %p320 = scmp.eq.s32.totalorder %s28, 0
      %p321 = por %p319, %p320
      %p322 = scmp.le.s32.totalorder 1, %s22
      %p323 = scmp.lt.s32.totalorder %s22, 3
      %p324 = pnand %p322, %p323
      %p325 = pneg %p324
      // Predicated region
      $region9: #{tpu_custom_call.1} parent=5 // pred_check
        _
      $region10: #{tpu_custom_call.1} parent=5 // pred_check_branch
        %327 = sbr.rel (%p324) target = $region12
      $region11: #{tpu_custom_call.1} parent=5 // pred_region
        %s328 = ssub.s32 %s22, 1
        // Predicated region
        $region13: #{tpu_custom_call.1} parent=11 // pred_check
          %p329 = pneg %p139
        $region14: #{tpu_custom_call.1} parent=11 // pred_check_branch
          %331 = sbr.rel (%p329) target = $region16
        $region15: #{tpu_custom_call.1} parent=11 // pred_region
          _
        $region16: #{tpu_custom_call.1} parent=11 // pred_fallthru
          _
        // Predicated region
        $region17: #{tpu_custom_call.1} parent=11 // pred_check
          %p332 = pneg %p160
        $region18: #{tpu_custom_call.1} parent=11 // pred_check_branch
          %334 = sbr.rel (%p332) target = $region20
        $region19: #{tpu_custom_call.1} parent=11 // pred_region
          _
        $region20: #{tpu_custom_call.1} parent=11 // pred_fallthru
          _
        // Predicated region
        $region21: #{tpu_custom_call.1} parent=11 // pred_check
          %p335 = pneg %p181
        $region22: #{tpu_custom_call.1} parent=11 // pred_check_branch
          %337 = sbr.rel (%p335) target = $region24
        $region23: #{tpu_custom_call.1} parent=11 // pred_region
          _
        $region24: #{tpu_custom_call.1} parent=11 // pred_fallthru
          _
        // Predicated region
        $region25: #{tpu_custom_call.1} parent=11 // pred_check
          %p338 = pneg %p202
        $region26: #{tpu_custom_call.1} parent=11 // pred_check_branch
          %340 = sbr.rel (%p338) target = $region28
        $region27: #{tpu_custom_call.1} parent=11 // pred_region
          _
        $region28: #{tpu_custom_call.1} parent=11 // pred_fallthru
          _
        // Predicated region
        $region29: #{tpu_custom_call.1} parent=11 // pred_check
          %p341 = pneg %p223
        $region30: #{tpu_custom_call.1} parent=11 // pred_check_branch
          %343 = sbr.rel (%p341) target = $region32
        $region31: #{tpu_custom_call.1} parent=11 // pred_region
          _
        $region32: #{tpu_custom_call.1} parent=11 // pred_fallthru
          _
        // Predicated region
        $region33: #{tpu_custom_call.1} parent=11 // pred_check
          %p344 = pneg %p244
        $region34: #{tpu_custom_call.1} parent=11 // pred_check_branch
          %346 = sbr.rel (%p344) target = $region36
        $region35: #{tpu_custom_call.1} parent=11 // pred_region
          _
        $region36: #{tpu_custom_call.1} parent=11 // pred_fallthru
          _
        // Predicated region
        $region37: #{tpu_custom_call.1} parent=11 // pred_check
          %p347 = pneg %p265
        $region38: #{tpu_custom_call.1} parent=11 // pred_check_branch
          %349 = sbr.rel (%p347) target = $region40
        $region39: #{tpu_custom_call.1} parent=11 // pred_region
          _
        $region40: #{tpu_custom_call.1} parent=11 // pred_fallthru
          _
        // Predicated region
        $region41: #{tpu_custom_call.1} parent=11 // pred_check
          %p350 = pneg %p286
        $region42: #{tpu_custom_call.1} parent=11 // pred_check_branch
          %352 = sbr.rel (%p350) target = $region44
        $region43: #{tpu_custom_call.1} parent=11 // pred_region
          _
        $region44: #{tpu_custom_call.1} parent=11 // pred_fallthru
          _
      $region12: #{tpu_custom_call.1} parent=5 // pred_fallthru
        _
      %p353 = scmp.lt.s32.totalorder %s22, 2
      // Predicated region
      $region45: #{tpu_custom_call.1} parent=5 // pred_check
        %p354 = pneg %p353
      $region46: #{tpu_custom_call.1} parent=5 // pred_check_branch
        %356 = sbr.rel (%p354) target = $region48
      $region47: #{tpu_custom_call.1} parent=5 // pred_region
        // Predicated region
        $region49: #{tpu_custom_call.1} parent=47 // pred_check
          %p357 = pneg %p56
        $region50: #{tpu_custom_call.1} parent=47 // pred_check_branch
          %359 = sbr.rel (%p357) target = $region52
        $region51: #{tpu_custom_call.1} parent=47 // pred_region
          %p360 = scmp.lt.s32.totalorder %s29, 1
          %s361 = scalar_select %p360, %s29, 1
          %p362 = scmp.lt.s32.totalorder %s30, 0
          %s363 = scalar_select %p362, %s30, 0
          %s364 = smul.addr %s361, 64
          %s365 = sadd.s32 %s363, %s364
          %s366 = smul.addr %s365, 8
          %s367 = scalar_lea.vmem %s0, %s366
        $region52: #{tpu_custom_call.1} parent=47 // pred_fallthru
          _
        // Predicated region
        $region53: #{tpu_custom_call.1} parent=47 // pred_check
          %p368 = pneg %p84
        $region54: #{tpu_custom_call.1} parent=47 // pred_check_branch
          %370 = sbr.rel (%p368) target = $region56
        $region55: #{tpu_custom_call.1} parent=47 // pred_region
          %p371 = scmp.lt.s32.totalorder %s29, 1
          %s372 = scalar_select %p371, %s29, 1
          %p373 = scmp.lt.s32.totalorder %s30, 0
          %s374 = scalar_select %p373, %s30, 0
          %s375 = smul.addr %s372, 64
          %s376 = sadd.s32 %s374, %s375
          %s377 = smul.addr %s376, 8
          %s378 = scalar_lea.vmem %s1, %s377
        $region56: #{tpu_custom_call.1} parent=47 // pred_fallthru
          _
        // Predicated region
        $region57: #{tpu_custom_call.1} parent=47 // pred_check
          %p379 = pneg %p112
        $region58: #{tpu_custom_call.1} parent=47 // pred_check_branch
          %381 = sbr.rel (%p379) target = $region60
        $region59: #{tpu_custom_call.1} parent=47 // pred_region
          %p382 = scmp.lt.s32.totalorder %s29, 1
          %s383 = scalar_select %p382, %s29, 1
          %p384 = scmp.lt.s32.totalorder %s30, 0
          %s385 = scalar_select %p384, %s30, 0
          %s386 = smul.addr %s383, 64
          %s387 = sadd.s32 %s385, %s386
          %s388 = smul.addr %s387, 8
          %s389 = scalar_lea.vmem %s2, %s388
        $region60: #{tpu_custom_call.1} parent=47 // pred_fallthru
          _
      $region48: #{tpu_custom_call.1} parent=5 // pred_fallthru
        _
      %p390 = scmp.le.s32.totalorder 1, %s22
      %p391 = scmp.lt.s32.totalorder %s22, 3
      %p392 = pnand %p390, %p391
      %p393 = pneg %p392
      // Predicated region
      $region61: #{tpu_custom_call.1} parent=5 // pred_check
        _
      $region62: #{tpu_custom_call.1} parent=5 // pred_check_branch
        %395 = sbr.rel (%p392) target = $region64
      $region63: #{tpu_custom_call.1} parent=5 // pred_region
        %s396 = ssub.s32 %s22, 1
        %p397 = scmp.lt.s32.totalorder %s31, 1
        %s398 = scalar_select %p397, %s31, 1
        %p399 = scmp.lt.s32.totalorder %s32, 0
        %s400 = scalar_select %p399, %s32, 0
        %s401 = smul.addr %s398, 64
        %s402 = sadd.s32 %s400, %s401
        %s403 = smul.addr %s402, 8
        %s404 = scalar_lea.vmem %s0, %s403
        %p405 = pneg %p62
        %p406 = pneg %p59
        %p407 = scmp.lt.s32.totalorder %s31, 1
        %s408 = scalar_select %p407, %s31, 1
        %p409 = scmp.lt.s32.totalorder %s32, 0
        %s410 = scalar_select %p409, %s32, 0
        %s411 = smul.addr %s408, 64
        %s412 = sadd.s32 %s410, %s411
        %s413 = smul.addr %s412, 8
        %s414 = scalar_lea.vmem %s1, %s413
        %p415 = pneg %p90
        %p416 = pneg %p87
        %p417 = scmp.lt.s32.totalorder %s31, 1
        %s418 = scalar_select %p417, %s31, 1
        %p419 = scmp.lt.s32.totalorder %s32, 0
        %s420 = scalar_select %p419, %s32, 0
        %s421 = smul.addr %s418, 64
        %s422 = sadd.s32 %s420, %s421
        %s423 = smul.addr %s422, 8
        %s424 = scalar_lea.vmem %s2, %s423
        %p425 = pneg %p118
        %p426 = pneg %p115
        %p427 = pneg %p139
        %p428 = pneg %p136
        %p429 = pneg %p160
        %p430 = pneg %p157
        %p431 = pneg %p181
        %p432 = pneg %p178
        %p433 = pneg %p202
        %p434 = pneg %p199
        %p435 = pneg %p223
        %p436 = pneg %p220
        %p437 = pneg %p244
        %p438 = pneg %p241
        %p439 = pneg %p265
        %p440 = pneg %p262
        %p441 = pneg %p286
        %p442 = pneg %p283
        %p443 = pneg %p314
        %p444 = pneg %p311
        %s445 = sand.u32 %s301, 1
        %s446 = scalar_lea.sflag [#allocation4], %s445
        %s447 = sand.u32 %s301, 1
        %s448 = scalar_lea.vmem [#allocation3], %s447
        %p449 = scmp.lt.s32.totalorder %s31, 1
        %s450 = scalar_select %p449, %s31, 1
        %p451 = scmp.lt.s32.totalorder %s32, 0
        %s452 = scalar_select %p451, %s32, 0
        %s453 = smul.addr %s450, 64
        %s454 = sadd.s32 %s452, %s453
        %s455 = smul.addr %s454, 8
        %s456 = scalar_lea.vmem %s0, %s455
        %p457 = scmp.lt.s32.totalorder %s31, 1
        %s458 = scalar_select %p457, %s31, 1
        %p459 = scmp.lt.s32.totalorder %s32, 0
        %s460 = scalar_select %p459, %s32, 0
        %s461 = smul.addr %s458, 64
        %s462 = sadd.s32 %s460, %s461
        %s463 = smul.addr %s462, 8
        %s464 = scalar_lea.vmem %s1, %s463
        %p465 = scmp.lt.s32.totalorder %s31, 1
        %s466 = scalar_select %p465, %s31, 1
        %p467 = scmp.lt.s32.totalorder %s32, 0
        %s468 = scalar_select %p467, %s32, 0
        %s469 = smul.addr %s466, 64
        %s470 = sadd.s32 %s468, %s469
        %s471 = smul.addr %s470, 8
        %s472 = scalar_lea.vmem %s2, %s471
        %v473 = vld [vmem:[%s456] sm:$0xff]
        %v474 = vld [vmem:[%s456 + $0x8] sm:$0xff]
        %v475 = vld [vmem:[%s456 + $0x10] sm:$0xff]
        %v476 = vld [vmem:[%s456 + $0x18] sm:$0xff]
        %v477 = vld [vmem:[%s456 + $0x20] sm:$0xff]
        %v478 = vld [vmem:[%s456 + $0x28] sm:$0xff]
        %v479 = vld [vmem:[%s456 + $0x30] sm:$0xff]
        %v480 = vld [vmem:[%s456 + $0x38] sm:$0xff]
        %v481 = vld [vmem:[%s456 + $0x40] sm:$0xff]
        %v482 = vld [vmem:[%s456 + $0x48] sm:$0xff]
        %v483 = vld [vmem:[%s456 + $0x50] sm:$0xff]
        %v484 = vld [vmem:[%s456 + $0x58] sm:$0xff]
        %v485 = vld [vmem:[%s456 + $0x60] sm:$0xff]
        %v486 = vld [vmem:[%s456 + $0x68] sm:$0xff]
        %v487 = vld [vmem:[%s456 + $0x70] sm:$0xff]
        %v488 = vld [vmem:[%s456 + $0x78] sm:$0xff]
        %v489 = vld [vmem:[%s456 + $0x80] sm:$0xff]
        %v490 = vld [vmem:[%s456 + $0x88] sm:$0xff]
        %v491 = vld [vmem:[%s456 + $0x90] sm:$0xff]
        %v492 = vld [vmem:[%s456 + $0x98] sm:$0xff]
        %v493 = vld [vmem:[%s456 + $0xa0] sm:$0xff]
        %v494 = vld [vmem:[%s456 + $0xa8] sm:$0xff]
        %v495 = vld [vmem:[%s456 + $0xb0] sm:$0xff]
        %v496 = vld [vmem:[%s456 + $0xb8] sm:$0xff]
        %v497 = vld [vmem:[%s456 + $0xc0] sm:$0xff]
        %v498 = vld [vmem:[%s456 + $0xc8] sm:$0xff]
        %v499 = vld [vmem:[%s456 + $0xd0] sm:$0xff]
        %v500 = vld [vmem:[%s456 + $0xd8] sm:$0xff]
        %v501 = vld [vmem:[%s456 + $0xe0] sm:$0xff]
        %v502 = vld [vmem:[%s456 + $0xe8] sm:$0xff]
        %v503 = vld [vmem:[%s456 + $0xf0] sm:$0xff]
        %v504 = vld [vmem:[%s456 + $0xf8] sm:$0xff]
        %v505 = vld [vmem:[%s456 + $0x100] sm:$0xff]
        %v506 = vld [vmem:[%s456 + $0x108] sm:$0xff]
        %v507 = vld [vmem:[%s456 + $0x110] sm:$0xff]
        %v508 = vld [vmem:[%s456 + $0x118] sm:$0xff]
        %v509 = vld [vmem:[%s456 + $0x120] sm:$0xff]
        %v510 = vld [vmem:[%s456 + $0x128] sm:$0xff]
        %v511 = vld [vmem:[%s456 + $0x130] sm:$0xff]
        %v512 = vld [vmem:[%s456 + $0x138] sm:$0xff]
        %v513 = vld [vmem:[%s456 + $0x140] sm:$0xff]
        %v514 = vld [vmem:[%s456 + $0x148] sm:$0xff]
        %v515 = vld [vmem:[%s456 + $0x150] sm:$0xff]
        %v516 = vld [vmem:[%s456 + $0x158] sm:$0xff]
        %v517 = vld [vmem:[%s456 + $0x160] sm:$0xff]
        %v518 = vld [vmem:[%s456 + $0x168] sm:$0xff]
        %v519 = vld [vmem:[%s456 + $0x170] sm:$0xff]
        %v520 = vld [vmem:[%s456 + $0x178] sm:$0xff]
        %v521 = vld [vmem:[%s456 + $0x180] sm:$0xff]
        %v522 = vld [vmem:[%s456 + $0x188] sm:$0xff]
        %v523 = vld [vmem:[%s456 + $0x190] sm:$0xff]
        %v524 = vld [vmem:[%s456 + $0x198] sm:$0xff]
        %v525 = vld [vmem:[%s456 + $0x1a0] sm:$0xff]
        %v526 = vld [vmem:[%s456 + $0x1a8] sm:$0xff]
        %v527 = vld [vmem:[%s456 + $0x1b0] sm:$0xff]
        %v528 = vld [vmem:[%s456 + $0x1b8] sm:$0xff]
        %v529 = vld [vmem:[%s456 + $0x1c0] sm:$0xff]
        %v530 = vld [vmem:[%s456 + $0x1c8] sm:$0xff]
        %v531 = vld [vmem:[%s456 + $0x1d0] sm:$0xff]
        %v532 = vld [vmem:[%s456 + $0x1d8] sm:$0xff]
        %v533 = vld [vmem:[%s456 + $0x1e0] sm:$0xff]
        %v534 = vld [vmem:[%s456 + $0x1e8] sm:$0xff]
        %v535 = vld [vmem:[%s456 + $0x1f0] sm:$0xff]
        %v536 = vld [vmem:[%s456 + $0x1f8] sm:$0xff]
        %v537 = vpack.c.bf16 %v474, %v473
        %v538 = vpack.c.bf16 %v476, %v475
        %v539 = vpack.c.bf16 %v478, %v477
        %v540 = vpack.c.bf16 %v480, %v479
        %v541 = vpack.c.bf16 %v482, %v481
        %v542 = vpack.c.bf16 %v484, %v483
        %v543 = vpack.c.bf16 %v486, %v485
        %v544 = vpack.c.bf16 %v488, %v487
        %v545 = vpack.c.bf16 %v490, %v489
        %v546 = vpack.c.bf16 %v492, %v491
        %v547 = vpack.c.bf16 %v494, %v493
        %v548 = vpack.c.bf16 %v496, %v495
        %v549 = vpack.c.bf16 %v498, %v497
        %v550 = vpack.c.bf16 %v500, %v499
        %v551 = vpack.c.bf16 %v502, %v501
        %v552 = vpack.c.bf16 %v504, %v503
        %v553 = vpack.c.bf16 %v506, %v505
        %v554 = vpack.c.bf16 %v508, %v507
        %v555 = vpack.c.bf16 %v510, %v509
        %v556 = vpack.c.bf16 %v512, %v511
        %v557 = vpack.c.bf16 %v514, %v513
        %v558 = vpack.c.bf16 %v516, %v515
        %v559 = vpack.c.bf16 %v518, %v517
        %v560 = vpack.c.bf16 %v520, %v519
        %v561 = vpack.c.bf16 %v522, %v521
        %v562 = vpack.c.bf16 %v524, %v523
        %v563 = vpack.c.bf16 %v526, %v525
        %v564 = vpack.c.bf16 %v528, %v527
        %v565 = vpack.c.bf16 %v530, %v529
        %v566 = vpack.c.bf16 %v532, %v531
        %v567 = vpack.c.bf16 %v534, %v533
        %v568 = vpack.c.bf16 %v536, %v535
        %v569 = vld [vmem:[%s464] sm:$0xff]
        %v570 = vld [vmem:[%s464 + $0x8] sm:$0xff]
        %v571 = vld [vmem:[%s464 + $0x10] sm:$0xff]
        %v572 = vld [vmem:[%s464 + $0x18] sm:$0xff]
        %v573 = vld [vmem:[%s464 + $0x20] sm:$0xff]
        %v574 = vld [vmem:[%s464 + $0x28] sm:$0xff]
        %v575 = vld [vmem:[%s464 + $0x30] sm:$0xff]
        %v576 = vld [vmem:[%s464 + $0x38] sm:$0xff]
        %v577 = vld [vmem:[%s464 + $0x40] sm:$0xff]
        %v578 = vld [vmem:[%s464 + $0x48] sm:$0xff]
        %v579 = vld [vmem:[%s464 + $0x50] sm:$0xff]
        %v580 = vld [vmem:[%s464 + $0x58] sm:$0xff]
        %v581 = vld [vmem:[%s464 + $0x60] sm:$0xff]
        %v582 = vld [vmem:[%s464 + $0x68] sm:$0xff]
        %v583 = vld [vmem:[%s464 + $0x70] sm:$0xff]
        %v584 = vld [vmem:[%s464 + $0x78] sm:$0xff]
        %v585 = vld [vmem:[%s464 + $0x80] sm:$0xff]
        %v586 = vld [vmem:[%s464 + $0x88] sm:$0xff]
        %v587 = vld [vmem:[%s464 + $0x90] sm:$0xff]
        %v588 = vld [vmem:[%s464 + $0x98] sm:$0xff]
        %v589 = vld [vmem:[%s464 + $0xa0] sm:$0xff]
        %v590 = vld [vmem:[%s464 + $0xa8] sm:$0xff]
        %v591 = vld [vmem:[%s464 + $0xb0] sm:$0xff]
        %v592 = vld [vmem:[%s464 + $0xb8] sm:$0xff]
        %v593 = vld [vmem:[%s464 + $0xc0] sm:$0xff]
        %v594 = vld [vmem:[%s464 + $0xc8] sm:$0xff]
        %v595 = vld [vmem:[%s464 + $0xd0] sm:$0xff]
        %v596 = vld [vmem:[%s464 + $0xd8] sm:$0xff]
        %v597 = vld [vmem:[%s464 + $0xe0] sm:$0xff]
        %v598 = vld [vmem:[%s464 + $0xe8] sm:$0xff]
        %v599 = vld [vmem:[%s464 + $0xf0] sm:$0xff]
        %v600 = vld [vmem:[%s464 + $0xf8] sm:$0xff]
        %v601 = vld [vmem:[%s464 + $0x100] sm:$0xff]
        %v602 = vld [vmem:[%s464 + $0x108] sm:$0xff]
        %v603 = vld [vmem:[%s464 + $0x110] sm:$0xff]
        %v604 = vld [vmem:[%s464 + $0x118] sm:$0xff]
        %v605 = vld [vmem:[%s464 + $0x120] sm:$0xff]
        %v606 = vld [vmem:[%s464 + $0x128] sm:$0xff]
        %v607 = vld [vmem:[%s464 + $0x130] sm:$0xff]
        %v608 = vld [vmem:[%s464 + $0x138] sm:$0xff]
        %v609 = vld [vmem:[%s464 + $0x140] sm:$0xff]
        %v610 = vld [vmem:[%s464 + $0x148] sm:$0xff]
        %v611 = vld [vmem:[%s464 + $0x150] sm:$0xff]
        %v612 = vld [vmem:[%s464 + $0x158] sm:$0xff]
        %v613 = vld [vmem:[%s464 + $0x160] sm:$0xff]
        %v614 = vld [vmem:[%s464 + $0x168] sm:$0xff]
        %v615 = vld [vmem:[%s464 + $0x170] sm:$0xff]
        %v616 = vld [vmem:[%s464 + $0x178] sm:$0xff]
        %v617 = vld [vmem:[%s464 + $0x180] sm:$0xff]
        %v618 = vld [vmem:[%s464 + $0x188] sm:$0xff]
        %v619 = vld [vmem:[%s464 + $0x190] sm:$0xff]
        %v620 = vld [vmem:[%s464 + $0x198] sm:$0xff]
        %v621 = vld [vmem:[%s464 + $0x1a0] sm:$0xff]
        %v622 = vld [vmem:[%s464 + $0x1a8] sm:$0xff]
        %v623 = vld [vmem:[%s464 + $0x1b0] sm:$0xff]
        %v624 = vld [vmem:[%s464 + $0x1b8] sm:$0xff]
        %v625 = vld [vmem:[%s464 + $0x1c0] sm:$0xff]
        %v626 = vld [vmem:[%s464 + $0x1c8] sm:$0xff]
        %v627 = vld [vmem:[%s464 + $0x1d0] sm:$0xff]
        %v628 = vld [vmem:[%s464 + $0x1d8] sm:$0xff]
        %v629 = vld [vmem:[%s464 + $0x1e0] sm:$0xff]
        %v630 = vld [vmem:[%s464 + $0x1e8] sm:$0xff]
        %v631 = vld [vmem:[%s464 + $0x1f0] sm:$0xff]
        %v632 = vld [vmem:[%s464 + $0x1f8] sm:$0xff]
        %v633 = vpack.c.bf16 %v570, %v569
        %v634 = vpack.c.bf16 %v572, %v571
        %v635 = vpack.c.bf16 %v574, %v573
        %v636 = vpack.c.bf16 %v576, %v575
        %v637 = vpack.c.bf16 %v578, %v577
        %v638 = vpack.c.bf16 %v580, %v579
        %v639 = vpack.c.bf16 %v582, %v581
        %v640 = vpack.c.bf16 %v584, %v583
        %v641 = vpack.c.bf16 %v586, %v585
        %v642 = vpack.c.bf16 %v588, %v587
        %v643 = vpack.c.bf16 %v590, %v589
        %v644 = vpack.c.bf16 %v592, %v591
        %v645 = vpack.c.bf16 %v594, %v593
        %v646 = vpack.c.bf16 %v596, %v595
        %v647 = vpack.c.bf16 %v598, %v597
        %v648 = vpack.c.bf16 %v600, %v599
        %v649 = vpack.c.bf16 %v602, %v601
        %v650 = vpack.c.bf16 %v604, %v603
        %v651 = vpack.c.bf16 %v606, %v605
        %v652 = vpack.c.bf16 %v608, %v607
        %v653 = vpack.c.bf16 %v610, %v609
        %v654 = vpack.c.bf16 %v612, %v611
        %v655 = vpack.c.bf16 %v614, %v613
        %v656 = vpack.c.bf16 %v616, %v615
        %v657 = vpack.c.bf16 %v618, %v617
        %v658 = vpack.c.bf16 %v620, %v619
        %v659 = vpack.c.bf16 %v622, %v621
        %v660 = vpack.c.bf16 %v624, %v623
        %v661 = vpack.c.bf16 %v626, %v625
        %v662 = vpack.c.bf16 %v628, %v627
        %v663 = vpack.c.bf16 %v630, %v629
        %v664 = vpack.c.bf16 %v632, %v631
        %v665 = vld [vmem:[%s472] sm:$0xff]
        %v666 = vld [vmem:[%s472 + $0x8] sm:$0xff]
        %v667 = vld [vmem:[%s472 + $0x10] sm:$0xff]
        %v668 = vld [vmem:[%s472 + $0x18] sm:$0xff]
        %v669 = vld [vmem:[%s472 + $0x20] sm:$0xff]
        %v670 = vld [vmem:[%s472 + $0x28] sm:$0xff]
        %v671 = vld [vmem:[%s472 + $0x30] sm:$0xff]
        %v672 = vld [vmem:[%s472 + $0x38] sm:$0xff]
        %v673 = vld [vmem:[%s472 + $0x40] sm:$0xff]
        %v674 = vld [vmem:[%s472 + $0x48] sm:$0xff]
        %v675 = vld [vmem:[%s472 + $0x50] sm:$0xff]
        %v676 = vld [vmem:[%s472 + $0x58] sm:$0xff]
        %v677 = vld [vmem:[%s472 + $0x60] sm:$0xff]
        %v678 = vld [vmem:[%s472 + $0x68] sm:$0xff]
        %v679 = vld [vmem:[%s472 + $0x70] sm:$0xff]
        %v680 = vld [vmem:[%s472 + $0x78] sm:$0xff]
        %v681 = vld [vmem:[%s472 + $0x80] sm:$0xff]
        %v682 = vld [vmem:[%s472 + $0x88] sm:$0xff]
        %v683 = vld [vmem:[%s472 + $0x90] sm:$0xff]
        %v684 = vld [vmem:[%s472 + $0x98] sm:$0xff]
        %v685 = vld [vmem:[%s472 + $0xa0] sm:$0xff]
        %v686 = vld [vmem:[%s472 + $0xa8] sm:$0xff]
        %v687 = vld [vmem:[%s472 + $0xb0] sm:$0xff]
        %v688 = vld [vmem:[%s472 + $0xb8] sm:$0xff]
        %v689 = vld [vmem:[%s472 + $0xc0] sm:$0xff]
        %v690 = vld [vmem:[%s472 + $0xc8] sm:$0xff]
        %v691 = vld [vmem:[%s472 + $0xd0] sm:$0xff]
        %v692 = vld [vmem:[%s472 + $0xd8] sm:$0xff]
        %v693 = vld [vmem:[%s472 + $0xe0] sm:$0xff]
        %v694 = vld [vmem:[%s472 + $0xe8] sm:$0xff]
        %v695 = vld [vmem:[%s472 + $0xf0] sm:$0xff]
        %v696 = vld [vmem:[%s472 + $0xf8] sm:$0xff]
        %v697 = vld [vmem:[%s472 + $0x100] sm:$0xff]
        %v698 = vld [vmem:[%s472 + $0x108] sm:$0xff]
        %v699 = vld [vmem:[%s472 + $0x110] sm:$0xff]
        %v700 = vld [vmem:[%s472 + $0x118] sm:$0xff]
        %v701 = vld [vmem:[%s472 + $0x120] sm:$0xff]
        %v702 = vld [vmem:[%s472 + $0x128] sm:$0xff]
        %v703 = vld [vmem:[%s472 + $0x130] sm:$0xff]
        %v704 = vld [vmem:[%s472 + $0x138] sm:$0xff]
        %v705 = vld [vmem:[%s472 + $0x140] sm:$0xff]
        %v706 = vld [vmem:[%s472 + $0x148] sm:$0xff]
        %v707 = vld [vmem:[%s472 + $0x150] sm:$0xff]
        %v708 = vld [vmem:[%s472 + $0x158] sm:$0xff]
        %v709 = vld [vmem:[%s472 + $0x160] sm:$0xff]
        %v710 = vld [vmem:[%s472 + $0x168] sm:$0xff]
        %v711 = vld [vmem:[%s472 + $0x170] sm:$0xff]
        %v712 = vld [vmem:[%s472 + $0x178] sm:$0xff]
        %v713 = vld [vmem:[%s472 + $0x180] sm:$0xff]
        %v714 = vld [vmem:[%s472 + $0x188] sm:$0xff]
        %v715 = vld [vmem:[%s472 + $0x190] sm:$0xff]
        %v716 = vld [vmem:[%s472 + $0x198] sm:$0xff]
        %v717 = vld [vmem:[%s472 + $0x1a0] sm:$0xff]
        %v718 = vld [vmem:[%s472 + $0x1a8] sm:$0xff]
        %v719 = vld [vmem:[%s472 + $0x1b0] sm:$0xff]
        %v720 = vld [vmem:[%s472 + $0x1b8] sm:$0xff]
        %v721 = vld [vmem:[%s472 + $0x1c0] sm:$0xff]
        %v722 = vld [vmem:[%s472 + $0x1c8] sm:$0xff]
        %v723 = vld [vmem:[%s472 + $0x1d0] sm:$0xff]
        %v724 = vld [vmem:[%s472 + $0x1d8] sm:$0xff]
        %v725 = vld [vmem:[%s472 + $0x1e0] sm:$0xff]
        %v726 = vld [vmem:[%s472 + $0x1e8] sm:$0xff]
        %v727 = vld [vmem:[%s472 + $0x1f0] sm:$0xff]
        %v728 = vld [vmem:[%s472 + $0x1f8] sm:$0xff]
        %v729 = vpack.c.bf16 %v666, %v665
        %v730 = vpack.c.bf16 %v668, %v667
        %v731 = vpack.c.bf16 %v670, %v669
        %v732 = vpack.c.bf16 %v672, %v671
        %v733 = vpack.c.bf16 %v674, %v673
        %v734 = vpack.c.bf16 %v676, %v675
        %v735 = vpack.c.bf16 %v678, %v677
        %v736 = vpack.c.bf16 %v680, %v679
        %v737 = vpack.c.bf16 %v682, %v681
        %v738 = vpack.c.bf16 %v684, %v683
        %v739 = vpack.c.bf16 %v686, %v685
        %v740 = vpack.c.bf16 %v688, %v687
        %v741 = vpack.c.bf16 %v690, %v689
        %v742 = vpack.c.bf16 %v692, %v691
        %v743 = vpack.c.bf16 %v694, %v693
        %v744 = vpack.c.bf16 %v696, %v695
        %v745 = vpack.c.bf16 %v698, %v697
        %v746 = vpack.c.bf16 %v700, %v699
        %v747 = vpack.c.bf16 %v702, %v701
        %v748 = vpack.c.bf16 %v704, %v703
        %v749 = vpack.c.bf16 %v706, %v705
        %v750 = vpack.c.bf16 %v708, %v707
        %v751 = vpack.c.bf16 %v710, %v709
        %v752 = vpack.c.bf16 %v712, %v711
        %v753 = vpack.c.bf16 %v714, %v713
        %v754 = vpack.c.bf16 %v716, %v715
        %v755 = vpack.c.bf16 %v718, %v717
        %v756 = vpack.c.bf16 %v720, %v719
        %v757 = vpack.c.bf16 %v722, %v721
        %v758 = vpack.c.bf16 %v724, %v723
        %v759 = vpack.c.bf16 %v726, %v725
        %v760 = vpack.c.bf16 %v728, %v727
        %v761 = vld [vmem:[%s3] sm:$0xff]
        %v762 = vld [vmem:[%s3 + $0x8] sm:$0xff]
        %v763 = vld [vmem:[%s3 + $0x10] sm:$0xff]
        %v764 = vld [vmem:[%s3 + $0x18] sm:$0xff]
        %v765 = vld [vmem:[%s3 + $0x20] sm:$0xff]
        %v766 = vld [vmem:[%s3 + $0x28] sm:$0xff]
        %v767 = vld [vmem:[%s3 + $0x30] sm:$0xff]
        %v768 = vld [vmem:[%s3 + $0x38] sm:$0xff]
        %v769 = vld [vmem:[%s3 + $0x40] sm:$0xff]
        %v770 = vld [vmem:[%s3 + $0x48] sm:$0xff]
        %v771 = vld [vmem:[%s3 + $0x50] sm:$0xff]
        %v772 = vld [vmem:[%s3 + $0x58] sm:$0xff]
        %v773 = vld [vmem:[%s3 + $0x60] sm:$0xff]
        %v774 = vld [vmem:[%s3 + $0x68] sm:$0xff]
        %v775 = vld [vmem:[%s3 + $0x70] sm:$0xff]
        %v776 = vld [vmem:[%s3 + $0x78] sm:$0xff]
        %v777 = vld [vmem:[%s3 + $0x80] sm:$0xff]
        %v778 = vld [vmem:[%s3 + $0x88] sm:$0xff]
        %v779 = vld [vmem:[%s3 + $0x90] sm:$0xff]
        %v780 = vld [vmem:[%s3 + $0x98] sm:$0xff]
        %v781 = vld [vmem:[%s3 + $0xa0] sm:$0xff]
        %v782 = vld [vmem:[%s3 + $0xa8] sm:$0xff]
        %v783 = vld [vmem:[%s3 + $0xb0] sm:$0xff]
        %v784 = vld [vmem:[%s3 + $0xb8] sm:$0xff]
        %v785 = vld [vmem:[%s3 + $0xc0] sm:$0xff]
        %v786 = vld [vmem:[%s3 + $0xc8] sm:$0xff]
        %v787 = vld [vmem:[%s3 + $0xd0] sm:$0xff]
        %v788 = vld [vmem:[%s3 + $0xd8] sm:$0xff]
        %v789 = vld [vmem:[%s3 + $0xe0] sm:$0xff]
        %v790 = vld [vmem:[%s3 + $0xe8] sm:$0xff]
        %v791 = vld [vmem:[%s3 + $0xf0] sm:$0xff]
        %v792 = vld [vmem:[%s3 + $0xf8] sm:$0xff]
        %v793 = vld [vmem:[%s3 + $0x100] sm:$0xff]
        %v794 = vld [vmem:[%s3 + $0x108] sm:$0xff]
        %v795 = vld [vmem:[%s3 + $0x110] sm:$0xff]
        %v796 = vld [vmem:[%s3 + $0x118] sm:$0xff]
        %v797 = vld [vmem:[%s3 + $0x120] sm:$0xff]
        %v798 = vld [vmem:[%s3 + $0x128] sm:$0xff]
        %v799 = vld [vmem:[%s3 + $0x130] sm:$0xff]
        %v800 = vld [vmem:[%s3 + $0x138] sm:$0xff]
        %v801 = vld [vmem:[%s3 + $0x140] sm:$0xff]
        %v802 = vld [vmem:[%s3 + $0x148] sm:$0xff]
        %v803 = vld [vmem:[%s3 + $0x150] sm:$0xff]
        %v804 = vld [vmem:[%s3 + $0x158] sm:$0xff]
        %v805 = vld [vmem:[%s3 + $0x160] sm:$0xff]
        %v806 = vld [vmem:[%s3 + $0x168] sm:$0xff]
        %v807 = vld [vmem:[%s3 + $0x170] sm:$0xff]
        %v808 = vld [vmem:[%s3 + $0x178] sm:$0xff]
        %v809 = vld [vmem:[%s3 + $0x180] sm:$0xff]
        %v810 = vld [vmem:[%s3 + $0x188] sm:$0xff]
        %v811 = vld [vmem:[%s3 + $0x190] sm:$0xff]
        %v812 = vld [vmem:[%s3 + $0x198] sm:$0xff]
        %v813 = vld [vmem:[%s3 + $0x1a0] sm:$0xff]
        %v814 = vld [vmem:[%s3 + $0x1a8] sm:$0xff]
        %v815 = vld [vmem:[%s3 + $0x1b0] sm:$0xff]
        %v816 = vld [vmem:[%s3 + $0x1b8] sm:$0xff]
        %v817 = vld [vmem:[%s3 + $0x1c0] sm:$0xff]
        %v818 = vld [vmem:[%s3 + $0x1c8] sm:$0xff]
        %v819 = vld [vmem:[%s3 + $0x1d0] sm:$0xff]
        %v820 = vld [vmem:[%s3 + $0x1d8] sm:$0xff]
        %v821 = vld [vmem:[%s3 + $0x1e0] sm:$0xff]
        %v822 = vld [vmem:[%s3 + $0x1e8] sm:$0xff]
        %v823 = vld [vmem:[%s3 + $0x1f0] sm:$0xff]
        %v824 = vld [vmem:[%s3 + $0x1f8] sm:$0xff]
        %v825 = vld [vmem:[%s3 + $0x200] sm:$0xff]
        %v826 = vld [vmem:[%s3 + $0x208] sm:$0xff]
        %v827 = vld [vmem:[%s3 + $0x210] sm:$0xff]
        %v828 = vld [vmem:[%s3 + $0x218] sm:$0xff]
        %v829 = vld [vmem:[%s3 + $0x220] sm:$0xff]
        %v830 = vld [vmem:[%s3 + $0x228] sm:$0xff]
        %v831 = vld [vmem:[%s3 + $0x230] sm:$0xff]
        %v832 = vld [vmem:[%s3 + $0x238] sm:$0xff]
        %v833 = vld [vmem:[%s3 + $0x240] sm:$0xff]
        %v834 = vld [vmem:[%s3 + $0x248] sm:$0xff]
        %v835 = vld [vmem:[%s3 + $0x250] sm:$0xff]
        %v836 = vld [vmem:[%s3 + $0x258] sm:$0xff]
        %v837 = vld [vmem:[%s3 + $0x260] sm:$0xff]
        %v838 = vld [vmem:[%s3 + $0x268] sm:$0xff]
        %v839 = vld [vmem:[%s3 + $0x270] sm:$0xff]
        %v840 = vld [vmem:[%s3 + $0x278] sm:$0xff]
        %v841 = vld [vmem:[%s3 + $0x280] sm:$0xff]
        %v842 = vld [vmem:[%s3 + $0x288] sm:$0xff]
        %v843 = vld [vmem:[%s3 + $0x290] sm:$0xff]
        %v844 = vld [vmem:[%s3 + $0x298] sm:$0xff]
        %v845 = vld [vmem:[%s3 + $0x2a0] sm:$0xff]
        %v846 = vld [vmem:[%s3 + $0x2a8] sm:$0xff]
        %v847 = vld [vmem:[%s3 + $0x2b0] sm:$0xff]
        %v848 = vld [vmem:[%s3 + $0x2b8] sm:$0xff]
        %v849 = vld [vmem:[%s3 + $0x2c0] sm:$0xff]
        %v850 = vld [vmem:[%s3 + $0x2c8] sm:$0xff]
        %v851 = vld [vmem:[%s3 + $0x2d0] sm:$0xff]
        %v852 = vld [vmem:[%s3 + $0x2d8] sm:$0xff]
        %v853 = vld [vmem:[%s3 + $0x2e0] sm:$0xff]
        %v854 = vld [vmem:[%s3 + $0x2e8] sm:$0xff]
        %v855 = vld [vmem:[%s3 + $0x2f0] sm:$0xff]
        %v856 = vld [vmem:[%s3 + $0x2f8] sm:$0xff]
        %v857 = vld [vmem:[%s3 + $0x300] sm:$0xff]
        %v858 = vld [vmem:[%s3 + $0x308] sm:$0xff]
        %v859 = vld [vmem:[%s3 + $0x310] sm:$0xff]
        %v860 = vld [vmem:[%s3 + $0x318] sm:$0xff]
        %v861 = vld [vmem:[%s3 + $0x320] sm:$0xff]
        %v862 = vld [vmem:[%s3 + $0x328] sm:$0xff]
        %v863 = vld [vmem:[%s3 + $0x330] sm:$0xff]
        %v864 = vld [vmem:[%s3 + $0x338] sm:$0xff]
        %v865 = vld [vmem:[%s3 + $0x340] sm:$0xff]
        %v866 = vld [vmem:[%s3 + $0x348] sm:$0xff]
        %v867 = vld [vmem:[%s3 + $0x350] sm:$0xff]
        %v868 = vld [vmem:[%s3 + $0x358] sm:$0xff]
        %v869 = vld [vmem:[%s3 + $0x360] sm:$0xff]
        %v870 = vld [vmem:[%s3 + $0x368] sm:$0xff]
        %v871 = vld [vmem:[%s3 + $0x370] sm:$0xff]
        %v872 = vld [vmem:[%s3 + $0x378] sm:$0xff]
        %v873 = vld [vmem:[%s3 + $0x380] sm:$0xff]
        %v874 = vld [vmem:[%s3 + $0x388] sm:$0xff]
        %v875 = vld [vmem:[%s3 + $0x390] sm:$0xff]
        %v876 = vld [vmem:[%s3 + $0x398] sm:$0xff]
        %v877 = vld [vmem:[%s3 + $0x3a0] sm:$0xff]
        %v878 = vld [vmem:[%s3 + $0x3a8] sm:$0xff]
        %v879 = vld [vmem:[%s3 + $0x3b0] sm:$0xff]
        %v880 = vld [vmem:[%s3 + $0x3b8] sm:$0xff]
        %v881 = vld [vmem:[%s3 + $0x3c0] sm:$0xff]
        %v882 = vld [vmem:[%s3 + $0x3c8] sm:$0xff]
        %v883 = vld [vmem:[%s3 + $0x3d0] sm:$0xff]
        %v884 = vld [vmem:[%s3 + $0x3d8] sm:$0xff]
        %v885 = vld [vmem:[%s3 + $0x3e0] sm:$0xff]
        %v886 = vld [vmem:[%s3 + $0x3e8] sm:$0xff]
        %v887 = vld [vmem:[%s3 + $0x3f0] sm:$0xff]
        %v888 = vld [vmem:[%s3 + $0x3f8] sm:$0xff]
        %v889 = vld [vmem:[%s4] sm:$0xff]
        %v890 = vld [vmem:[%s4 + $0x8] sm:$0xff]
        %v891 = vld [vmem:[%s4 + $0x10] sm:$0xff]
        %v892 = vld [vmem:[%s4 + $0x18] sm:$0xff]
        %v893 = vld [vmem:[%s4 + $0x20] sm:$0xff]
        %v894 = vld [vmem:[%s4 + $0x28] sm:$0xff]
        %v895 = vld [vmem:[%s4 + $0x30] sm:$0xff]
        %v896 = vld [vmem:[%s4 + $0x38] sm:$0xff]
        %v897 = vld [vmem:[%s4 + $0x40] sm:$0xff]
        %v898 = vld [vmem:[%s4 + $0x48] sm:$0xff]
        %v899 = vld [vmem:[%s4 + $0x50] sm:$0xff]
        %v900 = vld [vmem:[%s4 + $0x58] sm:$0xff]
        %v901 = vld [vmem:[%s4 + $0x60] sm:$0xff]
        %v902 = vld [vmem:[%s4 + $0x68] sm:$0xff]
        %v903 = vld [vmem:[%s4 + $0x70] sm:$0xff]
        %v904 = vld [vmem:[%s4 + $0x78] sm:$0xff]
        %v905 = vld [vmem:[%s4 + $0x80] sm:$0xff]
        %v906 = vld [vmem:[%s4 + $0x88] sm:$0xff]
        %v907 = vld [vmem:[%s4 + $0x90] sm:$0xff]
        %v908 = vld [vmem:[%s4 + $0x98] sm:$0xff]
        %v909 = vld [vmem:[%s4 + $0xa0] sm:$0xff]
        %v910 = vld [vmem:[%s4 + $0xa8] sm:$0xff]
        %v911 = vld [vmem:[%s4 + $0xb0] sm:$0xff]
        %v912 = vld [vmem:[%s4 + $0xb8] sm:$0xff]
        %v913 = vld [vmem:[%s4 + $0xc0] sm:$0xff]
        %v914 = vld [vmem:[%s4 + $0xc8] sm:$0xff]
        %v915 = vld [vmem:[%s4 + $0xd0] sm:$0xff]
        %v916 = vld [vmem:[%s4 + $0xd8] sm:$0xff]
        %v917 = vld [vmem:[%s4 + $0xe0] sm:$0xff]
        %v918 = vld [vmem:[%s4 + $0xe8] sm:$0xff]
        %v919 = vld [vmem:[%s4 + $0xf0] sm:$0xff]
        %v920 = vld [vmem:[%s4 + $0xf8] sm:$0xff]
        %v921 = vld [vmem:[%s4 + $0x100] sm:$0xff]
        %v922 = vld [vmem:[%s4 + $0x108] sm:$0xff]
        %v923 = vld [vmem:[%s4 + $0x110] sm:$0xff]
        %v924 = vld [vmem:[%s4 + $0x118] sm:$0xff]
        %v925 = vld [vmem:[%s4 + $0x120] sm:$0xff]
        %v926 = vld [vmem:[%s4 + $0x128] sm:$0xff]
        %v927 = vld [vmem:[%s4 + $0x130] sm:$0xff]
        %v928 = vld [vmem:[%s4 + $0x138] sm:$0xff]
        %v929 = vld [vmem:[%s4 + $0x140] sm:$0xff]
        %v930 = vld [vmem:[%s4 + $0x148] sm:$0xff]
        %v931 = vld [vmem:[%s4 + $0x150] sm:$0xff]
        %v932 = vld [vmem:[%s4 + $0x158] sm:$0xff]
        %v933 = vld [vmem:[%s4 + $0x160] sm:$0xff]
        %v934 = vld [vmem:[%s4 + $0x168] sm:$0xff]
        %v935 = vld [vmem:[%s4 + $0x170] sm:$0xff]
        %v936 = vld [vmem:[%s4 + $0x178] sm:$0xff]
        %v937 = vld [vmem:[%s4 + $0x180] sm:$0xff]
        %v938 = vld [vmem:[%s4 + $0x188] sm:$0xff]
        %v939 = vld [vmem:[%s4 + $0x190] sm:$0xff]
        %v940 = vld [vmem:[%s4 + $0x198] sm:$0xff]
        %v941 = vld [vmem:[%s4 + $0x1a0] sm:$0xff]
        %v942 = vld [vmem:[%s4 + $0x1a8] sm:$0xff]
        %v943 = vld [vmem:[%s4 + $0x1b0] sm:$0xff]
        %v944 = vld [vmem:[%s4 + $0x1b8] sm:$0xff]
        %v945 = vld [vmem:[%s4 + $0x1c0] sm:$0xff]
        %v946 = vld [vmem:[%s4 + $0x1c8] sm:$0xff]
        %v947 = vld [vmem:[%s4 + $0x1d0] sm:$0xff]
        %v948 = vld [vmem:[%s4 + $0x1d8] sm:$0xff]
        %v949 = vld [vmem:[%s4 + $0x1e0] sm:$0xff]
        %v950 = vld [vmem:[%s4 + $0x1e8] sm:$0xff]
        %v951 = vld [vmem:[%s4 + $0x1f0] sm:$0xff]
        %v952 = vld [vmem:[%s4 + $0x1f8] sm:$0xff]
        %v953 = vld [vmem:[%s4 + $0x200] sm:$0xff]
        %v954 = vld [vmem:[%s4 + $0x208] sm:$0xff]
        %v955 = vld [vmem:[%s4 + $0x210] sm:$0xff]
        %v956 = vld [vmem:[%s4 + $0x218] sm:$0xff]
        %v957 = vld [vmem:[%s4 + $0x220] sm:$0xff]
        %v958 = vld [vmem:[%s4 + $0x228] sm:$0xff]
        %v959 = vld [vmem:[%s4 + $0x230] sm:$0xff]
        %v960 = vld [vmem:[%s4 + $0x238] sm:$0xff]
        %v961 = vld [vmem:[%s4 + $0x240] sm:$0xff]
        %v962 = vld [vmem:[%s4 + $0x248] sm:$0xff]
        %v963 = vld [vmem:[%s4 + $0x250] sm:$0xff]
        %v964 = vld [vmem:[%s4 + $0x258] sm:$0xff]
        %v965 = vld [vmem:[%s4 + $0x260] sm:$0xff]
        %v966 = vld [vmem:[%s4 + $0x268] sm:$0xff]
        %v967 = vld [vmem:[%s4 + $0x270] sm:$0xff]
        %v968 = vld [vmem:[%s4 + $0x278] sm:$0xff]
        %v969 = vld [vmem:[%s4 + $0x280] sm:$0xff]
        %v970 = vld [vmem:[%s4 + $0x288] sm:$0xff]
        %v971 = vld [vmem:[%s4 + $0x290] sm:$0xff]
        %v972 = vld [vmem:[%s4 + $0x298] sm:$0xff]
        %v973 = vld [vmem:[%s4 + $0x2a0] sm:$0xff]
        %v974 = vld [vmem:[%s4 + $0x2a8] sm:$0xff]
        %v975 = vld [vmem:[%s4 + $0x2b0] sm:$0xff]
        %v976 = vld [vmem:[%s4 + $0x2b8] sm:$0xff]
        %v977 = vld [vmem:[%s4 + $0x2c0] sm:$0xff]
        %v978 = vld [vmem:[%s4 + $0x2c8] sm:$0xff]
        %v979 = vld [vmem:[%s4 + $0x2d0] sm:$0xff]
        %v980 = vld [vmem:[%s4 + $0x2d8] sm:$0xff]
        %v981 = vld [vmem:[%s4 + $0x2e0] sm:$0xff]
        %v982 = vld [vmem:[%s4 + $0x2e8] sm:$0xff]
        %v983 = vld [vmem:[%s4 + $0x2f0] sm:$0xff]
        %v984 = vld [vmem:[%s4 + $0x2f8] sm:$0xff]
        %v985 = vld [vmem:[%s4 + $0x300] sm:$0xff]
        %v986 = vld [vmem:[%s4 + $0x308] sm:$0xff]
        %v987 = vld [vmem:[%s4 + $0x310] sm:$0xff]
        %v988 = vld [vmem:[%s4 + $0x318] sm:$0xff]
        %v989 = vld [vmem:[%s4 + $0x320] sm:$0xff]
        %v990 = vld [vmem:[%s4 + $0x328] sm:$0xff]
        %v991 = vld [vmem:[%s4 + $0x330] sm:$0xff]
        %v992 = vld [vmem:[%s4 + $0x338] sm:$0xff]
        %v993 = vld [vmem:[%s4 + $0x340] sm:$0xff]
        %v994 = vld [vmem:[%s4 + $0x348] sm:$0xff]
        %v995 = vld [vmem:[%s4 + $0x350] sm:$0xff]
        %v996 = vld [vmem:[%s4 + $0x358] sm:$0xff]
        %v997 = vld [vmem:[%s4 + $0x360] sm:$0xff]
        %v998 = vld [vmem:[%s4 + $0x368] sm:$0xff]
        %v999 = vld [vmem:[%s4 + $0x370] sm:$0xff]
        %v1000 = vld [vmem:[%s4 + $0x378] sm:$0xff]
        %v1001 = vld [vmem:[%s4 + $0x380] sm:$0xff]
        %v1002 = vld [vmem:[%s4 + $0x388] sm:$0xff]
        %v1003 = vld [vmem:[%s4 + $0x390] sm:$0xff]
        %v1004 = vld [vmem:[%s4 + $0x398] sm:$0xff]
        %v1005 = vld [vmem:[%s4 + $0x3a0] sm:$0xff]
        %v1006 = vld [vmem:[%s4 + $0x3a8] sm:$0xff]
        %v1007 = vld [vmem:[%s4 + $0x3b0] sm:$0xff]
        %v1008 = vld [vmem:[%s4 + $0x3b8] sm:$0xff]
        %v1009 = vld [vmem:[%s4 + $0x3c0] sm:$0xff]
        %v1010 = vld [vmem:[%s4 + $0x3c8] sm:$0xff]
        %v1011 = vld [vmem:[%s4 + $0x3d0] sm:$0xff]
        %v1012 = vld [vmem:[%s4 + $0x3d8] sm:$0xff]
        %v1013 = vld [vmem:[%s4 + $0x3e0] sm:$0xff]
        %v1014 = vld [vmem:[%s4 + $0x3e8] sm:$0xff]
        %v1015 = vld [vmem:[%s4 + $0x3f0] sm:$0xff]
        %v1016 = vld [vmem:[%s4 + $0x3f8] sm:$0xff]
        %v1145 = vunpack.c.l.b16 %v889
        %v1146 = vunpack.c.h.b16 %v889
        %v1147 = vunpack.c.l.b16 %v890
        %v1148 = vunpack.c.h.b16 %v890
        %v1149 = vunpack.c.l.b16 %v891
        %v1150 = vunpack.c.h.b16 %v891
        %v1151 = vunpack.c.l.b16 %v892
        %v1152 = vunpack.c.h.b16 %v892
        %v1153 = vunpack.c.l.b16 %v893
        %v1154 = vunpack.c.h.b16 %v893
        %v1155 = vunpack.c.l.b16 %v894
        %v1156 = vunpack.c.h.b16 %v894
        %v1157 = vunpack.c.l.b16 %v895
        %v1158 = vunpack.c.h.b16 %v895
        %v1159 = vunpack.c.l.b16 %v896
        %v1160 = vunpack.c.h.b16 %v896
        %v1161 = vunpack.c.l.b16 %v897
        %v1162 = vunpack.c.h.b16 %v897
        %v1163 = vunpack.c.l.b16 %v898
        %v1164 = vunpack.c.h.b16 %v898
        %v1165 = vunpack.c.l.b16 %v899
        %v1166 = vunpack.c.h.b16 %v899
        %v1167 = vunpack.c.l.b16 %v900
        %v1168 = vunpack.c.h.b16 %v900
        %v1169 = vunpack.c.l.b16 %v901
        %v1170 = vunpack.c.h.b16 %v901
        %v1171 = vunpack.c.l.b16 %v902
        %v1172 = vunpack.c.h.b16 %v902
        %v1173 = vunpack.c.l.b16 %v903
        %v1174 = vunpack.c.h.b16 %v903
        %v1175 = vunpack.c.l.b16 %v904
        %v1176 = vunpack.c.h.b16 %v904
        %v1177 = vunpack.c.l.b16 %v905
        %v1178 = vunpack.c.h.b16 %v905
        %v1179 = vunpack.c.l.b16 %v906
        %v1180 = vunpack.c.h.b16 %v906
        %v1181 = vunpack.c.l.b16 %v907
        %v1182 = vunpack.c.h.b16 %v907
        %v1183 = vunpack.c.l.b16 %v908
        %v1184 = vunpack.c.h.b16 %v908
        %v1185 = vunpack.c.l.b16 %v909
        %v1186 = vunpack.c.h.b16 %v909
        %v1187 = vunpack.c.l.b16 %v910
        %v1188 = vunpack.c.h.b16 %v910
        %v1189 = vunpack.c.l.b16 %v911
        %v1190 = vunpack.c.h.b16 %v911
        %v1191 = vunpack.c.l.b16 %v912
        %v1192 = vunpack.c.h.b16 %v912
        %v1193 = vunpack.c.l.b16 %v913
        %v1194 = vunpack.c.h.b16 %v913
        %v1195 = vunpack.c.l.b16 %v914
        %v1196 = vunpack.c.h.b16 %v914
        %v1197 = vunpack.c.l.b16 %v915
        %v1198 = vunpack.c.h.b16 %v915
        %v1199 = vunpack.c.l.b16 %v916
        %v1200 = vunpack.c.h.b16 %v916
        %v1201 = vunpack.c.l.b16 %v917
        %v1202 = vunpack.c.h.b16 %v917
        %v1203 = vunpack.c.l.b16 %v918
        %v1204 = vunpack.c.h.b16 %v918
        %v1205 = vunpack.c.l.b16 %v919
        %v1206 = vunpack.c.h.b16 %v919
        %v1207 = vunpack.c.l.b16 %v920
        %v1208 = vunpack.c.h.b16 %v920
        %v1209 = vunpack.c.l.b16 %v921
        %v1210 = vunpack.c.h.b16 %v921
        %v1211 = vunpack.c.l.b16 %v922
        %v1212 = vunpack.c.h.b16 %v922
        %v1213 = vunpack.c.l.b16 %v923
        %v1214 = vunpack.c.h.b16 %v923
        %v1215 = vunpack.c.l.b16 %v924
        %v1216 = vunpack.c.h.b16 %v924
        %v1217 = vunpack.c.l.b16 %v925
        %v1218 = vunpack.c.h.b16 %v925
        %v1219 = vunpack.c.l.b16 %v926
        %v1220 = vunpack.c.h.b16 %v926
        %v1221 = vunpack.c.l.b16 %v927
        %v1222 = vunpack.c.h.b16 %v927
        %v1223 = vunpack.c.l.b16 %v928
        %v1224 = vunpack.c.h.b16 %v928
        %v1225 = vunpack.c.l.b16 %v929
        %v1226 = vunpack.c.h.b16 %v929
        %v1227 = vunpack.c.l.b16 %v930
        %v1228 = vunpack.c.h.b16 %v930
        %v1229 = vunpack.c.l.b16 %v931
        %v1230 = vunpack.c.h.b16 %v931
        %v1231 = vunpack.c.l.b16 %v932
        %v1232 = vunpack.c.h.b16 %v932
        %v1233 = vunpack.c.l.b16 %v933
        %v1234 = vunpack.c.h.b16 %v933
        %v1235 = vunpack.c.l.b16 %v934
        %v1236 = vunpack.c.h.b16 %v934
        %v1237 = vunpack.c.l.b16 %v935
        %v1238 = vunpack.c.h.b16 %v935
        %v1239 = vunpack.c.l.b16 %v936
        %v1240 = vunpack.c.h.b16 %v936
        %v1241 = vunpack.c.l.b16 %v937
        %v1242 = vunpack.c.h.b16 %v937
        %v1243 = vunpack.c.l.b16 %v938
        %v1244 = vunpack.c.h.b16 %v938
        %v1245 = vunpack.c.l.b16 %v939
        %v1246 = vunpack.c.h.b16 %v939
        %v1247 = vunpack.c.l.b16 %v940
        %v1248 = vunpack.c.h.b16 %v940
        %v1249 = vunpack.c.l.b16 %v941
        %v1250 = vunpack.c.h.b16 %v941
        %v1251 = vunpack.c.l.b16 %v942
        %v1252 = vunpack.c.h.b16 %v942
        %v1253 = vunpack.c.l.b16 %v943
        %v1254 = vunpack.c.h.b16 %v943
        %v1255 = vunpack.c.l.b16 %v944
        %v1256 = vunpack.c.h.b16 %v944
        %v1257 = vunpack.c.l.b16 %v945
        %v1258 = vunpack.c.h.b16 %v945
        %v1259 = vunpack.c.l.b16 %v946
        %v1260 = vunpack.c.h.b16 %v946
        %v1261 = vunpack.c.l.b16 %v947
        %v1262 = vunpack.c.h.b16 %v947
        %v1263 = vunpack.c.l.b16 %v948
        %v1264 = vunpack.c.h.b16 %v948
        %v1265 = vunpack.c.l.b16 %v949
        %v1266 = vunpack.c.h.b16 %v949
        %v1267 = vunpack.c.l.b16 %v950
        %v1268 = vunpack.c.h.b16 %v950
        %v1269 = vunpack.c.l.b16 %v951
        %v1270 = vunpack.c.h.b16 %v951
        %v1271 = vunpack.c.l.b16 %v952
        %v1272 = vunpack.c.h.b16 %v952
        %v1273 = vunpack.c.l.b16 %v953
        %v1274 = vunpack.c.h.b16 %v953
        %v1275 = vunpack.c.l.b16 %v954
        %v1276 = vunpack.c.h.b16 %v954
        %v1277 = vunpack.c.l.b16 %v955
        %v1278 = vunpack.c.h.b16 %v955
        %v1279 = vunpack.c.l.b16 %v956
        %v1280 = vunpack.c.h.b16 %v956
        %v1281 = vunpack.c.l.b16 %v957
        %v1282 = vunpack.c.h.b16 %v957
        %v1283 = vunpack.c.l.b16 %v958
        %v1284 = vunpack.c.h.b16 %v958
        %v1285 = vunpack.c.l.b16 %v959
        %v1286 = vunpack.c.h.b16 %v959
        %v1287 = vunpack.c.l.b16 %v960
        %v1288 = vunpack.c.h.b16 %v960
        %v1289 = vunpack.c.l.b16 %v961
        %v1290 = vunpack.c.h.b16 %v961
        %v1291 = vunpack.c.l.b16 %v962
        %v1292 = vunpack.c.h.b16 %v962
        %v1293 = vunpack.c.l.b16 %v963
        %v1294 = vunpack.c.h.b16 %v963
        %v1295 = vunpack.c.l.b16 %v964
        %v1296 = vunpack.c.h.b16 %v964
        %v1297 = vunpack.c.l.b16 %v965
        %v1298 = vunpack.c.h.b16 %v965
        %v1299 = vunpack.c.l.b16 %v966
        %v1300 = vunpack.c.h.b16 %v966
        %v1301 = vunpack.c.l.b16 %v967
        %v1302 = vunpack.c.h.b16 %v967
        %v1303 = vunpack.c.l.b16 %v968
        %v1304 = vunpack.c.h.b16 %v968
        %v1305 = vunpack.c.l.b16 %v969
        %v1306 = vunpack.c.h.b16 %v969
        %v1307 = vunpack.c.l.b16 %v970
        %v1308 = vunpack.c.h.b16 %v970
        %v1309 = vunpack.c.l.b16 %v971
        %v1310 = vunpack.c.h.b16 %v971
        %v1311 = vunpack.c.l.b16 %v972
        %v1312 = vunpack.c.h.b16 %v972
        %v1313 = vunpack.c.l.b16 %v973
        %v1314 = vunpack.c.h.b16 %v973
        %v1315 = vunpack.c.l.b16 %v974
        %v1316 = vunpack.c.h.b16 %v974
        %v1317 = vunpack.c.l.b16 %v975
        %v1318 = vunpack.c.h.b16 %v975
        %v1319 = vunpack.c.l.b16 %v976
        %v1320 = vunpack.c.h.b16 %v976
        %v1321 = vunpack.c.l.b16 %v977
        %v1322 = vunpack.c.h.b16 %v977
        %v1323 = vunpack.c.l.b16 %v978
        %v1324 = vunpack.c.h.b16 %v978
        %v1325 = vunpack.c.l.b16 %v979
        %v1326 = vunpack.c.h.b16 %v979
        %v1327 = vunpack.c.l.b16 %v980
        %v1328 = vunpack.c.h.b16 %v980
        %v1329 = vunpack.c.l.b16 %v981
        %v1330 = vunpack.c.h.b16 %v981
        %v1331 = vunpack.c.l.b16 %v982
        %v1332 = vunpack.c.h.b16 %v982
        %v1333 = vunpack.c.l.b16 %v983
        %v1334 = vunpack.c.h.b16 %v983
        %v1335 = vunpack.c.l.b16 %v984
        %v1336 = vunpack.c.h.b16 %v984
        %v1337 = vunpack.c.l.b16 %v985
        %v1338 = vunpack.c.h.b16 %v985
        %v1339 = vunpack.c.l.b16 %v986
        %v1340 = vunpack.c.h.b16 %v986
        %v1341 = vunpack.c.l.b16 %v987
        %v1342 = vunpack.c.h.b16 %v987
        %v1343 = vunpack.c.l.b16 %v988
        %v1344 = vunpack.c.h.b16 %v988
        %v1345 = vunpack.c.l.b16 %v989
        %v1346 = vunpack.c.h.b16 %v989
        %v1347 = vunpack.c.l.b16 %v990
        %v1348 = vunpack.c.h.b16 %v990
        %v1349 = vunpack.c.l.b16 %v991
        %v1350 = vunpack.c.h.b16 %v991
        %v1351 = vunpack.c.l.b16 %v992
        %v1352 = vunpack.c.h.b16 %v992
        %v1353 = vunpack.c.l.b16 %v993
        %v1354 = vunpack.c.h.b16 %v993
        %v1355 = vunpack.c.l.b16 %v994
        %v1356 = vunpack.c.h.b16 %v994
        %v1357 = vunpack.c.l.b16 %v995
        %v1358 = vunpack.c.h.b16 %v995
        %v1359 = vunpack.c.l.b16 %v996
        %v1360 = vunpack.c.h.b16 %v996
        %v1361 = vunpack.c.l.b16 %v997
        %v1362 = vunpack.c.h.b16 %v997
        %v1363 = vunpack.c.l.b16 %v998
        %v1364 = vunpack.c.h.b16 %v998
        %v1365 = vunpack.c.l.b16 %v999
        %v1366 = vunpack.c.h.b16 %v999
        %v1367 = vunpack.c.l.b16 %v1000
        %v1368 = vunpack.c.h.b16 %v1000
        %v1369 = vunpack.c.l.b16 %v1001
        %v1370 = vunpack.c.h.b16 %v1001
        %v1371 = vunpack.c.l.b16 %v1002
        %v1372 = vunpack.c.h.b16 %v1002
        %v1373 = vunpack.c.l.b16 %v1003
        %v1374 = vunpack.c.h.b16 %v1003
        %v1375 = vunpack.c.l.b16 %v1004
        %v1376 = vunpack.c.h.b16 %v1004
        %v1377 = vunpack.c.l.b16 %v1005
        %v1378 = vunpack.c.h.b16 %v1005
        %v1379 = vunpack.c.l.b16 %v1006
        %v1380 = vunpack.c.h.b16 %v1006
        %v1381 = vunpack.c.l.b16 %v1007
        %v1382 = vunpack.c.h.b16 %v1007
        %v1383 = vunpack.c.l.b16 %v1008
        %v1384 = vunpack.c.h.b16 %v1008
        %v1385 = vunpack.c.l.b16 %v1009
        %v1386 = vunpack.c.h.b16 %v1009
        %v1387 = vunpack.c.l.b16 %v1010
        %v1388 = vunpack.c.h.b16 %v1010
        %v1389 = vunpack.c.l.b16 %v1011
        %v1390 = vunpack.c.h.b16 %v1011
        %v1391 = vunpack.c.l.b16 %v1012
        %v1392 = vunpack.c.h.b16 %v1012
        %v1393 = vunpack.c.l.b16 %v1013
        %v1394 = vunpack.c.h.b16 %v1013
        %v1395 = vunpack.c.l.b16 %v1014
        %v1396 = vunpack.c.h.b16 %v1014
        %v1397 = vunpack.c.l.b16 %v1015
        %v1398 = vunpack.c.h.b16 %v1015
        %v1399 = vunpack.c.l.b16 %v1016
        %v1400 = vunpack.c.h.b16 %v1016
        %v1401 = vpack.c.b16 %v1149, %v1145
        %v1402 = vpack.c.b16 %v1150, %v1146
        %v1403 = vpack.c.b16 %v1151, %v1147
        %v1404 = vpack.c.b16 %v1152, %v1148
        %v1405 = vpack.c.b16 %v1157, %v1153
        %v1406 = vpack.c.b16 %v1158, %v1154
        %v1407 = vpack.c.b16 %v1159, %v1155
        %v1408 = vpack.c.b16 %v1160, %v1156
        %v1409 = vpack.c.b16 %v1165, %v1161
        %v1410 = vpack.c.b16 %v1166, %v1162
        %v1411 = vpack.c.b16 %v1167, %v1163
        %v1412 = vpack.c.b16 %v1168, %v1164
        %v1413 = vpack.c.b16 %v1173, %v1169
        %v1414 = vpack.c.b16 %v1174, %v1170
        %v1415 = vpack.c.b16 %v1175, %v1171
        %v1416 = vpack.c.b16 %v1176, %v1172
        %v1417 = vpack.c.b16 %v1181, %v1177
        %v1418 = vpack.c.b16 %v1182, %v1178
        %v1419 = vpack.c.b16 %v1183, %v1179
        %v1420 = vpack.c.b16 %v1184, %v1180
        %v1421 = vpack.c.b16 %v1189, %v1185
        %v1422 = vpack.c.b16 %v1190, %v1186
        %v1423 = vpack.c.b16 %v1191, %v1187
        %v1424 = vpack.c.b16 %v1192, %v1188
        %v1425 = vpack.c.b16 %v1197, %v1193
        %v1426 = vpack.c.b16 %v1198, %v1194
        %v1427 = vpack.c.b16 %v1199, %v1195
        %v1428 = vpack.c.b16 %v1200, %v1196
        %v1429 = vpack.c.b16 %v1205, %v1201
        %v1430 = vpack.c.b16 %v1206, %v1202
        %v1431 = vpack.c.b16 %v1207, %v1203
        %v1432 = vpack.c.b16 %v1208, %v1204
        %v1433 = vpack.c.b16 %v1213, %v1209
        %v1434 = vpack.c.b16 %v1214, %v1210
        %v1435 = vpack.c.b16 %v1215, %v1211
        %v1436 = vpack.c.b16 %v1216, %v1212
        %v1437 = vpack.c.b16 %v1221, %v1217
        %v1438 = vpack.c.b16 %v1222, %v1218
        %v1439 = vpack.c.b16 %v1223, %v1219
        %v1440 = vpack.c.b16 %v1224, %v1220
        %v1441 = vpack.c.b16 %v1229, %v1225
        %v1442 = vpack.c.b16 %v1230, %v1226
        %v1443 = vpack.c.b16 %v1231, %v1227
        %v1444 = vpack.c.b16 %v1232, %v1228
        %v1445 = vpack.c.b16 %v1237, %v1233
        %v1446 = vpack.c.b16 %v1238, %v1234
        %v1447 = vpack.c.b16 %v1239, %v1235
        %v1448 = vpack.c.b16 %v1240, %v1236
        %v1449 = vpack.c.b16 %v1245, %v1241
        %v1450 = vpack.c.b16 %v1246, %v1242
        %v1451 = vpack.c.b16 %v1247, %v1243
        %v1452 = vpack.c.b16 %v1248, %v1244
        %v1453 = vpack.c.b16 %v1253, %v1249
        %v1454 = vpack.c.b16 %v1254, %v1250
        %v1455 = vpack.c.b16 %v1255, %v1251
        %v1456 = vpack.c.b16 %v1256, %v1252
        %v1457 = vpack.c.b16 %v1261, %v1257
        %v1458 = vpack.c.b16 %v1262, %v1258
        %v1459 = vpack.c.b16 %v1263, %v1259
        %v1460 = vpack.c.b16 %v1264, %v1260
        %v1461 = vpack.c.b16 %v1269, %v1265
        %v1462 = vpack.c.b16 %v1270, %v1266
        %v1463 = vpack.c.b16 %v1271, %v1267
        %v1464 = vpack.c.b16 %v1272, %v1268
        %v1465 = vpack.c.b16 %v1277, %v1273
        %v1466 = vpack.c.b16 %v1278, %v1274
        %v1467 = vpack.c.b16 %v1279, %v1275
        %v1468 = vpack.c.b16 %v1280, %v1276
        %v1469 = vpack.c.b16 %v1285, %v1281
        %v1470 = vpack.c.b16 %v1286, %v1282
        %v1471 = vpack.c.b16 %v1287, %v1283
        %v1472 = vpack.c.b16 %v1288, %v1284
        %v1473 = vpack.c.b16 %v1293, %v1289
        %v1474 = vpack.c.b16 %v1294, %v1290
        %v1475 = vpack.c.b16 %v1295, %v1291
        %v1476 = vpack.c.b16 %v1296, %v1292
        %v1477 = vpack.c.b16 %v1301, %v1297
        %v1478 = vpack.c.b16 %v1302, %v1298
        %v1479 = vpack.c.b16 %v1303, %v1299
        %v1480 = vpack.c.b16 %v1304, %v1300
        %v1481 = vpack.c.b16 %v1309, %v1305
        %v1482 = vpack.c.b16 %v1310, %v1306
        %v1483 = vpack.c.b16 %v1311, %v1307
        %v1484 = vpack.c.b16 %v1312, %v1308
        %v1485 = vpack.c.b16 %v1317, %v1313
        %v1486 = vpack.c.b16 %v1318, %v1314
        %v1487 = vpack.c.b16 %v1319, %v1315
        %v1488 = vpack.c.b16 %v1320, %v1316
        %v1489 = vpack.c.b16 %v1325, %v1321
        %v1490 = vpack.c.b16 %v1326, %v1322
        %v1491 = vpack.c.b16 %v1327, %v1323
        %v1492 = vpack.c.b16 %v1328, %v1324
        %v1493 = vpack.c.b16 %v1333, %v1329
        %v1494 = vpack.c.b16 %v1334, %v1330
        %v1495 = vpack.c.b16 %v1335, %v1331
        %v1496 = vpack.c.b16 %v1336, %v1332
        %v1497 = vpack.c.b16 %v1341, %v1337
        %v1498 = vpack.c.b16 %v1342, %v1338
        %v1499 = vpack.c.b16 %v1343, %v1339
        %v1500 = vpack.c.b16 %v1344, %v1340
        %v1501 = vpack.c.b16 %v1349, %v1345
        %v1502 = vpack.c.b16 %v1350, %v1346
        %v1503 = vpack.c.b16 %v1351, %v1347
        %v1504 = vpack.c.b16 %v1352, %v1348
        %v1505 = vpack.c.b16 %v1357, %v1353
        %v1506 = vpack.c.b16 %v1358, %v1354
        %v1507 = vpack.c.b16 %v1359, %v1355
        %v1508 = vpack.c.b16 %v1360, %v1356
        %v1509 = vpack.c.b16 %v1365, %v1361
        %v1510 = vpack.c.b16 %v1366, %v1362
        %v1511 = vpack.c.b16 %v1367, %v1363
        %v1512 = vpack.c.b16 %v1368, %v1364
        %v1513 = vpack.c.b16 %v1373, %v1369
        %v1514 = vpack.c.b16 %v1374, %v1370
        %v1515 = vpack.c.b16 %v1375, %v1371
        %v1516 = vpack.c.b16 %v1376, %v1372
        %v1517 = vpack.c.b16 %v1381, %v1377
        %v1518 = vpack.c.b16 %v1382, %v1378
        %v1519 = vpack.c.b16 %v1383, %v1379
        %v1520 = vpack.c.b16 %v1384, %v1380
        %v1521 = vpack.c.b16 %v1389, %v1385
        %v1522 = vpack.c.b16 %v1390, %v1386
        %v1523 = vpack.c.b16 %v1391, %v1387
        %v1524 = vpack.c.b16 %v1392, %v1388
        %v1525 = vpack.c.b16 %v1397, %v1393
        %v1526 = vpack.c.b16 %v1398, %v1394
        %v1527 = vpack.c.b16 %v1399, %v1395
        %v1528 = vpack.c.b16 %v1400, %v1396
        %1657 = vmatpush.bf16.msra.mxu0 %v640
        %1658 = vmatpush.bf16.msra.mxu0 %v639
        %1659 = vmatpush.bf16.msra.mxu0 %v638
        %1660 = vmatpush.bf16.msra.mxu0 %v637
        %1661 = vmatpush.bf16.msra.mxu0 %v636
        %1662 = vmatpush.bf16.msra.mxu0 %v635
        %1663 = vmatpush.bf16.msra.mxu0 %v634
        %1664 = vmatpush.bf16.msra.mxu0 %v633
        %1665 = vmatmul.bf16.gmra.mxu0 %v1401
        %v1666 = vpop.f32.mrf.mxu0
        %v1667 = vadd.f32 0.0, %v1666
        %v1668 = vpop.f32.mrf.mxu0
        %v1669 = vadd.f32 0.0, %v1668
        %1670 = vmatmul.bf16.gmra.mxu0 %v1405
        %v1671 = vpop.f32.mrf.mxu0
        %v1672 = vadd.f32 0.0, %v1671
        %v1673 = vpop.f32.mrf.mxu0
        %v1674 = vadd.f32 0.0, %v1673
        %1675 = vmatmul.bf16.gmra.mxu0 %v1409
        %v1676 = vpop.f32.mrf.mxu0
        %v1677 = vadd.f32 0.0, %v1676
        %v1678 = vpop.f32.mrf.mxu0
        %v1679 = vadd.f32 0.0, %v1678
        %1680 = vmatmul.bf16.gmra.mxu0 %v1413
        %v1681 = vpop.f32.mrf.mxu0
        %v1682 = vadd.f32 0.0, %v1681
        %v1683 = vpop.f32.mrf.mxu0
        %v1684 = vadd.f32 0.0, %v1683
        %1685 = vmatmul.bf16.gmra.mxu0 %v1417
        %v1686 = vpop.f32.mrf.mxu0
        %v1687 = vadd.f32 0.0, %v1686
        %v1688 = vpop.f32.mrf.mxu0
        %v1689 = vadd.f32 0.0, %v1688
        %1690 = vmatmul.bf16.gmra.mxu0 %v1421
        %v1691 = vpop.f32.mrf.mxu0
        %v1692 = vadd.f32 0.0, %v1691
        %v1693 = vpop.f32.mrf.mxu0
        %v1694 = vadd.f32 0.0, %v1693
        %1695 = vmatmul.bf16.gmra.mxu0 %v1425
        %v1696 = vpop.f32.mrf.mxu0
        %v1697 = vadd.f32 0.0, %v1696
        %v1698 = vpop.f32.mrf.mxu0
        %v1699 = vadd.f32 0.0, %v1698
        %1700 = vmatmul.bf16.gmra.mxu0 %v1429
        %v1701 = vpop.f32.mrf.mxu0
        %v1702 = vadd.f32 0.0, %v1701
        %v1703 = vpop.f32.mrf.mxu0
        %v1704 = vadd.f32 0.0, %v1703
        %1705 = vmatmul.bf16.gmra.mxu0 %v1433
        %v1706 = vpop.f32.mrf.mxu0
        %v1707 = vadd.f32 0.0, %v1706
        %v1708 = vpop.f32.mrf.mxu0
        %v1709 = vadd.f32 0.0, %v1708
        %1710 = vmatmul.bf16.gmra.mxu0 %v1437
        %v1711 = vpop.f32.mrf.mxu0
        %v1712 = vadd.f32 0.0, %v1711
        %v1713 = vpop.f32.mrf.mxu0
        %v1714 = vadd.f32 0.0, %v1713
        %1715 = vmatmul.bf16.gmra.mxu0 %v1441
        %v1716 = vpop.f32.mrf.mxu0
        %v1717 = vadd.f32 0.0, %v1716
        %v1718 = vpop.f32.mrf.mxu0
        %v1719 = vadd.f32 0.0, %v1718
        %1720 = vmatmul.bf16.gmra.mxu0 %v1445
        %v1721 = vpop.f32.mrf.mxu0
        %v1722 = vadd.f32 0.0, %v1721
        %v1723 = vpop.f32.mrf.mxu0
        %v1724 = vadd.f32 0.0, %v1723
        %1725 = vmatmul.bf16.gmra.mxu0 %v1449
        %v1726 = vpop.f32.mrf.mxu0
        %v1727 = vadd.f32 0.0, %v1726
        %v1728 = vpop.f32.mrf.mxu0
        %v1729 = vadd.f32 0.0, %v1728
        %1730 = vmatmul.bf16.gmra.mxu0 %v1453
        %v1731 = vpop.f32.mrf.mxu0
        %v1732 = vadd.f32 0.0, %v1731
        %v1733 = vpop.f32.mrf.mxu0
        %v1734 = vadd.f32 0.0, %v1733
        %1735 = vmatmul.bf16.gmra.mxu0 %v1457
        %v1736 = vpop.f32.mrf.mxu0
        %v1737 = vadd.f32 0.0, %v1736
        %v1738 = vpop.f32.mrf.mxu0
        %v1739 = vadd.f32 0.0, %v1738
        %1740 = vmatmul.bf16.gmra.mxu0 %v1461
        %v1741 = vpop.f32.mrf.mxu0
        %v1742 = vadd.f32 0.0, %v1741
        %v1743 = vpop.f32.mrf.mxu0
        %v1744 = vadd.f32 0.0, %v1743
        %1745 = vmatmul.bf16.gmra.mxu0 %v1465
        %v1746 = vpop.f32.mrf.mxu0
        %v1747 = vadd.f32 0.0, %v1746
        %v1748 = vpop.f32.mrf.mxu0
        %v1749 = vadd.f32 0.0, %v1748
        %1750 = vmatmul.bf16.gmra.mxu0 %v1469
        %v1751 = vpop.f32.mrf.mxu0
        %v1752 = vadd.f32 0.0, %v1751
        %v1753 = vpop.f32.mrf.mxu0
        %v1754 = vadd.f32 0.0, %v1753
        %1755 = vmatmul.bf16.gmra.mxu0 %v1473
        %v1756 = vpop.f32.mrf.mxu0
        %v1757 = vadd.f32 0.0, %v1756
        %v1758 = vpop.f32.mrf.mxu0
        %v1759 = vadd.f32 0.0, %v1758
        %1760 = vmatmul.bf16.gmra.mxu0 %v1477
        %v1761 = vpop.f32.mrf.mxu0
        %v1762 = vadd.f32 0.0, %v1761
        %v1763 = vpop.f32.mrf.mxu0
        %v1764 = vadd.f32 0.0, %v1763
        %1765 = vmatmul.bf16.gmra.mxu0 %v1481
        %v1766 = vpop.f32.mrf.mxu0
        %v1767 = vadd.f32 0.0, %v1766
        %v1768 = vpop.f32.mrf.mxu0
        %v1769 = vadd.f32 0.0, %v1768
        %1770 = vmatmul.bf16.gmra.mxu0 %v1485
        %v1771 = vpop.f32.mrf.mxu0
        %v1772 = vadd.f32 0.0, %v1771
        %v1773 = vpop.f32.mrf.mxu0
        %v1774 = vadd.f32 0.0, %v1773
        %1775 = vmatmul.bf16.gmra.mxu0 %v1489
        %v1776 = vpop.f32.mrf.mxu0
        %v1777 = vadd.f32 0.0, %v1776
        %v1778 = vpop.f32.mrf.mxu0
        %v1779 = vadd.f32 0.0, %v1778
        %1780 = vmatmul.bf16.gmra.mxu0 %v1493
        %v1781 = vpop.f32.mrf.mxu0
        %v1782 = vadd.f32 0.0, %v1781
        %v1783 = vpop.f32.mrf.mxu0
        %v1784 = vadd.f32 0.0, %v1783
        %1785 = vmatmul.bf16.gmra.mxu0 %v1497
        %v1786 = vpop.f32.mrf.mxu0
        %v1787 = vadd.f32 0.0, %v1786
        %v1788 = vpop.f32.mrf.mxu0
        %v1789 = vadd.f32 0.0, %v1788
        %1790 = vmatmul.bf16.gmra.mxu0 %v1501
        %v1791 = vpop.f32.mrf.mxu0
        %v1792 = vadd.f32 0.0, %v1791
        %v1793 = vpop.f32.mrf.mxu0
        %v1794 = vadd.f32 0.0, %v1793
        %1795 = vmatmul.bf16.gmra.mxu0 %v1505
        %v1796 = vpop.f32.mrf.mxu0
        %v1797 = vadd.f32 0.0, %v1796
        %v1798 = vpop.f32.mrf.mxu0
        %v1799 = vadd.f32 0.0, %v1798
        %1800 = vmatmul.bf16.gmra.mxu0 %v1509
        %v1801 = vpop.f32.mrf.mxu0
        %v1802 = vadd.f32 0.0, %v1801
        %v1803 = vpop.f32.mrf.mxu0
        %v1804 = vadd.f32 0.0, %v1803
        %1805 = vmatmul.bf16.gmra.mxu0 %v1513
        %v1806 = vpop.f32.mrf.mxu0
        %v1807 = vadd.f32 0.0, %v1806
        %v1808 = vpop.f32.mrf.mxu0
        %v1809 = vadd.f32 0.0, %v1808
        %1810 = vmatmul.bf16.gmra.mxu0 %v1517
        %v1811 = vpop.f32.mrf.mxu0
        %v1812 = vadd.f32 0.0, %v1811
        %v1813 = vpop.f32.mrf.mxu0
        %v1814 = vadd.f32 0.0, %v1813
        %1815 = vmatmul.bf16.gmra.mxu0 %v1521
        %v1816 = vpop.f32.mrf.mxu0
        %v1817 = vadd.f32 0.0, %v1816
        %v1818 = vpop.f32.mrf.mxu0
        %v1819 = vadd.f32 0.0, %v1818
        %1820 = vmatmul.bf16.gmra.mxu0 %v1525
        %v1821 = vpop.f32.mrf.mxu0
        %v1822 = vadd.f32 0.0, %v1821
        %v1823 = vpop.f32.mrf.mxu0
        %v1824 = vadd.f32 0.0, %v1823
        %1825 = vdwg.mxu0
        %1826 = vmatpush.bf16.msra.mxu0 %v648
        %1827 = vmatpush.bf16.msra.mxu0 %v647
        %1828 = vmatpush.bf16.msra.mxu0 %v646
        %1829 = vmatpush.bf16.msra.mxu0 %v645
        %1830 = vmatpush.bf16.msra.mxu0 %v644
        %1831 = vmatpush.bf16.msra.mxu0 %v643
        %1832 = vmatpush.bf16.msra.mxu0 %v642
        %1833 = vmatpush.bf16.msra.mxu0 %v641
        %1834 = vmatmul.bf16.gmra.mxu0 %v1402
        %v1835 = vpop.f32.mrf.mxu0
        %v1836 = vadd.f32 %v1667, %v1835
        %v1837 = vpop.f32.mrf.mxu0
        %v1838 = vadd.f32 %v1669, %v1837
        %1839 = vmatmul.bf16.gmra.mxu0 %v1406
        %v1840 = vpop.f32.mrf.mxu0
        %v1841 = vadd.f32 %v1672, %v1840
        %v1842 = vpop.f32.mrf.mxu0
        %v1843 = vadd.f32 %v1674, %v1842
        %1844 = vmatmul.bf16.gmra.mxu0 %v1410
        %v1845 = vpop.f32.mrf.mxu0
        %v1846 = vadd.f32 %v1677, %v1845
        %v1847 = vpop.f32.mrf.mxu0
        %v1848 = vadd.f32 %v1679, %v1847
        %1849 = vmatmul.bf16.gmra.mxu0 %v1414
        %v1850 = vpop.f32.mrf.mxu0
        %v1851 = vadd.f32 %v1682, %v1850
        %v1852 = vpop.f32.mrf.mxu0
        %v1853 = vadd.f32 %v1684, %v1852
        %1854 = vmatmul.bf16.gmra.mxu0 %v1418
        %v1855 = vpop.f32.mrf.mxu0
        %v1856 = vadd.f32 %v1687, %v1855
        %v1857 = vpop.f32.mrf.mxu0
        %v1858 = vadd.f32 %v1689, %v1857
        %1859 = vmatmul.bf16.gmra.mxu0 %v1422
        %v1860 = vpop.f32.mrf.mxu0
        %v1861 = vadd.f32 %v1692, %v1860
        %v1862 = vpop.f32.mrf.mxu0
        %v1863 = vadd.f32 %v1694, %v1862
        %1864 = vmatmul.bf16.gmra.mxu0 %v1426
        %v1865 = vpop.f32.mrf.mxu0
        %v1866 = vadd.f32 %v1697, %v1865
        %v1867 = vpop.f32.mrf.mxu0
        %v1868 = vadd.f32 %v1699, %v1867
        %1869 = vmatmul.bf16.gmra.mxu0 %v1430
        %v1870 = vpop.f32.mrf.mxu0
        %v1871 = vadd.f32 %v1702, %v1870
        %v1872 = vpop.f32.mrf.mxu0
        %v1873 = vadd.f32 %v1704, %v1872
        %1874 = vmatmul.bf16.gmra.mxu0 %v1434
        %v1875 = vpop.f32.mrf.mxu0
        %v1876 = vadd.f32 %v1707, %v1875
        %v1877 = vpop.f32.mrf.mxu0
        %v1878 = vadd.f32 %v1709, %v1877
        %1879 = vmatmul.bf16.gmra.mxu0 %v1438
        %v1880 = vpop.f32.mrf.mxu0
        %v1881 = vadd.f32 %v1712, %v1880
        %v1882 = vpop.f32.mrf.mxu0
        %v1883 = vadd.f32 %v1714, %v1882
        %1884 = vmatmul.bf16.gmra.mxu0 %v1442
        %v1885 = vpop.f32.mrf.mxu0
        %v1886 = vadd.f32 %v1717, %v1885
        %v1887 = vpop.f32.mrf.mxu0
        %v1888 = vadd.f32 %v1719, %v1887
        %1889 = vmatmul.bf16.gmra.mxu0 %v1446
        %v1890 = vpop.f32.mrf.mxu0
        %v1891 = vadd.f32 %v1722, %v1890
        %v1892 = vpop.f32.mrf.mxu0
        %v1893 = vadd.f32 %v1724, %v1892
        %1894 = vmatmul.bf16.gmra.mxu0 %v1450
        %v1895 = vpop.f32.mrf.mxu0
        %v1896 = vadd.f32 %v1727, %v1895
        %v1897 = vpop.f32.mrf.mxu0
        %v1898 = vadd.f32 %v1729, %v1897
        %1899 = vmatmul.bf16.gmra.mxu0 %v1454
        %v1900 = vpop.f32.mrf.mxu0
        %v1901 = vadd.f32 %v1732, %v1900
        %v1902 = vpop.f32.mrf.mxu0
        %v1903 = vadd.f32 %v1734, %v1902
        %1904 = vmatmul.bf16.gmra.mxu0 %v1458
        %v1905 = vpop.f32.mrf.mxu0
        %v1906 = vadd.f32 %v1737, %v1905
        %v1907 = vpop.f32.mrf.mxu0
        %v1908 = vadd.f32 %v1739, %v1907
        %1909 = vmatmul.bf16.gmra.mxu0 %v1462
        %v1910 = vpop.f32.mrf.mxu0
        %v1911 = vadd.f32 %v1742, %v1910
        %v1912 = vpop.f32.mrf.mxu0
        %v1913 = vadd.f32 %v1744, %v1912
        %1914 = vmatmul.bf16.gmra.mxu0 %v1466
        %v1915 = vpop.f32.mrf.mxu0
        %v1916 = vadd.f32 %v1747, %v1915
        %v1917 = vpop.f32.mrf.mxu0
        %v1918 = vadd.f32 %v1749, %v1917
        %1919 = vmatmul.bf16.gmra.mxu0 %v1470
        %v1920 = vpop.f32.mrf.mxu0
        %v1921 = vadd.f32 %v1752, %v1920
        %v1922 = vpop.f32.mrf.mxu0
        %v1923 = vadd.f32 %v1754, %v1922
        %1924 = vmatmul.bf16.gmra.mxu0 %v1474
        %v1925 = vpop.f32.mrf.mxu0
        %v1926 = vadd.f32 %v1757, %v1925
        %v1927 = vpop.f32.mrf.mxu0
        %v1928 = vadd.f32 %v1759, %v1927
        %1929 = vmatmul.bf16.gmra.mxu0 %v1478
        %v1930 = vpop.f32.mrf.mxu0
        %v1931 = vadd.f32 %v1762, %v1930
        %v1932 = vpop.f32.mrf.mxu0
        %v1933 = vadd.f32 %v1764, %v1932
        %1934 = vmatmul.bf16.gmra.mxu0 %v1482
        %v1935 = vpop.f32.mrf.mxu0
        %v1936 = vadd.f32 %v1767, %v1935
        %v1937 = vpop.f32.mrf.mxu0
        %v1938 = vadd.f32 %v1769, %v1937
        %1939 = vmatmul.bf16.gmra.mxu0 %v1486
        %v1940 = vpop.f32.mrf.mxu0
        %v1941 = vadd.f32 %v1772, %v1940
        %v1942 = vpop.f32.mrf.mxu0
        %v1943 = vadd.f32 %v1774, %v1942
        %1944 = vmatmul.bf16.gmra.mxu0 %v1490
        %v1945 = vpop.f32.mrf.mxu0
        %v1946 = vadd.f32 %v1777, %v1945
        %v1947 = vpop.f32.mrf.mxu0
        %v1948 = vadd.f32 %v1779, %v1947
        %1949 = vmatmul.bf16.gmra.mxu0 %v1494
        %v1950 = vpop.f32.mrf.mxu0
        %v1951 = vadd.f32 %v1782, %v1950
        %v1952 = vpop.f32.mrf.mxu0
        %v1953 = vadd.f32 %v1784, %v1952
        %1954 = vmatmul.bf16.gmra.mxu0 %v1498
        %v1955 = vpop.f32.mrf.mxu0
        %v1956 = vadd.f32 %v1787, %v1955
        %v1957 = vpop.f32.mrf.mxu0
        %v1958 = vadd.f32 %v1789, %v1957
        %1959 = vmatmul.bf16.gmra.mxu0 %v1502
        %v1960 = vpop.f32.mrf.mxu0
        %v1961 = vadd.f32 %v1792, %v1960
        %v1962 = vpop.f32.mrf.mxu0
        %v1963 = vadd.f32 %v1794, %v1962
        %1964 = vmatmul.bf16.gmra.mxu0 %v1506
        %v1965 = vpop.f32.mrf.mxu0
        %v1966 = vadd.f32 %v1797, %v1965
        %v1967 = vpop.f32.mrf.mxu0
        %v1968 = vadd.f32 %v1799, %v1967
        %1969 = vmatmul.bf16.gmra.mxu0 %v1510
        %v1970 = vpop.f32.mrf.mxu0
        %v1971 = vadd.f32 %v1802, %v1970
        %v1972 = vpop.f32.mrf.mxu0
        %v1973 = vadd.f32 %v1804, %v1972
        %1974 = vmatmul.bf16.gmra.mxu0 %v1514
        %v1975 = vpop.f32.mrf.mxu0
        %v1976 = vadd.f32 %v1807, %v1975
        %v1977 = vpop.f32.mrf.mxu0
        %v1978 = vadd.f32 %v1809, %v1977
        %1979 = vmatmul.bf16.gmra.mxu0 %v1518
        %v1980 = vpop.f32.mrf.mxu0
        %v1981 = vadd.f32 %v1812, %v1980
        %v1982 = vpop.f32.mrf.mxu0
        %v1983 = vadd.f32 %v1814, %v1982
        %1984 = vmatmul.bf16.gmra.mxu0 %v1522
        %v1985 = vpop.f32.mrf.mxu0
        %v1986 = vadd.f32 %v1817, %v1985
        %v1987 = vpop.f32.mrf.mxu0
        %v1988 = vadd.f32 %v1819, %v1987
        %1989 = vmatmul.bf16.gmra.mxu0 %v1526
        %v1990 = vpop.f32.mrf.mxu0
        %v1991 = vadd.f32 %v1822, %v1990
        %v1992 = vpop.f32.mrf.mxu0
        %v1993 = vadd.f32 %v1824, %v1992
        %1994 = vdwg.mxu0
        %1995 = vmatpush.bf16.msra.mxu0 %v656
        %1996 = vmatpush.bf16.msra.mxu0 %v655
        %1997 = vmatpush.bf16.msra.mxu0 %v654
        %1998 = vmatpush.bf16.msra.mxu0 %v653
        %1999 = vmatpush.bf16.msra.mxu0 %v652
        %2000 = vmatpush.bf16.msra.mxu0 %v651
        %2001 = vmatpush.bf16.msra.mxu0 %v650
        %2002 = vmatpush.bf16.msra.mxu0 %v649
        %2003 = vmatmul.bf16.gmra.mxu0 %v1403
        %v2004 = vpop.f32.mrf.mxu0
        %v2005 = vadd.f32 %v1836, %v2004
        %v2006 = vpop.f32.mrf.mxu0
        %v2007 = vadd.f32 %v1838, %v2006
        %2008 = vmatmul.bf16.gmra.mxu0 %v1407
        %v2009 = vpop.f32.mrf.mxu0
        %v2010 = vadd.f32 %v1841, %v2009
        %v2011 = vpop.f32.mrf.mxu0
        %v2012 = vadd.f32 %v1843, %v2011
        %2013 = vmatmul.bf16.gmra.mxu0 %v1411
        %v2014 = vpop.f32.mrf.mxu0
        %v2015 = vadd.f32 %v1846, %v2014
        %v2016 = vpop.f32.mrf.mxu0
        %v2017 = vadd.f32 %v1848, %v2016
        %2018 = vmatmul.bf16.gmra.mxu0 %v1415
        %v2019 = vpop.f32.mrf.mxu0
        %v2020 = vadd.f32 %v1851, %v2019
        %v2021 = vpop.f32.mrf.mxu0
        %v2022 = vadd.f32 %v1853, %v2021
        %2023 = vmatmul.bf16.gmra.mxu0 %v1419
        %v2024 = vpop.f32.mrf.mxu0
        %v2025 = vadd.f32 %v1856, %v2024
        %v2026 = vpop.f32.mrf.mxu0
        %v2027 = vadd.f32 %v1858, %v2026
        %2028 = vmatmul.bf16.gmra.mxu0 %v1423
        %v2029 = vpop.f32.mrf.mxu0
        %v2030 = vadd.f32 %v1861, %v2029
        %v2031 = vpop.f32.mrf.mxu0
        %v2032 = vadd.f32 %v1863, %v2031
        %2033 = vmatmul.bf16.gmra.mxu0 %v1427
        %v2034 = vpop.f32.mrf.mxu0
        %v2035 = vadd.f32 %v1866, %v2034
        %v2036 = vpop.f32.mrf.mxu0
        %v2037 = vadd.f32 %v1868, %v2036
        %2038 = vmatmul.bf16.gmra.mxu0 %v1431
        %v2039 = vpop.f32.mrf.mxu0
        %v2040 = vadd.f32 %v1871, %v2039
        %v2041 = vpop.f32.mrf.mxu0
        %v2042 = vadd.f32 %v1873, %v2041
        %2043 = vmatmul.bf16.gmra.mxu0 %v1435
        %v2044 = vpop.f32.mrf.mxu0
        %v2045 = vadd.f32 %v1876, %v2044
        %v2046 = vpop.f32.mrf.mxu0
        %v2047 = vadd.f32 %v1878, %v2046
        %2048 = vmatmul.bf16.gmra.mxu0 %v1439
        %v2049 = vpop.f32.mrf.mxu0
        %v2050 = vadd.f32 %v1881, %v2049
        %v2051 = vpop.f32.mrf.mxu0
        %v2052 = vadd.f32 %v1883, %v2051
        %2053 = vmatmul.bf16.gmra.mxu0 %v1443
        %v2054 = vpop.f32.mrf.mxu0
        %v2055 = vadd.f32 %v1886, %v2054
        %v2056 = vpop.f32.mrf.mxu0
        %v2057 = vadd.f32 %v1888, %v2056
        %2058 = vmatmul.bf16.gmra.mxu0 %v1447
        %v2059 = vpop.f32.mrf.mxu0
        %v2060 = vadd.f32 %v1891, %v2059
        %v2061 = vpop.f32.mrf.mxu0
        %v2062 = vadd.f32 %v1893, %v2061
        %2063 = vmatmul.bf16.gmra.mxu0 %v1451
        %v2064 = vpop.f32.mrf.mxu0
        %v2065 = vadd.f32 %v1896, %v2064
        %v2066 = vpop.f32.mrf.mxu0
        %v2067 = vadd.f32 %v1898, %v2066
        %2068 = vmatmul.bf16.gmra.mxu0 %v1455
        %v2069 = vpop.f32.mrf.mxu0
        %v2070 = vadd.f32 %v1901, %v2069
        %v2071 = vpop.f32.mrf.mxu0
        %v2072 = vadd.f32 %v1903, %v2071
        %2073 = vmatmul.bf16.gmra.mxu0 %v1459
        %v2074 = vpop.f32.mrf.mxu0
        %v2075 = vadd.f32 %v1906, %v2074
        %v2076 = vpop.f32.mrf.mxu0
        %v2077 = vadd.f32 %v1908, %v2076
        %2078 = vmatmul.bf16.gmra.mxu0 %v1463
        %v2079 = vpop.f32.mrf.mxu0
        %v2080 = vadd.f32 %v1911, %v2079
        %v2081 = vpop.f32.mrf.mxu0
        %v2082 = vadd.f32 %v1913, %v2081
        %2083 = vmatmul.bf16.gmra.mxu0 %v1467
        %v2084 = vpop.f32.mrf.mxu0
        %v2085 = vadd.f32 %v1916, %v2084
        %v2086 = vpop.f32.mrf.mxu0
        %v2087 = vadd.f32 %v1918, %v2086
        %2088 = vmatmul.bf16.gmra.mxu0 %v1471
        %v2089 = vpop.f32.mrf.mxu0
        %v2090 = vadd.f32 %v1921, %v2089
        %v2091 = vpop.f32.mrf.mxu0
        %v2092 = vadd.f32 %v1923, %v2091
        %2093 = vmatmul.bf16.gmra.mxu0 %v1475
        %v2094 = vpop.f32.mrf.mxu0
        %v2095 = vadd.f32 %v1926, %v2094
        %v2096 = vpop.f32.mrf.mxu0
        %v2097 = vadd.f32 %v1928, %v2096
        %2098 = vmatmul.bf16.gmra.mxu0 %v1479
        %v2099 = vpop.f32.mrf.mxu0
        %v2100 = vadd.f32 %v1931, %v2099
        %v2101 = vpop.f32.mrf.mxu0
        %v2102 = vadd.f32 %v1933, %v2101
        %2103 = vmatmul.bf16.gmra.mxu0 %v1483
        %v2104 = vpop.f32.mrf.mxu0
        %v2105 = vadd.f32 %v1936, %v2104
        %v2106 = vpop.f32.mrf.mxu0
        %v2107 = vadd.f32 %v1938, %v2106
        %2108 = vmatmul.bf16.gmra.mxu0 %v1487
        %v2109 = vpop.f32.mrf.mxu0
        %v2110 = vadd.f32 %v1941, %v2109
        %v2111 = vpop.f32.mrf.mxu0
        %v2112 = vadd.f32 %v1943, %v2111
        %2113 = vmatmul.bf16.gmra.mxu0 %v1491
        %v2114 = vpop.f32.mrf.mxu0
        %v2115 = vadd.f32 %v1946, %v2114
        %v2116 = vpop.f32.mrf.mxu0
        %v2117 = vadd.f32 %v1948, %v2116
        %2118 = vmatmul.bf16.gmra.mxu0 %v1495
        %v2119 = vpop.f32.mrf.mxu0
        %v2120 = vadd.f32 %v1951, %v2119
        %v2121 = vpop.f32.mrf.mxu0
        %v2122 = vadd.f32 %v1953, %v2121
        %2123 = vmatmul.bf16.gmra.mxu0 %v1499
        %v2124 = vpop.f32.mrf.mxu0
        %v2125 = vadd.f32 %v1956, %v2124
        %v2126 = vpop.f32.mrf.mxu0
        %v2127 = vadd.f32 %v1958, %v2126
        %2128 = vmatmul.bf16.gmra.mxu0 %v1503
        %v2129 = vpop.f32.mrf.mxu0
        %v2130 = vadd.f32 %v1961, %v2129
        %v2131 = vpop.f32.mrf.mxu0
        %v2132 = vadd.f32 %v1963, %v2131
        %2133 = vmatmul.bf16.gmra.mxu0 %v1507
        %v2134 = vpop.f32.mrf.mxu0
        %v2135 = vadd.f32 %v1966, %v2134
        %v2136 = vpop.f32.mrf.mxu0
        %v2137 = vadd.f32 %v1968, %v2136
        %2138 = vmatmul.bf16.gmra.mxu0 %v1511
        %v2139 = vpop.f32.mrf.mxu0
        %v2140 = vadd.f32 %v1971, %v2139
        %v2141 = vpop.f32.mrf.mxu0
        %v2142 = vadd.f32 %v1973, %v2141
        %2143 = vmatmul.bf16.gmra.mxu0 %v1515
        %v2144 = vpop.f32.mrf.mxu0
        %v2145 = vadd.f32 %v1976, %v2144
        %v2146 = vpop.f32.mrf.mxu0
        %v2147 = vadd.f32 %v1978, %v2146
        %2148 = vmatmul.bf16.gmra.mxu0 %v1519
        %v2149 = vpop.f32.mrf.mxu0
        %v2150 = vadd.f32 %v1981, %v2149
        %v2151 = vpop.f32.mrf.mxu0
        %v2152 = vadd.f32 %v1983, %v2151
        %2153 = vmatmul.bf16.gmra.mxu0 %v1523
        %v2154 = vpop.f32.mrf.mxu0
        %v2155 = vadd.f32 %v1986, %v2154
        %v2156 = vpop.f32.mrf.mxu0
        %v2157 = vadd.f32 %v1988, %v2156
        %2158 = vmatmul.bf16.gmra.mxu0 %v1527
        %v2159 = vpop.f32.mrf.mxu0
        %v2160 = vadd.f32 %v1991, %v2159
        %v2161 = vpop.f32.mrf.mxu0
        %v2162 = vadd.f32 %v1993, %v2161
        %2163 = vdwg.mxu0
        %2164 = vmatpush.bf16.msra.mxu0 %v664
        %2165 = vmatpush.bf16.msra.mxu0 %v663
        %2166 = vmatpush.bf16.msra.mxu0 %v662
        %2167 = vmatpush.bf16.msra.mxu0 %v661
        %2168 = vmatpush.bf16.msra.mxu0 %v660
        %2169 = vmatpush.bf16.msra.mxu0 %v659
        %2170 = vmatpush.bf16.msra.mxu0 %v658
        %2171 = vmatpush.bf16.msra.mxu0 %v657
        %2172 = vmatmul.bf16.gmra.mxu0 %v1404
        %v2173 = vpop.f32.mrf.mxu0
        %v2174 = vadd.f32 %v2005, %v2173
        %v2175 = vpop.f32.mrf.mxu0
        %v2176 = vadd.f32 %v2007, %v2175
        %2177 = vmatmul.bf16.gmra.mxu0 %v1408
        %v2178 = vpop.f32.mrf.mxu0
        %v2179 = vadd.f32 %v2010, %v2178
        %v2180 = vpop.f32.mrf.mxu0
        %v2181 = vadd.f32 %v2012, %v2180
        %2182 = vmatmul.bf16.gmra.mxu0 %v1412
        %v2183 = vpop.f32.mrf.mxu0
        %v2184 = vadd.f32 %v2015, %v2183
        %v2185 = vpop.f32.mrf.mxu0
        %v2186 = vadd.f32 %v2017, %v2185
        %2187 = vmatmul.bf16.gmra.mxu0 %v1416
        %v2188 = vpop.f32.mrf.mxu0
        %v2189 = vadd.f32 %v2020, %v2188
        %v2190 = vpop.f32.mrf.mxu0
        %v2191 = vadd.f32 %v2022, %v2190
        %2192 = vmatmul.bf16.gmra.mxu0 %v1420
        %v2193 = vpop.f32.mrf.mxu0
        %v2194 = vadd.f32 %v2025, %v2193
        %v2195 = vpop.f32.mrf.mxu0
        %v2196 = vadd.f32 %v2027, %v2195
        %2197 = vmatmul.bf16.gmra.mxu0 %v1424
        %v2198 = vpop.f32.mrf.mxu0
        %v2199 = vadd.f32 %v2030, %v2198
        %v2200 = vpop.f32.mrf.mxu0
        %v2201 = vadd.f32 %v2032, %v2200
        %2202 = vmatmul.bf16.gmra.mxu0 %v1428
        %v2203 = vpop.f32.mrf.mxu0
        %v2204 = vadd.f32 %v2035, %v2203
        %v2205 = vpop.f32.mrf.mxu0
        %v2206 = vadd.f32 %v2037, %v2205
        %2207 = vmatmul.bf16.gmra.mxu0 %v1432
        %v2208 = vpop.f32.mrf.mxu0
        %v2209 = vadd.f32 %v2040, %v2208
        %v2210 = vpop.f32.mrf.mxu0
        %v2211 = vadd.f32 %v2042, %v2210
        %2212 = vmatmul.bf16.gmra.mxu0 %v1436
        %v2213 = vpop.f32.mrf.mxu0
        %v2214 = vadd.f32 %v2045, %v2213
        %v2215 = vpop.f32.mrf.mxu0
        %v2216 = vadd.f32 %v2047, %v2215
        %2217 = vmatmul.bf16.gmra.mxu0 %v1440
        %v2218 = vpop.f32.mrf.mxu0
        %v2219 = vadd.f32 %v2050, %v2218
        %v2220 = vpop.f32.mrf.mxu0
        %v2221 = vadd.f32 %v2052, %v2220
        %2222 = vmatmul.bf16.gmra.mxu0 %v1444
        %v2223 = vpop.f32.mrf.mxu0
        %v2224 = vadd.f32 %v2055, %v2223
        %v2225 = vpop.f32.mrf.mxu0
        %v2226 = vadd.f32 %v2057, %v2225
        %2227 = vmatmul.bf16.gmra.mxu0 %v1448
        %v2228 = vpop.f32.mrf.mxu0
        %v2229 = vadd.f32 %v2060, %v2228
        %v2230 = vpop.f32.mrf.mxu0
        %v2231 = vadd.f32 %v2062, %v2230
        %2232 = vmatmul.bf16.gmra.mxu0 %v1452
        %v2233 = vpop.f32.mrf.mxu0
        %v2234 = vadd.f32 %v2065, %v2233
        %v2235 = vpop.f32.mrf.mxu0
        %v2236 = vadd.f32 %v2067, %v2235
        %2237 = vmatmul.bf16.gmra.mxu0 %v1456
        %v2238 = vpop.f32.mrf.mxu0
        %v2239 = vadd.f32 %v2070, %v2238
        %v2240 = vpop.f32.mrf.mxu0
        %v2241 = vadd.f32 %v2072, %v2240
        %2242 = vmatmul.bf16.gmra.mxu0 %v1460
        %v2243 = vpop.f32.mrf.mxu0
        %v2244 = vadd.f32 %v2075, %v2243
        %v2245 = vpop.f32.mrf.mxu0
        %v2246 = vadd.f32 %v2077, %v2245
        %2247 = vmatmul.bf16.gmra.mxu0 %v1464
        %v2248 = vpop.f32.mrf.mxu0
        %v2249 = vadd.f32 %v2080, %v2248
        %v2250 = vpop.f32.mrf.mxu0
        %v2251 = vadd.f32 %v2082, %v2250
        %2252 = vmatmul.bf16.gmra.mxu0 %v1468
        %v2253 = vpop.f32.mrf.mxu0
        %v2254 = vadd.f32 %v2085, %v2253
        %v2255 = vpop.f32.mrf.mxu0
        %v2256 = vadd.f32 %v2087, %v2255
        %2257 = vmatmul.bf16.gmra.mxu0 %v1472
        %v2258 = vpop.f32.mrf.mxu0
        %v2259 = vadd.f32 %v2090, %v2258
        %v2260 = vpop.f32.mrf.mxu0
        %v2261 = vadd.f32 %v2092, %v2260
        %2262 = vmatmul.bf16.gmra.mxu0 %v1476
        %v2263 = vpop.f32.mrf.mxu0
        %v2264 = vadd.f32 %v2095, %v2263
        %v2265 = vpop.f32.mrf.mxu0
        %v2266 = vadd.f32 %v2097, %v2265
        %2267 = vmatmul.bf16.gmra.mxu0 %v1480
        %v2268 = vpop.f32.mrf.mxu0
        %v2269 = vadd.f32 %v2100, %v2268
        %v2270 = vpop.f32.mrf.mxu0
        %v2271 = vadd.f32 %v2102, %v2270
        %2272 = vmatmul.bf16.gmra.mxu0 %v1484
        %v2273 = vpop.f32.mrf.mxu0
        %v2274 = vadd.f32 %v2105, %v2273
        %v2275 = vpop.f32.mrf.mxu0
        %v2276 = vadd.f32 %v2107, %v2275
        %2277 = vmatmul.bf16.gmra.mxu0 %v1488
        %v2278 = vpop.f32.mrf.mxu0
        %v2279 = vadd.f32 %v2110, %v2278
        %v2280 = vpop.f32.mrf.mxu0
        %v2281 = vadd.f32 %v2112, %v2280
        %2282 = vmatmul.bf16.gmra.mxu0 %v1492
        %v2283 = vpop.f32.mrf.mxu0
        %v2284 = vadd.f32 %v2115, %v2283
        %v2285 = vpop.f32.mrf.mxu0
        %v2286 = vadd.f32 %v2117, %v2285
        %2287 = vmatmul.bf16.gmra.mxu0 %v1496
        %v2288 = vpop.f32.mrf.mxu0
        %v2289 = vadd.f32 %v2120, %v2288
        %v2290 = vpop.f32.mrf.mxu0
        %v2291 = vadd.f32 %v2122, %v2290
        %2292 = vmatmul.bf16.gmra.mxu0 %v1500
        %v2293 = vpop.f32.mrf.mxu0
        %v2294 = vadd.f32 %v2125, %v2293
        %v2295 = vpop.f32.mrf.mxu0
        %v2296 = vadd.f32 %v2127, %v2295
        %2297 = vmatmul.bf16.gmra.mxu0 %v1504
        %v2298 = vpop.f32.mrf.mxu0
        %v2299 = vadd.f32 %v2130, %v2298
        %v2300 = vpop.f32.mrf.mxu0
        %v2301 = vadd.f32 %v2132, %v2300
        %2302 = vmatmul.bf16.gmra.mxu0 %v1508
        %v2303 = vpop.f32.mrf.mxu0
        %v2304 = vadd.f32 %v2135, %v2303
        %v2305 = vpop.f32.mrf.mxu0
        %v2306 = vadd.f32 %v2137, %v2305
        %2307 = vmatmul.bf16.gmra.mxu0 %v1512
        %v2308 = vpop.f32.mrf.mxu0
        %v2309 = vadd.f32 %v2140, %v2308
        %v2310 = vpop.f32.mrf.mxu0
        %v2311 = vadd.f32 %v2142, %v2310
        %2312 = vmatmul.bf16.gmra.mxu0 %v1516
        %v2313 = vpop.f32.mrf.mxu0
        %v2314 = vadd.f32 %v2145, %v2313
        %v2315 = vpop.f32.mrf.mxu0
        %v2316 = vadd.f32 %v2147, %v2315
        %2317 = vmatmul.bf16.gmra.mxu0 %v1520
        %v2318 = vpop.f32.mrf.mxu0
        %v2319 = vadd.f32 %v2150, %v2318
        %v2320 = vpop.f32.mrf.mxu0
        %v2321 = vadd.f32 %v2152, %v2320
        %2322 = vmatmul.bf16.gmra.mxu0 %v1524
        %v2323 = vpop.f32.mrf.mxu0
        %v2324 = vadd.f32 %v2155, %v2323
        %v2325 = vpop.f32.mrf.mxu0
        %v2326 = vadd.f32 %v2157, %v2325
        %2327 = vmatmul.bf16.gmra.mxu0 %v1528
        %v2328 = vpop.f32.mrf.mxu0
        %v2329 = vadd.f32 %v2160, %v2328
        %v2330 = vpop.f32.mrf.mxu0
        %v2331 = vadd.f32 %v2162, %v2330
        %2332 = vdwg.mxu0
        %v2461 = vunpack.c.l.b16 %v761
        %v2462 = vunpack.c.h.b16 %v761
        %v2463 = vunpack.c.l.b16 %v762
        %v2464 = vunpack.c.h.b16 %v762
        %v2465 = vunpack.c.l.b16 %v763
        %v2466 = vunpack.c.h.b16 %v763
        %v2467 = vunpack.c.l.b16 %v764
        %v2468 = vunpack.c.h.b16 %v764
        %v2469 = vunpack.c.l.b16 %v765
        %v2470 = vunpack.c.h.b16 %v765
        %v2471 = vunpack.c.l.b16 %v766
        %v2472 = vunpack.c.h.b16 %v766
        %v2473 = vunpack.c.l.b16 %v767
        %v2474 = vunpack.c.h.b16 %v767
        %v2475 = vunpack.c.l.b16 %v768
        %v2476 = vunpack.c.h.b16 %v768
        %v2477 = vunpack.c.l.b16 %v769
        %v2478 = vunpack.c.h.b16 %v769
        %v2479 = vunpack.c.l.b16 %v770
        %v2480 = vunpack.c.h.b16 %v770
        %v2481 = vunpack.c.l.b16 %v771
        %v2482 = vunpack.c.h.b16 %v771
        %v2483 = vunpack.c.l.b16 %v772
        %v2484 = vunpack.c.h.b16 %v772
        %v2485 = vunpack.c.l.b16 %v773
        %v2486 = vunpack.c.h.b16 %v773
        %v2487 = vunpack.c.l.b16 %v774
        %v2488 = vunpack.c.h.b16 %v774
        %v2489 = vunpack.c.l.b16 %v775
        %v2490 = vunpack.c.h.b16 %v775
        %v2491 = vunpack.c.l.b16 %v776
        %v2492 = vunpack.c.h.b16 %v776
        %v2493 = vunpack.c.l.b16 %v777
        %v2494 = vunpack.c.h.b16 %v777
        %v2495 = vunpack.c.l.b16 %v778
        %v2496 = vunpack.c.h.b16 %v778
        %v2497 = vunpack.c.l.b16 %v779
        %v2498 = vunpack.c.h.b16 %v779
        %v2499 = vunpack.c.l.b16 %v780
        %v2500 = vunpack.c.h.b16 %v780
        %v2501 = vunpack.c.l.b16 %v781
        %v2502 = vunpack.c.h.b16 %v781
        %v2503 = vunpack.c.l.b16 %v782
        %v2504 = vunpack.c.h.b16 %v782
        %v2505 = vunpack.c.l.b16 %v783
        %v2506 = vunpack.c.h.b16 %v783
        %v2507 = vunpack.c.l.b16 %v784
        %v2508 = vunpack.c.h.b16 %v784
        %v2509 = vunpack.c.l.b16 %v785
        %v2510 = vunpack.c.h.b16 %v785
        %v2511 = vunpack.c.l.b16 %v786
        %v2512 = vunpack.c.h.b16 %v786
        %v2513 = vunpack.c.l.b16 %v787
        %v2514 = vunpack.c.h.b16 %v787
        %v2515 = vunpack.c.l.b16 %v788
        %v2516 = vunpack.c.h.b16 %v788
        %v2517 = vunpack.c.l.b16 %v789
        %v2518 = vunpack.c.h.b16 %v789
        %v2519 = vunpack.c.l.b16 %v790
        %v2520 = vunpack.c.h.b16 %v790
        %v2521 = vunpack.c.l.b16 %v791
        %v2522 = vunpack.c.h.b16 %v791
        %v2523 = vunpack.c.l.b16 %v792
        %v2524 = vunpack.c.h.b16 %v792
        %v2525 = vunpack.c.l.b16 %v793
        %v2526 = vunpack.c.h.b16 %v793
        %v2527 = vunpack.c.l.b16 %v794
        %v2528 = vunpack.c.h.b16 %v794
        %v2529 = vunpack.c.l.b16 %v795
        %v2530 = vunpack.c.h.b16 %v795
        %v2531 = vunpack.c.l.b16 %v796
        %v2532 = vunpack.c.h.b16 %v796
        %v2533 = vunpack.c.l.b16 %v797
        %v2534 = vunpack.c.h.b16 %v797
        %v2535 = vunpack.c.l.b16 %v798
        %v2536 = vunpack.c.h.b16 %v798
        %v2537 = vunpack.c.l.b16 %v799
        %v2538 = vunpack.c.h.b16 %v799
        %v2539 = vunpack.c.l.b16 %v800
        %v2540 = vunpack.c.h.b16 %v800
        %v2541 = vunpack.c.l.b16 %v801
        %v2542 = vunpack.c.h.b16 %v801
        %v2543 = vunpack.c.l.b16 %v802
        %v2544 = vunpack.c.h.b16 %v802
        %v2545 = vunpack.c.l.b16 %v803
        %v2546 = vunpack.c.h.b16 %v803
        %v2547 = vunpack.c.l.b16 %v804
        %v2548 = vunpack.c.h.b16 %v804
        %v2549 = vunpack.c.l.b16 %v805
        %v2550 = vunpack.c.h.b16 %v805
        %v2551 = vunpack.c.l.b16 %v806
        %v2552 = vunpack.c.h.b16 %v806
        %v2553 = vunpack.c.l.b16 %v807
        %v2554 = vunpack.c.h.b16 %v807
        %v2555 = vunpack.c.l.b16 %v808
        %v2556 = vunpack.c.h.b16 %v808
        %v2557 = vunpack.c.l.b16 %v809
        %v2558 = vunpack.c.h.b16 %v809
        %v2559 = vunpack.c.l.b16 %v810
        %v2560 = vunpack.c.h.b16 %v810
        %v2561 = vunpack.c.l.b16 %v811
        %v2562 = vunpack.c.h.b16 %v811
        %v2563 = vunpack.c.l.b16 %v812
        %v2564 = vunpack.c.h.b16 %v812
        %v2565 = vunpack.c.l.b16 %v813
        %v2566 = vunpack.c.h.b16 %v813
        %v2567 = vunpack.c.l.b16 %v814
        %v2568 = vunpack.c.h.b16 %v814
        %v2569 = vunpack.c.l.b16 %v815
        %v2570 = vunpack.c.h.b16 %v815
        %v2571 = vunpack.c.l.b16 %v816
        %v2572 = vunpack.c.h.b16 %v816
        %v2573 = vunpack.c.l.b16 %v817
        %v2574 = vunpack.c.h.b16 %v817
        %v2575 = vunpack.c.l.b16 %v818
        %v2576 = vunpack.c.h.b16 %v818
        %v2577 = vunpack.c.l.b16 %v819
        %v2578 = vunpack.c.h.b16 %v819
        %v2579 = vunpack.c.l.b16 %v820
        %v2580 = vunpack.c.h.b16 %v820
        %v2581 = vunpack.c.l.b16 %v821
        %v2582 = vunpack.c.h.b16 %v821
        %v2583 = vunpack.c.l.b16 %v822
        %v2584 = vunpack.c.h.b16 %v822
        %v2585 = vunpack.c.l.b16 %v823
        %v2586 = vunpack.c.h.b16 %v823
        %v2587 = vunpack.c.l.b16 %v824
        %v2588 = vunpack.c.h.b16 %v824
        %v2589 = vunpack.c.l.b16 %v825
        %v2590 = vunpack.c.h.b16 %v825
        %v2591 = vunpack.c.l.b16 %v826
        %v2592 = vunpack.c.h.b16 %v826
        %v2593 = vunpack.c.l.b16 %v827
        %v2594 = vunpack.c.h.b16 %v827
        %v2595 = vunpack.c.l.b16 %v828
        %v2596 = vunpack.c.h.b16 %v828
        %v2597 = vunpack.c.l.b16 %v829
        %v2598 = vunpack.c.h.b16 %v829
        %v2599 = vunpack.c.l.b16 %v830
        %v2600 = vunpack.c.h.b16 %v830
        %v2601 = vunpack.c.l.b16 %v831
        %v2602 = vunpack.c.h.b16 %v831
        %v2603 = vunpack.c.l.b16 %v832
        %v2604 = vunpack.c.h.b16 %v832
        %v2605 = vunpack.c.l.b16 %v833
        %v2606 = vunpack.c.h.b16 %v833
        %v2607 = vunpack.c.l.b16 %v834
        %v2608 = vunpack.c.h.b16 %v834
        %v2609 = vunpack.c.l.b16 %v835
        %v2610 = vunpack.c.h.b16 %v835
        %v2611 = vunpack.c.l.b16 %v836
        %v2612 = vunpack.c.h.b16 %v836
        %v2613 = vunpack.c.l.b16 %v837
        %v2614 = vunpack.c.h.b16 %v837
        %v2615 = vunpack.c.l.b16 %v838
        %v2616 = vunpack.c.h.b16 %v838
        %v2617 = vunpack.c.l.b16 %v839
        %v2618 = vunpack.c.h.b16 %v839
        %v2619 = vunpack.c.l.b16 %v840
        %v2620 = vunpack.c.h.b16 %v840
        %v2621 = vunpack.c.l.b16 %v841
        %v2622 = vunpack.c.h.b16 %v841
        %v2623 = vunpack.c.l.b16 %v842
        %v2624 = vunpack.c.h.b16 %v842
        %v2625 = vunpack.c.l.b16 %v843
        %v2626 = vunpack.c.h.b16 %v843
        %v2627 = vunpack.c.l.b16 %v844
        %v2628 = vunpack.c.h.b16 %v844
        %v2629 = vunpack.c.l.b16 %v845
        %v2630 = vunpack.c.h.b16 %v845
        %v2631 = vunpack.c.l.b16 %v846
        %v2632 = vunpack.c.h.b16 %v846
        %v2633 = vunpack.c.l.b16 %v847
        %v2634 = vunpack.c.h.b16 %v847
        %v2635 = vunpack.c.l.b16 %v848
        %v2636 = vunpack.c.h.b16 %v848
        %v2637 = vunpack.c.l.b16 %v849
        %v2638 = vunpack.c.h.b16 %v849
        %v2639 = vunpack.c.l.b16 %v850
        %v2640 = vunpack.c.h.b16 %v850
        %v2641 = vunpack.c.l.b16 %v851
        %v2642 = vunpack.c.h.b16 %v851
        %v2643 = vunpack.c.l.b16 %v852
        %v2644 = vunpack.c.h.b16 %v852
        %v2645 = vunpack.c.l.b16 %v853
        %v2646 = vunpack.c.h.b16 %v853
        %v2647 = vunpack.c.l.b16 %v854
        %v2648 = vunpack.c.h.b16 %v854
        %v2649 = vunpack.c.l.b16 %v855
        %v2650 = vunpack.c.h.b16 %v855
        %v2651 = vunpack.c.l.b16 %v856
        %v2652 = vunpack.c.h.b16 %v856
        %v2653 = vunpack.c.l.b16 %v857
        %v2654 = vunpack.c.h.b16 %v857
        %v2655 = vunpack.c.l.b16 %v858
        %v2656 = vunpack.c.h.b16 %v858
        %v2657 = vunpack.c.l.b16 %v859
        %v2658 = vunpack.c.h.b16 %v859
        %v2659 = vunpack.c.l.b16 %v860
        %v2660 = vunpack.c.h.b16 %v860
        %v2661 = vunpack.c.l.b16 %v861
        %v2662 = vunpack.c.h.b16 %v861
        %v2663 = vunpack.c.l.b16 %v862
        %v2664 = vunpack.c.h.b16 %v862
        %v2665 = vunpack.c.l.b16 %v863
        %v2666 = vunpack.c.h.b16 %v863
        %v2667 = vunpack.c.l.b16 %v864
        %v2668 = vunpack.c.h.b16 %v864
        %v2669 = vunpack.c.l.b16 %v865
        %v2670 = vunpack.c.h.b16 %v865
        %v2671 = vunpack.c.l.b16 %v866
        %v2672 = vunpack.c.h.b16 %v866
        %v2673 = vunpack.c.l.b16 %v867
        %v2674 = vunpack.c.h.b16 %v867
        %v2675 = vunpack.c.l.b16 %v868
        %v2676 = vunpack.c.h.b16 %v868
        %v2677 = vunpack.c.l.b16 %v869
        %v2678 = vunpack.c.h.b16 %v869
        %v2679 = vunpack.c.l.b16 %v870
        %v2680 = vunpack.c.h.b16 %v870
        %v2681 = vunpack.c.l.b16 %v871
        %v2682 = vunpack.c.h.b16 %v871
        %v2683 = vunpack.c.l.b16 %v872
        %v2684 = vunpack.c.h.b16 %v872
        %v2685 = vunpack.c.l.b16 %v873
        %v2686 = vunpack.c.h.b16 %v873
        %v2687 = vunpack.c.l.b16 %v874
        %v2688 = vunpack.c.h.b16 %v874
        %v2689 = vunpack.c.l.b16 %v875
        %v2690 = vunpack.c.h.b16 %v875
        %v2691 = vunpack.c.l.b16 %v876
        %v2692 = vunpack.c.h.b16 %v876
        %v2693 = vunpack.c.l.b16 %v877
        %v2694 = vunpack.c.h.b16 %v877
        %v2695 = vunpack.c.l.b16 %v878
        %v2696 = vunpack.c.h.b16 %v878
        %v2697 = vunpack.c.l.b16 %v879
        %v2698 = vunpack.c.h.b16 %v879
        %v2699 = vunpack.c.l.b16 %v880
        %v2700 = vunpack.c.h.b16 %v880
        %v2701 = vunpack.c.l.b16 %v881
        %v2702 = vunpack.c.h.b16 %v881
        %v2703 = vunpack.c.l.b16 %v882
        %v2704 = vunpack.c.h.b16 %v882
        %v2705 = vunpack.c.l.b16 %v883
        %v2706 = vunpack.c.h.b16 %v883
        %v2707 = vunpack.c.l.b16 %v884
        %v2708 = vunpack.c.h.b16 %v884
        %v2709 = vunpack.c.l.b16 %v885
        %v2710 = vunpack.c.h.b16 %v885
        %v2711 = vunpack.c.l.b16 %v886
        %v2712 = vunpack.c.h.b16 %v886
        %v2713 = vunpack.c.l.b16 %v887
        %v2714 = vunpack.c.h.b16 %v887
        %v2715 = vunpack.c.l.b16 %v888
        %v2716 = vunpack.c.h.b16 %v888
        %v2717 = vpack.c.b16 %v2465, %v2461
        %v2718 = vpack.c.b16 %v2466, %v2462
        %v2719 = vpack.c.b16 %v2467, %v2463
        %v2720 = vpack.c.b16 %v2468, %v2464
        %v2721 = vpack.c.b16 %v2473, %v2469
        %v2722 = vpack.c.b16 %v2474, %v2470
        %v2723 = vpack.c.b16 %v2475, %v2471
        %v2724 = vpack.c.b16 %v2476, %v2472
        %v2725 = vpack.c.b16 %v2481, %v2477
        %v2726 = vpack.c.b16 %v2482, %v2478
        %v2727 = vpack.c.b16 %v2483, %v2479
        %v2728 = vpack.c.b16 %v2484, %v2480
        %v2729 = vpack.c.b16 %v2489, %v2485
        %v2730 = vpack.c.b16 %v2490, %v2486
        %v2731 = vpack.c.b16 %v2491, %v2487
        %v2732 = vpack.c.b16 %v2492, %v2488
        %v2733 = vpack.c.b16 %v2497, %v2493
        %v2734 = vpack.c.b16 %v2498, %v2494
        %v2735 = vpack.c.b16 %v2499, %v2495
        %v2736 = vpack.c.b16 %v2500, %v2496
        %v2737 = vpack.c.b16 %v2505, %v2501
        %v2738 = vpack.c.b16 %v2506, %v2502
        %v2739 = vpack.c.b16 %v2507, %v2503
        %v2740 = vpack.c.b16 %v2508, %v2504
        %v2741 = vpack.c.b16 %v2513, %v2509
        %v2742 = vpack.c.b16 %v2514, %v2510
        %v2743 = vpack.c.b16 %v2515, %v2511
        %v2744 = vpack.c.b16 %v2516, %v2512
        %v2745 = vpack.c.b16 %v2521, %v2517
        %v2746 = vpack.c.b16 %v2522, %v2518
        %v2747 = vpack.c.b16 %v2523, %v2519
        %v2748 = vpack.c.b16 %v2524, %v2520
        %v2749 = vpack.c.b16 %v2529, %v2525
        %v2750 = vpack.c.b16 %v2530, %v2526
        %v2751 = vpack.c.b16 %v2531, %v2527
        %v2752 = vpack.c.b16 %v2532, %v2528
        %v2753 = vpack.c.b16 %v2537, %v2533
        %v2754 = vpack.c.b16 %v2538, %v2534
        %v2755 = vpack.c.b16 %v2539, %v2535
        %v2756 = vpack.c.b16 %v2540, %v2536
        %v2757 = vpack.c.b16 %v2545, %v2541
        %v2758 = vpack.c.b16 %v2546, %v2542
        %v2759 = vpack.c.b16 %v2547, %v2543
        %v2760 = vpack.c.b16 %v2548, %v2544
        %v2761 = vpack.c.b16 %v2553, %v2549
        %v2762 = vpack.c.b16 %v2554, %v2550
        %v2763 = vpack.c.b16 %v2555, %v2551
        %v2764 = vpack.c.b16 %v2556, %v2552
        %v2765 = vpack.c.b16 %v2561, %v2557
        %v2766 = vpack.c.b16 %v2562, %v2558
        %v2767 = vpack.c.b16 %v2563, %v2559
        %v2768 = vpack.c.b16 %v2564, %v2560
        %v2769 = vpack.c.b16 %v2569, %v2565
        %v2770 = vpack.c.b16 %v2570, %v2566
        %v2771 = vpack.c.b16 %v2571, %v2567
        %v2772 = vpack.c.b16 %v2572, %v2568
        %v2773 = vpack.c.b16 %v2577, %v2573
        %v2774 = vpack.c.b16 %v2578, %v2574
        %v2775 = vpack.c.b16 %v2579, %v2575
        %v2776 = vpack.c.b16 %v2580, %v2576
        %v2777 = vpack.c.b16 %v2585, %v2581
        %v2778 = vpack.c.b16 %v2586, %v2582
        %v2779 = vpack.c.b16 %v2587, %v2583
        %v2780 = vpack.c.b16 %v2588, %v2584
        %v2781 = vpack.c.b16 %v2593, %v2589
        %v2782 = vpack.c.b16 %v2594, %v2590
        %v2783 = vpack.c.b16 %v2595, %v2591
        %v2784 = vpack.c.b16 %v2596, %v2592
        %v2785 = vpack.c.b16 %v2601, %v2597
        %v2786 = vpack.c.b16 %v2602, %v2598
        %v2787 = vpack.c.b16 %v2603, %v2599
        %v2788 = vpack.c.b16 %v2604, %v2600
        %v2789 = vpack.c.b16 %v2609, %v2605
        %v2790 = vpack.c.b16 %v2610, %v2606
        %v2791 = vpack.c.b16 %v2611, %v2607
        %v2792 = vpack.c.b16 %v2612, %v2608
        %v2793 = vpack.c.b16 %v2617, %v2613
        %v2794 = vpack.c.b16 %v2618, %v2614
        %v2795 = vpack.c.b16 %v2619, %v2615
        %v2796 = vpack.c.b16 %v2620, %v2616
        %v2797 = vpack.c.b16 %v2625, %v2621
        %v2798 = vpack.c.b16 %v2626, %v2622
        %v2799 = vpack.c.b16 %v2627, %v2623
        %v2800 = vpack.c.b16 %v2628, %v2624
        %v2801 = vpack.c.b16 %v2633, %v2629
        %v2802 = vpack.c.b16 %v2634, %v2630
        %v2803 = vpack.c.b16 %v2635, %v2631
        %v2804 = vpack.c.b16 %v2636, %v2632
        %v2805 = vpack.c.b16 %v2641, %v2637
        %v2806 = vpack.c.b16 %v2642, %v2638
        %v2807 = vpack.c.b16 %v2643, %v2639
        %v2808 = vpack.c.b16 %v2644, %v2640
        %v2809 = vpack.c.b16 %v2649, %v2645
        %v2810 = vpack.c.b16 %v2650, %v2646
        %v2811 = vpack.c.b16 %v2651, %v2647
        %v2812 = vpack.c.b16 %v2652, %v2648
        %v2813 = vpack.c.b16 %v2657, %v2653
        %v2814 = vpack.c.b16 %v2658, %v2654
        %v2815 = vpack.c.b16 %v2659, %v2655
        %v2816 = vpack.c.b16 %v2660, %v2656
        %v2817 = vpack.c.b16 %v2665, %v2661
        %v2818 = vpack.c.b16 %v2666, %v2662
        %v2819 = vpack.c.b16 %v2667, %v2663
        %v2820 = vpack.c.b16 %v2668, %v2664
        %v2821 = vpack.c.b16 %v2673, %v2669
        %v2822 = vpack.c.b16 %v2674, %v2670
        %v2823 = vpack.c.b16 %v2675, %v2671
        %v2824 = vpack.c.b16 %v2676, %v2672
        %v2825 = vpack.c.b16 %v2681, %v2677
        %v2826 = vpack.c.b16 %v2682, %v2678
        %v2827 = vpack.c.b16 %v2683, %v2679
        %v2828 = vpack.c.b16 %v2684, %v2680
        %v2829 = vpack.c.b16 %v2689, %v2685
        %v2830 = vpack.c.b16 %v2690, %v2686
        %v2831 = vpack.c.b16 %v2691, %v2687
        %v2832 = vpack.c.b16 %v2692, %v2688
        %v2833 = vpack.c.b16 %v2697, %v2693
        %v2834 = vpack.c.b16 %v2698, %v2694
        %v2835 = vpack.c.b16 %v2699, %v2695
        %v2836 = vpack.c.b16 %v2700, %v2696
        %v2837 = vpack.c.b16 %v2705, %v2701
        %v2838 = vpack.c.b16 %v2706, %v2702
        %v2839 = vpack.c.b16 %v2707, %v2703
        %v2840 = vpack.c.b16 %v2708, %v2704
        %v2841 = vpack.c.b16 %v2713, %v2709
        %v2842 = vpack.c.b16 %v2714, %v2710
        %v2843 = vpack.c.b16 %v2715, %v2711
        %v2844 = vpack.c.b16 %v2716, %v2712
        %2973 = vmatpush.bf16.msra.mxu0 %v544
        %2974 = vmatpush.bf16.msra.mxu0 %v543
        %2975 = vmatpush.bf16.msra.mxu0 %v542
        %2976 = vmatpush.bf16.msra.mxu0 %v541
        %2977 = vmatpush.bf16.msra.mxu0 %v540
        %2978 = vmatpush.bf16.msra.mxu0 %v539
        %2979 = vmatpush.bf16.msra.mxu0 %v538
        %2980 = vmatpush.bf16.msra.mxu0 %v537
        %2981 = vmatmul.bf16.gmra.mxu0 %v2717
        %v2982 = vpop.f32.mrf.mxu0
        %v2983 = vadd.f32 %v2174, %v2982
        %v2984 = vpop.f32.mrf.mxu0
        %v2985 = vadd.f32 %v2176, %v2984
        %2986 = vmatmul.bf16.gmra.mxu0 %v2721
        %v2987 = vpop.f32.mrf.mxu0
        %v2988 = vadd.f32 %v2179, %v2987
        %v2989 = vpop.f32.mrf.mxu0
        %v2990 = vadd.f32 %v2181, %v2989
        %2991 = vmatmul.bf16.gmra.mxu0 %v2725
        %v2992 = vpop.f32.mrf.mxu0
        %v2993 = vadd.f32 %v2184, %v2992
        %v2994 = vpop.f32.mrf.mxu0
        %v2995 = vadd.f32 %v2186, %v2994
        %2996 = vmatmul.bf16.gmra.mxu0 %v2729
        %v2997 = vpop.f32.mrf.mxu0
        %v2998 = vadd.f32 %v2189, %v2997
        %v2999 = vpop.f32.mrf.mxu0
        %v3000 = vadd.f32 %v2191, %v2999
        %3001 = vmatmul.bf16.gmra.mxu0 %v2733
        %v3002 = vpop.f32.mrf.mxu0
        %v3003 = vadd.f32 %v2194, %v3002
        %v3004 = vpop.f32.mrf.mxu0
        %v3005 = vadd.f32 %v2196, %v3004
        %3006 = vmatmul.bf16.gmra.mxu0 %v2737
        %v3007 = vpop.f32.mrf.mxu0
        %v3008 = vadd.f32 %v2199, %v3007
        %v3009 = vpop.f32.mrf.mxu0
        %v3010 = vadd.f32 %v2201, %v3009
        %3011 = vmatmul.bf16.gmra.mxu0 %v2741
        %v3012 = vpop.f32.mrf.mxu0
        %v3013 = vadd.f32 %v2204, %v3012
        %v3014 = vpop.f32.mrf.mxu0
        %v3015 = vadd.f32 %v2206, %v3014
        %3016 = vmatmul.bf16.gmra.mxu0 %v2745
        %v3017 = vpop.f32.mrf.mxu0
        %v3018 = vadd.f32 %v2209, %v3017
        %v3019 = vpop.f32.mrf.mxu0
        %v3020 = vadd.f32 %v2211, %v3019
        %3021 = vmatmul.bf16.gmra.mxu0 %v2749
        %v3022 = vpop.f32.mrf.mxu0
        %v3023 = vadd.f32 %v2214, %v3022
        %v3024 = vpop.f32.mrf.mxu0
        %v3025 = vadd.f32 %v2216, %v3024
        %3026 = vmatmul.bf16.gmra.mxu0 %v2753
        %v3027 = vpop.f32.mrf.mxu0
        %v3028 = vadd.f32 %v2219, %v3027
        %v3029 = vpop.f32.mrf.mxu0
        %v3030 = vadd.f32 %v2221, %v3029
        %3031 = vmatmul.bf16.gmra.mxu0 %v2757
        %v3032 = vpop.f32.mrf.mxu0
        %v3033 = vadd.f32 %v2224, %v3032
        %v3034 = vpop.f32.mrf.mxu0
        %v3035 = vadd.f32 %v2226, %v3034
        %3036 = vmatmul.bf16.gmra.mxu0 %v2761
        %v3037 = vpop.f32.mrf.mxu0
        %v3038 = vadd.f32 %v2229, %v3037
        %v3039 = vpop.f32.mrf.mxu0
        %v3040 = vadd.f32 %v2231, %v3039
        %3041 = vmatmul.bf16.gmra.mxu0 %v2765
        %v3042 = vpop.f32.mrf.mxu0
        %v3043 = vadd.f32 %v2234, %v3042
        %v3044 = vpop.f32.mrf.mxu0
        %v3045 = vadd.f32 %v2236, %v3044
        %3046 = vmatmul.bf16.gmra.mxu0 %v2769
        %v3047 = vpop.f32.mrf.mxu0
        %v3048 = vadd.f32 %v2239, %v3047
        %v3049 = vpop.f32.mrf.mxu0
        %v3050 = vadd.f32 %v2241, %v3049
        %3051 = vmatmul.bf16.gmra.mxu0 %v2773
        %v3052 = vpop.f32.mrf.mxu0
        %v3053 = vadd.f32 %v2244, %v3052
        %v3054 = vpop.f32.mrf.mxu0
        %v3055 = vadd.f32 %v2246, %v3054
        %3056 = vmatmul.bf16.gmra.mxu0 %v2777
        %v3057 = vpop.f32.mrf.mxu0
        %v3058 = vadd.f32 %v2249, %v3057
        %v3059 = vpop.f32.mrf.mxu0
        %v3060 = vadd.f32 %v2251, %v3059
        %3061 = vmatmul.bf16.gmra.mxu0 %v2781
        %v3062 = vpop.f32.mrf.mxu0
        %v3063 = vadd.f32 %v2254, %v3062
        %v3064 = vpop.f32.mrf.mxu0
        %v3065 = vadd.f32 %v2256, %v3064
        %3066 = vmatmul.bf16.gmra.mxu0 %v2785
        %v3067 = vpop.f32.mrf.mxu0
        %v3068 = vadd.f32 %v2259, %v3067
        %v3069 = vpop.f32.mrf.mxu0
        %v3070 = vadd.f32 %v2261, %v3069
        %3071 = vmatmul.bf16.gmra.mxu0 %v2789
        %v3072 = vpop.f32.mrf.mxu0
        %v3073 = vadd.f32 %v2264, %v3072
        %v3074 = vpop.f32.mrf.mxu0
        %v3075 = vadd.f32 %v2266, %v3074
        %3076 = vmatmul.bf16.gmra.mxu0 %v2793
        %v3077 = vpop.f32.mrf.mxu0
        %v3078 = vadd.f32 %v2269, %v3077
        %v3079 = vpop.f32.mrf.mxu0
        %v3080 = vadd.f32 %v2271, %v3079
        %3081 = vmatmul.bf16.gmra.mxu0 %v2797
        %v3082 = vpop.f32.mrf.mxu0
        %v3083 = vadd.f32 %v2274, %v3082
        %v3084 = vpop.f32.mrf.mxu0
        %v3085 = vadd.f32 %v2276, %v3084
        %3086 = vmatmul.bf16.gmra.mxu0 %v2801
        %v3087 = vpop.f32.mrf.mxu0
        %v3088 = vadd.f32 %v2279, %v3087
        %v3089 = vpop.f32.mrf.mxu0
        %v3090 = vadd.f32 %v2281, %v3089
        %3091 = vmatmul.bf16.gmra.mxu0 %v2805
        %v3092 = vpop.f32.mrf.mxu0
        %v3093 = vadd.f32 %v2284, %v3092
        %v3094 = vpop.f32.mrf.mxu0
        %v3095 = vadd.f32 %v2286, %v3094
        %3096 = vmatmul.bf16.gmra.mxu0 %v2809
        %v3097 = vpop.f32.mrf.mxu0
        %v3098 = vadd.f32 %v2289, %v3097
        %v3099 = vpop.f32.mrf.mxu0
        %v3100 = vadd.f32 %v2291, %v3099
        %3101 = vmatmul.bf16.gmra.mxu0 %v2813
        %v3102 = vpop.f32.mrf.mxu0
        %v3103 = vadd.f32 %v2294, %v3102
        %v3104 = vpop.f32.mrf.mxu0
        %v3105 = vadd.f32 %v2296, %v3104
        %3106 = vmatmul.bf16.gmra.mxu0 %v2817
        %v3107 = vpop.f32.mrf.mxu0
        %v3108 = vadd.f32 %v2299, %v3107
        %v3109 = vpop.f32.mrf.mxu0
        %v3110 = vadd.f32 %v2301, %v3109
        %3111 = vmatmul.bf16.gmra.mxu0 %v2821
        %v3112 = vpop.f32.mrf.mxu0
        %v3113 = vadd.f32 %v2304, %v3112
        %v3114 = vpop.f32.mrf.mxu0
        %v3115 = vadd.f32 %v2306, %v3114
        %3116 = vmatmul.bf16.gmra.mxu0 %v2825
        %v3117 = vpop.f32.mrf.mxu0
        %v3118 = vadd.f32 %v2309, %v3117
        %v3119 = vpop.f32.mrf.mxu0
        %v3120 = vadd.f32 %v2311, %v3119
        %3121 = vmatmul.bf16.gmra.mxu0 %v2829
        %v3122 = vpop.f32.mrf.mxu0
        %v3123 = vadd.f32 %v2314, %v3122
        %v3124 = vpop.f32.mrf.mxu0
        %v3125 = vadd.f32 %v2316, %v3124
        %3126 = vmatmul.bf16.gmra.mxu0 %v2833
        %v3127 = vpop.f32.mrf.mxu0
        %v3128 = vadd.f32 %v2319, %v3127
        %v3129 = vpop.f32.mrf.mxu0
        %v3130 = vadd.f32 %v2321, %v3129
        %3131 = vmatmul.bf16.gmra.mxu0 %v2837
        %v3132 = vpop.f32.mrf.mxu0
        %v3133 = vadd.f32 %v2324, %v3132
        %v3134 = vpop.f32.mrf.mxu0
        %v3135 = vadd.f32 %v2326, %v3134
        %3136 = vmatmul.bf16.gmra.mxu0 %v2841
        %v3137 = vpop.f32.mrf.mxu0
        %v3138 = vadd.f32 %v2329, %v3137
        %v3139 = vpop.f32.mrf.mxu0
        %v3140 = vadd.f32 %v2331, %v3139
        %3141 = vdwg.mxu0
        %3142 = vmatpush.bf16.msra.mxu0 %v552
        %3143 = vmatpush.bf16.msra.mxu0 %v551
        %3144 = vmatpush.bf16.msra.mxu0 %v550
        %3145 = vmatpush.bf16.msra.mxu0 %v549
        %3146 = vmatpush.bf16.msra.mxu0 %v548
        %3147 = vmatpush.bf16.msra.mxu0 %v547
        %3148 = vmatpush.bf16.msra.mxu0 %v546
        %3149 = vmatpush.bf16.msra.mxu0 %v545
        %3150 = vmatmul.bf16.gmra.mxu0 %v2718
        %v3151 = vpop.f32.mrf.mxu0
        %v3152 = vadd.f32 %v2983, %v3151
        %v3153 = vpop.f32.mrf.mxu0
        %v3154 = vadd.f32 %v2985, %v3153
        %3155 = vmatmul.bf16.gmra.mxu0 %v2722
        %v3156 = vpop.f32.mrf.mxu0
        %v3157 = vadd.f32 %v2988, %v3156
        %v3158 = vpop.f32.mrf.mxu0
        %v3159 = vadd.f32 %v2990, %v3158
        %3160 = vmatmul.bf16.gmra.mxu0 %v2726
        %v3161 = vpop.f32.mrf.mxu0
        %v3162 = vadd.f32 %v2993, %v3161
        %v3163 = vpop.f32.mrf.mxu0
        %v3164 = vadd.f32 %v2995, %v3163
        %3165 = vmatmul.bf16.gmra.mxu0 %v2730
        %v3166 = vpop.f32.mrf.mxu0
        %v3167 = vadd.f32 %v2998, %v3166
        %v3168 = vpop.f32.mrf.mxu0
        %v3169 = vadd.f32 %v3000, %v3168
        %3170 = vmatmul.bf16.gmra.mxu0 %v2734
        %v3171 = vpop.f32.mrf.mxu0
        %v3172 = vadd.f32 %v3003, %v3171
        %v3173 = vpop.f32.mrf.mxu0
        %v3174 = vadd.f32 %v3005, %v3173
        %3175 = vmatmul.bf16.gmra.mxu0 %v2738
        %v3176 = vpop.f32.mrf.mxu0
        %v3177 = vadd.f32 %v3008, %v3176
        %v3178 = vpop.f32.mrf.mxu0
        %v3179 = vadd.f32 %v3010, %v3178
        %3180 = vmatmul.bf16.gmra.mxu0 %v2742
        %v3181 = vpop.f32.mrf.mxu0
        %v3182 = vadd.f32 %v3013, %v3181
        %v3183 = vpop.f32.mrf.mxu0
        %v3184 = vadd.f32 %v3015, %v3183
        %3185 = vmatmul.bf16.gmra.mxu0 %v2746
        %v3186 = vpop.f32.mrf.mxu0
        %v3187 = vadd.f32 %v3018, %v3186
        %v3188 = vpop.f32.mrf.mxu0
        %v3189 = vadd.f32 %v3020, %v3188
        %3190 = vmatmul.bf16.gmra.mxu0 %v2750
        %v3191 = vpop.f32.mrf.mxu0
        %v3192 = vadd.f32 %v3023, %v3191
        %v3193 = vpop.f32.mrf.mxu0
        %v3194 = vadd.f32 %v3025, %v3193
        %3195 = vmatmul.bf16.gmra.mxu0 %v2754
        %v3196 = vpop.f32.mrf.mxu0
        %v3197 = vadd.f32 %v3028, %v3196
        %v3198 = vpop.f32.mrf.mxu0
        %v3199 = vadd.f32 %v3030, %v3198
        %3200 = vmatmul.bf16.gmra.mxu0 %v2758
        %v3201 = vpop.f32.mrf.mxu0
        %v3202 = vadd.f32 %v3033, %v3201
        %v3203 = vpop.f32.mrf.mxu0
        %v3204 = vadd.f32 %v3035, %v3203
        %3205 = vmatmul.bf16.gmra.mxu0 %v2762
        %v3206 = vpop.f32.mrf.mxu0
        %v3207 = vadd.f32 %v3038, %v3206
        %v3208 = vpop.f32.mrf.mxu0
        %v3209 = vadd.f32 %v3040, %v3208
        %3210 = vmatmul.bf16.gmra.mxu0 %v2766
        %v3211 = vpop.f32.mrf.mxu0
        %v3212 = vadd.f32 %v3043, %v3211
        %v3213 = vpop.f32.mrf.mxu0
        %v3214 = vadd.f32 %v3045, %v3213
        %3215 = vmatmul.bf16.gmra.mxu0 %v2770
        %v3216 = vpop.f32.mrf.mxu0
        %v3217 = vadd.f32 %v3048, %v3216
        %v3218 = vpop.f32.mrf.mxu0
        %v3219 = vadd.f32 %v3050, %v3218
        %3220 = vmatmul.bf16.gmra.mxu0 %v2774
        %v3221 = vpop.f32.mrf.mxu0
        %v3222 = vadd.f32 %v3053, %v3221
        %v3223 = vpop.f32.mrf.mxu0
        %v3224 = vadd.f32 %v3055, %v3223
        %3225 = vmatmul.bf16.gmra.mxu0 %v2778
        %v3226 = vpop.f32.mrf.mxu0
        %v3227 = vadd.f32 %v3058, %v3226
        %v3228 = vpop.f32.mrf.mxu0
        %v3229 = vadd.f32 %v3060, %v3228
        %3230 = vmatmul.bf16.gmra.mxu0 %v2782
        %v3231 = vpop.f32.mrf.mxu0
        %v3232 = vadd.f32 %v3063, %v3231
        %v3233 = vpop.f32.mrf.mxu0
        %v3234 = vadd.f32 %v3065, %v3233
        %3235 = vmatmul.bf16.gmra.mxu0 %v2786
        %v3236 = vpop.f32.mrf.mxu0
        %v3237 = vadd.f32 %v3068, %v3236
        %v3238 = vpop.f32.mrf.mxu0
        %v3239 = vadd.f32 %v3070, %v3238
        %3240 = vmatmul.bf16.gmra.mxu0 %v2790
        %v3241 = vpop.f32.mrf.mxu0
        %v3242 = vadd.f32 %v3073, %v3241
        %v3243 = vpop.f32.mrf.mxu0
        %v3244 = vadd.f32 %v3075, %v3243
        %3245 = vmatmul.bf16.gmra.mxu0 %v2794
        %v3246 = vpop.f32.mrf.mxu0
        %v3247 = vadd.f32 %v3078, %v3246
        %v3248 = vpop.f32.mrf.mxu0
        %v3249 = vadd.f32 %v3080, %v3248
        %3250 = vmatmul.bf16.gmra.mxu0 %v2798
        %v3251 = vpop.f32.mrf.mxu0
        %v3252 = vadd.f32 %v3083, %v3251
        %v3253 = vpop.f32.mrf.mxu0
        %v3254 = vadd.f32 %v3085, %v3253
        %3255 = vmatmul.bf16.gmra.mxu0 %v2802
        %v3256 = vpop.f32.mrf.mxu0
        %v3257 = vadd.f32 %v3088, %v3256
        %v3258 = vpop.f32.mrf.mxu0
        %v3259 = vadd.f32 %v3090, %v3258
        %3260 = vmatmul.bf16.gmra.mxu0 %v2806
        %v3261 = vpop.f32.mrf.mxu0
        %v3262 = vadd.f32 %v3093, %v3261
        %v3263 = vpop.f32.mrf.mxu0
        %v3264 = vadd.f32 %v3095, %v3263
        %3265 = vmatmul.bf16.gmra.mxu0 %v2810
        %v3266 = vpop.f32.mrf.mxu0
        %v3267 = vadd.f32 %v3098, %v3266
        %v3268 = vpop.f32.mrf.mxu0
        %v3269 = vadd.f32 %v3100, %v3268
        %3270 = vmatmul.bf16.gmra.mxu0 %v2814
        %v3271 = vpop.f32.mrf.mxu0
        %v3272 = vadd.f32 %v3103, %v3271
        %v3273 = vpop.f32.mrf.mxu0
        %v3274 = vadd.f32 %v3105, %v3273
        %3275 = vmatmul.bf16.gmra.mxu0 %v2818
        %v3276 = vpop.f32.mrf.mxu0
        %v3277 = vadd.f32 %v3108, %v3276
        %v3278 = vpop.f32.mrf.mxu0
        %v3279 = vadd.f32 %v3110, %v3278
        %3280 = vmatmul.bf16.gmra.mxu0 %v2822
        %v3281 = vpop.f32.mrf.mxu0
        %v3282 = vadd.f32 %v3113, %v3281
        %v3283 = vpop.f32.mrf.mxu0
        %v3284 = vadd.f32 %v3115, %v3283
        %3285 = vmatmul.bf16.gmra.mxu0 %v2826
        %v3286 = vpop.f32.mrf.mxu0
        %v3287 = vadd.f32 %v3118, %v3286
        %v3288 = vpop.f32.mrf.mxu0
        %v3289 = vadd.f32 %v3120, %v3288
        %3290 = vmatmul.bf16.gmra.mxu0 %v2830
        %v3291 = vpop.f32.mrf.mxu0
        %v3292 = vadd.f32 %v3123, %v3291
        %v3293 = vpop.f32.mrf.mxu0
        %v3294 = vadd.f32 %v3125, %v3293
        %3295 = vmatmul.bf16.gmra.mxu0 %v2834
        %v3296 = vpop.f32.mrf.mxu0
        %v3297 = vadd.f32 %v3128, %v3296
        %v3298 = vpop.f32.mrf.mxu0
        %v3299 = vadd.f32 %v3130, %v3298
        %3300 = vmatmul.bf16.gmra.mxu0 %v2838
        %v3301 = vpop.f32.mrf.mxu0
        %v3302 = vadd.f32 %v3133, %v3301
        %v3303 = vpop.f32.mrf.mxu0
        %v3304 = vadd.f32 %v3135, %v3303
        %3305 = vmatmul.bf16.gmra.mxu0 %v2842
        %v3306 = vpop.f32.mrf.mxu0
        %v3307 = vadd.f32 %v3138, %v3306
        %v3308 = vpop.f32.mrf.mxu0
        %v3309 = vadd.f32 %v3140, %v3308
        %3310 = vdwg.mxu0
        %3311 = vmatpush.bf16.msra.mxu0 %v560
        %3312 = vmatpush.bf16.msra.mxu0 %v559
        %3313 = vmatpush.bf16.msra.mxu0 %v558
        %3314 = vmatpush.bf16.msra.mxu0 %v557
        %3315 = vmatpush.bf16.msra.mxu0 %v556
        %3316 = vmatpush.bf16.msra.mxu0 %v555
        %3317 = vmatpush.bf16.msra.mxu0 %v554
        %3318 = vmatpush.bf16.msra.mxu0 %v553
        %3319 = vmatmul.bf16.gmra.mxu0 %v2719
        %v3320 = vpop.f32.mrf.mxu0
        %v3321 = vadd.f32 %v3152, %v3320
        %v3322 = vpop.f32.mrf.mxu0
        %v3323 = vadd.f32 %v3154, %v3322
        %3324 = vmatmul.bf16.gmra.mxu0 %v2723
        %v3325 = vpop.f32.mrf.mxu0
        %v3326 = vadd.f32 %v3157, %v3325
        %v3327 = vpop.f32.mrf.mxu0
        %v3328 = vadd.f32 %v3159, %v3327
        %3329 = vmatmul.bf16.gmra.mxu0 %v2727
        %v3330 = vpop.f32.mrf.mxu0
        %v3331 = vadd.f32 %v3162, %v3330
        %v3332 = vpop.f32.mrf.mxu0
        %v3333 = vadd.f32 %v3164, %v3332
        %3334 = vmatmul.bf16.gmra.mxu0 %v2731
        %v3335 = vpop.f32.mrf.mxu0
        %v3336 = vadd.f32 %v3167, %v3335
        %v3337 = vpop.f32.mrf.mxu0
        %v3338 = vadd.f32 %v3169, %v3337
        %3339 = vmatmul.bf16.gmra.mxu0 %v2735
        %v3340 = vpop.f32.mrf.mxu0
        %v3341 = vadd.f32 %v3172, %v3340
        %v3342 = vpop.f32.mrf.mxu0
        %v3343 = vadd.f32 %v3174, %v3342
        %3344 = vmatmul.bf16.gmra.mxu0 %v2739
        %v3345 = vpop.f32.mrf.mxu0
        %v3346 = vadd.f32 %v3177, %v3345
        %v3347 = vpop.f32.mrf.mxu0
        %v3348 = vadd.f32 %v3179, %v3347
        %3349 = vmatmul.bf16.gmra.mxu0 %v2743
        %v3350 = vpop.f32.mrf.mxu0
        %v3351 = vadd.f32 %v3182, %v3350
        %v3352 = vpop.f32.mrf.mxu0
        %v3353 = vadd.f32 %v3184, %v3352
        %3354 = vmatmul.bf16.gmra.mxu0 %v2747
        %v3355 = vpop.f32.mrf.mxu0
        %v3356 = vadd.f32 %v3187, %v3355
        %v3357 = vpop.f32.mrf.mxu0
        %v3358 = vadd.f32 %v3189, %v3357
        %3359 = vmatmul.bf16.gmra.mxu0 %v2751
        %v3360 = vpop.f32.mrf.mxu0
        %v3361 = vadd.f32 %v3192, %v3360
        %v3362 = vpop.f32.mrf.mxu0
        %v3363 = vadd.f32 %v3194, %v3362
        %3364 = vmatmul.bf16.gmra.mxu0 %v2755
        %v3365 = vpop.f32.mrf.mxu0
        %v3366 = vadd.f32 %v3197, %v3365
        %v3367 = vpop.f32.mrf.mxu0
        %v3368 = vadd.f32 %v3199, %v3367
        %3369 = vmatmul.bf16.gmra.mxu0 %v2759
        %v3370 = vpop.f32.mrf.mxu0
        %v3371 = vadd.f32 %v3202, %v3370
        %v3372 = vpop.f32.mrf.mxu0
        %v3373 = vadd.f32 %v3204, %v3372
        %3374 = vmatmul.bf16.gmra.mxu0 %v2763
        %v3375 = vpop.f32.mrf.mxu0
        %v3376 = vadd.f32 %v3207, %v3375
        %v3377 = vpop.f32.mrf.mxu0
        %v3378 = vadd.f32 %v3209, %v3377
        %3379 = vmatmul.bf16.gmra.mxu0 %v2767
        %v3380 = vpop.f32.mrf.mxu0
        %v3381 = vadd.f32 %v3212, %v3380
        %v3382 = vpop.f32.mrf.mxu0
        %v3383 = vadd.f32 %v3214, %v3382
        %3384 = vmatmul.bf16.gmra.mxu0 %v2771
        %v3385 = vpop.f32.mrf.mxu0
        %v3386 = vadd.f32 %v3217, %v3385
        %v3387 = vpop.f32.mrf.mxu0
        %v3388 = vadd.f32 %v3219, %v3387
        %3389 = vmatmul.bf16.gmra.mxu0 %v2775
        %v3390 = vpop.f32.mrf.mxu0
        %v3391 = vadd.f32 %v3222, %v3390
        %v3392 = vpop.f32.mrf.mxu0
        %v3393 = vadd.f32 %v3224, %v3392
        %3394 = vmatmul.bf16.gmra.mxu0 %v2779
        %v3395 = vpop.f32.mrf.mxu0
        %v3396 = vadd.f32 %v3227, %v3395
        %v3397 = vpop.f32.mrf.mxu0
        %v3398 = vadd.f32 %v3229, %v3397
        %3399 = vmatmul.bf16.gmra.mxu0 %v2783
        %v3400 = vpop.f32.mrf.mxu0
        %v3401 = vadd.f32 %v3232, %v3400
        %v3402 = vpop.f32.mrf.mxu0
        %v3403 = vadd.f32 %v3234, %v3402
        %3404 = vmatmul.bf16.gmra.mxu0 %v2787
        %v3405 = vpop.f32.mrf.mxu0
        %v3406 = vadd.f32 %v3237, %v3405
        %v3407 = vpop.f32.mrf.mxu0
        %v3408 = vadd.f32 %v3239, %v3407
        %3409 = vmatmul.bf16.gmra.mxu0 %v2791
        %v3410 = vpop.f32.mrf.mxu0
        %v3411 = vadd.f32 %v3242, %v3410
        %v3412 = vpop.f32.mrf.mxu0
        %v3413 = vadd.f32 %v3244, %v3412
        %3414 = vmatmul.bf16.gmra.mxu0 %v2795
        %v3415 = vpop.f32.mrf.mxu0
        %v3416 = vadd.f32 %v3247, %v3415
        %v3417 = vpop.f32.mrf.mxu0
        %v3418 = vadd.f32 %v3249, %v3417
        %3419 = vmatmul.bf16.gmra.mxu0 %v2799
        %v3420 = vpop.f32.mrf.mxu0
        %v3421 = vadd.f32 %v3252, %v3420
        %v3422 = vpop.f32.mrf.mxu0
        %v3423 = vadd.f32 %v3254, %v3422
        %3424 = vmatmul.bf16.gmra.mxu0 %v2803
        %v3425 = vpop.f32.mrf.mxu0
        %v3426 = vadd.f32 %v3257, %v3425
        %v3427 = vpop.f32.mrf.mxu0
        %v3428 = vadd.f32 %v3259, %v3427
        %3429 = vmatmul.bf16.gmra.mxu0 %v2807
        %v3430 = vpop.f32.mrf.mxu0
        %v3431 = vadd.f32 %v3262, %v3430
        %v3432 = vpop.f32.mrf.mxu0
        %v3433 = vadd.f32 %v3264, %v3432
        %3434 = vmatmul.bf16.gmra.mxu0 %v2811
        %v3435 = vpop.f32.mrf.mxu0
        %v3436 = vadd.f32 %v3267, %v3435
        %v3437 = vpop.f32.mrf.mxu0
        %v3438 = vadd.f32 %v3269, %v3437
        %3439 = vmatmul.bf16.gmra.mxu0 %v2815
        %v3440 = vpop.f32.mrf.mxu0
        %v3441 = vadd.f32 %v3272, %v3440
        %v3442 = vpop.f32.mrf.mxu0
        %v3443 = vadd.f32 %v3274, %v3442
        %3444 = vmatmul.bf16.gmra.mxu0 %v2819
        %v3445 = vpop.f32.mrf.mxu0
        %v3446 = vadd.f32 %v3277, %v3445
        %v3447 = vpop.f32.mrf.mxu0
        %v3448 = vadd.f32 %v3279, %v3447
        %3449 = vmatmul.bf16.gmra.mxu0 %v2823
        %v3450 = vpop.f32.mrf.mxu0
        %v3451 = vadd.f32 %v3282, %v3450
        %v3452 = vpop.f32.mrf.mxu0
        %v3453 = vadd.f32 %v3284, %v3452
        %3454 = vmatmul.bf16.gmra.mxu0 %v2827
        %v3455 = vpop.f32.mrf.mxu0
        %v3456 = vadd.f32 %v3287, %v3455
        %v3457 = vpop.f32.mrf.mxu0
        %v3458 = vadd.f32 %v3289, %v3457
        %3459 = vmatmul.bf16.gmra.mxu0 %v2831
        %v3460 = vpop.f32.mrf.mxu0
        %v3461 = vadd.f32 %v3292, %v3460
        %v3462 = vpop.f32.mrf.mxu0
        %v3463 = vadd.f32 %v3294, %v3462
        %3464 = vmatmul.bf16.gmra.mxu0 %v2835
        %v3465 = vpop.f32.mrf.mxu0
        %v3466 = vadd.f32 %v3297, %v3465
        %v3467 = vpop.f32.mrf.mxu0
        %v3468 = vadd.f32 %v3299, %v3467
        %3469 = vmatmul.bf16.gmra.mxu0 %v2839
        %v3470 = vpop.f32.mrf.mxu0
        %v3471 = vadd.f32 %v3302, %v3470
        %v3472 = vpop.f32.mrf.mxu0
        %v3473 = vadd.f32 %v3304, %v3472
        %3474 = vmatmul.bf16.gmra.mxu0 %v2843
        %v3475 = vpop.f32.mrf.mxu0
        %v3476 = vadd.f32 %v3307, %v3475
        %v3477 = vpop.f32.mrf.mxu0
        %v3478 = vadd.f32 %v3309, %v3477
        %3479 = vdwg.mxu0
        %3480 = vmatpush.bf16.msra.mxu0 %v568
        %3481 = vmatpush.bf16.msra.mxu0 %v567
        %3482 = vmatpush.bf16.msra.mxu0 %v566
        %3483 = vmatpush.bf16.msra.mxu0 %v565
        %3484 = vmatpush.bf16.msra.mxu0 %v564
        %3485 = vmatpush.bf16.msra.mxu0 %v563
        %3486 = vmatpush.bf16.msra.mxu0 %v562
        %3487 = vmatpush.bf16.msra.mxu0 %v561
        %3488 = vmatmul.bf16.gmra.mxu0 %v2720
        %v3489 = vpop.f32.mrf.mxu0
        %v3490 = vadd.f32 %v3321, %v3489
        %v3491 = vpop.f32.mrf.mxu0
        %v3492 = vadd.f32 %v3323, %v3491
        %3493 = vmatmul.bf16.gmra.mxu0 %v2724
        %v3494 = vpop.f32.mrf.mxu0
        %v3495 = vadd.f32 %v3326, %v3494
        %v3496 = vpop.f32.mrf.mxu0
        %v3497 = vadd.f32 %v3328, %v3496
        %3498 = vmatmul.bf16.gmra.mxu0 %v2728
        %v3499 = vpop.f32.mrf.mxu0
        %v3500 = vadd.f32 %v3331, %v3499
        %v3501 = vpop.f32.mrf.mxu0
        %v3502 = vadd.f32 %v3333, %v3501
        %3503 = vmatmul.bf16.gmra.mxu0 %v2732
        %v3504 = vpop.f32.mrf.mxu0
        %v3505 = vadd.f32 %v3336, %v3504
        %v3506 = vpop.f32.mrf.mxu0
        %v3507 = vadd.f32 %v3338, %v3506
        %3508 = vmatmul.bf16.gmra.mxu0 %v2736
        %v3509 = vpop.f32.mrf.mxu0
        %v3510 = vadd.f32 %v3341, %v3509
        %v3511 = vpop.f32.mrf.mxu0
        %v3512 = vadd.f32 %v3343, %v3511
        %3513 = vmatmul.bf16.gmra.mxu0 %v2740
        %v3514 = vpop.f32.mrf.mxu0
        %v3515 = vadd.f32 %v3346, %v3514
        %v3516 = vpop.f32.mrf.mxu0
        %v3517 = vadd.f32 %v3348, %v3516
        %3518 = vmatmul.bf16.gmra.mxu0 %v2744
        %v3519 = vpop.f32.mrf.mxu0
        %v3520 = vadd.f32 %v3351, %v3519
        %v3521 = vpop.f32.mrf.mxu0
        %v3522 = vadd.f32 %v3353, %v3521
        %3523 = vmatmul.bf16.gmra.mxu0 %v2748
        %v3524 = vpop.f32.mrf.mxu0
        %v3525 = vadd.f32 %v3356, %v3524
        %v3526 = vpop.f32.mrf.mxu0
        %v3527 = vadd.f32 %v3358, %v3526
        %3528 = vmatmul.bf16.gmra.mxu0 %v2752
        %v3529 = vpop.f32.mrf.mxu0
        %v3530 = vadd.f32 %v3361, %v3529
        %v3531 = vpop.f32.mrf.mxu0
        %v3532 = vadd.f32 %v3363, %v3531
        %3533 = vmatmul.bf16.gmra.mxu0 %v2756
        %v3534 = vpop.f32.mrf.mxu0
        %v3535 = vadd.f32 %v3366, %v3534
        %v3536 = vpop.f32.mrf.mxu0
        %v3537 = vadd.f32 %v3368, %v3536
        %3538 = vmatmul.bf16.gmra.mxu0 %v2760
        %v3539 = vpop.f32.mrf.mxu0
        %v3540 = vadd.f32 %v3371, %v3539
        %v3541 = vpop.f32.mrf.mxu0
        %v3542 = vadd.f32 %v3373, %v3541
        %3543 = vmatmul.bf16.gmra.mxu0 %v2764
        %v3544 = vpop.f32.mrf.mxu0
        %v3545 = vadd.f32 %v3376, %v3544
        %v3546 = vpop.f32.mrf.mxu0
        %v3547 = vadd.f32 %v3378, %v3546
        %3548 = vmatmul.bf16.gmra.mxu0 %v2768
        %v3549 = vpop.f32.mrf.mxu0
        %v3550 = vadd.f32 %v3381, %v3549
        %v3551 = vpop.f32.mrf.mxu0
        %v3552 = vadd.f32 %v3383, %v3551
        %3553 = vmatmul.bf16.gmra.mxu0 %v2772
        %v3554 = vpop.f32.mrf.mxu0
        %v3555 = vadd.f32 %v3386, %v3554
        %v3556 = vpop.f32.mrf.mxu0
        %v3557 = vadd.f32 %v3388, %v3556
        %3558 = vmatmul.bf16.gmra.mxu0 %v2776
        %v3559 = vpop.f32.mrf.mxu0
        %v3560 = vadd.f32 %v3391, %v3559
        %v3561 = vpop.f32.mrf.mxu0
        %v3562 = vadd.f32 %v3393, %v3561
        %3563 = vmatmul.bf16.gmra.mxu0 %v2780
        %v3564 = vpop.f32.mrf.mxu0
        %v3565 = vadd.f32 %v3396, %v3564
        %v3566 = vpop.f32.mrf.mxu0
        %v3567 = vadd.f32 %v3398, %v3566
        %3568 = vmatmul.bf16.gmra.mxu0 %v2784
        %v3569 = vpop.f32.mrf.mxu0
        %v3570 = vadd.f32 %v3401, %v3569
        %v3571 = vpop.f32.mrf.mxu0
        %v3572 = vadd.f32 %v3403, %v3571
        %3573 = vmatmul.bf16.gmra.mxu0 %v2788
        %v3574 = vpop.f32.mrf.mxu0
        %v3575 = vadd.f32 %v3406, %v3574
        %v3576 = vpop.f32.mrf.mxu0
        %v3577 = vadd.f32 %v3408, %v3576
        %3578 = vmatmul.bf16.gmra.mxu0 %v2792
        %v3579 = vpop.f32.mrf.mxu0
        %v3580 = vadd.f32 %v3411, %v3579
        %v3581 = vpop.f32.mrf.mxu0
        %v3582 = vadd.f32 %v3413, %v3581
        %3583 = vmatmul.bf16.gmra.mxu0 %v2796
        %v3584 = vpop.f32.mrf.mxu0
        %v3585 = vadd.f32 %v3416, %v3584
        %v3586 = vpop.f32.mrf.mxu0
        %v3587 = vadd.f32 %v3418, %v3586
        %3588 = vmatmul.bf16.gmra.mxu0 %v2800
        %v3589 = vpop.f32.mrf.mxu0
        %v3590 = vadd.f32 %v3421, %v3589
        %v3591 = vpop.f32.mrf.mxu0
        %v3592 = vadd.f32 %v3423, %v3591
        %3593 = vmatmul.bf16.gmra.mxu0 %v2804
        %v3594 = vpop.f32.mrf.mxu0
        %v3595 = vadd.f32 %v3426, %v3594
        %v3596 = vpop.f32.mrf.mxu0
        %v3597 = vadd.f32 %v3428, %v3596
        %3598 = vmatmul.bf16.gmra.mxu0 %v2808
        %v3599 = vpop.f32.mrf.mxu0
        %v3600 = vadd.f32 %v3431, %v3599
        %v3601 = vpop.f32.mrf.mxu0
        %v3602 = vadd.f32 %v3433, %v3601
        %3603 = vmatmul.bf16.gmra.mxu0 %v2812
        %v3604 = vpop.f32.mrf.mxu0
        %v3605 = vadd.f32 %v3436, %v3604
        %v3606 = vpop.f32.mrf.mxu0
        %v3607 = vadd.f32 %v3438, %v3606
        %3608 = vmatmul.bf16.gmra.mxu0 %v2816
        %v3609 = vpop.f32.mrf.mxu0
        %v3610 = vadd.f32 %v3441, %v3609
        %v3611 = vpop.f32.mrf.mxu0
        %v3612 = vadd.f32 %v3443, %v3611
        %3613 = vmatmul.bf16.gmra.mxu0 %v2820
        %v3614 = vpop.f32.mrf.mxu0
        %v3615 = vadd.f32 %v3446, %v3614
        %v3616 = vpop.f32.mrf.mxu0
        %v3617 = vadd.f32 %v3448, %v3616
        %3618 = vmatmul.bf16.gmra.mxu0 %v2824
        %v3619 = vpop.f32.mrf.mxu0
        %v3620 = vadd.f32 %v3451, %v3619
        %v3621 = vpop.f32.mrf.mxu0
        %v3622 = vadd.f32 %v3453, %v3621
        %3623 = vmatmul.bf16.gmra.mxu0 %v2828
        %v3624 = vpop.f32.mrf.mxu0
        %v3625 = vadd.f32 %v3456, %v3624
        %v3626 = vpop.f32.mrf.mxu0
        %v3627 = vadd.f32 %v3458, %v3626
        %3628 = vmatmul.bf16.gmra.mxu0 %v2832
        %v3629 = vpop.f32.mrf.mxu0
        %v3630 = vadd.f32 %v3461, %v3629
        %v3631 = vpop.f32.mrf.mxu0
        %v3632 = vadd.f32 %v3463, %v3631
        %3633 = vmatmul.bf16.gmra.mxu0 %v2836
        %v3634 = vpop.f32.mrf.mxu0
        %v3635 = vadd.f32 %v3466, %v3634
        %v3636 = vpop.f32.mrf.mxu0
        %v3637 = vadd.f32 %v3468, %v3636
        %3638 = vmatmul.bf16.gmra.mxu0 %v2840
        %v3639 = vpop.f32.mrf.mxu0
        %v3640 = vadd.f32 %v3471, %v3639
        %v3641 = vpop.f32.mrf.mxu0
        %v3642 = vadd.f32 %v3473, %v3641
        %3643 = vmatmul.bf16.gmra.mxu0 %v2844
        %v3644 = vpop.f32.mrf.mxu0
        %v3645 = vadd.f32 %v3476, %v3644
        %v3646 = vpop.f32.mrf.mxu0
        %v3647 = vadd.f32 %v3478, %v3646
        %3648 = vdwg.mxu0
        %v3649 = vld [vmem:[%s5] sm:$0xff]
        %v3650 = vld [vmem:[%s5 + $0x8] sm:$0xff]
        %v3651 = vld [vmem:[%s5 + $0x10] sm:$0xff]
        %v3652 = vld [vmem:[%s5 + $0x18] sm:$0xff]
        %v3653 = vld [vmem:[%s5 + $0x20] sm:$0xff]
        %v3654 = vld [vmem:[%s5 + $0x28] sm:$0xff]
        %v3655 = vld [vmem:[%s5 + $0x30] sm:$0xff]
        %v3656 = vld [vmem:[%s5 + $0x38] sm:$0xff]
        %v3657 = vld [vmem:[%s5 + $0x40] sm:$0xff]
        %v3658 = vld [vmem:[%s5 + $0x48] sm:$0xff]
        %v3659 = vld [vmem:[%s5 + $0x50] sm:$0xff]
        %v3660 = vld [vmem:[%s5 + $0x58] sm:$0xff]
        %v3661 = vld [vmem:[%s5 + $0x60] sm:$0xff]
        %v3662 = vld [vmem:[%s5 + $0x68] sm:$0xff]
        %v3663 = vld [vmem:[%s5 + $0x70] sm:$0xff]
        %v3664 = vld [vmem:[%s5 + $0x78] sm:$0xff]
        %v3665 = vld [vmem:[%s5 + $0x80] sm:$0xff]
        %v3666 = vld [vmem:[%s5 + $0x88] sm:$0xff]
        %v3667 = vld [vmem:[%s5 + $0x90] sm:$0xff]
        %v3668 = vld [vmem:[%s5 + $0x98] sm:$0xff]
        %v3669 = vld [vmem:[%s5 + $0xa0] sm:$0xff]
        %v3670 = vld [vmem:[%s5 + $0xa8] sm:$0xff]
        %v3671 = vld [vmem:[%s5 + $0xb0] sm:$0xff]
        %v3672 = vld [vmem:[%s5 + $0xb8] sm:$0xff]
        %v3673 = vld [vmem:[%s5 + $0xc0] sm:$0xff]
        %v3674 = vld [vmem:[%s5 + $0xc8] sm:$0xff]
        %v3675 = vld [vmem:[%s5 + $0xd0] sm:$0xff]
        %v3676 = vld [vmem:[%s5 + $0xd8] sm:$0xff]
        %v3677 = vld [vmem:[%s5 + $0xe0] sm:$0xff]
        %v3678 = vld [vmem:[%s5 + $0xe8] sm:$0xff]
        %v3679 = vld [vmem:[%s5 + $0xf0] sm:$0xff]
        %v3680 = vld [vmem:[%s5 + $0xf8] sm:$0xff]
        %v3681 = vld [vmem:[%s5 + $0x100] sm:$0xff]
        %v3682 = vld [vmem:[%s5 + $0x108] sm:$0xff]
        %v3683 = vld [vmem:[%s5 + $0x110] sm:$0xff]
        %v3684 = vld [vmem:[%s5 + $0x118] sm:$0xff]
        %v3685 = vld [vmem:[%s5 + $0x120] sm:$0xff]
        %v3686 = vld [vmem:[%s5 + $0x128] sm:$0xff]
        %v3687 = vld [vmem:[%s5 + $0x130] sm:$0xff]
        %v3688 = vld [vmem:[%s5 + $0x138] sm:$0xff]
        %v3689 = vld [vmem:[%s5 + $0x140] sm:$0xff]
        %v3690 = vld [vmem:[%s5 + $0x148] sm:$0xff]
        %v3691 = vld [vmem:[%s5 + $0x150] sm:$0xff]
        %v3692 = vld [vmem:[%s5 + $0x158] sm:$0xff]
        %v3693 = vld [vmem:[%s5 + $0x160] sm:$0xff]
        %v3694 = vld [vmem:[%s5 + $0x168] sm:$0xff]
        %v3695 = vld [vmem:[%s5 + $0x170] sm:$0xff]
        %v3696 = vld [vmem:[%s5 + $0x178] sm:$0xff]
        %v3697 = vld [vmem:[%s5 + $0x180] sm:$0xff]
        %v3698 = vld [vmem:[%s5 + $0x188] sm:$0xff]
        %v3699 = vld [vmem:[%s5 + $0x190] sm:$0xff]
        %v3700 = vld [vmem:[%s5 + $0x198] sm:$0xff]
        %v3701 = vld [vmem:[%s5 + $0x1a0] sm:$0xff]
        %v3702 = vld [vmem:[%s5 + $0x1a8] sm:$0xff]
        %v3703 = vld [vmem:[%s5 + $0x1b0] sm:$0xff]
        %v3704 = vld [vmem:[%s5 + $0x1b8] sm:$0xff]
        %v3705 = vld [vmem:[%s5 + $0x1c0] sm:$0xff]
        %v3706 = vld [vmem:[%s5 + $0x1c8] sm:$0xff]
        %v3707 = vld [vmem:[%s5 + $0x1d0] sm:$0xff]
        %v3708 = vld [vmem:[%s5 + $0x1d8] sm:$0xff]
        %v3709 = vld [vmem:[%s5 + $0x1e0] sm:$0xff]
        %v3710 = vld [vmem:[%s5 + $0x1e8] sm:$0xff]
        %v3711 = vld [vmem:[%s5 + $0x1f0] sm:$0xff]
        %v3712 = vld [vmem:[%s5 + $0x1f8] sm:$0xff]
        %v3713 = vld [vmem:[%s5 + $0x200] sm:$0xff]
        %v3714 = vld [vmem:[%s5 + $0x208] sm:$0xff]
        %v3715 = vld [vmem:[%s5 + $0x210] sm:$0xff]
        %v3716 = vld [vmem:[%s5 + $0x218] sm:$0xff]
        %v3717 = vld [vmem:[%s5 + $0x220] sm:$0xff]
        %v3718 = vld [vmem:[%s5 + $0x228] sm:$0xff]
        %v3719 = vld [vmem:[%s5 + $0x230] sm:$0xff]
        %v3720 = vld [vmem:[%s5 + $0x238] sm:$0xff]
        %v3721 = vld [vmem:[%s5 + $0x240] sm:$0xff]
        %v3722 = vld [vmem:[%s5 + $0x248] sm:$0xff]
        %v3723 = vld [vmem:[%s5 + $0x250] sm:$0xff]
        %v3724 = vld [vmem:[%s5 + $0x258] sm:$0xff]
        %v3725 = vld [vmem:[%s5 + $0x260] sm:$0xff]
        %v3726 = vld [vmem:[%s5 + $0x268] sm:$0xff]
        %v3727 = vld [vmem:[%s5 + $0x270] sm:$0xff]
        %v3728 = vld [vmem:[%s5 + $0x278] sm:$0xff]
        %v3729 = vld [vmem:[%s5 + $0x280] sm:$0xff]
        %v3730 = vld [vmem:[%s5 + $0x288] sm:$0xff]
        %v3731 = vld [vmem:[%s5 + $0x290] sm:$0xff]
        %v3732 = vld [vmem:[%s5 + $0x298] sm:$0xff]
        %v3733 = vld [vmem:[%s5 + $0x2a0] sm:$0xff]
        %v3734 = vld [vmem:[%s5 + $0x2a8] sm:$0xff]
        %v3735 = vld [vmem:[%s5 + $0x2b0] sm:$0xff]
        %v3736 = vld [vmem:[%s5 + $0x2b8] sm:$0xff]
        %v3737 = vld [vmem:[%s5 + $0x2c0] sm:$0xff]
        %v3738 = vld [vmem:[%s5 + $0x2c8] sm:$0xff]
        %v3739 = vld [vmem:[%s5 + $0x2d0] sm:$0xff]
        %v3740 = vld [vmem:[%s5 + $0x2d8] sm:$0xff]
        %v3741 = vld [vmem:[%s5 + $0x2e0] sm:$0xff]
        %v3742 = vld [vmem:[%s5 + $0x2e8] sm:$0xff]
        %v3743 = vld [vmem:[%s5 + $0x2f0] sm:$0xff]
        %v3744 = vld [vmem:[%s5 + $0x2f8] sm:$0xff]
        %v3745 = vld [vmem:[%s5 + $0x300] sm:$0xff]
        %v3746 = vld [vmem:[%s5 + $0x308] sm:$0xff]
        %v3747 = vld [vmem:[%s5 + $0x310] sm:$0xff]
        %v3748 = vld [vmem:[%s5 + $0x318] sm:$0xff]
        %v3749 = vld [vmem:[%s5 + $0x320] sm:$0xff]
        %v3750 = vld [vmem:[%s5 + $0x328] sm:$0xff]
        %v3751 = vld [vmem:[%s5 + $0x330] sm:$0xff]
        %v3752 = vld [vmem:[%s5 + $0x338] sm:$0xff]
        %v3753 = vld [vmem:[%s5 + $0x340] sm:$0xff]
        %v3754 = vld [vmem:[%s5 + $0x348] sm:$0xff]
        %v3755 = vld [vmem:[%s5 + $0x350] sm:$0xff]
        %v3756 = vld [vmem:[%s5 + $0x358] sm:$0xff]
        %v3757 = vld [vmem:[%s5 + $0x360] sm:$0xff]
        %v3758 = vld [vmem:[%s5 + $0x368] sm:$0xff]
        %v3759 = vld [vmem:[%s5 + $0x370] sm:$0xff]
        %v3760 = vld [vmem:[%s5 + $0x378] sm:$0xff]
        %v3761 = vld [vmem:[%s5 + $0x380] sm:$0xff]
        %v3762 = vld [vmem:[%s5 + $0x388] sm:$0xff]
        %v3763 = vld [vmem:[%s5 + $0x390] sm:$0xff]
        %v3764 = vld [vmem:[%s5 + $0x398] sm:$0xff]
        %v3765 = vld [vmem:[%s5 + $0x3a0] sm:$0xff]
        %v3766 = vld [vmem:[%s5 + $0x3a8] sm:$0xff]
        %v3767 = vld [vmem:[%s5 + $0x3b0] sm:$0xff]
        %v3768 = vld [vmem:[%s5 + $0x3b8] sm:$0xff]
        %v3769 = vld [vmem:[%s5 + $0x3c0] sm:$0xff]
        %v3770 = vld [vmem:[%s5 + $0x3c8] sm:$0xff]
        %v3771 = vld [vmem:[%s5 + $0x3d0] sm:$0xff]
        %v3772 = vld [vmem:[%s5 + $0x3d8] sm:$0xff]
        %v3773 = vld [vmem:[%s5 + $0x3e0] sm:$0xff]
        %v3774 = vld [vmem:[%s5 + $0x3e8] sm:$0xff]
        %v3775 = vld [vmem:[%s5 + $0x3f0] sm:$0xff]
        %v3776 = vld [vmem:[%s5 + $0x3f8] sm:$0xff]
        %v3905 = vunpack.c.l.b16 %v3649
        %v3906 = vunpack.c.h.b16 %v3649
        %v3907 = vunpack.c.l.b16 %v3650
        %v3908 = vunpack.c.h.b16 %v3650
        %v3909 = vunpack.c.l.b16 %v3651
        %v3910 = vunpack.c.h.b16 %v3651
        %v3911 = vunpack.c.l.b16 %v3652
        %v3912 = vunpack.c.h.b16 %v3652
        %v3913 = vunpack.c.l.b16 %v3653
        %v3914 = vunpack.c.h.b16 %v3653
        %v3915 = vunpack.c.l.b16 %v3654
        %v3916 = vunpack.c.h.b16 %v3654
        %v3917 = vunpack.c.l.b16 %v3655
        %v3918 = vunpack.c.h.b16 %v3655
        %v3919 = vunpack.c.l.b16 %v3656
        %v3920 = vunpack.c.h.b16 %v3656
        %v3921 = vunpack.c.l.b16 %v3657
        %v3922 = vunpack.c.h.b16 %v3657
        %v3923 = vunpack.c.l.b16 %v3658
        %v3924 = vunpack.c.h.b16 %v3658
        %v3925 = vunpack.c.l.b16 %v3659
        %v3926 = vunpack.c.h.b16 %v3659
        %v3927 = vunpack.c.l.b16 %v3660
        %v3928 = vunpack.c.h.b16 %v3660
        %v3929 = vunpack.c.l.b16 %v3661
        %v3930 = vunpack.c.h.b16 %v3661
        %v3931 = vunpack.c.l.b16 %v3662
        %v3932 = vunpack.c.h.b16 %v3662
        %v3933 = vunpack.c.l.b16 %v3663
        %v3934 = vunpack.c.h.b16 %v3663
        %v3935 = vunpack.c.l.b16 %v3664
        %v3936 = vunpack.c.h.b16 %v3664
        %v3937 = vunpack.c.l.b16 %v3665
        %v3938 = vunpack.c.h.b16 %v3665
        %v3939 = vunpack.c.l.b16 %v3666
        %v3940 = vunpack.c.h.b16 %v3666
        %v3941 = vunpack.c.l.b16 %v3667
        %v3942 = vunpack.c.h.b16 %v3667
        %v3943 = vunpack.c.l.b16 %v3668
        %v3944 = vunpack.c.h.b16 %v3668
        %v3945 = vunpack.c.l.b16 %v3669
        %v3946 = vunpack.c.h.b16 %v3669
        %v3947 = vunpack.c.l.b16 %v3670
        %v3948 = vunpack.c.h.b16 %v3670
        %v3949 = vunpack.c.l.b16 %v3671
        %v3950 = vunpack.c.h.b16 %v3671
        %v3951 = vunpack.c.l.b16 %v3672
        %v3952 = vunpack.c.h.b16 %v3672
        %v3953 = vunpack.c.l.b16 %v3673
        %v3954 = vunpack.c.h.b16 %v3673
        %v3955 = vunpack.c.l.b16 %v3674
        %v3956 = vunpack.c.h.b16 %v3674
        %v3957 = vunpack.c.l.b16 %v3675
        %v3958 = vunpack.c.h.b16 %v3675
        %v3959 = vunpack.c.l.b16 %v3676
        %v3960 = vunpack.c.h.b16 %v3676
        %v3961 = vunpack.c.l.b16 %v3677
        %v3962 = vunpack.c.h.b16 %v3677
        %v3963 = vunpack.c.l.b16 %v3678
        %v3964 = vunpack.c.h.b16 %v3678
        %v3965 = vunpack.c.l.b16 %v3679
        %v3966 = vunpack.c.h.b16 %v3679
        %v3967 = vunpack.c.l.b16 %v3680
        %v3968 = vunpack.c.h.b16 %v3680
        %v3969 = vunpack.c.l.b16 %v3681
        %v3970 = vunpack.c.h.b16 %v3681
        %v3971 = vunpack.c.l.b16 %v3682
        %v3972 = vunpack.c.h.b16 %v3682
        %v3973 = vunpack.c.l.b16 %v3683
        %v3974 = vunpack.c.h.b16 %v3683
        %v3975 = vunpack.c.l.b16 %v3684
        %v3976 = vunpack.c.h.b16 %v3684
        %v3977 = vunpack.c.l.b16 %v3685
        %v3978 = vunpack.c.h.b16 %v3685
        %v3979 = vunpack.c.l.b16 %v3686
        %v3980 = vunpack.c.h.b16 %v3686
        %v3981 = vunpack.c.l.b16 %v3687
        %v3982 = vunpack.c.h.b16 %v3687
        %v3983 = vunpack.c.l.b16 %v3688
        %v3984 = vunpack.c.h.b16 %v3688
        %v3985 = vunpack.c.l.b16 %v3689
        %v3986 = vunpack.c.h.b16 %v3689
        %v3987 = vunpack.c.l.b16 %v3690
        %v3988 = vunpack.c.h.b16 %v3690
        %v3989 = vunpack.c.l.b16 %v3691
        %v3990 = vunpack.c.h.b16 %v3691
        %v3991 = vunpack.c.l.b16 %v3692
        %v3992 = vunpack.c.h.b16 %v3692
        %v3993 = vunpack.c.l.b16 %v3693
        %v3994 = vunpack.c.h.b16 %v3693
        %v3995 = vunpack.c.l.b16 %v3694
        %v3996 = vunpack.c.h.b16 %v3694
        %v3997 = vunpack.c.l.b16 %v3695
        %v3998 = vunpack.c.h.b16 %v3695
        %v3999 = vunpack.c.l.b16 %v3696
        %v4000 = vunpack.c.h.b16 %v3696
        %v4001 = vunpack.c.l.b16 %v3697
        %v4002 = vunpack.c.h.b16 %v3697
        %v4003 = vunpack.c.l.b16 %v3698
        %v4004 = vunpack.c.h.b16 %v3698
        %v4005 = vunpack.c.l.b16 %v3699
        %v4006 = vunpack.c.h.b16 %v3699
        %v4007 = vunpack.c.l.b16 %v3700
        %v4008 = vunpack.c.h.b16 %v3700
        %v4009 = vunpack.c.l.b16 %v3701
        %v4010 = vunpack.c.h.b16 %v3701
        %v4011 = vunpack.c.l.b16 %v3702
        %v4012 = vunpack.c.h.b16 %v3702
        %v4013 = vunpack.c.l.b16 %v3703
        %v4014 = vunpack.c.h.b16 %v3703
        %v4015 = vunpack.c.l.b16 %v3704
        %v4016 = vunpack.c.h.b16 %v3704
        %v4017 = vunpack.c.l.b16 %v3705
        %v4018 = vunpack.c.h.b16 %v3705
        %v4019 = vunpack.c.l.b16 %v3706
        %v4020 = vunpack.c.h.b16 %v3706
        %v4021 = vunpack.c.l.b16 %v3707
        %v4022 = vunpack.c.h.b16 %v3707
        %v4023 = vunpack.c.l.b16 %v3708
        %v4024 = vunpack.c.h.b16 %v3708
        %v4025 = vunpack.c.l.b16 %v3709
        %v4026 = vunpack.c.h.b16 %v3709
        %v4027 = vunpack.c.l.b16 %v3710
        %v4028 = vunpack.c.h.b16 %v3710
        %v4029 = vunpack.c.l.b16 %v3711
        %v4030 = vunpack.c.h.b16 %v3711
        %v4031 = vunpack.c.l.b16 %v3712
        %v4032 = vunpack.c.h.b16 %v3712
        %v4033 = vunpack.c.l.b16 %v3713
        %v4034 = vunpack.c.h.b16 %v3713
        %v4035 = vunpack.c.l.b16 %v3714
        %v4036 = vunpack.c.h.b16 %v3714
        %v4037 = vunpack.c.l.b16 %v3715
        %v4038 = vunpack.c.h.b16 %v3715
        %v4039 = vunpack.c.l.b16 %v3716
        %v4040 = vunpack.c.h.b16 %v3716
        %v4041 = vunpack.c.l.b16 %v3717
        %v4042 = vunpack.c.h.b16 %v3717
        %v4043 = vunpack.c.l.b16 %v3718
        %v4044 = vunpack.c.h.b16 %v3718
        %v4045 = vunpack.c.l.b16 %v3719
        %v4046 = vunpack.c.h.b16 %v3719
        %v4047 = vunpack.c.l.b16 %v3720
        %v4048 = vunpack.c.h.b16 %v3720
        %v4049 = vunpack.c.l.b16 %v3721
        %v4050 = vunpack.c.h.b16 %v3721
        %v4051 = vunpack.c.l.b16 %v3722
        %v4052 = vunpack.c.h.b16 %v3722
        %v4053 = vunpack.c.l.b16 %v3723
        %v4054 = vunpack.c.h.b16 %v3723
        %v4055 = vunpack.c.l.b16 %v3724
        %v4056 = vunpack.c.h.b16 %v3724
        %v4057 = vunpack.c.l.b16 %v3725
        %v4058 = vunpack.c.h.b16 %v3725
        %v4059 = vunpack.c.l.b16 %v3726
        %v4060 = vunpack.c.h.b16 %v3726
        %v4061 = vunpack.c.l.b16 %v3727
        %v4062 = vunpack.c.h.b16 %v3727
        %v4063 = vunpack.c.l.b16 %v3728
        %v4064 = vunpack.c.h.b16 %v3728
        %v4065 = vunpack.c.l.b16 %v3729
        %v4066 = vunpack.c.h.b16 %v3729
        %v4067 = vunpack.c.l.b16 %v3730
        %v4068 = vunpack.c.h.b16 %v3730
        %v4069 = vunpack.c.l.b16 %v3731
        %v4070 = vunpack.c.h.b16 %v3731
        %v4071 = vunpack.c.l.b16 %v3732
        %v4072 = vunpack.c.h.b16 %v3732
        %v4073 = vunpack.c.l.b16 %v3733
        %v4074 = vunpack.c.h.b16 %v3733
        %v4075 = vunpack.c.l.b16 %v3734
        %v4076 = vunpack.c.h.b16 %v3734
        %v4077 = vunpack.c.l.b16 %v3735
        %v4078 = vunpack.c.h.b16 %v3735
        %v4079 = vunpack.c.l.b16 %v3736
        %v4080 = vunpack.c.h.b16 %v3736
        %v4081 = vunpack.c.l.b16 %v3737
        %v4082 = vunpack.c.h.b16 %v3737
        %v4083 = vunpack.c.l.b16 %v3738
        %v4084 = vunpack.c.h.b16 %v3738
        %v4085 = vunpack.c.l.b16 %v3739
        %v4086 = vunpack.c.h.b16 %v3739
        %v4087 = vunpack.c.l.b16 %v3740
        %v4088 = vunpack.c.h.b16 %v3740
        %v4089 = vunpack.c.l.b16 %v3741
        %v4090 = vunpack.c.h.b16 %v3741
        %v4091 = vunpack.c.l.b16 %v3742
        %v4092 = vunpack.c.h.b16 %v3742
        %v4093 = vunpack.c.l.b16 %v3743
        %v4094 = vunpack.c.h.b16 %v3743
        %v4095 = vunpack.c.l.b16 %v3744
        %v4096 = vunpack.c.h.b16 %v3744
        %v4097 = vunpack.c.l.b16 %v3745
        %v4098 = vunpack.c.h.b16 %v3745
        %v4099 = vunpack.c.l.b16 %v3746
        %v4100 = vunpack.c.h.b16 %v3746
        %v4101 = vunpack.c.l.b16 %v3747
        %v4102 = vunpack.c.h.b16 %v3747
        %v4103 = vunpack.c.l.b16 %v3748
        %v4104 = vunpack.c.h.b16 %v3748
        %v4105 = vunpack.c.l.b16 %v3749
        %v4106 = vunpack.c.h.b16 %v3749
        %v4107 = vunpack.c.l.b16 %v3750
        %v4108 = vunpack.c.h.b16 %v3750
        %v4109 = vunpack.c.l.b16 %v3751
        %v4110 = vunpack.c.h.b16 %v3751
        %v4111 = vunpack.c.l.b16 %v3752
        %v4112 = vunpack.c.h.b16 %v3752
        %v4113 = vunpack.c.l.b16 %v3753
        %v4114 = vunpack.c.h.b16 %v3753
        %v4115 = vunpack.c.l.b16 %v3754
        %v4116 = vunpack.c.h.b16 %v3754
        %v4117 = vunpack.c.l.b16 %v3755
        %v4118 = vunpack.c.h.b16 %v3755
        %v4119 = vunpack.c.l.b16 %v3756
        %v4120 = vunpack.c.h.b16 %v3756
        %v4121 = vunpack.c.l.b16 %v3757
        %v4122 = vunpack.c.h.b16 %v3757
        %v4123 = vunpack.c.l.b16 %v3758
        %v4124 = vunpack.c.h.b16 %v3758
        %v4125 = vunpack.c.l.b16 %v3759
        %v4126 = vunpack.c.h.b16 %v3759
        %v4127 = vunpack.c.l.b16 %v3760
        %v4128 = vunpack.c.h.b16 %v3760
        %v4129 = vunpack.c.l.b16 %v3761
        %v4130 = vunpack.c.h.b16 %v3761
        %v4131 = vunpack.c.l.b16 %v3762
        %v4132 = vunpack.c.h.b16 %v3762
        %v4133 = vunpack.c.l.b16 %v3763
        %v4134 = vunpack.c.h.b16 %v3763
        %v4135 = vunpack.c.l.b16 %v3764
        %v4136 = vunpack.c.h.b16 %v3764
        %v4137 = vunpack.c.l.b16 %v3765
        %v4138 = vunpack.c.h.b16 %v3765
        %v4139 = vunpack.c.l.b16 %v3766
        %v4140 = vunpack.c.h.b16 %v3766
        %v4141 = vunpack.c.l.b16 %v3767
        %v4142 = vunpack.c.h.b16 %v3767
        %v4143 = vunpack.c.l.b16 %v3768
        %v4144 = vunpack.c.h.b16 %v3768
        %v4145 = vunpack.c.l.b16 %v3769
        %v4146 = vunpack.c.h.b16 %v3769
        %v4147 = vunpack.c.l.b16 %v3770
        %v4148 = vunpack.c.h.b16 %v3770
        %v4149 = vunpack.c.l.b16 %v3771
        %v4150 = vunpack.c.h.b16 %v3771
        %v4151 = vunpack.c.l.b16 %v3772
        %v4152 = vunpack.c.h.b16 %v3772
        %v4153 = vunpack.c.l.b16 %v3773
        %v4154 = vunpack.c.h.b16 %v3773
        %v4155 = vunpack.c.l.b16 %v3774
        %v4156 = vunpack.c.h.b16 %v3774
        %v4157 = vunpack.c.l.b16 %v3775
        %v4158 = vunpack.c.h.b16 %v3775
        %v4159 = vunpack.c.l.b16 %v3776
        %v4160 = vunpack.c.h.b16 %v3776
        %v4161 = vpack.c.b16 %v3909, %v3905
        %v4162 = vpack.c.b16 %v3910, %v3906
        %v4163 = vpack.c.b16 %v3911, %v3907
        %v4164 = vpack.c.b16 %v3912, %v3908
        %v4165 = vpack.c.b16 %v3917, %v3913
        %v4166 = vpack.c.b16 %v3918, %v3914
        %v4167 = vpack.c.b16 %v3919, %v3915
        %v4168 = vpack.c.b16 %v3920, %v3916
        %v4169 = vpack.c.b16 %v3925, %v3921
        %v4170 = vpack.c.b16 %v3926, %v3922
        %v4171 = vpack.c.b16 %v3927, %v3923
        %v4172 = vpack.c.b16 %v3928, %v3924
        %v4173 = vpack.c.b16 %v3933, %v3929
        %v4174 = vpack.c.b16 %v3934, %v3930
        %v4175 = vpack.c.b16 %v3935, %v3931
        %v4176 = vpack.c.b16 %v3936, %v3932
        %v4177 = vpack.c.b16 %v3941, %v3937
        %v4178 = vpack.c.b16 %v3942, %v3938
        %v4179 = vpack.c.b16 %v3943, %v3939
        %v4180 = vpack.c.b16 %v3944, %v3940
        %v4181 = vpack.c.b16 %v3949, %v3945
        %v4182 = vpack.c.b16 %v3950, %v3946
        %v4183 = vpack.c.b16 %v3951, %v3947
        %v4184 = vpack.c.b16 %v3952, %v3948
        %v4185 = vpack.c.b16 %v3957, %v3953
        %v4186 = vpack.c.b16 %v3958, %v3954
        %v4187 = vpack.c.b16 %v3959, %v3955
        %v4188 = vpack.c.b16 %v3960, %v3956
        %v4189 = vpack.c.b16 %v3965, %v3961
        %v4190 = vpack.c.b16 %v3966, %v3962
        %v4191 = vpack.c.b16 %v3967, %v3963
        %v4192 = vpack.c.b16 %v3968, %v3964
        %v4193 = vpack.c.b16 %v3973, %v3969
        %v4194 = vpack.c.b16 %v3974, %v3970
        %v4195 = vpack.c.b16 %v3975, %v3971
        %v4196 = vpack.c.b16 %v3976, %v3972
        %v4197 = vpack.c.b16 %v3981, %v3977
        %v4198 = vpack.c.b16 %v3982, %v3978
        %v4199 = vpack.c.b16 %v3983, %v3979
        %v4200 = vpack.c.b16 %v3984, %v3980
        %v4201 = vpack.c.b16 %v3989, %v3985
        %v4202 = vpack.c.b16 %v3990, %v3986
        %v4203 = vpack.c.b16 %v3991, %v3987
        %v4204 = vpack.c.b16 %v3992, %v3988
        %v4205 = vpack.c.b16 %v3997, %v3993
        %v4206 = vpack.c.b16 %v3998, %v3994
        %v4207 = vpack.c.b16 %v3999, %v3995
        %v4208 = vpack.c.b16 %v4000, %v3996
        %v4209 = vpack.c.b16 %v4005, %v4001
        %v4210 = vpack.c.b16 %v4006, %v4002
        %v4211 = vpack.c.b16 %v4007, %v4003
        %v4212 = vpack.c.b16 %v4008, %v4004
        %v4213 = vpack.c.b16 %v4013, %v4009
        %v4214 = vpack.c.b16 %v4014, %v4010
        %v4215 = vpack.c.b16 %v4015, %v4011
        %v4216 = vpack.c.b16 %v4016, %v4012
        %v4217 = vpack.c.b16 %v4021, %v4017
        %v4218 = vpack.c.b16 %v4022, %v4018
        %v4219 = vpack.c.b16 %v4023, %v4019
        %v4220 = vpack.c.b16 %v4024, %v4020
        %v4221 = vpack.c.b16 %v4029, %v4025
        %v4222 = vpack.c.b16 %v4030, %v4026
        %v4223 = vpack.c.b16 %v4031, %v4027
        %v4224 = vpack.c.b16 %v4032, %v4028
        %v4225 = vpack.c.b16 %v4037, %v4033
        %v4226 = vpack.c.b16 %v4038, %v4034
        %v4227 = vpack.c.b16 %v4039, %v4035
        %v4228 = vpack.c.b16 %v4040, %v4036
        %v4229 = vpack.c.b16 %v4045, %v4041
        %v4230 = vpack.c.b16 %v4046, %v4042
        %v4231 = vpack.c.b16 %v4047, %v4043
        %v4232 = vpack.c.b16 %v4048, %v4044
        %v4233 = vpack.c.b16 %v4053, %v4049
        %v4234 = vpack.c.b16 %v4054, %v4050
        %v4235 = vpack.c.b16 %v4055, %v4051
        %v4236 = vpack.c.b16 %v4056, %v4052
        %v4237 = vpack.c.b16 %v4061, %v4057
        %v4238 = vpack.c.b16 %v4062, %v4058
        %v4239 = vpack.c.b16 %v4063, %v4059
        %v4240 = vpack.c.b16 %v4064, %v4060
        %v4241 = vpack.c.b16 %v4069, %v4065
        %v4242 = vpack.c.b16 %v4070, %v4066
        %v4243 = vpack.c.b16 %v4071, %v4067
        %v4244 = vpack.c.b16 %v4072, %v4068
        %v4245 = vpack.c.b16 %v4077, %v4073
        %v4246 = vpack.c.b16 %v4078, %v4074
        %v4247 = vpack.c.b16 %v4079, %v4075
        %v4248 = vpack.c.b16 %v4080, %v4076
        %v4249 = vpack.c.b16 %v4085, %v4081
        %v4250 = vpack.c.b16 %v4086, %v4082
        %v4251 = vpack.c.b16 %v4087, %v4083
        %v4252 = vpack.c.b16 %v4088, %v4084
        %v4253 = vpack.c.b16 %v4093, %v4089
        %v4254 = vpack.c.b16 %v4094, %v4090
        %v4255 = vpack.c.b16 %v4095, %v4091
        %v4256 = vpack.c.b16 %v4096, %v4092
        %v4257 = vpack.c.b16 %v4101, %v4097
        %v4258 = vpack.c.b16 %v4102, %v4098
        %v4259 = vpack.c.b16 %v4103, %v4099
        %v4260 = vpack.c.b16 %v4104, %v4100
        %v4261 = vpack.c.b16 %v4109, %v4105
        %v4262 = vpack.c.b16 %v4110, %v4106
        %v4263 = vpack.c.b16 %v4111, %v4107
        %v4264 = vpack.c.b16 %v4112, %v4108
        %v4265 = vpack.c.b16 %v4117, %v4113
        %v4266 = vpack.c.b16 %v4118, %v4114
        %v4267 = vpack.c.b16 %v4119, %v4115
        %v4268 = vpack.c.b16 %v4120, %v4116
        %v4269 = vpack.c.b16 %v4125, %v4121
        %v4270 = vpack.c.b16 %v4126, %v4122
        %v4271 = vpack.c.b16 %v4127, %v4123
        %v4272 = vpack.c.b16 %v4128, %v4124
        %v4273 = vpack.c.b16 %v4133, %v4129
        %v4274 = vpack.c.b16 %v4134, %v4130
        %v4275 = vpack.c.b16 %v4135, %v4131
        %v4276 = vpack.c.b16 %v4136, %v4132
        %v4277 = vpack.c.b16 %v4141, %v4137
        %v4278 = vpack.c.b16 %v4142, %v4138
        %v4279 = vpack.c.b16 %v4143, %v4139
        %v4280 = vpack.c.b16 %v4144, %v4140
        %v4281 = vpack.c.b16 %v4149, %v4145
        %v4282 = vpack.c.b16 %v4150, %v4146
        %v4283 = vpack.c.b16 %v4151, %v4147
        %v4284 = vpack.c.b16 %v4152, %v4148
        %v4285 = vpack.c.b16 %v4157, %v4153
        %v4286 = vpack.c.b16 %v4158, %v4154
        %v4287 = vpack.c.b16 %v4159, %v4155
        %v4288 = vpack.c.b16 %v4160, %v4156
        %4417 = vmatpush.bf16.msra.mxu0 %v736
        %4418 = vmatpush.bf16.msra.mxu0 %v735
        %4419 = vmatpush.bf16.msra.mxu0 %v734
        %4420 = vmatpush.bf16.msra.mxu0 %v733
        %4421 = vmatpush.bf16.msra.mxu0 %v732
        %4422 = vmatpush.bf16.msra.mxu0 %v731
        %4423 = vmatpush.bf16.msra.mxu0 %v730
        %4424 = vmatpush.bf16.msra.mxu0 %v729
        %4425 = vmatmul.bf16.gmra.mxu0 %v4161
        %v4426 = vpop.f32.mrf.mxu0
        %v4427 = vadd.f32 0.0, %v4426
        %v4428 = vpop.f32.mrf.mxu0
        %v4429 = vadd.f32 0.0, %v4428
        %4430 = vmatmul.bf16.gmra.mxu0 %v4165
        %v4431 = vpop.f32.mrf.mxu0
        %v4432 = vadd.f32 0.0, %v4431
        %v4433 = vpop.f32.mrf.mxu0
        %v4434 = vadd.f32 0.0, %v4433
        %4435 = vmatmul.bf16.gmra.mxu0 %v4169
        %v4436 = vpop.f32.mrf.mxu0
        %v4437 = vadd.f32 0.0, %v4436
        %v4438 = vpop.f32.mrf.mxu0
        %v4439 = vadd.f32 0.0, %v4438
        %4440 = vmatmul.bf16.gmra.mxu0 %v4173
        %v4441 = vpop.f32.mrf.mxu0
        %v4442 = vadd.f32 0.0, %v4441
        %v4443 = vpop.f32.mrf.mxu0
        %v4444 = vadd.f32 0.0, %v4443
        %4445 = vmatmul.bf16.gmra.mxu0 %v4177
        %v4446 = vpop.f32.mrf.mxu0
        %v4447 = vadd.f32 0.0, %v4446
        %v4448 = vpop.f32.mrf.mxu0
        %v4449 = vadd.f32 0.0, %v4448
        %4450 = vmatmul.bf16.gmra.mxu0 %v4181
        %v4451 = vpop.f32.mrf.mxu0
        %v4452 = vadd.f32 0.0, %v4451
        %v4453 = vpop.f32.mrf.mxu0
        %v4454 = vadd.f32 0.0, %v4453
        %4455 = vmatmul.bf16.gmra.mxu0 %v4185
        %v4456 = vpop.f32.mrf.mxu0
        %v4457 = vadd.f32 0.0, %v4456
        %v4458 = vpop.f32.mrf.mxu0
        %v4459 = vadd.f32 0.0, %v4458
        %4460 = vmatmul.bf16.gmra.mxu0 %v4189
        %v4461 = vpop.f32.mrf.mxu0
        %v4462 = vadd.f32 0.0, %v4461
        %v4463 = vpop.f32.mrf.mxu0
        %v4464 = vadd.f32 0.0, %v4463
        %4465 = vmatmul.bf16.gmra.mxu0 %v4193
        %v4466 = vpop.f32.mrf.mxu0
        %v4467 = vadd.f32 0.0, %v4466
        %v4468 = vpop.f32.mrf.mxu0
        %v4469 = vadd.f32 0.0, %v4468
        %4470 = vmatmul.bf16.gmra.mxu0 %v4197
        %v4471 = vpop.f32.mrf.mxu0
        %v4472 = vadd.f32 0.0, %v4471
        %v4473 = vpop.f32.mrf.mxu0
        %v4474 = vadd.f32 0.0, %v4473
        %4475 = vmatmul.bf16.gmra.mxu0 %v4201
        %v4476 = vpop.f32.mrf.mxu0
        %v4477 = vadd.f32 0.0, %v4476
        %v4478 = vpop.f32.mrf.mxu0
        %v4479 = vadd.f32 0.0, %v4478
        %4480 = vmatmul.bf16.gmra.mxu0 %v4205
        %v4481 = vpop.f32.mrf.mxu0
        %v4482 = vadd.f32 0.0, %v4481
        %v4483 = vpop.f32.mrf.mxu0
        %v4484 = vadd.f32 0.0, %v4483
        %4485 = vmatmul.bf16.gmra.mxu0 %v4209
        %v4486 = vpop.f32.mrf.mxu0
        %v4487 = vadd.f32 0.0, %v4486
        %v4488 = vpop.f32.mrf.mxu0
        %v4489 = vadd.f32 0.0, %v4488
        %4490 = vmatmul.bf16.gmra.mxu0 %v4213
        %v4491 = vpop.f32.mrf.mxu0
        %v4492 = vadd.f32 0.0, %v4491
        %v4493 = vpop.f32.mrf.mxu0
        %v4494 = vadd.f32 0.0, %v4493
        %4495 = vmatmul.bf16.gmra.mxu0 %v4217
        %v4496 = vpop.f32.mrf.mxu0
        %v4497 = vadd.f32 0.0, %v4496
        %v4498 = vpop.f32.mrf.mxu0
        %v4499 = vadd.f32 0.0, %v4498
        %4500 = vmatmul.bf16.gmra.mxu0 %v4221
        %v4501 = vpop.f32.mrf.mxu0
        %v4502 = vadd.f32 0.0, %v4501
        %v4503 = vpop.f32.mrf.mxu0
        %v4504 = vadd.f32 0.0, %v4503
        %4505 = vmatmul.bf16.gmra.mxu0 %v4225
        %v4506 = vpop.f32.mrf.mxu0
        %v4507 = vadd.f32 0.0, %v4506
        %v4508 = vpop.f32.mrf.mxu0
        %v4509 = vadd.f32 0.0, %v4508
        %4510 = vmatmul.bf16.gmra.mxu0 %v4229
        %v4511 = vpop.f32.mrf.mxu0
        %v4512 = vadd.f32 0.0, %v4511
        %v4513 = vpop.f32.mrf.mxu0
        %v4514 = vadd.f32 0.0, %v4513
        %4515 = vmatmul.bf16.gmra.mxu0 %v4233
        %v4516 = vpop.f32.mrf.mxu0
        %v4517 = vadd.f32 0.0, %v4516
        %v4518 = vpop.f32.mrf.mxu0
        %v4519 = vadd.f32 0.0, %v4518
        %4520 = vmatmul.bf16.gmra.mxu0 %v4237
        %v4521 = vpop.f32.mrf.mxu0
        %v4522 = vadd.f32 0.0, %v4521
        %v4523 = vpop.f32.mrf.mxu0
        %v4524 = vadd.f32 0.0, %v4523
        %4525 = vmatmul.bf16.gmra.mxu0 %v4241
        %v4526 = vpop.f32.mrf.mxu0
        %v4527 = vadd.f32 0.0, %v4526
        %v4528 = vpop.f32.mrf.mxu0
        %v4529 = vadd.f32 0.0, %v4528
        %4530 = vmatmul.bf16.gmra.mxu0 %v4245
        %v4531 = vpop.f32.mrf.mxu0
        %v4532 = vadd.f32 0.0, %v4531
        %v4533 = vpop.f32.mrf.mxu0
        %v4534 = vadd.f32 0.0, %v4533
        %4535 = vmatmul.bf16.gmra.mxu0 %v4249
        %v4536 = vpop.f32.mrf.mxu0
        %v4537 = vadd.f32 0.0, %v4536
        %v4538 = vpop.f32.mrf.mxu0
        %v4539 = vadd.f32 0.0, %v4538
        %4540 = vmatmul.bf16.gmra.mxu0 %v4253
        %v4541 = vpop.f32.mrf.mxu0
        %v4542 = vadd.f32 0.0, %v4541
        %v4543 = vpop.f32.mrf.mxu0
        %v4544 = vadd.f32 0.0, %v4543
        %4545 = vmatmul.bf16.gmra.mxu0 %v4257
        %v4546 = vpop.f32.mrf.mxu0
        %v4547 = vadd.f32 0.0, %v4546
        %v4548 = vpop.f32.mrf.mxu0
        %v4549 = vadd.f32 0.0, %v4548
        %4550 = vmatmul.bf16.gmra.mxu0 %v4261
        %v4551 = vpop.f32.mrf.mxu0
        %v4552 = vadd.f32 0.0, %v4551
        %v4553 = vpop.f32.mrf.mxu0
        %v4554 = vadd.f32 0.0, %v4553
        %4555 = vmatmul.bf16.gmra.mxu0 %v4265
        %v4556 = vpop.f32.mrf.mxu0
        %v4557 = vadd.f32 0.0, %v4556
        %v4558 = vpop.f32.mrf.mxu0
        %v4559 = vadd.f32 0.0, %v4558
        %4560 = vmatmul.bf16.gmra.mxu0 %v4269
        %v4561 = vpop.f32.mrf.mxu0
        %v4562 = vadd.f32 0.0, %v4561
        %v4563 = vpop.f32.mrf.mxu0
        %v4564 = vadd.f32 0.0, %v4563
        %4565 = vmatmul.bf16.gmra.mxu0 %v4273
        %v4566 = vpop.f32.mrf.mxu0
        %v4567 = vadd.f32 0.0, %v4566
        %v4568 = vpop.f32.mrf.mxu0
        %v4569 = vadd.f32 0.0, %v4568
        %4570 = vmatmul.bf16.gmra.mxu0 %v4277
        %v4571 = vpop.f32.mrf.mxu0
        %v4572 = vadd.f32 0.0, %v4571
        %v4573 = vpop.f32.mrf.mxu0
        %v4574 = vadd.f32 0.0, %v4573
        %4575 = vmatmul.bf16.gmra.mxu0 %v4281
        %v4576 = vpop.f32.mrf.mxu0
        %v4577 = vadd.f32 0.0, %v4576
        %v4578 = vpop.f32.mrf.mxu0
        %v4579 = vadd.f32 0.0, %v4578
        %4580 = vmatmul.bf16.gmra.mxu0 %v4285
        %v4581 = vpop.f32.mrf.mxu0
        %v4582 = vadd.f32 0.0, %v4581
        %v4583 = vpop.f32.mrf.mxu0
        %v4584 = vadd.f32 0.0, %v4583
        %4585 = vdwg.mxu0
        %4586 = vmatpush.bf16.msra.mxu0 %v744
        %4587 = vmatpush.bf16.msra.mxu0 %v743
        %4588 = vmatpush.bf16.msra.mxu0 %v742
        %4589 = vmatpush.bf16.msra.mxu0 %v741
        %4590 = vmatpush.bf16.msra.mxu0 %v740
        %4591 = vmatpush.bf16.msra.mxu0 %v739
        %4592 = vmatpush.bf16.msra.mxu0 %v738
        %4593 = vmatpush.bf16.msra.mxu0 %v737
        %4594 = vmatmul.bf16.gmra.mxu0 %v4162
        %v4595 = vpop.f32.mrf.mxu0
        %v4596 = vadd.f32 %v4427, %v4595
        %v4597 = vpop.f32.mrf.mxu0
        %v4598 = vadd.f32 %v4429, %v4597
        %4599 = vmatmul.bf16.gmra.mxu0 %v4166
        %v4600 = vpop.f32.mrf.mxu0
        %v4601 = vadd.f32 %v4432, %v4600
        %v4602 = vpop.f32.mrf.mxu0
        %v4603 = vadd.f32 %v4434, %v4602
        %4604 = vmatmul.bf16.gmra.mxu0 %v4170
        %v4605 = vpop.f32.mrf.mxu0
        %v4606 = vadd.f32 %v4437, %v4605
        %v4607 = vpop.f32.mrf.mxu0
        %v4608 = vadd.f32 %v4439, %v4607
        %4609 = vmatmul.bf16.gmra.mxu0 %v4174
        %v4610 = vpop.f32.mrf.mxu0
        %v4611 = vadd.f32 %v4442, %v4610
        %v4612 = vpop.f32.mrf.mxu0
        %v4613 = vadd.f32 %v4444, %v4612
        %4614 = vmatmul.bf16.gmra.mxu0 %v4178
        %v4615 = vpop.f32.mrf.mxu0
        %v4616 = vadd.f32 %v4447, %v4615
        %v4617 = vpop.f32.mrf.mxu0
        %v4618 = vadd.f32 %v4449, %v4617
        %4619 = vmatmul.bf16.gmra.mxu0 %v4182
        %v4620 = vpop.f32.mrf.mxu0
        %v4621 = vadd.f32 %v4452, %v4620
        %v4622 = vpop.f32.mrf.mxu0
        %v4623 = vadd.f32 %v4454, %v4622
        %4624 = vmatmul.bf16.gmra.mxu0 %v4186
        %v4625 = vpop.f32.mrf.mxu0
        %v4626 = vadd.f32 %v4457, %v4625
        %v4627 = vpop.f32.mrf.mxu0
        %v4628 = vadd.f32 %v4459, %v4627
        %4629 = vmatmul.bf16.gmra.mxu0 %v4190
        %v4630 = vpop.f32.mrf.mxu0
        %v4631 = vadd.f32 %v4462, %v4630
        %v4632 = vpop.f32.mrf.mxu0
        %v4633 = vadd.f32 %v4464, %v4632
        %4634 = vmatmul.bf16.gmra.mxu0 %v4194
        %v4635 = vpop.f32.mrf.mxu0
        %v4636 = vadd.f32 %v4467, %v4635
        %v4637 = vpop.f32.mrf.mxu0
        %v4638 = vadd.f32 %v4469, %v4637
        %4639 = vmatmul.bf16.gmra.mxu0 %v4198
        %v4640 = vpop.f32.mrf.mxu0
        %v4641 = vadd.f32 %v4472, %v4640
        %v4642 = vpop.f32.mrf.mxu0
        %v4643 = vadd.f32 %v4474, %v4642
        %4644 = vmatmul.bf16.gmra.mxu0 %v4202
        %v4645 = vpop.f32.mrf.mxu0
        %v4646 = vadd.f32 %v4477, %v4645
        %v4647 = vpop.f32.mrf.mxu0
        %v4648 = vadd.f32 %v4479, %v4647
        %4649 = vmatmul.bf16.gmra.mxu0 %v4206
        %v4650 = vpop.f32.mrf.mxu0
        %v4651 = vadd.f32 %v4482, %v4650
        %v4652 = vpop.f32.mrf.mxu0
        %v4653 = vadd.f32 %v4484, %v4652
        %4654 = vmatmul.bf16.gmra.mxu0 %v4210
        %v4655 = vpop.f32.mrf.mxu0
        %v4656 = vadd.f32 %v4487, %v4655
        %v4657 = vpop.f32.mrf.mxu0
        %v4658 = vadd.f32 %v4489, %v4657
        %4659 = vmatmul.bf16.gmra.mxu0 %v4214
        %v4660 = vpop.f32.mrf.mxu0
        %v4661 = vadd.f32 %v4492, %v4660
        %v4662 = vpop.f32.mrf.mxu0
        %v4663 = vadd.f32 %v4494, %v4662
        %4664 = vmatmul.bf16.gmra.mxu0 %v4218
        %v4665 = vpop.f32.mrf.mxu0
        %v4666 = vadd.f32 %v4497, %v4665
        %v4667 = vpop.f32.mrf.mxu0
        %v4668 = vadd.f32 %v4499, %v4667
        %4669 = vmatmul.bf16.gmra.mxu0 %v4222
        %v4670 = vpop.f32.mrf.mxu0
        %v4671 = vadd.f32 %v4502, %v4670
        %v4672 = vpop.f32.mrf.mxu0
        %v4673 = vadd.f32 %v4504, %v4672
        %4674 = vmatmul.bf16.gmra.mxu0 %v4226
        %v4675 = vpop.f32.mrf.mxu0
        %v4676 = vadd.f32 %v4507, %v4675
        %v4677 = vpop.f32.mrf.mxu0
        %v4678 = vadd.f32 %v4509, %v4677
        %4679 = vmatmul.bf16.gmra.mxu0 %v4230
        %v4680 = vpop.f32.mrf.mxu0
        %v4681 = vadd.f32 %v4512, %v4680
        %v4682 = vpop.f32.mrf.mxu0
        %v4683 = vadd.f32 %v4514, %v4682
        %4684 = vmatmul.bf16.gmra.mxu0 %v4234
        %v4685 = vpop.f32.mrf.mxu0
        %v4686 = vadd.f32 %v4517, %v4685
        %v4687 = vpop.f32.mrf.mxu0
        %v4688 = vadd.f32 %v4519, %v4687
        %4689 = vmatmul.bf16.gmra.mxu0 %v4238
        %v4690 = vpop.f32.mrf.mxu0
        %v4691 = vadd.f32 %v4522, %v4690
        %v4692 = vpop.f32.mrf.mxu0
        %v4693 = vadd.f32 %v4524, %v4692
        %4694 = vmatmul.bf16.gmra.mxu0 %v4242
        %v4695 = vpop.f32.mrf.mxu0
        %v4696 = vadd.f32 %v4527, %v4695
        %v4697 = vpop.f32.mrf.mxu0
        %v4698 = vadd.f32 %v4529, %v4697
        %4699 = vmatmul.bf16.gmra.mxu0 %v4246
        %v4700 = vpop.f32.mrf.mxu0
        %v4701 = vadd.f32 %v4532, %v4700
        %v4702 = vpop.f32.mrf.mxu0
        %v4703 = vadd.f32 %v4534, %v4702
        %4704 = vmatmul.bf16.gmra.mxu0 %v4250
        %v4705 = vpop.f32.mrf.mxu0
        %v4706 = vadd.f32 %v4537, %v4705
        %v4707 = vpop.f32.mrf.mxu0
        %v4708 = vadd.f32 %v4539, %v4707
        %4709 = vmatmul.bf16.gmra.mxu0 %v4254
        %v4710 = vpop.f32.mrf.mxu0
        %v4711 = vadd.f32 %v4542, %v4710
        %v4712 = vpop.f32.mrf.mxu0
        %v4713 = vadd.f32 %v4544, %v4712
        %4714 = vmatmul.bf16.gmra.mxu0 %v4258
        %v4715 = vpop.f32.mrf.mxu0
        %v4716 = vadd.f32 %v4547, %v4715
        %v4717 = vpop.f32.mrf.mxu0
        %v4718 = vadd.f32 %v4549, %v4717
        %4719 = vmatmul.bf16.gmra.mxu0 %v4262
        %v4720 = vpop.f32.mrf.mxu0
        %v4721 = vadd.f32 %v4552, %v4720
        %v4722 = vpop.f32.mrf.mxu0
        %v4723 = vadd.f32 %v4554, %v4722
        %4724 = vmatmul.bf16.gmra.mxu0 %v4266
        %v4725 = vpop.f32.mrf.mxu0
        %v4726 = vadd.f32 %v4557, %v4725
        %v4727 = vpop.f32.mrf.mxu0
        %v4728 = vadd.f32 %v4559, %v4727
        %4729 = vmatmul.bf16.gmra.mxu0 %v4270
        %v4730 = vpop.f32.mrf.mxu0
        %v4731 = vadd.f32 %v4562, %v4730
        %v4732 = vpop.f32.mrf.mxu0
        %v4733 = vadd.f32 %v4564, %v4732
        %4734 = vmatmul.bf16.gmra.mxu0 %v4274
        %v4735 = vpop.f32.mrf.mxu0
        %v4736 = vadd.f32 %v4567, %v4735
        %v4737 = vpop.f32.mrf.mxu0
        %v4738 = vadd.f32 %v4569, %v4737
        %4739 = vmatmul.bf16.gmra.mxu0 %v4278
        %v4740 = vpop.f32.mrf.mxu0
        %v4741 = vadd.f32 %v4572, %v4740
        %v4742 = vpop.f32.mrf.mxu0
        %v4743 = vadd.f32 %v4574, %v4742
        %4744 = vmatmul.bf16.gmra.mxu0 %v4282
        %v4745 = vpop.f32.mrf.mxu0
        %v4746 = vadd.f32 %v4577, %v4745
        %v4747 = vpop.f32.mrf.mxu0
        %v4748 = vadd.f32 %v4579, %v4747
        %4749 = vmatmul.bf16.gmra.mxu0 %v4286
        %v4750 = vpop.f32.mrf.mxu0
        %v4751 = vadd.f32 %v4582, %v4750
        %v4752 = vpop.f32.mrf.mxu0
        %v4753 = vadd.f32 %v4584, %v4752
        %4754 = vdwg.mxu0
        %4755 = vmatpush.bf16.msra.mxu0 %v752
        %4756 = vmatpush.bf16.msra.mxu0 %v751
        %4757 = vmatpush.bf16.msra.mxu0 %v750
        %4758 = vmatpush.bf16.msra.mxu0 %v749
        %4759 = vmatpush.bf16.msra.mxu0 %v748
        %4760 = vmatpush.bf16.msra.mxu0 %v747
        %4761 = vmatpush.bf16.msra.mxu0 %v746
        %4762 = vmatpush.bf16.msra.mxu0 %v745
        %4763 = vmatmul.bf16.gmra.mxu0 %v4163
        %v4764 = vpop.f32.mrf.mxu0
        %v4765 = vadd.f32 %v4596, %v4764
        %v4766 = vpop.f32.mrf.mxu0
        %v4767 = vadd.f32 %v4598, %v4766
        %4768 = vmatmul.bf16.gmra.mxu0 %v4167
        %v4769 = vpop.f32.mrf.mxu0
        %v4770 = vadd.f32 %v4601, %v4769
        %v4771 = vpop.f32.mrf.mxu0
        %v4772 = vadd.f32 %v4603, %v4771
        %4773 = vmatmul.bf16.gmra.mxu0 %v4171
        %v4774 = vpop.f32.mrf.mxu0
        %v4775 = vadd.f32 %v4606, %v4774
        %v4776 = vpop.f32.mrf.mxu0
        %v4777 = vadd.f32 %v4608, %v4776
        %4778 = vmatmul.bf16.gmra.mxu0 %v4175
        %v4779 = vpop.f32.mrf.mxu0
        %v4780 = vadd.f32 %v4611, %v4779
        %v4781 = vpop.f32.mrf.mxu0
        %v4782 = vadd.f32 %v4613, %v4781
        %4783 = vmatmul.bf16.gmra.mxu0 %v4179
        %v4784 = vpop.f32.mrf.mxu0
        %v4785 = vadd.f32 %v4616, %v4784
        %v4786 = vpop.f32.mrf.mxu0
        %v4787 = vadd.f32 %v4618, %v4786
        %4788 = vmatmul.bf16.gmra.mxu0 %v4183
        %v4789 = vpop.f32.mrf.mxu0
        %v4790 = vadd.f32 %v4621, %v4789
        %v4791 = vpop.f32.mrf.mxu0
        %v4792 = vadd.f32 %v4623, %v4791
        %4793 = vmatmul.bf16.gmra.mxu0 %v4187
        %v4794 = vpop.f32.mrf.mxu0
        %v4795 = vadd.f32 %v4626, %v4794
        %v4796 = vpop.f32.mrf.mxu0
        %v4797 = vadd.f32 %v4628, %v4796
        %4798 = vmatmul.bf16.gmra.mxu0 %v4191
        %v4799 = vpop.f32.mrf.mxu0
        %v4800 = vadd.f32 %v4631, %v4799
        %v4801 = vpop.f32.mrf.mxu0
        %v4802 = vadd.f32 %v4633, %v4801
        %4803 = vmatmul.bf16.gmra.mxu0 %v4195
        %v4804 = vpop.f32.mrf.mxu0
        %v4805 = vadd.f32 %v4636, %v4804
        %v4806 = vpop.f32.mrf.mxu0
        %v4807 = vadd.f32 %v4638, %v4806
        %4808 = vmatmul.bf16.gmra.mxu0 %v4199
        %v4809 = vpop.f32.mrf.mxu0
        %v4810 = vadd.f32 %v4641, %v4809
        %v4811 = vpop.f32.mrf.mxu0
        %v4812 = vadd.f32 %v4643, %v4811
        %4813 = vmatmul.bf16.gmra.mxu0 %v4203
        %v4814 = vpop.f32.mrf.mxu0
        %v4815 = vadd.f32 %v4646, %v4814
        %v4816 = vpop.f32.mrf.mxu0
        %v4817 = vadd.f32 %v4648, %v4816
        %4818 = vmatmul.bf16.gmra.mxu0 %v4207
        %v4819 = vpop.f32.mrf.mxu0
        %v4820 = vadd.f32 %v4651, %v4819
        %v4821 = vpop.f32.mrf.mxu0
        %v4822 = vadd.f32 %v4653, %v4821
        %4823 = vmatmul.bf16.gmra.mxu0 %v4211
        %v4824 = vpop.f32.mrf.mxu0
        %v4825 = vadd.f32 %v4656, %v4824
        %v4826 = vpop.f32.mrf.mxu0
        %v4827 = vadd.f32 %v4658, %v4826
        %4828 = vmatmul.bf16.gmra.mxu0 %v4215
        %v4829 = vpop.f32.mrf.mxu0
        %v4830 = vadd.f32 %v4661, %v4829
        %v4831 = vpop.f32.mrf.mxu0
        %v4832 = vadd.f32 %v4663, %v4831
        %4833 = vmatmul.bf16.gmra.mxu0 %v4219
        %v4834 = vpop.f32.mrf.mxu0
        %v4835 = vadd.f32 %v4666, %v4834
        %v4836 = vpop.f32.mrf.mxu0
        %v4837 = vadd.f32 %v4668, %v4836
        %4838 = vmatmul.bf16.gmra.mxu0 %v4223
        %v4839 = vpop.f32.mrf.mxu0
        %v4840 = vadd.f32 %v4671, %v4839
        %v4841 = vpop.f32.mrf.mxu0
        %v4842 = vadd.f32 %v4673, %v4841
        %4843 = vmatmul.bf16.gmra.mxu0 %v4227
        %v4844 = vpop.f32.mrf.mxu0
        %v4845 = vadd.f32 %v4676, %v4844
        %v4846 = vpop.f32.mrf.mxu0
        %v4847 = vadd.f32 %v4678, %v4846
        %4848 = vmatmul.bf16.gmra.mxu0 %v4231
        %v4849 = vpop.f32.mrf.mxu0
        %v4850 = vadd.f32 %v4681, %v4849
        %v4851 = vpop.f32.mrf.mxu0
        %v4852 = vadd.f32 %v4683, %v4851
        %4853 = vmatmul.bf16.gmra.mxu0 %v4235
        %v4854 = vpop.f32.mrf.mxu0
        %v4855 = vadd.f32 %v4686, %v4854
        %v4856 = vpop.f32.mrf.mxu0
        %v4857 = vadd.f32 %v4688, %v4856
        %4858 = vmatmul.bf16.gmra.mxu0 %v4239
        %v4859 = vpop.f32.mrf.mxu0
        %v4860 = vadd.f32 %v4691, %v4859
        %v4861 = vpop.f32.mrf.mxu0
        %v4862 = vadd.f32 %v4693, %v4861
        %4863 = vmatmul.bf16.gmra.mxu0 %v4243
        %v4864 = vpop.f32.mrf.mxu0
        %v4865 = vadd.f32 %v4696, %v4864
        %v4866 = vpop.f32.mrf.mxu0
        %v4867 = vadd.f32 %v4698, %v4866
        %4868 = vmatmul.bf16.gmra.mxu0 %v4247
        %v4869 = vpop.f32.mrf.mxu0
        %v4870 = vadd.f32 %v4701, %v4869
        %v4871 = vpop.f32.mrf.mxu0
        %v4872 = vadd.f32 %v4703, %v4871
        %4873 = vmatmul.bf16.gmra.mxu0 %v4251
        %v4874 = vpop.f32.mrf.mxu0
        %v4875 = vadd.f32 %v4706, %v4874
        %v4876 = vpop.f32.mrf.mxu0
        %v4877 = vadd.f32 %v4708, %v4876
        %4878 = vmatmul.bf16.gmra.mxu0 %v4255
        %v4879 = vpop.f32.mrf.mxu0
        %v4880 = vadd.f32 %v4711, %v4879
        %v4881 = vpop.f32.mrf.mxu0
        %v4882 = vadd.f32 %v4713, %v4881
        %4883 = vmatmul.bf16.gmra.mxu0 %v4259
        %v4884 = vpop.f32.mrf.mxu0
        %v4885 = vadd.f32 %v4716, %v4884
        %v4886 = vpop.f32.mrf.mxu0
        %v4887 = vadd.f32 %v4718, %v4886
        %4888 = vmatmul.bf16.gmra.mxu0 %v4263
        %v4889 = vpop.f32.mrf.mxu0
        %v4890 = vadd.f32 %v4721, %v4889
        %v4891 = vpop.f32.mrf.mxu0
        %v4892 = vadd.f32 %v4723, %v4891
        %4893 = vmatmul.bf16.gmra.mxu0 %v4267
        %v4894 = vpop.f32.mrf.mxu0
        %v4895 = vadd.f32 %v4726, %v4894
        %v4896 = vpop.f32.mrf.mxu0
        %v4897 = vadd.f32 %v4728, %v4896
        %4898 = vmatmul.bf16.gmra.mxu0 %v4271
        %v4899 = vpop.f32.mrf.mxu0
        %v4900 = vadd.f32 %v4731, %v4899
        %v4901 = vpop.f32.mrf.mxu0
        %v4902 = vadd.f32 %v4733, %v4901
        %4903 = vmatmul.bf16.gmra.mxu0 %v4275
        %v4904 = vpop.f32.mrf.mxu0
        %v4905 = vadd.f32 %v4736, %v4904
        %v4906 = vpop.f32.mrf.mxu0
        %v4907 = vadd.f32 %v4738, %v4906
        %4908 = vmatmul.bf16.gmra.mxu0 %v4279
        %v4909 = vpop.f32.mrf.mxu0
        %v4910 = vadd.f32 %v4741, %v4909
        %v4911 = vpop.f32.mrf.mxu0
        %v4912 = vadd.f32 %v4743, %v4911
        %4913 = vmatmul.bf16.gmra.mxu0 %v4283
        %v4914 = vpop.f32.mrf.mxu0
        %v4915 = vadd.f32 %v4746, %v4914
        %v4916 = vpop.f32.mrf.mxu0
        %v4917 = vadd.f32 %v4748, %v4916
        %4918 = vmatmul.bf16.gmra.mxu0 %v4287
        %v4919 = vpop.f32.mrf.mxu0
        %v4920 = vadd.f32 %v4751, %v4919
        %v4921 = vpop.f32.mrf.mxu0
        %v4922 = vadd.f32 %v4753, %v4921
        %4923 = vdwg.mxu0
        %4924 = vmatpush.bf16.msra.mxu0 %v760
        %4925 = vmatpush.bf16.msra.mxu0 %v759
        %4926 = vmatpush.bf16.msra.mxu0 %v758
        %4927 = vmatpush.bf16.msra.mxu0 %v757
        %4928 = vmatpush.bf16.msra.mxu0 %v756
        %4929 = vmatpush.bf16.msra.mxu0 %v755
        %4930 = vmatpush.bf16.msra.mxu0 %v754
        %4931 = vmatpush.bf16.msra.mxu0 %v753
        %4932 = vmatmul.bf16.gmra.mxu0 %v4164
        %v4933 = vpop.f32.mrf.mxu0
        %v4934 = vadd.f32 %v4765, %v4933
        %v4935 = vpop.f32.mrf.mxu0
        %v4936 = vadd.f32 %v4767, %v4935
        %4937 = vmatmul.bf16.gmra.mxu0 %v4168
        %v4938 = vpop.f32.mrf.mxu0
        %v4939 = vadd.f32 %v4770, %v4938
        %v4940 = vpop.f32.mrf.mxu0
        %v4941 = vadd.f32 %v4772, %v4940
        %4942 = vmatmul.bf16.gmra.mxu0 %v4172
        %v4943 = vpop.f32.mrf.mxu0
        %v4944 = vadd.f32 %v4775, %v4943
        %v4945 = vpop.f32.mrf.mxu0
        %v4946 = vadd.f32 %v4777, %v4945
        %4947 = vmatmul.bf16.gmra.mxu0 %v4176
        %v4948 = vpop.f32.mrf.mxu0
        %v4949 = vadd.f32 %v4780, %v4948
        %v4950 = vpop.f32.mrf.mxu0
        %v4951 = vadd.f32 %v4782, %v4950
        %4952 = vmatmul.bf16.gmra.mxu0 %v4180
        %v4953 = vpop.f32.mrf.mxu0
        %v4954 = vadd.f32 %v4785, %v4953
        %v4955 = vpop.f32.mrf.mxu0
        %v4956 = vadd.f32 %v4787, %v4955
        %4957 = vmatmul.bf16.gmra.mxu0 %v4184
        %v4958 = vpop.f32.mrf.mxu0
        %v4959 = vadd.f32 %v4790, %v4958
        %v4960 = vpop.f32.mrf.mxu0
        %v4961 = vadd.f32 %v4792, %v4960
        %4962 = vmatmul.bf16.gmra.mxu0 %v4188
        %v4963 = vpop.f32.mrf.mxu0
        %v4964 = vadd.f32 %v4795, %v4963
        %v4965 = vpop.f32.mrf.mxu0
        %v4966 = vadd.f32 %v4797, %v4965
        %4967 = vmatmul.bf16.gmra.mxu0 %v4192
        %v4968 = vpop.f32.mrf.mxu0
        %v4969 = vadd.f32 %v4800, %v4968
        %v4970 = vpop.f32.mrf.mxu0
        %v4971 = vadd.f32 %v4802, %v4970
        %4972 = vmatmul.bf16.gmra.mxu0 %v4196
        %v4973 = vpop.f32.mrf.mxu0
        %v4974 = vadd.f32 %v4805, %v4973
        %v4975 = vpop.f32.mrf.mxu0
        %v4976 = vadd.f32 %v4807, %v4975
        %4977 = vmatmul.bf16.gmra.mxu0 %v4200
        %v4978 = vpop.f32.mrf.mxu0
        %v4979 = vadd.f32 %v4810, %v4978
        %v4980 = vpop.f32.mrf.mxu0
        %v4981 = vadd.f32 %v4812, %v4980
        %4982 = vmatmul.bf16.gmra.mxu0 %v4204
        %v4983 = vpop.f32.mrf.mxu0
        %v4984 = vadd.f32 %v4815, %v4983
        %v4985 = vpop.f32.mrf.mxu0
        %v4986 = vadd.f32 %v4817, %v4985
        %4987 = vmatmul.bf16.gmra.mxu0 %v4208
        %v4988 = vpop.f32.mrf.mxu0
        %v4989 = vadd.f32 %v4820, %v4988
        %v4990 = vpop.f32.mrf.mxu0
        %v4991 = vadd.f32 %v4822, %v4990
        %4992 = vmatmul.bf16.gmra.mxu0 %v4212
        %v4993 = vpop.f32.mrf.mxu0
        %v4994 = vadd.f32 %v4825, %v4993
        %v4995 = vpop.f32.mrf.mxu0
        %v4996 = vadd.f32 %v4827, %v4995
        %4997 = vmatmul.bf16.gmra.mxu0 %v4216
        %v4998 = vpop.f32.mrf.mxu0
        %v4999 = vadd.f32 %v4830, %v4998
        %v5000 = vpop.f32.mrf.mxu0
        %v5001 = vadd.f32 %v4832, %v5000
        %5002 = vmatmul.bf16.gmra.mxu0 %v4220
        %v5003 = vpop.f32.mrf.mxu0
        %v5004 = vadd.f32 %v4835, %v5003
        %v5005 = vpop.f32.mrf.mxu0
        %v5006 = vadd.f32 %v4837, %v5005
        %5007 = vmatmul.bf16.gmra.mxu0 %v4224
        %v5008 = vpop.f32.mrf.mxu0
        %v5009 = vadd.f32 %v4840, %v5008
        %v5010 = vpop.f32.mrf.mxu0
        %v5011 = vadd.f32 %v4842, %v5010
        %5012 = vmatmul.bf16.gmra.mxu0 %v4228
        %v5013 = vpop.f32.mrf.mxu0
        %v5014 = vadd.f32 %v4845, %v5013
        %v5015 = vpop.f32.mrf.mxu0
        %v5016 = vadd.f32 %v4847, %v5015
        %5017 = vmatmul.bf16.gmra.mxu0 %v4232
        %v5018 = vpop.f32.mrf.mxu0
        %v5019 = vadd.f32 %v4850, %v5018
        %v5020 = vpop.f32.mrf.mxu0
        %v5021 = vadd.f32 %v4852, %v5020
        %5022 = vmatmul.bf16.gmra.mxu0 %v4236
        %v5023 = vpop.f32.mrf.mxu0
        %v5024 = vadd.f32 %v4855, %v5023
        %v5025 = vpop.f32.mrf.mxu0
        %v5026 = vadd.f32 %v4857, %v5025
        %5027 = vmatmul.bf16.gmra.mxu0 %v4240
        %v5028 = vpop.f32.mrf.mxu0
        %v5029 = vadd.f32 %v4860, %v5028
        %v5030 = vpop.f32.mrf.mxu0
        %v5031 = vadd.f32 %v4862, %v5030
        %5032 = vmatmul.bf16.gmra.mxu0 %v4244
        %v5033 = vpop.f32.mrf.mxu0
        %v5034 = vadd.f32 %v4865, %v5033
        %v5035 = vpop.f32.mrf.mxu0
        %v5036 = vadd.f32 %v4867, %v5035
        %5037 = vmatmul.bf16.gmra.mxu0 %v4248
        %v5038 = vpop.f32.mrf.mxu0
        %v5039 = vadd.f32 %v4870, %v5038
        %v5040 = vpop.f32.mrf.mxu0
        %v5041 = vadd.f32 %v4872, %v5040
        %5042 = vmatmul.bf16.gmra.mxu0 %v4252
        %v5043 = vpop.f32.mrf.mxu0
        %v5044 = vadd.f32 %v4875, %v5043
        %v5045 = vpop.f32.mrf.mxu0
        %v5046 = vadd.f32 %v4877, %v5045
        %5047 = vmatmul.bf16.gmra.mxu0 %v4256
        %v5048 = vpop.f32.mrf.mxu0
        %v5049 = vadd.f32 %v4880, %v5048
        %v5050 = vpop.f32.mrf.mxu0
        %v5051 = vadd.f32 %v4882, %v5050
        %5052 = vmatmul.bf16.gmra.mxu0 %v4260
        %v5053 = vpop.f32.mrf.mxu0
        %v5054 = vadd.f32 %v4885, %v5053
        %v5055 = vpop.f32.mrf.mxu0
        %v5056 = vadd.f32 %v4887, %v5055
        %5057 = vmatmul.bf16.gmra.mxu0 %v4264
        %v5058 = vpop.f32.mrf.mxu0
        %v5059 = vadd.f32 %v4890, %v5058
        %v5060 = vpop.f32.mrf.mxu0
        %v5061 = vadd.f32 %v4892, %v5060
        %5062 = vmatmul.bf16.gmra.mxu0 %v4268
        %v5063 = vpop.f32.mrf.mxu0
        %v5064 = vadd.f32 %v4895, %v5063
        %v5065 = vpop.f32.mrf.mxu0
        %v5066 = vadd.f32 %v4897, %v5065
        %5067 = vmatmul.bf16.gmra.mxu0 %v4272
        %v5068 = vpop.f32.mrf.mxu0
        %v5069 = vadd.f32 %v4900, %v5068
        %v5070 = vpop.f32.mrf.mxu0
        %v5071 = vadd.f32 %v4902, %v5070
        %5072 = vmatmul.bf16.gmra.mxu0 %v4276
        %v5073 = vpop.f32.mrf.mxu0
        %v5074 = vadd.f32 %v4905, %v5073
        %v5075 = vpop.f32.mrf.mxu0
        %v5076 = vadd.f32 %v4907, %v5075
        %5077 = vmatmul.bf16.gmra.mxu0 %v4280
        %v5078 = vpop.f32.mrf.mxu0
        %v5079 = vadd.f32 %v4910, %v5078
        %v5080 = vpop.f32.mrf.mxu0
        %v5081 = vadd.f32 %v4912, %v5080
        %5082 = vmatmul.bf16.gmra.mxu0 %v4284
        %v5083 = vpop.f32.mrf.mxu0
        %v5084 = vadd.f32 %v4915, %v5083
        %v5085 = vpop.f32.mrf.mxu0
        %v5086 = vadd.f32 %v4917, %v5085
        %5087 = vmatmul.bf16.gmra.mxu0 %v4288
        %v5088 = vpop.f32.mrf.mxu0
        %v5089 = vadd.f32 %v4920, %v5088
        %v5090 = vpop.f32.mrf.mxu0
        %v5091 = vadd.f32 %v4922, %v5090
        %5092 = vdwg.mxu0
        %v5093 = vadd.f32 %v3490, %v4934
        %v5094 = vadd.f32 %v3492, %v4936
        %v5095 = vadd.f32 %v3495, %v4939
        %v5096 = vadd.f32 %v3497, %v4941
        %v5097 = vadd.f32 %v3500, %v4944
        %v5098 = vadd.f32 %v3502, %v4946
        %v5099 = vadd.f32 %v3505, %v4949
        %v5100 = vadd.f32 %v3507, %v4951
        %v5101 = vadd.f32 %v3510, %v4954
        %v5102 = vadd.f32 %v3512, %v4956
        %v5103 = vadd.f32 %v3515, %v4959
        %v5104 = vadd.f32 %v3517, %v4961
        %v5105 = vadd.f32 %v3520, %v4964
        %v5106 = vadd.f32 %v3522, %v4966
        %v5107 = vadd.f32 %v3525, %v4969
        %v5108 = vadd.f32 %v3527, %v4971
        %v5109 = vadd.f32 %v3530, %v4974
        %v5110 = vadd.f32 %v3532, %v4976
        %v5111 = vadd.f32 %v3535, %v4979
        %v5112 = vadd.f32 %v3537, %v4981
        %v5113 = vadd.f32 %v3540, %v4984
        %v5114 = vadd.f32 %v3542, %v4986
        %v5115 = vadd.f32 %v3545, %v4989
        %v5116 = vadd.f32 %v3547, %v4991
        %v5117 = vadd.f32 %v3550, %v4994
        %v5118 = vadd.f32 %v3552, %v4996
        %v5119 = vadd.f32 %v3555, %v4999
        %v5120 = vadd.f32 %v3557, %v5001
        %v5121 = vadd.f32 %v3560, %v5004
        %v5122 = vadd.f32 %v3562, %v5006
        %v5123 = vadd.f32 %v3565, %v5009
        %v5124 = vadd.f32 %v3567, %v5011
        %v5125 = vadd.f32 %v3570, %v5014
        %v5126 = vadd.f32 %v3572, %v5016
        %v5127 = vadd.f32 %v3575, %v5019
        %v5128 = vadd.f32 %v3577, %v5021
        %v5129 = vadd.f32 %v3580, %v5024
        %v5130 = vadd.f32 %v3582, %v5026
        %v5131 = vadd.f32 %v3585, %v5029
        %v5132 = vadd.f32 %v3587, %v5031
        %v5133 = vadd.f32 %v3590, %v5034
        %v5134 = vadd.f32 %v3592, %v5036
        %v5135 = vadd.f32 %v3595, %v5039
        %v5136 = vadd.f32 %v3597, %v5041
        %v5137 = vadd.f32 %v3600, %v5044
        %v5138 = vadd.f32 %v3602, %v5046
        %v5139 = vadd.f32 %v3605, %v5049
        %v5140 = vadd.f32 %v3607, %v5051
        %v5141 = vadd.f32 %v3610, %v5054
        %v5142 = vadd.f32 %v3612, %v5056
        %v5143 = vadd.f32 %v3615, %v5059
        %v5144 = vadd.f32 %v3617, %v5061
        %v5145 = vadd.f32 %v3620, %v5064
        %v5146 = vadd.f32 %v3622, %v5066
        %v5147 = vadd.f32 %v3625, %v5069
        %v5148 = vadd.f32 %v3627, %v5071
        %v5149 = vadd.f32 %v3630, %v5074
        %v5150 = vadd.f32 %v3632, %v5076
        %v5151 = vadd.f32 %v3635, %v5079
        %v5152 = vadd.f32 %v3637, %v5081
        %v5153 = vadd.f32 %v3640, %v5084
        %v5154 = vadd.f32 %v3642, %v5086
        %v5155 = vadd.f32 %v3645, %v5089
        %v5156 = vadd.f32 %v3647, %v5091
        %v5157 = vld [vmem:[%s6] sm:$0xff]
        %v5158 = vld [vmem:[%s6 + $0x8] sm:$0xff]
        %v5159 = vld [vmem:[%s6 + $0x10] sm:$0xff]
        %v5160 = vld [vmem:[%s6 + $0x18] sm:$0xff]
        %v5161 = vld [vmem:[%s6 + $0x20] sm:$0xff]
        %v5162 = vld [vmem:[%s6 + $0x28] sm:$0xff]
        %v5163 = vld [vmem:[%s6 + $0x30] sm:$0xff]
        %v5164 = vld [vmem:[%s6 + $0x38] sm:$0xff]
        %v5165 = vld [vmem:[%s6 + $0x40] sm:$0xff]
        %v5166 = vld [vmem:[%s6 + $0x48] sm:$0xff]
        %v5167 = vld [vmem:[%s6 + $0x50] sm:$0xff]
        %v5168 = vld [vmem:[%s6 + $0x58] sm:$0xff]
        %v5169 = vld [vmem:[%s6 + $0x60] sm:$0xff]
        %v5170 = vld [vmem:[%s6 + $0x68] sm:$0xff]
        %v5171 = vld [vmem:[%s6 + $0x70] sm:$0xff]
        %v5172 = vld [vmem:[%s6 + $0x78] sm:$0xff]
        %v5173 = vld [vmem:[%s6 + $0x80] sm:$0xff]
        %v5174 = vld [vmem:[%s6 + $0x88] sm:$0xff]
        %v5175 = vld [vmem:[%s6 + $0x90] sm:$0xff]
        %v5176 = vld [vmem:[%s6 + $0x98] sm:$0xff]
        %v5177 = vld [vmem:[%s6 + $0xa0] sm:$0xff]
        %v5178 = vld [vmem:[%s6 + $0xa8] sm:$0xff]
        %v5179 = vld [vmem:[%s6 + $0xb0] sm:$0xff]
        %v5180 = vld [vmem:[%s6 + $0xb8] sm:$0xff]
        %v5181 = vld [vmem:[%s6 + $0xc0] sm:$0xff]
        %v5182 = vld [vmem:[%s6 + $0xc8] sm:$0xff]
        %v5183 = vld [vmem:[%s6 + $0xd0] sm:$0xff]
        %v5184 = vld [vmem:[%s6 + $0xd8] sm:$0xff]
        %v5185 = vld [vmem:[%s6 + $0xe0] sm:$0xff]
        %v5186 = vld [vmem:[%s6 + $0xe8] sm:$0xff]
        %v5187 = vld [vmem:[%s6 + $0xf0] sm:$0xff]
        %v5188 = vld [vmem:[%s6 + $0xf8] sm:$0xff]
        %v5189 = vld [vmem:[%s6 + $0x100] sm:$0xff]
        %v5190 = vld [vmem:[%s6 + $0x108] sm:$0xff]
        %v5191 = vld [vmem:[%s6 + $0x110] sm:$0xff]
        %v5192 = vld [vmem:[%s6 + $0x118] sm:$0xff]
        %v5193 = vld [vmem:[%s6 + $0x120] sm:$0xff]
        %v5194 = vld [vmem:[%s6 + $0x128] sm:$0xff]
        %v5195 = vld [vmem:[%s6 + $0x130] sm:$0xff]
        %v5196 = vld [vmem:[%s6 + $0x138] sm:$0xff]
        %v5197 = vld [vmem:[%s6 + $0x140] sm:$0xff]
        %v5198 = vld [vmem:[%s6 + $0x148] sm:$0xff]
        %v5199 = vld [vmem:[%s6 + $0x150] sm:$0xff]
        %v5200 = vld [vmem:[%s6 + $0x158] sm:$0xff]
        %v5201 = vld [vmem:[%s6 + $0x160] sm:$0xff]
        %v5202 = vld [vmem:[%s6 + $0x168] sm:$0xff]
        %v5203 = vld [vmem:[%s6 + $0x170] sm:$0xff]
        %v5204 = vld [vmem:[%s6 + $0x178] sm:$0xff]
        %v5205 = vld [vmem:[%s6 + $0x180] sm:$0xff]
        %v5206 = vld [vmem:[%s6 + $0x188] sm:$0xff]
        %v5207 = vld [vmem:[%s6 + $0x190] sm:$0xff]
        %v5208 = vld [vmem:[%s6 + $0x198] sm:$0xff]
        %v5209 = vld [vmem:[%s6 + $0x1a0] sm:$0xff]
        %v5210 = vld [vmem:[%s6 + $0x1a8] sm:$0xff]
        %v5211 = vld [vmem:[%s6 + $0x1b0] sm:$0xff]
        %v5212 = vld [vmem:[%s6 + $0x1b8] sm:$0xff]
        %v5213 = vld [vmem:[%s6 + $0x1c0] sm:$0xff]
        %v5214 = vld [vmem:[%s6 + $0x1c8] sm:$0xff]
        %v5215 = vld [vmem:[%s6 + $0x1d0] sm:$0xff]
        %v5216 = vld [vmem:[%s6 + $0x1d8] sm:$0xff]
        %v5217 = vld [vmem:[%s6 + $0x1e0] sm:$0xff]
        %v5218 = vld [vmem:[%s6 + $0x1e8] sm:$0xff]
        %v5219 = vld [vmem:[%s6 + $0x1f0] sm:$0xff]
        %v5220 = vld [vmem:[%s6 + $0x1f8] sm:$0xff]
        %5222 = vset.pattern.permute.xlu0 0
        %5223 = vperm.xlu0 %5222, %v5157
        %v5224 = vpop.permute.xlu0 %5223
        %5227 = vset.pattern.permute.xlu0 0
        %5228 = vperm.xlu0 %5227, %v5158
        %v5229 = vpop.permute.xlu0 %5228
        %5232 = vset.pattern.permute.xlu0 0
        %5233 = vperm.xlu0 %5232, %v5159
        %v5234 = vpop.permute.xlu0 %5233
        %5237 = vset.pattern.permute.xlu0 0
        %5238 = vperm.xlu0 %5237, %v5160
        %v5239 = vpop.permute.xlu0 %5238
        %5242 = vset.pattern.permute.xlu0 0
        %5243 = vperm.xlu0 %5242, %v5161
        %v5244 = vpop.permute.xlu0 %5243
        %5247 = vset.pattern.permute.xlu0 0
        %5248 = vperm.xlu0 %5247, %v5162
        %v5249 = vpop.permute.xlu0 %5248
        %5252 = vset.pattern.permute.xlu0 0
        %5253 = vperm.xlu0 %5252, %v5163
        %v5254 = vpop.permute.xlu0 %5253
        %5257 = vset.pattern.permute.xlu0 0
        %5258 = vperm.xlu0 %5257, %v5164
        %v5259 = vpop.permute.xlu0 %5258
        %5262 = vset.pattern.permute.xlu0 0
        %5263 = vperm.xlu0 %5262, %v5165
        %v5264 = vpop.permute.xlu0 %5263
        %5267 = vset.pattern.permute.xlu0 0
        %5268 = vperm.xlu0 %5267, %v5166
        %v5269 = vpop.permute.xlu0 %5268
        %5272 = vset.pattern.permute.xlu0 0
        %5273 = vperm.xlu0 %5272, %v5167
        %v5274 = vpop.permute.xlu0 %5273
        %5277 = vset.pattern.permute.xlu0 0
        %5278 = vperm.xlu0 %5277, %v5168
        %v5279 = vpop.permute.xlu0 %5278
        %5282 = vset.pattern.permute.xlu0 0
        %5283 = vperm.xlu0 %5282, %v5169
        %v5284 = vpop.permute.xlu0 %5283
        %5287 = vset.pattern.permute.xlu0 0
        %5288 = vperm.xlu0 %5287, %v5170
        %v5289 = vpop.permute.xlu0 %5288
        %5292 = vset.pattern.permute.xlu0 0
        %5293 = vperm.xlu0 %5292, %v5171
        %v5294 = vpop.permute.xlu0 %5293
        %5297 = vset.pattern.permute.xlu0 0
        %5298 = vperm.xlu0 %5297, %v5172
        %v5299 = vpop.permute.xlu0 %5298
        %5302 = vset.pattern.permute.xlu0 0
        %5303 = vperm.xlu0 %5302, %v5173
        %v5304 = vpop.permute.xlu0 %5303
        %5307 = vset.pattern.permute.xlu0 0
        %5308 = vperm.xlu0 %5307, %v5174
        %v5309 = vpop.permute.xlu0 %5308
        %5312 = vset.pattern.permute.xlu0 0
        %5313 = vperm.xlu0 %5312, %v5175
        %v5314 = vpop.permute.xlu0 %5313
        %5317 = vset.pattern.permute.xlu0 0
        %5318 = vperm.xlu0 %5317, %v5176
        %v5319 = vpop.permute.xlu0 %5318
        %5322 = vset.pattern.permute.xlu0 0
        %5323 = vperm.xlu0 %5322, %v5177
        %v5324 = vpop.permute.xlu0 %5323
        %5327 = vset.pattern.permute.xlu0 0
        %5328 = vperm.xlu0 %5327, %v5178
        %v5329 = vpop.permute.xlu0 %5328
        %5332 = vset.pattern.permute.xlu0 0
        %5333 = vperm.xlu0 %5332, %v5179
        %v5334 = vpop.permute.xlu0 %5333
        %5337 = vset.pattern.permute.xlu0 0
        %5338 = vperm.xlu0 %5337, %v5180
        %v5339 = vpop.permute.xlu0 %5338
        %5342 = vset.pattern.permute.xlu0 0
        %5343 = vperm.xlu0 %5342, %v5181
        %v5344 = vpop.permute.xlu0 %5343
        %5347 = vset.pattern.permute.xlu0 0
        %5348 = vperm.xlu0 %5347, %v5182
        %v5349 = vpop.permute.xlu0 %5348
        %5352 = vset.pattern.permute.xlu0 0
        %5353 = vperm.xlu0 %5352, %v5183
        %v5354 = vpop.permute.xlu0 %5353
        %5357 = vset.pattern.permute.xlu0 0
        %5358 = vperm.xlu0 %5357, %v5184
        %v5359 = vpop.permute.xlu0 %5358
        %5362 = vset.pattern.permute.xlu0 0
        %5363 = vperm.xlu0 %5362, %v5185
        %v5364 = vpop.permute.xlu0 %5363
        %5367 = vset.pattern.permute.xlu0 0
        %5368 = vperm.xlu0 %5367, %v5186
        %v5369 = vpop.permute.xlu0 %5368
        %5372 = vset.pattern.permute.xlu0 0
        %5373 = vperm.xlu0 %5372, %v5187
        %v5374 = vpop.permute.xlu0 %5373
        %5377 = vset.pattern.permute.xlu0 0
        %5378 = vperm.xlu0 %5377, %v5188
        %v5379 = vpop.permute.xlu0 %5378
        %5382 = vset.pattern.permute.xlu0 0
        %5383 = vperm.xlu0 %5382, %v5189
        %v5384 = vpop.permute.xlu0 %5383
        %5387 = vset.pattern.permute.xlu0 0
        %5388 = vperm.xlu0 %5387, %v5190
        %v5389 = vpop.permute.xlu0 %5388
        %5392 = vset.pattern.permute.xlu0 0
        %5393 = vperm.xlu0 %5392, %v5191
        %v5394 = vpop.permute.xlu0 %5393
        %5397 = vset.pattern.permute.xlu0 0
        %5398 = vperm.xlu0 %5397, %v5192
        %v5399 = vpop.permute.xlu0 %5398
        %5402 = vset.pattern.permute.xlu0 0
        %5403 = vperm.xlu0 %5402, %v5193
        %v5404 = vpop.permute.xlu0 %5403
        %5407 = vset.pattern.permute.xlu0 0
        %5408 = vperm.xlu0 %5407, %v5194
        %v5409 = vpop.permute.xlu0 %5408
        %5412 = vset.pattern.permute.xlu0 0
        %5413 = vperm.xlu0 %5412, %v5195
        %v5414 = vpop.permute.xlu0 %5413
        %5417 = vset.pattern.permute.xlu0 0
        %5418 = vperm.xlu0 %5417, %v5196
        %v5419 = vpop.permute.xlu0 %5418
        %5422 = vset.pattern.permute.xlu0 0
        %5423 = vperm.xlu0 %5422, %v5197
        %v5424 = vpop.permute.xlu0 %5423
        %5427 = vset.pattern.permute.xlu0 0
        %5428 = vperm.xlu0 %5427, %v5198
        %v5429 = vpop.permute.xlu0 %5428
        %5432 = vset.pattern.permute.xlu0 0
        %5433 = vperm.xlu0 %5432, %v5199
        %v5434 = vpop.permute.xlu0 %5433
        %5437 = vset.pattern.permute.xlu0 0
        %5438 = vperm.xlu0 %5437, %v5200
        %v5439 = vpop.permute.xlu0 %5438
        %5442 = vset.pattern.permute.xlu0 0
        %5443 = vperm.xlu0 %5442, %v5201
        %v5444 = vpop.permute.xlu0 %5443
        %5447 = vset.pattern.permute.xlu0 0
        %5448 = vperm.xlu0 %5447, %v5202
        %v5449 = vpop.permute.xlu0 %5448
        %5452 = vset.pattern.permute.xlu0 0
        %5453 = vperm.xlu0 %5452, %v5203
        %v5454 = vpop.permute.xlu0 %5453
        %5457 = vset.pattern.permute.xlu0 0
        %5458 = vperm.xlu0 %5457, %v5204
        %v5459 = vpop.permute.xlu0 %5458
        %5462 = vset.pattern.permute.xlu0 0
        %5463 = vperm.xlu0 %5462, %v5205
        %v5464 = vpop.permute.xlu0 %5463
        %5467 = vset.pattern.permute.xlu0 0
        %5468 = vperm.xlu0 %5467, %v5206
        %v5469 = vpop.permute.xlu0 %5468
        %5472 = vset.pattern.permute.xlu0 0
        %5473 = vperm.xlu0 %5472, %v5207
        %v5474 = vpop.permute.xlu0 %5473
        %5477 = vset.pattern.permute.xlu0 0
        %5478 = vperm.xlu0 %5477, %v5208
        %v5479 = vpop.permute.xlu0 %5478
        %5482 = vset.pattern.permute.xlu0 0
        %5483 = vperm.xlu0 %5482, %v5209
        %v5484 = vpop.permute.xlu0 %5483
        %5487 = vset.pattern.permute.xlu0 0
        %5488 = vperm.xlu0 %5487, %v5210
        %v5489 = vpop.permute.xlu0 %5488
        %5492 = vset.pattern.permute.xlu0 0
        %5493 = vperm.xlu0 %5492, %v5211
        %v5494 = vpop.permute.xlu0 %5493
        %5497 = vset.pattern.permute.xlu0 0
        %5498 = vperm.xlu0 %5497, %v5212
        %v5499 = vpop.permute.xlu0 %5498
        %5502 = vset.pattern.permute.xlu0 0
        %5503 = vperm.xlu0 %5502, %v5213
        %v5504 = vpop.permute.xlu0 %5503
        %5507 = vset.pattern.permute.xlu0 0
        %5508 = vperm.xlu0 %5507, %v5214
        %v5509 = vpop.permute.xlu0 %5508
        %5512 = vset.pattern.permute.xlu0 0
        %5513 = vperm.xlu0 %5512, %v5215
        %v5514 = vpop.permute.xlu0 %5513
        %5517 = vset.pattern.permute.xlu0 0
        %5518 = vperm.xlu0 %5517, %v5216
        %v5519 = vpop.permute.xlu0 %5518
        %5522 = vset.pattern.permute.xlu0 0
        %5523 = vperm.xlu0 %5522, %v5217
        %v5524 = vpop.permute.xlu0 %5523
        %5527 = vset.pattern.permute.xlu0 0
        %5528 = vperm.xlu0 %5527, %v5218
        %v5529 = vpop.permute.xlu0 %5528
        %5532 = vset.pattern.permute.xlu0 0
        %5533 = vperm.xlu0 %5532, %v5219
        %v5534 = vpop.permute.xlu0 %5533
        %5537 = vset.pattern.permute.xlu0 0
        %5538 = vperm.xlu0 %5537, %v5220
        %v5539 = vpop.permute.xlu0 %5538
        %v5541 = vadd.f32 %v5093, %v5224
        %v5542 = vadd.f32 %v5094, %v5229
        %v5543 = vadd.f32 %v5095, %v5234
        %v5544 = vadd.f32 %v5096, %v5239
        %v5545 = vadd.f32 %v5097, %v5244
        %v5546 = vadd.f32 %v5098, %v5249
        %v5547 = vadd.f32 %v5099, %v5254
        %v5548 = vadd.f32 %v5100, %v5259
        %v5549 = vadd.f32 %v5101, %v5264
        %v5550 = vadd.f32 %v5102, %v5269
        %v5551 = vadd.f32 %v5103, %v5274
        %v5552 = vadd.f32 %v5104, %v5279
        %v5553 = vadd.f32 %v5105, %v5284
        %v5554 = vadd.f32 %v5106, %v5289
        %v5555 = vadd.f32 %v5107, %v5294
        %v5556 = vadd.f32 %v5108, %v5299
        %v5557 = vadd.f32 %v5109, %v5304
        %v5558 = vadd.f32 %v5110, %v5309
        %v5559 = vadd.f32 %v5111, %v5314
        %v5560 = vadd.f32 %v5112, %v5319
        %v5561 = vadd.f32 %v5113, %v5324
        %v5562 = vadd.f32 %v5114, %v5329
        %v5563 = vadd.f32 %v5115, %v5334
        %v5564 = vadd.f32 %v5116, %v5339
        %v5565 = vadd.f32 %v5117, %v5344
        %v5566 = vadd.f32 %v5118, %v5349
        %v5567 = vadd.f32 %v5119, %v5354
        %v5568 = vadd.f32 %v5120, %v5359
        %v5569 = vadd.f32 %v5121, %v5364
        %v5570 = vadd.f32 %v5122, %v5369
        %v5571 = vadd.f32 %v5123, %v5374
        %v5572 = vadd.f32 %v5124, %v5379
        %v5573 = vadd.f32 %v5125, %v5384
        %v5574 = vadd.f32 %v5126, %v5389
        %v5575 = vadd.f32 %v5127, %v5394
        %v5576 = vadd.f32 %v5128, %v5399
        %v5577 = vadd.f32 %v5129, %v5404
        %v5578 = vadd.f32 %v5130, %v5409
        %v5579 = vadd.f32 %v5131, %v5414
        %v5580 = vadd.f32 %v5132, %v5419
        %v5581 = vadd.f32 %v5133, %v5424
        %v5582 = vadd.f32 %v5134, %v5429
        %v5583 = vadd.f32 %v5135, %v5434
        %v5584 = vadd.f32 %v5136, %v5439
        %v5585 = vadd.f32 %v5137, %v5444
        %v5586 = vadd.f32 %v5138, %v5449
        %v5587 = vadd.f32 %v5139, %v5454
        %v5588 = vadd.f32 %v5140, %v5459
        %v5589 = vadd.f32 %v5141, %v5464
        %v5590 = vadd.f32 %v5142, %v5469
        %v5591 = vadd.f32 %v5143, %v5474
        %v5592 = vadd.f32 %v5144, %v5479
        %v5593 = vadd.f32 %v5145, %v5484
        %v5594 = vadd.f32 %v5146, %v5489
        %v5595 = vadd.f32 %v5147, %v5494
        %v5596 = vadd.f32 %v5148, %v5499
        %v5597 = vadd.f32 %v5149, %v5504
        %v5598 = vadd.f32 %v5150, %v5509
        %v5599 = vadd.f32 %v5151, %v5514
        %v5600 = vadd.f32 %v5152, %v5519
        %v5601 = vadd.f32 %v5153, %v5524
        %v5602 = vadd.f32 %v5154, %v5529
        %v5603 = vadd.f32 %v5155, %v5534
        %v5604 = vadd.f32 %v5156, %v5539
        %v5605 = vmax.f32 %v5541, 0.0
        %v5606 = vmax.f32 %v5542, 0.0
        %v5607 = vmax.f32 %v5543, 0.0
        %v5608 = vmax.f32 %v5544, 0.0
        %v5609 = vmax.f32 %v5545, 0.0
        %v5610 = vmax.f32 %v5546, 0.0
        %v5611 = vmax.f32 %v5547, 0.0
        %v5612 = vmax.f32 %v5548, 0.0
        %v5613 = vmax.f32 %v5549, 0.0
        %v5614 = vmax.f32 %v5550, 0.0
        %v5615 = vmax.f32 %v5551, 0.0
        %v5616 = vmax.f32 %v5552, 0.0
        %v5617 = vmax.f32 %v5553, 0.0
        %v5618 = vmax.f32 %v5554, 0.0
        %v5619 = vmax.f32 %v5555, 0.0
        %v5620 = vmax.f32 %v5556, 0.0
        %v5621 = vmax.f32 %v5557, 0.0
        %v5622 = vmax.f32 %v5558, 0.0
        %v5623 = vmax.f32 %v5559, 0.0
        %v5624 = vmax.f32 %v5560, 0.0
        %v5625 = vmax.f32 %v5561, 0.0
        %v5626 = vmax.f32 %v5562, 0.0
        %v5627 = vmax.f32 %v5563, 0.0
        %v5628 = vmax.f32 %v5564, 0.0
        %v5629 = vmax.f32 %v5565, 0.0
        %v5630 = vmax.f32 %v5566, 0.0
        %v5631 = vmax.f32 %v5567, 0.0
        %v5632 = vmax.f32 %v5568, 0.0
        %v5633 = vmax.f32 %v5569, 0.0
        %v5634 = vmax.f32 %v5570, 0.0
        %v5635 = vmax.f32 %v5571, 0.0
        %v5636 = vmax.f32 %v5572, 0.0
        %v5637 = vmax.f32 %v5573, 0.0
        %v5638 = vmax.f32 %v5574, 0.0
        %v5639 = vmax.f32 %v5575, 0.0
        %v5640 = vmax.f32 %v5576, 0.0
        %v5641 = vmax.f32 %v5577, 0.0
        %v5642 = vmax.f32 %v5578, 0.0
        %v5643 = vmax.f32 %v5579, 0.0
        %v5644 = vmax.f32 %v5580, 0.0
        %v5645 = vmax.f32 %v5581, 0.0
        %v5646 = vmax.f32 %v5582, 0.0
        %v5647 = vmax.f32 %v5583, 0.0
        %v5648 = vmax.f32 %v5584, 0.0
        %v5649 = vmax.f32 %v5585, 0.0
        %v5650 = vmax.f32 %v5586, 0.0
        %v5651 = vmax.f32 %v5587, 0.0
        %v5652 = vmax.f32 %v5588, 0.0
        %v5653 = vmax.f32 %v5589, 0.0
        %v5654 = vmax.f32 %v5590, 0.0
        %v5655 = vmax.f32 %v5591, 0.0
        %v5656 = vmax.f32 %v5592, 0.0
        %v5657 = vmax.f32 %v5593, 0.0
        %v5658 = vmax.f32 %v5594, 0.0
        %v5659 = vmax.f32 %v5595, 0.0
        %v5660 = vmax.f32 %v5596, 0.0
        %v5661 = vmax.f32 %v5597, 0.0
        %v5662 = vmax.f32 %v5598, 0.0
        %v5663 = vmax.f32 %v5599, 0.0
        %v5664 = vmax.f32 %v5600, 0.0
        %v5665 = vmax.f32 %v5601, 0.0
        %v5666 = vmax.f32 %v5602, 0.0
        %v5667 = vmax.f32 %v5603, 0.0
        %v5668 = vmax.f32 %v5604, 0.0
        %v5669 = vld [vmem:[%s7] sm:$0xff]
        %v5670 = vld [vmem:[%s7 + $0x8] sm:$0xff]
        %v5671 = vld [vmem:[%s7 + $0x10] sm:$0xff]
        %v5672 = vld [vmem:[%s7 + $0x18] sm:$0xff]
        %v5673 = vld [vmem:[%s7 + $0x20] sm:$0xff]
        %v5674 = vld [vmem:[%s7 + $0x28] sm:$0xff]
        %v5675 = vld [vmem:[%s7 + $0x30] sm:$0xff]
        %v5676 = vld [vmem:[%s7 + $0x38] sm:$0xff]
        %v5677 = vld [vmem:[%s7 + $0x40] sm:$0xff]
        %v5678 = vld [vmem:[%s7 + $0x48] sm:$0xff]
        %v5679 = vld [vmem:[%s7 + $0x50] sm:$0xff]
        %v5680 = vld [vmem:[%s7 + $0x58] sm:$0xff]
        %v5681 = vld [vmem:[%s7 + $0x60] sm:$0xff]
        %v5682 = vld [vmem:[%s7 + $0x68] sm:$0xff]
        %v5683 = vld [vmem:[%s7 + $0x70] sm:$0xff]
        %v5684 = vld [vmem:[%s7 + $0x78] sm:$0xff]
        %v5685 = vld [vmem:[%s7 + $0x80] sm:$0xff]
        %v5686 = vld [vmem:[%s7 + $0x88] sm:$0xff]
        %v5687 = vld [vmem:[%s7 + $0x90] sm:$0xff]
        %v5688 = vld [vmem:[%s7 + $0x98] sm:$0xff]
        %v5689 = vld [vmem:[%s7 + $0xa0] sm:$0xff]
        %v5690 = vld [vmem:[%s7 + $0xa8] sm:$0xff]
        %v5691 = vld [vmem:[%s7 + $0xb0] sm:$0xff]
        %v5692 = vld [vmem:[%s7 + $0xb8] sm:$0xff]
        %v5693 = vld [vmem:[%s7 + $0xc0] sm:$0xff]
        %v5694 = vld [vmem:[%s7 + $0xc8] sm:$0xff]
        %v5695 = vld [vmem:[%s7 + $0xd0] sm:$0xff]
        %v5696 = vld [vmem:[%s7 + $0xd8] sm:$0xff]
        %v5697 = vld [vmem:[%s7 + $0xe0] sm:$0xff]
        %v5698 = vld [vmem:[%s7 + $0xe8] sm:$0xff]
        %v5699 = vld [vmem:[%s7 + $0xf0] sm:$0xff]
        %v5700 = vld [vmem:[%s7 + $0xf8] sm:$0xff]
        %v5701 = vld [vmem:[%s7 + $0x100] sm:$0xff]
        %v5702 = vld [vmem:[%s7 + $0x108] sm:$0xff]
        %v5703 = vld [vmem:[%s7 + $0x110] sm:$0xff]
        %v5704 = vld [vmem:[%s7 + $0x118] sm:$0xff]
        %v5705 = vld [vmem:[%s7 + $0x120] sm:$0xff]
        %v5706 = vld [vmem:[%s7 + $0x128] sm:$0xff]
        %v5707 = vld [vmem:[%s7 + $0x130] sm:$0xff]
        %v5708 = vld [vmem:[%s7 + $0x138] sm:$0xff]
        %v5709 = vld [vmem:[%s7 + $0x140] sm:$0xff]
        %v5710 = vld [vmem:[%s7 + $0x148] sm:$0xff]
        %v5711 = vld [vmem:[%s7 + $0x150] sm:$0xff]
        %v5712 = vld [vmem:[%s7 + $0x158] sm:$0xff]
        %v5713 = vld [vmem:[%s7 + $0x160] sm:$0xff]
        %v5714 = vld [vmem:[%s7 + $0x168] sm:$0xff]
        %v5715 = vld [vmem:[%s7 + $0x170] sm:$0xff]
        %v5716 = vld [vmem:[%s7 + $0x178] sm:$0xff]
        %v5717 = vld [vmem:[%s7 + $0x180] sm:$0xff]
        %v5718 = vld [vmem:[%s7 + $0x188] sm:$0xff]
        %v5719 = vld [vmem:[%s7 + $0x190] sm:$0xff]
        %v5720 = vld [vmem:[%s7 + $0x198] sm:$0xff]
        %v5721 = vld [vmem:[%s7 + $0x1a0] sm:$0xff]
        %v5722 = vld [vmem:[%s7 + $0x1a8] sm:$0xff]
        %v5723 = vld [vmem:[%s7 + $0x1b0] sm:$0xff]
        %v5724 = vld [vmem:[%s7 + $0x1b8] sm:$0xff]
        %v5725 = vld [vmem:[%s7 + $0x1c0] sm:$0xff]
        %v5726 = vld [vmem:[%s7 + $0x1c8] sm:$0xff]
        %v5727 = vld [vmem:[%s7 + $0x1d0] sm:$0xff]
        %v5728 = vld [vmem:[%s7 + $0x1d8] sm:$0xff]
        %v5729 = vld [vmem:[%s7 + $0x1e0] sm:$0xff]
        %v5730 = vld [vmem:[%s7 + $0x1e8] sm:$0xff]
        %v5731 = vld [vmem:[%s7 + $0x1f0] sm:$0xff]
        %v5732 = vld [vmem:[%s7 + $0x1f8] sm:$0xff]
        %v5733 = vld [vmem:[%s7 + $0x200] sm:$0xff]
        %v5734 = vld [vmem:[%s7 + $0x208] sm:$0xff]
        %v5735 = vld [vmem:[%s7 + $0x210] sm:$0xff]
        %v5736 = vld [vmem:[%s7 + $0x218] sm:$0xff]
        %v5737 = vld [vmem:[%s7 + $0x220] sm:$0xff]
        %v5738 = vld [vmem:[%s7 + $0x228] sm:$0xff]
        %v5739 = vld [vmem:[%s7 + $0x230] sm:$0xff]
        %v5740 = vld [vmem:[%s7 + $0x238] sm:$0xff]
        %v5741 = vld [vmem:[%s7 + $0x240] sm:$0xff]
        %v5742 = vld [vmem:[%s7 + $0x248] sm:$0xff]
        %v5743 = vld [vmem:[%s7 + $0x250] sm:$0xff]
        %v5744 = vld [vmem:[%s7 + $0x258] sm:$0xff]
        %v5745 = vld [vmem:[%s7 + $0x260] sm:$0xff]
        %v5746 = vld [vmem:[%s7 + $0x268] sm:$0xff]
        %v5747 = vld [vmem:[%s7 + $0x270] sm:$0xff]
        %v5748 = vld [vmem:[%s7 + $0x278] sm:$0xff]
        %v5749 = vld [vmem:[%s7 + $0x280] sm:$0xff]
        %v5750 = vld [vmem:[%s7 + $0x288] sm:$0xff]
        %v5751 = vld [vmem:[%s7 + $0x290] sm:$0xff]
        %v5752 = vld [vmem:[%s7 + $0x298] sm:$0xff]
        %v5753 = vld [vmem:[%s7 + $0x2a0] sm:$0xff]
        %v5754 = vld [vmem:[%s7 + $0x2a8] sm:$0xff]
        %v5755 = vld [vmem:[%s7 + $0x2b0] sm:$0xff]
        %v5756 = vld [vmem:[%s7 + $0x2b8] sm:$0xff]
        %v5757 = vld [vmem:[%s7 + $0x2c0] sm:$0xff]
        %v5758 = vld [vmem:[%s7 + $0x2c8] sm:$0xff]
        %v5759 = vld [vmem:[%s7 + $0x2d0] sm:$0xff]
        %v5760 = vld [vmem:[%s7 + $0x2d8] sm:$0xff]
        %v5761 = vld [vmem:[%s7 + $0x2e0] sm:$0xff]
        %v5762 = vld [vmem:[%s7 + $0x2e8] sm:$0xff]
        %v5763 = vld [vmem:[%s7 + $0x2f0] sm:$0xff]
        %v5764 = vld [vmem:[%s7 + $0x2f8] sm:$0xff]
        %v5765 = vld [vmem:[%s7 + $0x300] sm:$0xff]
        %v5766 = vld [vmem:[%s7 + $0x308] sm:$0xff]
        %v5767 = vld [vmem:[%s7 + $0x310] sm:$0xff]
        %v5768 = vld [vmem:[%s7 + $0x318] sm:$0xff]
        %v5769 = vld [vmem:[%s7 + $0x320] sm:$0xff]
        %v5770 = vld [vmem:[%s7 + $0x328] sm:$0xff]
        %v5771 = vld [vmem:[%s7 + $0x330] sm:$0xff]
        %v5772 = vld [vmem:[%s7 + $0x338] sm:$0xff]
        %v5773 = vld [vmem:[%s7 + $0x340] sm:$0xff]
        %v5774 = vld [vmem:[%s7 + $0x348] sm:$0xff]
        %v5775 = vld [vmem:[%s7 + $0x350] sm:$0xff]
        %v5776 = vld [vmem:[%s7 + $0x358] sm:$0xff]
        %v5777 = vld [vmem:[%s7 + $0x360] sm:$0xff]
        %v5778 = vld [vmem:[%s7 + $0x368] sm:$0xff]
        %v5779 = vld [vmem:[%s7 + $0x370] sm:$0xff]
        %v5780 = vld [vmem:[%s7 + $0x378] sm:$0xff]
        %v5781 = vld [vmem:[%s7 + $0x380] sm:$0xff]
        %v5782 = vld [vmem:[%s7 + $0x388] sm:$0xff]
        %v5783 = vld [vmem:[%s7 + $0x390] sm:$0xff]
        %v5784 = vld [vmem:[%s7 + $0x398] sm:$0xff]
        %v5785 = vld [vmem:[%s7 + $0x3a0] sm:$0xff]
        %v5786 = vld [vmem:[%s7 + $0x3a8] sm:$0xff]
        %v5787 = vld [vmem:[%s7 + $0x3b0] sm:$0xff]
        %v5788 = vld [vmem:[%s7 + $0x3b8] sm:$0xff]
        %v5789 = vld [vmem:[%s7 + $0x3c0] sm:$0xff]
        %v5790 = vld [vmem:[%s7 + $0x3c8] sm:$0xff]
        %v5791 = vld [vmem:[%s7 + $0x3d0] sm:$0xff]
        %v5792 = vld [vmem:[%s7 + $0x3d8] sm:$0xff]
        %v5793 = vld [vmem:[%s7 + $0x3e0] sm:$0xff]
        %v5794 = vld [vmem:[%s7 + $0x3e8] sm:$0xff]
        %v5795 = vld [vmem:[%s7 + $0x3f0] sm:$0xff]
        %v5796 = vld [vmem:[%s7 + $0x3f8] sm:$0xff]
        %v5797 = vpack.c.bf16 %v5606, %v5605
        %v5798 = vpack.c.bf16 %v5608, %v5607
        %v5799 = vpack.c.bf16 %v5610, %v5609
        %v5800 = vpack.c.bf16 %v5612, %v5611
        %v5801 = vpack.c.bf16 %v5614, %v5613
        %v5802 = vpack.c.bf16 %v5616, %v5615
        %v5803 = vpack.c.bf16 %v5618, %v5617
        %v5804 = vpack.c.bf16 %v5620, %v5619
        %v5805 = vpack.c.bf16 %v5622, %v5621
        %v5806 = vpack.c.bf16 %v5624, %v5623
        %v5807 = vpack.c.bf16 %v5626, %v5625
        %v5808 = vpack.c.bf16 %v5628, %v5627
        %v5809 = vpack.c.bf16 %v5630, %v5629
        %v5810 = vpack.c.bf16 %v5632, %v5631
        %v5811 = vpack.c.bf16 %v5634, %v5633
        %v5812 = vpack.c.bf16 %v5636, %v5635
        %v5813 = vpack.c.bf16 %v5638, %v5637
        %v5814 = vpack.c.bf16 %v5640, %v5639
        %v5815 = vpack.c.bf16 %v5642, %v5641
        %v5816 = vpack.c.bf16 %v5644, %v5643
        %v5817 = vpack.c.bf16 %v5646, %v5645
        %v5818 = vpack.c.bf16 %v5648, %v5647
        %v5819 = vpack.c.bf16 %v5650, %v5649
        %v5820 = vpack.c.bf16 %v5652, %v5651
        %v5821 = vpack.c.bf16 %v5654, %v5653
        %v5822 = vpack.c.bf16 %v5656, %v5655
        %v5823 = vpack.c.bf16 %v5658, %v5657
        %v5824 = vpack.c.bf16 %v5660, %v5659
        %v5825 = vpack.c.bf16 %v5662, %v5661
        %v5826 = vpack.c.bf16 %v5664, %v5663
        %v5827 = vpack.c.bf16 %v5666, %v5665
        %v5828 = vpack.c.bf16 %v5668, %v5667
        %v5829 = vld [vmem:[%s8] sm:$0xff]
        %v5830 = vld [vmem:[%s8 + $0x8] sm:$0xff]
        %v5831 = vld [vmem:[%s8 + $0x10] sm:$0xff]
        %v5832 = vld [vmem:[%s8 + $0x18] sm:$0xff]
        %v5833 = vld [vmem:[%s8 + $0x20] sm:$0xff]
        %v5834 = vld [vmem:[%s8 + $0x28] sm:$0xff]
        %v5835 = vld [vmem:[%s8 + $0x30] sm:$0xff]
        %v5836 = vld [vmem:[%s8 + $0x38] sm:$0xff]
        %v5837 = vld [vmem:[%s8 + $0x40] sm:$0xff]
        %v5838 = vld [vmem:[%s8 + $0x48] sm:$0xff]
        %v5839 = vld [vmem:[%s8 + $0x50] sm:$0xff]
        %v5840 = vld [vmem:[%s8 + $0x58] sm:$0xff]
        %v5841 = vld [vmem:[%s8 + $0x60] sm:$0xff]
        %v5842 = vld [vmem:[%s8 + $0x68] sm:$0xff]
        %v5843 = vld [vmem:[%s8 + $0x70] sm:$0xff]
        %v5844 = vld [vmem:[%s8 + $0x78] sm:$0xff]
        %v5845 = vld [vmem:[%s8 + $0x80] sm:$0xff]
        %v5846 = vld [vmem:[%s8 + $0x88] sm:$0xff]
        %v5847 = vld [vmem:[%s8 + $0x90] sm:$0xff]
        %v5848 = vld [vmem:[%s8 + $0x98] sm:$0xff]
        %v5849 = vld [vmem:[%s8 + $0xa0] sm:$0xff]
        %v5850 = vld [vmem:[%s8 + $0xa8] sm:$0xff]
        %v5851 = vld [vmem:[%s8 + $0xb0] sm:$0xff]
        %v5852 = vld [vmem:[%s8 + $0xb8] sm:$0xff]
        %v5853 = vld [vmem:[%s8 + $0xc0] sm:$0xff]
        %v5854 = vld [vmem:[%s8 + $0xc8] sm:$0xff]
        %v5855 = vld [vmem:[%s8 + $0xd0] sm:$0xff]
        %v5856 = vld [vmem:[%s8 + $0xd8] sm:$0xff]
        %v5857 = vld [vmem:[%s8 + $0xe0] sm:$0xff]
        %v5858 = vld [vmem:[%s8 + $0xe8] sm:$0xff]
        %v5859 = vld [vmem:[%s8 + $0xf0] sm:$0xff]
        %v5860 = vld [vmem:[%s8 + $0xf8] sm:$0xff]
        %v5861 = vld [vmem:[%s8 + $0x100] sm:$0xff]
        %v5862 = vld [vmem:[%s8 + $0x108] sm:$0xff]
        %v5863 = vld [vmem:[%s8 + $0x110] sm:$0xff]
        %v5864 = vld [vmem:[%s8 + $0x118] sm:$0xff]
        %v5865 = vld [vmem:[%s8 + $0x120] sm:$0xff]
        %v5866 = vld [vmem:[%s8 + $0x128] sm:$0xff]
        %v5867 = vld [vmem:[%s8 + $0x130] sm:$0xff]
        %v5868 = vld [vmem:[%s8 + $0x138] sm:$0xff]
        %v5869 = vld [vmem:[%s8 + $0x140] sm:$0xff]
        %v5870 = vld [vmem:[%s8 + $0x148] sm:$0xff]
        %v5871 = vld [vmem:[%s8 + $0x150] sm:$0xff]
        %v5872 = vld [vmem:[%s8 + $0x158] sm:$0xff]
        %v5873 = vld [vmem:[%s8 + $0x160] sm:$0xff]
        %v5874 = vld [vmem:[%s8 + $0x168] sm:$0xff]
        %v5875 = vld [vmem:[%s8 + $0x170] sm:$0xff]
        %v5876 = vld [vmem:[%s8 + $0x178] sm:$0xff]
        %v5877 = vld [vmem:[%s8 + $0x180] sm:$0xff]
        %v5878 = vld [vmem:[%s8 + $0x188] sm:$0xff]
        %v5879 = vld [vmem:[%s8 + $0x190] sm:$0xff]
        %v5880 = vld [vmem:[%s8 + $0x198] sm:$0xff]
        %v5881 = vld [vmem:[%s8 + $0x1a0] sm:$0xff]
        %v5882 = vld [vmem:[%s8 + $0x1a8] sm:$0xff]
        %v5883 = vld [vmem:[%s8 + $0x1b0] sm:$0xff]
        %v5884 = vld [vmem:[%s8 + $0x1b8] sm:$0xff]
        %v5885 = vld [vmem:[%s8 + $0x1c0] sm:$0xff]
        %v5886 = vld [vmem:[%s8 + $0x1c8] sm:$0xff]
        %v5887 = vld [vmem:[%s8 + $0x1d0] sm:$0xff]
        %v5888 = vld [vmem:[%s8 + $0x1d8] sm:$0xff]
        %v5889 = vld [vmem:[%s8 + $0x1e0] sm:$0xff]
        %v5890 = vld [vmem:[%s8 + $0x1e8] sm:$0xff]
        %v5891 = vld [vmem:[%s8 + $0x1f0] sm:$0xff]
        %v5892 = vld [vmem:[%s8 + $0x1f8] sm:$0xff]
        %5894 = vset.pattern.permute.xlu0 0
        %5895 = vperm.xlu0 %5894, %v5829
        %v5896 = vpop.permute.xlu0 %5895
        %5899 = vset.pattern.permute.xlu0 0
        %5900 = vperm.xlu0 %5899, %v5830
        %v5901 = vpop.permute.xlu0 %5900
        %5904 = vset.pattern.permute.xlu0 0
        %5905 = vperm.xlu0 %5904, %v5831
        %v5906 = vpop.permute.xlu0 %5905
        %5909 = vset.pattern.permute.xlu0 0
        %5910 = vperm.xlu0 %5909, %v5832
        %v5911 = vpop.permute.xlu0 %5910
        %5914 = vset.pattern.permute.xlu0 0
        %5915 = vperm.xlu0 %5914, %v5833
        %v5916 = vpop.permute.xlu0 %5915
        %5919 = vset.pattern.permute.xlu0 0
        %5920 = vperm.xlu0 %5919, %v5834
        %v5921 = vpop.permute.xlu0 %5920
        %5924 = vset.pattern.permute.xlu0 0
        %5925 = vperm.xlu0 %5924, %v5835
        %v5926 = vpop.permute.xlu0 %5925
        %5929 = vset.pattern.permute.xlu0 0
        %5930 = vperm.xlu0 %5929, %v5836
        %v5931 = vpop.permute.xlu0 %5930
        %5934 = vset.pattern.permute.xlu0 0
        %5935 = vperm.xlu0 %5934, %v5837
        %v5936 = vpop.permute.xlu0 %5935
        %5939 = vset.pattern.permute.xlu0 0
        %5940 = vperm.xlu0 %5939, %v5838
        %v5941 = vpop.permute.xlu0 %5940
        %5944 = vset.pattern.permute.xlu0 0
        %5945 = vperm.xlu0 %5944, %v5839
        %v5946 = vpop.permute.xlu0 %5945
        %5949 = vset.pattern.permute.xlu0 0
        %5950 = vperm.xlu0 %5949, %v5840
        %v5951 = vpop.permute.xlu0 %5950
        %5954 = vset.pattern.permute.xlu0 0
        %5955 = vperm.xlu0 %5954, %v5841
        %v5956 = vpop.permute.xlu0 %5955
        %5959 = vset.pattern.permute.xlu0 0
        %5960 = vperm.xlu0 %5959, %v5842
        %v5961 = vpop.permute.xlu0 %5960
        %5964 = vset.pattern.permute.xlu0 0
        %5965 = vperm.xlu0 %5964, %v5843
        %v5966 = vpop.permute.xlu0 %5965
        %5969 = vset.pattern.permute.xlu0 0
        %5970 = vperm.xlu0 %5969, %v5844
        %v5971 = vpop.permute.xlu0 %5970
        %5974 = vset.pattern.permute.xlu0 0
        %5975 = vperm.xlu0 %5974, %v5845
        %v5976 = vpop.permute.xlu0 %5975
        %5979 = vset.pattern.permute.xlu0 0
        %5980 = vperm.xlu0 %5979, %v5846
        %v5981 = vpop.permute.xlu0 %5980
        %5984 = vset.pattern.permute.xlu0 0
        %5985 = vperm.xlu0 %5984, %v5847
        %v5986 = vpop.permute.xlu0 %5985
        %5989 = vset.pattern.permute.xlu0 0
        %5990 = vperm.xlu0 %5989, %v5848
        %v5991 = vpop.permute.xlu0 %5990
        %5994 = vset.pattern.permute.xlu0 0
        %5995 = vperm.xlu0 %5994, %v5849
        %v5996 = vpop.permute.xlu0 %5995
        %5999 = vset.pattern.permute.xlu0 0
        %6000 = vperm.xlu0 %5999, %v5850
        %v6001 = vpop.permute.xlu0 %6000
        %6004 = vset.pattern.permute.xlu0 0
        %6005 = vperm.xlu0 %6004, %v5851
        %v6006 = vpop.permute.xlu0 %6005
        %6009 = vset.pattern.permute.xlu0 0
        %6010 = vperm.xlu0 %6009, %v5852
        %v6011 = vpop.permute.xlu0 %6010
        %6014 = vset.pattern.permute.xlu0 0
        %6015 = vperm.xlu0 %6014, %v5853
        %v6016 = vpop.permute.xlu0 %6015
        %6019 = vset.pattern.permute.xlu0 0
        %6020 = vperm.xlu0 %6019, %v5854
        %v6021 = vpop.permute.xlu0 %6020
        %6024 = vset.pattern.permute.xlu0 0
        %6025 = vperm.xlu0 %6024, %v5855
        %v6026 = vpop.permute.xlu0 %6025
        %6029 = vset.pattern.permute.xlu0 0
        %6030 = vperm.xlu0 %6029, %v5856
        %v6031 = vpop.permute.xlu0 %6030
        %6034 = vset.pattern.permute.xlu0 0
        %6035 = vperm.xlu0 %6034, %v5857
        %v6036 = vpop.permute.xlu0 %6035
        %6039 = vset.pattern.permute.xlu0 0
        %6040 = vperm.xlu0 %6039, %v5858
        %v6041 = vpop.permute.xlu0 %6040
        %6044 = vset.pattern.permute.xlu0 0
        %6045 = vperm.xlu0 %6044, %v5859
        %v6046 = vpop.permute.xlu0 %6045
        %6049 = vset.pattern.permute.xlu0 0
        %6050 = vperm.xlu0 %6049, %v5860
        %v6051 = vpop.permute.xlu0 %6050
        %6054 = vset.pattern.permute.xlu0 0
        %6055 = vperm.xlu0 %6054, %v5861
        %v6056 = vpop.permute.xlu0 %6055
        %6059 = vset.pattern.permute.xlu0 0
        %6060 = vperm.xlu0 %6059, %v5862
        %v6061 = vpop.permute.xlu0 %6060
        %6064 = vset.pattern.permute.xlu0 0
        %6065 = vperm.xlu0 %6064, %v5863
        %v6066 = vpop.permute.xlu0 %6065
        %6069 = vset.pattern.permute.xlu0 0
        %6070 = vperm.xlu0 %6069, %v5864
        %v6071 = vpop.permute.xlu0 %6070
        %6074 = vset.pattern.permute.xlu0 0
        %6075 = vperm.xlu0 %6074, %v5865
        %v6076 = vpop.permute.xlu0 %6075
        %6079 = vset.pattern.permute.xlu0 0
        %6080 = vperm.xlu0 %6079, %v5866
        %v6081 = vpop.permute.xlu0 %6080
        %6084 = vset.pattern.permute.xlu0 0
        %6085 = vperm.xlu0 %6084, %v5867
        %v6086 = vpop.permute.xlu0 %6085
        %6089 = vset.pattern.permute.xlu0 0
        %6090 = vperm.xlu0 %6089, %v5868
        %v6091 = vpop.permute.xlu0 %6090
        %6094 = vset.pattern.permute.xlu0 0
        %6095 = vperm.xlu0 %6094, %v5869
        %v6096 = vpop.permute.xlu0 %6095
        %6099 = vset.pattern.permute.xlu0 0
        %6100 = vperm.xlu0 %6099, %v5870
        %v6101 = vpop.permute.xlu0 %6100
        %6104 = vset.pattern.permute.xlu0 0
        %6105 = vperm.xlu0 %6104, %v5871
        %v6106 = vpop.permute.xlu0 %6105
        %6109 = vset.pattern.permute.xlu0 0
        %6110 = vperm.xlu0 %6109, %v5872
        %v6111 = vpop.permute.xlu0 %6110
        %6114 = vset.pattern.permute.xlu0 0
        %6115 = vperm.xlu0 %6114, %v5873
        %v6116 = vpop.permute.xlu0 %6115
        %6119 = vset.pattern.permute.xlu0 0
        %6120 = vperm.xlu0 %6119, %v5874
        %v6121 = vpop.permute.xlu0 %6120
        %6124 = vset.pattern.permute.xlu0 0
        %6125 = vperm.xlu0 %6124, %v5875
        %v6126 = vpop.permute.xlu0 %6125
        %6129 = vset.pattern.permute.xlu0 0
        %6130 = vperm.xlu0 %6129, %v5876
        %v6131 = vpop.permute.xlu0 %6130
        %6134 = vset.pattern.permute.xlu0 0
        %6135 = vperm.xlu0 %6134, %v5877
        %v6136 = vpop.permute.xlu0 %6135
        %6139 = vset.pattern.permute.xlu0 0
        %6140 = vperm.xlu0 %6139, %v5878
        %v6141 = vpop.permute.xlu0 %6140
        %6144 = vset.pattern.permute.xlu0 0
        %6145 = vperm.xlu0 %6144, %v5879
        %v6146 = vpop.permute.xlu0 %6145
        %6149 = vset.pattern.permute.xlu0 0
        %6150 = vperm.xlu0 %6149, %v5880
        %v6151 = vpop.permute.xlu0 %6150
        %6154 = vset.pattern.permute.xlu0 0
        %6155 = vperm.xlu0 %6154, %v5881
        %v6156 = vpop.permute.xlu0 %6155
        %6159 = vset.pattern.permute.xlu0 0
        %6160 = vperm.xlu0 %6159, %v5882
        %v6161 = vpop.permute.xlu0 %6160
        %6164 = vset.pattern.permute.xlu0 0
        %6165 = vperm.xlu0 %6164, %v5883
        %v6166 = vpop.permute.xlu0 %6165
        %6169 = vset.pattern.permute.xlu0 0
        %6170 = vperm.xlu0 %6169, %v5884
        %v6171 = vpop.permute.xlu0 %6170
        %6174 = vset.pattern.permute.xlu0 0
        %6175 = vperm.xlu0 %6174, %v5885
        %v6176 = vpop.permute.xlu0 %6175
        %6179 = vset.pattern.permute.xlu0 0
        %6180 = vperm.xlu0 %6179, %v5886
        %v6181 = vpop.permute.xlu0 %6180
        %6184 = vset.pattern.permute.xlu0 0
        %6185 = vperm.xlu0 %6184, %v5887
        %v6186 = vpop.permute.xlu0 %6185
        %6189 = vset.pattern.permute.xlu0 0
        %6190 = vperm.xlu0 %6189, %v5888
        %v6191 = vpop.permute.xlu0 %6190
        %6194 = vset.pattern.permute.xlu0 0
        %6195 = vperm.xlu0 %6194, %v5889
        %v6196 = vpop.permute.xlu0 %6195
        %6199 = vset.pattern.permute.xlu0 0
        %6200 = vperm.xlu0 %6199, %v5890
        %v6201 = vpop.permute.xlu0 %6200
        %6204 = vset.pattern.permute.xlu0 0
        %6205 = vperm.xlu0 %6204, %v5891
        %v6206 = vpop.permute.xlu0 %6205
        %6209 = vset.pattern.permute.xlu0 0
        %6210 = vperm.xlu0 %6209, %v5892
        %v6211 = vpop.permute.xlu0 %6210
        %v6341 = vunpack.c.l.b16 %v5669
        %v6342 = vunpack.c.h.b16 %v5669
        %v6343 = vunpack.c.l.b16 %v5670
        %v6344 = vunpack.c.h.b16 %v5670
        %v6345 = vunpack.c.l.b16 %v5671
        %v6346 = vunpack.c.h.b16 %v5671
        %v6347 = vunpack.c.l.b16 %v5672
        %v6348 = vunpack.c.h.b16 %v5672
        %v6349 = vunpack.c.l.b16 %v5673
        %v6350 = vunpack.c.h.b16 %v5673
        %v6351 = vunpack.c.l.b16 %v5674
        %v6352 = vunpack.c.h.b16 %v5674
        %v6353 = vunpack.c.l.b16 %v5675
        %v6354 = vunpack.c.h.b16 %v5675
        %v6355 = vunpack.c.l.b16 %v5676
        %v6356 = vunpack.c.h.b16 %v5676
        %v6357 = vunpack.c.l.b16 %v5677
        %v6358 = vunpack.c.h.b16 %v5677
        %v6359 = vunpack.c.l.b16 %v5678
        %v6360 = vunpack.c.h.b16 %v5678
        %v6361 = vunpack.c.l.b16 %v5679
        %v6362 = vunpack.c.h.b16 %v5679
        %v6363 = vunpack.c.l.b16 %v5680
        %v6364 = vunpack.c.h.b16 %v5680
        %v6365 = vunpack.c.l.b16 %v5681
        %v6366 = vunpack.c.h.b16 %v5681
        %v6367 = vunpack.c.l.b16 %v5682
        %v6368 = vunpack.c.h.b16 %v5682
        %v6369 = vunpack.c.l.b16 %v5683
        %v6370 = vunpack.c.h.b16 %v5683
        %v6371 = vunpack.c.l.b16 %v5684
        %v6372 = vunpack.c.h.b16 %v5684
        %v6373 = vunpack.c.l.b16 %v5685
        %v6374 = vunpack.c.h.b16 %v5685
        %v6375 = vunpack.c.l.b16 %v5686
        %v6376 = vunpack.c.h.b16 %v5686
        %v6377 = vunpack.c.l.b16 %v5687
        %v6378 = vunpack.c.h.b16 %v5687
        %v6379 = vunpack.c.l.b16 %v5688
        %v6380 = vunpack.c.h.b16 %v5688
        %v6381 = vunpack.c.l.b16 %v5689
        %v6382 = vunpack.c.h.b16 %v5689
        %v6383 = vunpack.c.l.b16 %v5690
        %v6384 = vunpack.c.h.b16 %v5690
        %v6385 = vunpack.c.l.b16 %v5691
        %v6386 = vunpack.c.h.b16 %v5691
        %v6387 = vunpack.c.l.b16 %v5692
        %v6388 = vunpack.c.h.b16 %v5692
        %v6389 = vunpack.c.l.b16 %v5693
        %v6390 = vunpack.c.h.b16 %v5693
        %v6391 = vunpack.c.l.b16 %v5694
        %v6392 = vunpack.c.h.b16 %v5694
        %v6393 = vunpack.c.l.b16 %v5695
        %v6394 = vunpack.c.h.b16 %v5695
        %v6395 = vunpack.c.l.b16 %v5696
        %v6396 = vunpack.c.h.b16 %v5696
        %v6397 = vunpack.c.l.b16 %v5697
        %v6398 = vunpack.c.h.b16 %v5697
        %v6399 = vunpack.c.l.b16 %v5698
        %v6400 = vunpack.c.h.b16 %v5698
        %v6401 = vunpack.c.l.b16 %v5699
        %v6402 = vunpack.c.h.b16 %v5699
        %v6403 = vunpack.c.l.b16 %v5700
        %v6404 = vunpack.c.h.b16 %v5700
        %v6405 = vunpack.c.l.b16 %v5701
        %v6406 = vunpack.c.h.b16 %v5701
        %v6407 = vunpack.c.l.b16 %v5702
        %v6408 = vunpack.c.h.b16 %v5702
        %v6409 = vunpack.c.l.b16 %v5703
        %v6410 = vunpack.c.h.b16 %v5703
        %v6411 = vunpack.c.l.b16 %v5704
        %v6412 = vunpack.c.h.b16 %v5704
        %v6413 = vunpack.c.l.b16 %v5705
        %v6414 = vunpack.c.h.b16 %v5705
        %v6415 = vunpack.c.l.b16 %v5706
        %v6416 = vunpack.c.h.b16 %v5706
        %v6417 = vunpack.c.l.b16 %v5707
        %v6418 = vunpack.c.h.b16 %v5707
        %v6419 = vunpack.c.l.b16 %v5708
        %v6420 = vunpack.c.h.b16 %v5708
        %v6421 = vunpack.c.l.b16 %v5709
        %v6422 = vunpack.c.h.b16 %v5709
        %v6423 = vunpack.c.l.b16 %v5710
        %v6424 = vunpack.c.h.b16 %v5710
        %v6425 = vunpack.c.l.b16 %v5711
        %v6426 = vunpack.c.h.b16 %v5711
        %v6427 = vunpack.c.l.b16 %v5712
        %v6428 = vunpack.c.h.b16 %v5712
        %v6429 = vunpack.c.l.b16 %v5713
        %v6430 = vunpack.c.h.b16 %v5713
        %v6431 = vunpack.c.l.b16 %v5714
        %v6432 = vunpack.c.h.b16 %v5714
        %v6433 = vunpack.c.l.b16 %v5715
        %v6434 = vunpack.c.h.b16 %v5715
        %v6435 = vunpack.c.l.b16 %v5716
        %v6436 = vunpack.c.h.b16 %v5716
        %v6437 = vunpack.c.l.b16 %v5717
        %v6438 = vunpack.c.h.b16 %v5717
        %v6439 = vunpack.c.l.b16 %v5718
        %v6440 = vunpack.c.h.b16 %v5718
        %v6441 = vunpack.c.l.b16 %v5719
        %v6442 = vunpack.c.h.b16 %v5719
        %v6443 = vunpack.c.l.b16 %v5720
        %v6444 = vunpack.c.h.b16 %v5720
        %v6445 = vunpack.c.l.b16 %v5721
        %v6446 = vunpack.c.h.b16 %v5721
        %v6447 = vunpack.c.l.b16 %v5722
        %v6448 = vunpack.c.h.b16 %v5722
        %v6449 = vunpack.c.l.b16 %v5723
        %v6450 = vunpack.c.h.b16 %v5723
        %v6451 = vunpack.c.l.b16 %v5724
        %v6452 = vunpack.c.h.b16 %v5724
        %v6453 = vunpack.c.l.b16 %v5725
        %v6454 = vunpack.c.h.b16 %v5725
        %v6455 = vunpack.c.l.b16 %v5726
        %v6456 = vunpack.c.h.b16 %v5726
        %v6457 = vunpack.c.l.b16 %v5727
        %v6458 = vunpack.c.h.b16 %v5727
        %v6459 = vunpack.c.l.b16 %v5728
        %v6460 = vunpack.c.h.b16 %v5728
        %v6461 = vunpack.c.l.b16 %v5729
        %v6462 = vunpack.c.h.b16 %v5729
        %v6463 = vunpack.c.l.b16 %v5730
        %v6464 = vunpack.c.h.b16 %v5730
        %v6465 = vunpack.c.l.b16 %v5731
        %v6466 = vunpack.c.h.b16 %v5731
        %v6467 = vunpack.c.l.b16 %v5732
        %v6468 = vunpack.c.h.b16 %v5732
        %v6469 = vunpack.c.l.b16 %v5733
        %v6470 = vunpack.c.h.b16 %v5733
        %v6471 = vunpack.c.l.b16 %v5734
        %v6472 = vunpack.c.h.b16 %v5734
        %v6473 = vunpack.c.l.b16 %v5735
        %v6474 = vunpack.c.h.b16 %v5735
        %v6475 = vunpack.c.l.b16 %v5736
        %v6476 = vunpack.c.h.b16 %v5736
        %v6477 = vunpack.c.l.b16 %v5737
        %v6478 = vunpack.c.h.b16 %v5737
        %v6479 = vunpack.c.l.b16 %v5738
        %v6480 = vunpack.c.h.b16 %v5738
        %v6481 = vunpack.c.l.b16 %v5739
        %v6482 = vunpack.c.h.b16 %v5739
        %v6483 = vunpack.c.l.b16 %v5740
        %v6484 = vunpack.c.h.b16 %v5740
        %v6485 = vunpack.c.l.b16 %v5741
        %v6486 = vunpack.c.h.b16 %v5741
        %v6487 = vunpack.c.l.b16 %v5742
        %v6488 = vunpack.c.h.b16 %v5742
        %v6489 = vunpack.c.l.b16 %v5743
        %v6490 = vunpack.c.h.b16 %v5743
        %v6491 = vunpack.c.l.b16 %v5744
        %v6492 = vunpack.c.h.b16 %v5744
        %v6493 = vunpack.c.l.b16 %v5745
        %v6494 = vunpack.c.h.b16 %v5745
        %v6495 = vunpack.c.l.b16 %v5746
        %v6496 = vunpack.c.h.b16 %v5746
        %v6497 = vunpack.c.l.b16 %v5747
        %v6498 = vunpack.c.h.b16 %v5747
        %v6499 = vunpack.c.l.b16 %v5748
        %v6500 = vunpack.c.h.b16 %v5748
        %v6501 = vunpack.c.l.b16 %v5749
        %v6502 = vunpack.c.h.b16 %v5749
        %v6503 = vunpack.c.l.b16 %v5750
        %v6504 = vunpack.c.h.b16 %v5750
        %v6505 = vunpack.c.l.b16 %v5751
        %v6506 = vunpack.c.h.b16 %v5751
        %v6507 = vunpack.c.l.b16 %v5752
        %v6508 = vunpack.c.h.b16 %v5752
        %v6509 = vunpack.c.l.b16 %v5753
        %v6510 = vunpack.c.h.b16 %v5753
        %v6511 = vunpack.c.l.b16 %v5754
        %v6512 = vunpack.c.h.b16 %v5754
        %v6513 = vunpack.c.l.b16 %v5755
        %v6514 = vunpack.c.h.b16 %v5755
        %v6515 = vunpack.c.l.b16 %v5756
        %v6516 = vunpack.c.h.b16 %v5756
        %v6517 = vunpack.c.l.b16 %v5757
        %v6518 = vunpack.c.h.b16 %v5757
        %v6519 = vunpack.c.l.b16 %v5758
        %v6520 = vunpack.c.h.b16 %v5758
        %v6521 = vunpack.c.l.b16 %v5759
        %v6522 = vunpack.c.h.b16 %v5759
        %v6523 = vunpack.c.l.b16 %v5760
        %v6524 = vunpack.c.h.b16 %v5760
        %v6525 = vunpack.c.l.b16 %v5761
        %v6526 = vunpack.c.h.b16 %v5761
        %v6527 = vunpack.c.l.b16 %v5762
        %v6528 = vunpack.c.h.b16 %v5762
        %v6529 = vunpack.c.l.b16 %v5763
        %v6530 = vunpack.c.h.b16 %v5763
        %v6531 = vunpack.c.l.b16 %v5764
        %v6532 = vunpack.c.h.b16 %v5764
        %v6533 = vunpack.c.l.b16 %v5765
        %v6534 = vunpack.c.h.b16 %v5765
        %v6535 = vunpack.c.l.b16 %v5766
        %v6536 = vunpack.c.h.b16 %v5766
        %v6537 = vunpack.c.l.b16 %v5767
        %v6538 = vunpack.c.h.b16 %v5767
        %v6539 = vunpack.c.l.b16 %v5768
        %v6540 = vunpack.c.h.b16 %v5768
        %v6541 = vunpack.c.l.b16 %v5769
        %v6542 = vunpack.c.h.b16 %v5769
        %v6543 = vunpack.c.l.b16 %v5770
        %v6544 = vunpack.c.h.b16 %v5770
        %v6545 = vunpack.c.l.b16 %v5771
        %v6546 = vunpack.c.h.b16 %v5771
        %v6547 = vunpack.c.l.b16 %v5772
        %v6548 = vunpack.c.h.b16 %v5772
        %v6549 = vunpack.c.l.b16 %v5773
        %v6550 = vunpack.c.h.b16 %v5773
        %v6551 = vunpack.c.l.b16 %v5774
        %v6552 = vunpack.c.h.b16 %v5774
        %v6553 = vunpack.c.l.b16 %v5775
        %v6554 = vunpack.c.h.b16 %v5775
        %v6555 = vunpack.c.l.b16 %v5776
        %v6556 = vunpack.c.h.b16 %v5776
        %v6557 = vunpack.c.l.b16 %v5777
        %v6558 = vunpack.c.h.b16 %v5777
        %v6559 = vunpack.c.l.b16 %v5778
        %v6560 = vunpack.c.h.b16 %v5778
        %v6561 = vunpack.c.l.b16 %v5779
        %v6562 = vunpack.c.h.b16 %v5779
        %v6563 = vunpack.c.l.b16 %v5780
        %v6564 = vunpack.c.h.b16 %v5780
        %v6565 = vunpack.c.l.b16 %v5781
        %v6566 = vunpack.c.h.b16 %v5781
        %v6567 = vunpack.c.l.b16 %v5782
        %v6568 = vunpack.c.h.b16 %v5782
        %v6569 = vunpack.c.l.b16 %v5783
        %v6570 = vunpack.c.h.b16 %v5783
        %v6571 = vunpack.c.l.b16 %v5784
        %v6572 = vunpack.c.h.b16 %v5784
        %v6573 = vunpack.c.l.b16 %v5785
        %v6574 = vunpack.c.h.b16 %v5785
        %v6575 = vunpack.c.l.b16 %v5786
        %v6576 = vunpack.c.h.b16 %v5786
        %v6577 = vunpack.c.l.b16 %v5787
        %v6578 = vunpack.c.h.b16 %v5787
        %v6579 = vunpack.c.l.b16 %v5788
        %v6580 = vunpack.c.h.b16 %v5788
        %v6581 = vunpack.c.l.b16 %v5789
        %v6582 = vunpack.c.h.b16 %v5789
        %v6583 = vunpack.c.l.b16 %v5790
        %v6584 = vunpack.c.h.b16 %v5790
        %v6585 = vunpack.c.l.b16 %v5791
        %v6586 = vunpack.c.h.b16 %v5791
        %v6587 = vunpack.c.l.b16 %v5792
        %v6588 = vunpack.c.h.b16 %v5792
        %v6589 = vunpack.c.l.b16 %v5793
        %v6590 = vunpack.c.h.b16 %v5793
        %v6591 = vunpack.c.l.b16 %v5794
        %v6592 = vunpack.c.h.b16 %v5794
        %v6593 = vunpack.c.l.b16 %v5795
        %v6594 = vunpack.c.h.b16 %v5795
        %v6595 = vunpack.c.l.b16 %v5796
        %v6596 = vunpack.c.h.b16 %v5796
        %v6597 = vpack.c.b16 %v6345, %v6341
        %v6598 = vpack.c.b16 %v6346, %v6342
        %v6599 = vpack.c.b16 %v6347, %v6343
        %v6600 = vpack.c.b16 %v6348, %v6344
        %v6601 = vpack.c.b16 %v6353, %v6349
        %v6602 = vpack.c.b16 %v6354, %v6350
        %v6603 = vpack.c.b16 %v6355, %v6351
        %v6604 = vpack.c.b16 %v6356, %v6352
        %v6605 = vpack.c.b16 %v6361, %v6357
        %v6606 = vpack.c.b16 %v6362, %v6358
        %v6607 = vpack.c.b16 %v6363, %v6359
        %v6608 = vpack.c.b16 %v6364, %v6360
        %v6609 = vpack.c.b16 %v6369, %v6365
        %v6610 = vpack.c.b16 %v6370, %v6366
        %v6611 = vpack.c.b16 %v6371, %v6367
        %v6612 = vpack.c.b16 %v6372, %v6368
        %v6613 = vpack.c.b16 %v6377, %v6373
        %v6614 = vpack.c.b16 %v6378, %v6374
        %v6615 = vpack.c.b16 %v6379, %v6375
        %v6616 = vpack.c.b16 %v6380, %v6376
        %v6617 = vpack.c.b16 %v6385, %v6381
        %v6618 = vpack.c.b16 %v6386, %v6382
        %v6619 = vpack.c.b16 %v6387, %v6383
        %v6620 = vpack.c.b16 %v6388, %v6384
        %v6621 = vpack.c.b16 %v6393, %v6389
        %v6622 = vpack.c.b16 %v6394, %v6390
        %v6623 = vpack.c.b16 %v6395, %v6391
        %v6624 = vpack.c.b16 %v6396, %v6392
        %v6625 = vpack.c.b16 %v6401, %v6397
        %v6626 = vpack.c.b16 %v6402, %v6398
        %v6627 = vpack.c.b16 %v6403, %v6399
        %v6628 = vpack.c.b16 %v6404, %v6400
        %v6629 = vpack.c.b16 %v6409, %v6405
        %v6630 = vpack.c.b16 %v6410, %v6406
        %v6631 = vpack.c.b16 %v6411, %v6407
        %v6632 = vpack.c.b16 %v6412, %v6408
        %v6633 = vpack.c.b16 %v6417, %v6413
        %v6634 = vpack.c.b16 %v6418, %v6414
        %v6635 = vpack.c.b16 %v6419, %v6415
        %v6636 = vpack.c.b16 %v6420, %v6416
        %v6637 = vpack.c.b16 %v6425, %v6421
        %v6638 = vpack.c.b16 %v6426, %v6422
        %v6639 = vpack.c.b16 %v6427, %v6423
        %v6640 = vpack.c.b16 %v6428, %v6424
        %v6641 = vpack.c.b16 %v6433, %v6429
        %v6642 = vpack.c.b16 %v6434, %v6430
        %v6643 = vpack.c.b16 %v6435, %v6431
        %v6644 = vpack.c.b16 %v6436, %v6432
        %v6645 = vpack.c.b16 %v6441, %v6437
        %v6646 = vpack.c.b16 %v6442, %v6438
        %v6647 = vpack.c.b16 %v6443, %v6439
        %v6648 = vpack.c.b16 %v6444, %v6440
        %v6649 = vpack.c.b16 %v6449, %v6445
        %v6650 = vpack.c.b16 %v6450, %v6446
        %v6651 = vpack.c.b16 %v6451, %v6447
        %v6652 = vpack.c.b16 %v6452, %v6448
        %v6653 = vpack.c.b16 %v6457, %v6453
        %v6654 = vpack.c.b16 %v6458, %v6454
        %v6655 = vpack.c.b16 %v6459, %v6455
        %v6656 = vpack.c.b16 %v6460, %v6456
        %v6657 = vpack.c.b16 %v6465, %v6461
        %v6658 = vpack.c.b16 %v6466, %v6462
        %v6659 = vpack.c.b16 %v6467, %v6463
        %v6660 = vpack.c.b16 %v6468, %v6464
        %v6661 = vpack.c.b16 %v6473, %v6469
        %v6662 = vpack.c.b16 %v6474, %v6470
        %v6663 = vpack.c.b16 %v6475, %v6471
        %v6664 = vpack.c.b16 %v6476, %v6472
        %v6665 = vpack.c.b16 %v6481, %v6477
        %v6666 = vpack.c.b16 %v6482, %v6478
        %v6667 = vpack.c.b16 %v6483, %v6479
        %v6668 = vpack.c.b16 %v6484, %v6480
        %v6669 = vpack.c.b16 %v6489, %v6485
        %v6670 = vpack.c.b16 %v6490, %v6486
        %v6671 = vpack.c.b16 %v6491, %v6487
        %v6672 = vpack.c.b16 %v6492, %v6488
        %v6673 = vpack.c.b16 %v6497, %v6493
        %v6674 = vpack.c.b16 %v6498, %v6494
        %v6675 = vpack.c.b16 %v6499, %v6495
        %v6676 = vpack.c.b16 %v6500, %v6496
        %v6677 = vpack.c.b16 %v6505, %v6501
        %v6678 = vpack.c.b16 %v6506, %v6502
        %v6679 = vpack.c.b16 %v6507, %v6503
        %v6680 = vpack.c.b16 %v6508, %v6504
        %v6681 = vpack.c.b16 %v6513, %v6509
        %v6682 = vpack.c.b16 %v6514, %v6510
        %v6683 = vpack.c.b16 %v6515, %v6511
        %v6684 = vpack.c.b16 %v6516, %v6512
        %v6685 = vpack.c.b16 %v6521, %v6517
        %v6686 = vpack.c.b16 %v6522, %v6518
        %v6687 = vpack.c.b16 %v6523, %v6519
        %v6688 = vpack.c.b16 %v6524, %v6520
        %v6689 = vpack.c.b16 %v6529, %v6525
        %v6690 = vpack.c.b16 %v6530, %v6526
        %v6691 = vpack.c.b16 %v6531, %v6527
        %v6692 = vpack.c.b16 %v6532, %v6528
        %v6693 = vpack.c.b16 %v6537, %v6533
        %v6694 = vpack.c.b16 %v6538, %v6534
        %v6695 = vpack.c.b16 %v6539, %v6535
        %v6696 = vpack.c.b16 %v6540, %v6536
        %v6697 = vpack.c.b16 %v6545, %v6541
        %v6698 = vpack.c.b16 %v6546, %v6542
        %v6699 = vpack.c.b16 %v6547, %v6543
        %v6700 = vpack.c.b16 %v6548, %v6544
        %v6701 = vpack.c.b16 %v6553, %v6549
        %v6702 = vpack.c.b16 %v6554, %v6550
        %v6703 = vpack.c.b16 %v6555, %v6551
        %v6704 = vpack.c.b16 %v6556, %v6552
        %v6705 = vpack.c.b16 %v6561, %v6557
        %v6706 = vpack.c.b16 %v6562, %v6558
        %v6707 = vpack.c.b16 %v6563, %v6559
        %v6708 = vpack.c.b16 %v6564, %v6560
        %v6709 = vpack.c.b16 %v6569, %v6565
        %v6710 = vpack.c.b16 %v6570, %v6566
        %v6711 = vpack.c.b16 %v6571, %v6567
        %v6712 = vpack.c.b16 %v6572, %v6568
        %v6713 = vpack.c.b16 %v6577, %v6573
        %v6714 = vpack.c.b16 %v6578, %v6574
        %v6715 = vpack.c.b16 %v6579, %v6575
        %v6716 = vpack.c.b16 %v6580, %v6576
        %v6717 = vpack.c.b16 %v6585, %v6581
        %v6718 = vpack.c.b16 %v6586, %v6582
        %v6719 = vpack.c.b16 %v6587, %v6583
        %v6720 = vpack.c.b16 %v6588, %v6584
        %v6721 = vpack.c.b16 %v6593, %v6589
        %v6722 = vpack.c.b16 %v6594, %v6590
        %v6723 = vpack.c.b16 %v6595, %v6591
        %v6724 = vpack.c.b16 %v6596, %v6592
        %6853 = vmatpush.bf16.msra.mxu0 %v5804
        %6854 = vmatpush.bf16.msra.mxu0 %v5803
        %6855 = vmatpush.bf16.msra.mxu0 %v5802
        %6856 = vmatpush.bf16.msra.mxu0 %v5801
        %6857 = vmatpush.bf16.msra.mxu0 %v5800
        %6858 = vmatpush.bf16.msra.mxu0 %v5799
        %6859 = vmatpush.bf16.msra.mxu0 %v5798
        %6860 = vmatpush.bf16.msra.mxu0 %v5797
        %6861 = vmatmul.bf16.gmra.mxu0 %v6597
        %v6862 = vpop.f32.mrf.mxu0
        %v6863 = vadd.f32 %v5896, %v6862
        %v6864 = vpop.f32.mrf.mxu0
        %v6865 = vadd.f32 %v5901, %v6864
        %6866 = vmatmul.bf16.gmra.mxu0 %v6601
        %v6867 = vpop.f32.mrf.mxu0
        %v6868 = vadd.f32 %v5906, %v6867
        %v6869 = vpop.f32.mrf.mxu0
        %v6870 = vadd.f32 %v5911, %v6869
        %6871 = vmatmul.bf16.gmra.mxu0 %v6605
        %v6872 = vpop.f32.mrf.mxu0
        %v6873 = vadd.f32 %v5916, %v6872
        %v6874 = vpop.f32.mrf.mxu0
        %v6875 = vadd.f32 %v5921, %v6874
        %6876 = vmatmul.bf16.gmra.mxu0 %v6609
        %v6877 = vpop.f32.mrf.mxu0
        %v6878 = vadd.f32 %v5926, %v6877
        %v6879 = vpop.f32.mrf.mxu0
        %v6880 = vadd.f32 %v5931, %v6879
        %6881 = vmatmul.bf16.gmra.mxu0 %v6613
        %v6882 = vpop.f32.mrf.mxu0
        %v6883 = vadd.f32 %v5936, %v6882
        %v6884 = vpop.f32.mrf.mxu0
        %v6885 = vadd.f32 %v5941, %v6884
        %6886 = vmatmul.bf16.gmra.mxu0 %v6617
        %v6887 = vpop.f32.mrf.mxu0
        %v6888 = vadd.f32 %v5946, %v6887
        %v6889 = vpop.f32.mrf.mxu0
        %v6890 = vadd.f32 %v5951, %v6889
        %6891 = vmatmul.bf16.gmra.mxu0 %v6621
        %v6892 = vpop.f32.mrf.mxu0
        %v6893 = vadd.f32 %v5956, %v6892
        %v6894 = vpop.f32.mrf.mxu0
        %v6895 = vadd.f32 %v5961, %v6894
        %6896 = vmatmul.bf16.gmra.mxu0 %v6625
        %v6897 = vpop.f32.mrf.mxu0
        %v6898 = vadd.f32 %v5966, %v6897
        %v6899 = vpop.f32.mrf.mxu0
        %v6900 = vadd.f32 %v5971, %v6899
        %6901 = vmatmul.bf16.gmra.mxu0 %v6629
        %v6902 = vpop.f32.mrf.mxu0
        %v6903 = vadd.f32 %v5976, %v6902
        %v6904 = vpop.f32.mrf.mxu0
        %v6905 = vadd.f32 %v5981, %v6904
        %6906 = vmatmul.bf16.gmra.mxu0 %v6633
        %v6907 = vpop.f32.mrf.mxu0
        %v6908 = vadd.f32 %v5986, %v6907
        %v6909 = vpop.f32.mrf.mxu0
        %v6910 = vadd.f32 %v5991, %v6909
        %6911 = vmatmul.bf16.gmra.mxu0 %v6637
        %v6912 = vpop.f32.mrf.mxu0
        %v6913 = vadd.f32 %v5996, %v6912
        %v6914 = vpop.f32.mrf.mxu0
        %v6915 = vadd.f32 %v6001, %v6914
        %6916 = vmatmul.bf16.gmra.mxu0 %v6641
        %v6917 = vpop.f32.mrf.mxu0
        %v6918 = vadd.f32 %v6006, %v6917
        %v6919 = vpop.f32.mrf.mxu0
        %v6920 = vadd.f32 %v6011, %v6919
        %6921 = vmatmul.bf16.gmra.mxu0 %v6645
        %v6922 = vpop.f32.mrf.mxu0
        %v6923 = vadd.f32 %v6016, %v6922
        %v6924 = vpop.f32.mrf.mxu0
        %v6925 = vadd.f32 %v6021, %v6924
        %6926 = vmatmul.bf16.gmra.mxu0 %v6649
        %v6927 = vpop.f32.mrf.mxu0
        %v6928 = vadd.f32 %v6026, %v6927
        %v6929 = vpop.f32.mrf.mxu0
        %v6930 = vadd.f32 %v6031, %v6929
        %6931 = vmatmul.bf16.gmra.mxu0 %v6653
        %v6932 = vpop.f32.mrf.mxu0
        %v6933 = vadd.f32 %v6036, %v6932
        %v6934 = vpop.f32.mrf.mxu0
        %v6935 = vadd.f32 %v6041, %v6934
        %6936 = vmatmul.bf16.gmra.mxu0 %v6657
        %v6937 = vpop.f32.mrf.mxu0
        %v6938 = vadd.f32 %v6046, %v6937
        %v6939 = vpop.f32.mrf.mxu0
        %v6940 = vadd.f32 %v6051, %v6939
        %6941 = vmatmul.bf16.gmra.mxu0 %v6661
        %v6942 = vpop.f32.mrf.mxu0
        %v6943 = vadd.f32 %v6056, %v6942
        %v6944 = vpop.f32.mrf.mxu0
        %v6945 = vadd.f32 %v6061, %v6944
        %6946 = vmatmul.bf16.gmra.mxu0 %v6665
        %v6947 = vpop.f32.mrf.mxu0
        %v6948 = vadd.f32 %v6066, %v6947
        %v6949 = vpop.f32.mrf.mxu0
        %v6950 = vadd.f32 %v6071, %v6949
        %6951 = vmatmul.bf16.gmra.mxu0 %v6669
        %v6952 = vpop.f32.mrf.mxu0
        %v6953 = vadd.f32 %v6076, %v6952
        %v6954 = vpop.f32.mrf.mxu0
        %v6955 = vadd.f32 %v6081, %v6954
        %6956 = vmatmul.bf16.gmra.mxu0 %v6673
        %v6957 = vpop.f32.mrf.mxu0
        %v6958 = vadd.f32 %v6086, %v6957
        %v6959 = vpop.f32.mrf.mxu0
        %v6960 = vadd.f32 %v6091, %v6959
        %6961 = vmatmul.bf16.gmra.mxu0 %v6677
        %v6962 = vpop.f32.mrf.mxu0
        %v6963 = vadd.f32 %v6096, %v6962
        %v6964 = vpop.f32.mrf.mxu0
        %v6965 = vadd.f32 %v6101, %v6964
        %6966 = vmatmul.bf16.gmra.mxu0 %v6681
        %v6967 = vpop.f32.mrf.mxu0
        %v6968 = vadd.f32 %v6106, %v6967
        %v6969 = vpop.f32.mrf.mxu0
        %v6970 = vadd.f32 %v6111, %v6969
        %6971 = vmatmul.bf16.gmra.mxu0 %v6685
        %v6972 = vpop.f32.mrf.mxu0
        %v6973 = vadd.f32 %v6116, %v6972
        %v6974 = vpop.f32.mrf.mxu0
        %v6975 = vadd.f32 %v6121, %v6974
        %6976 = vmatmul.bf16.gmra.mxu0 %v6689
        %v6977 = vpop.f32.mrf.mxu0
        %v6978 = vadd.f32 %v6126, %v6977
        %v6979 = vpop.f32.mrf.mxu0
        %v6980 = vadd.f32 %v6131, %v6979
        %6981 = vmatmul.bf16.gmra.mxu0 %v6693
        %v6982 = vpop.f32.mrf.mxu0
        %v6983 = vadd.f32 %v6136, %v6982
        %v6984 = vpop.f32.mrf.mxu0
        %v6985 = vadd.f32 %v6141, %v6984
        %6986 = vmatmul.bf16.gmra.mxu0 %v6697
        %v6987 = vpop.f32.mrf.mxu0
        %v6988 = vadd.f32 %v6146, %v6987
        %v6989 = vpop.f32.mrf.mxu0
        %v6990 = vadd.f32 %v6151, %v6989
        %6991 = vmatmul.bf16.gmra.mxu0 %v6701
        %v6992 = vpop.f32.mrf.mxu0
        %v6993 = vadd.f32 %v6156, %v6992
        %v6994 = vpop.f32.mrf.mxu0
        %v6995 = vadd.f32 %v6161, %v6994
        %6996 = vmatmul.bf16.gmra.mxu0 %v6705
        %v6997 = vpop.f32.mrf.mxu0
        %v6998 = vadd.f32 %v6166, %v6997
        %v6999 = vpop.f32.mrf.mxu0
        %v7000 = vadd.f32 %v6171, %v6999
        %7001 = vmatmul.bf16.gmra.mxu0 %v6709
        %v7002 = vpop.f32.mrf.mxu0
        %v7003 = vadd.f32 %v6176, %v7002
        %v7004 = vpop.f32.mrf.mxu0
        %v7005 = vadd.f32 %v6181, %v7004
        %7006 = vmatmul.bf16.gmra.mxu0 %v6713
        %v7007 = vpop.f32.mrf.mxu0
        %v7008 = vadd.f32 %v6186, %v7007
        %v7009 = vpop.f32.mrf.mxu0
        %v7010 = vadd.f32 %v6191, %v7009
        %7011 = vmatmul.bf16.gmra.mxu0 %v6717
        %v7012 = vpop.f32.mrf.mxu0
        %v7013 = vadd.f32 %v6196, %v7012
        %v7014 = vpop.f32.mrf.mxu0
        %v7015 = vadd.f32 %v6201, %v7014
        %7016 = vmatmul.bf16.gmra.mxu0 %v6721
        %v7017 = vpop.f32.mrf.mxu0
        %v7018 = vadd.f32 %v6206, %v7017
        %v7019 = vpop.f32.mrf.mxu0
        %v7020 = vadd.f32 %v6211, %v7019
        %7021 = vdwg.mxu0
        %7022 = vmatpush.bf16.msra.mxu0 %v5812
        %7023 = vmatpush.bf16.msra.mxu0 %v5811
        %7024 = vmatpush.bf16.msra.mxu0 %v5810
        %7025 = vmatpush.bf16.msra.mxu0 %v5809
        %7026 = vmatpush.bf16.msra.mxu0 %v5808
        %7027 = vmatpush.bf16.msra.mxu0 %v5807
        %7028 = vmatpush.bf16.msra.mxu0 %v5806
        %7029 = vmatpush.bf16.msra.mxu0 %v5805
        %7030 = vmatmul.bf16.gmra.mxu0 %v6598
        %v7031 = vpop.f32.mrf.mxu0
        %v7032 = vadd.f32 %v6863, %v7031
        %v7033 = vpop.f32.mrf.mxu0
        %v7034 = vadd.f32 %v6865, %v7033
        %7035 = vmatmul.bf16.gmra.mxu0 %v6602
        %v7036 = vpop.f32.mrf.mxu0
        %v7037 = vadd.f32 %v6868, %v7036
        %v7038 = vpop.f32.mrf.mxu0
        %v7039 = vadd.f32 %v6870, %v7038
        %7040 = vmatmul.bf16.gmra.mxu0 %v6606
        %v7041 = vpop.f32.mrf.mxu0
        %v7042 = vadd.f32 %v6873, %v7041
        %v7043 = vpop.f32.mrf.mxu0
        %v7044 = vadd.f32 %v6875, %v7043
        %7045 = vmatmul.bf16.gmra.mxu0 %v6610
        %v7046 = vpop.f32.mrf.mxu0
        %v7047 = vadd.f32 %v6878, %v7046
        %v7048 = vpop.f32.mrf.mxu0
        %v7049 = vadd.f32 %v6880, %v7048
        %7050 = vmatmul.bf16.gmra.mxu0 %v6614
        %v7051 = vpop.f32.mrf.mxu0
        %v7052 = vadd.f32 %v6883, %v7051
        %v7053 = vpop.f32.mrf.mxu0
        %v7054 = vadd.f32 %v6885, %v7053
        %7055 = vmatmul.bf16.gmra.mxu0 %v6618
        %v7056 = vpop.f32.mrf.mxu0
        %v7057 = vadd.f32 %v6888, %v7056
        %v7058 = vpop.f32.mrf.mxu0
        %v7059 = vadd.f32 %v6890, %v7058
        %7060 = vmatmul.bf16.gmra.mxu0 %v6622
        %v7061 = vpop.f32.mrf.mxu0
        %v7062 = vadd.f32 %v6893, %v7061
        %v7063 = vpop.f32.mrf.mxu0
        %v7064 = vadd.f32 %v6895, %v7063
        %7065 = vmatmul.bf16.gmra.mxu0 %v6626
        %v7066 = vpop.f32.mrf.mxu0
        %v7067 = vadd.f32 %v6898, %v7066
        %v7068 = vpop.f32.mrf.mxu0
        %v7069 = vadd.f32 %v6900, %v7068
        %7070 = vmatmul.bf16.gmra.mxu0 %v6630
        %v7071 = vpop.f32.mrf.mxu0
        %v7072 = vadd.f32 %v6903, %v7071
        %v7073 = vpop.f32.mrf.mxu0
        %v7074 = vadd.f32 %v6905, %v7073
        %7075 = vmatmul.bf16.gmra.mxu0 %v6634
        %v7076 = vpop.f32.mrf.mxu0
        %v7077 = vadd.f32 %v6908, %v7076
        %v7078 = vpop.f32.mrf.mxu0
        %v7079 = vadd.f32 %v6910, %v7078
        %7080 = vmatmul.bf16.gmra.mxu0 %v6638
        %v7081 = vpop.f32.mrf.mxu0
        %v7082 = vadd.f32 %v6913, %v7081
        %v7083 = vpop.f32.mrf.mxu0
        %v7084 = vadd.f32 %v6915, %v7083
        %7085 = vmatmul.bf16.gmra.mxu0 %v6642
        %v7086 = vpop.f32.mrf.mxu0
        %v7087 = vadd.f32 %v6918, %v7086
        %v7088 = vpop.f32.mrf.mxu0
        %v7089 = vadd.f32 %v6920, %v7088
        %7090 = vmatmul.bf16.gmra.mxu0 %v6646
        %v7091 = vpop.f32.mrf.mxu0
        %v7092 = vadd.f32 %v6923, %v7091
        %v7093 = vpop.f32.mrf.mxu0
        %v7094 = vadd.f32 %v6925, %v7093
        %7095 = vmatmul.bf16.gmra.mxu0 %v6650
        %v7096 = vpop.f32.mrf.mxu0
        %v7097 = vadd.f32 %v6928, %v7096
        %v7098 = vpop.f32.mrf.mxu0
        %v7099 = vadd.f32 %v6930, %v7098
        %7100 = vmatmul.bf16.gmra.mxu0 %v6654
        %v7101 = vpop.f32.mrf.mxu0
        %v7102 = vadd.f32 %v6933, %v7101
        %v7103 = vpop.f32.mrf.mxu0
        %v7104 = vadd.f32 %v6935, %v7103
        %7105 = vmatmul.bf16.gmra.mxu0 %v6658
        %v7106 = vpop.f32.mrf.mxu0
        %v7107 = vadd.f32 %v6938, %v7106
        %v7108 = vpop.f32.mrf.mxu0
        %v7109 = vadd.f32 %v6940, %v7108
        %7110 = vmatmul.bf16.gmra.mxu0 %v6662
        %v7111 = vpop.f32.mrf.mxu0
        %v7112 = vadd.f32 %v6943, %v7111
        %v7113 = vpop.f32.mrf.mxu0
        %v7114 = vadd.f32 %v6945, %v7113
        %7115 = vmatmul.bf16.gmra.mxu0 %v6666
        %v7116 = vpop.f32.mrf.mxu0
        %v7117 = vadd.f32 %v6948, %v7116
        %v7118 = vpop.f32.mrf.mxu0
        %v7119 = vadd.f32 %v6950, %v7118
        %7120 = vmatmul.bf16.gmra.mxu0 %v6670
        %v7121 = vpop.f32.mrf.mxu0
        %v7122 = vadd.f32 %v6953, %v7121
        %v7123 = vpop.f32.mrf.mxu0
        %v7124 = vadd.f32 %v6955, %v7123
        %7125 = vmatmul.bf16.gmra.mxu0 %v6674
        %v7126 = vpop.f32.mrf.mxu0
        %v7127 = vadd.f32 %v6958, %v7126
        %v7128 = vpop.f32.mrf.mxu0
        %v7129 = vadd.f32 %v6960, %v7128
        %7130 = vmatmul.bf16.gmra.mxu0 %v6678
        %v7131 = vpop.f32.mrf.mxu0
        %v7132 = vadd.f32 %v6963, %v7131
        %v7133 = vpop.f32.mrf.mxu0
        %v7134 = vadd.f32 %v6965, %v7133
        %7135 = vmatmul.bf16.gmra.mxu0 %v6682
        %v7136 = vpop.f32.mrf.mxu0
        %v7137 = vadd.f32 %v6968, %v7136
        %v7138 = vpop.f32.mrf.mxu0
        %v7139 = vadd.f32 %v6970, %v7138
        %7140 = vmatmul.bf16.gmra.mxu0 %v6686
        %v7141 = vpop.f32.mrf.mxu0
        %v7142 = vadd.f32 %v6973, %v7141
        %v7143 = vpop.f32.mrf.mxu0
        %v7144 = vadd.f32 %v6975, %v7143
        %7145 = vmatmul.bf16.gmra.mxu0 %v6690
        %v7146 = vpop.f32.mrf.mxu0
        %v7147 = vadd.f32 %v6978, %v7146
        %v7148 = vpop.f32.mrf.mxu0
        %v7149 = vadd.f32 %v6980, %v7148
        %7150 = vmatmul.bf16.gmra.mxu0 %v6694
        %v7151 = vpop.f32.mrf.mxu0
        %v7152 = vadd.f32 %v6983, %v7151
        %v7153 = vpop.f32.mrf.mxu0
        %v7154 = vadd.f32 %v6985, %v7153
        %7155 = vmatmul.bf16.gmra.mxu0 %v6698
        %v7156 = vpop.f32.mrf.mxu0
        %v7157 = vadd.f32 %v6988, %v7156
        %v7158 = vpop.f32.mrf.mxu0
        %v7159 = vadd.f32 %v6990, %v7158
        %7160 = vmatmul.bf16.gmra.mxu0 %v6702
        %v7161 = vpop.f32.mrf.mxu0
        %v7162 = vadd.f32 %v6993, %v7161
        %v7163 = vpop.f32.mrf.mxu0
        %v7164 = vadd.f32 %v6995, %v7163
        %7165 = vmatmul.bf16.gmra.mxu0 %v6706
        %v7166 = vpop.f32.mrf.mxu0
        %v7167 = vadd.f32 %v6998, %v7166
        %v7168 = vpop.f32.mrf.mxu0
        %v7169 = vadd.f32 %v7000, %v7168
        %7170 = vmatmul.bf16.gmra.mxu0 %v6710
        %v7171 = vpop.f32.mrf.mxu0
        %v7172 = vadd.f32 %v7003, %v7171
        %v7173 = vpop.f32.mrf.mxu0
        %v7174 = vadd.f32 %v7005, %v7173
        %7175 = vmatmul.bf16.gmra.mxu0 %v6714
        %v7176 = vpop.f32.mrf.mxu0
        %v7177 = vadd.f32 %v7008, %v7176
        %v7178 = vpop.f32.mrf.mxu0
        %v7179 = vadd.f32 %v7010, %v7178
        %7180 = vmatmul.bf16.gmra.mxu0 %v6718
        %v7181 = vpop.f32.mrf.mxu0
        %v7182 = vadd.f32 %v7013, %v7181
        %v7183 = vpop.f32.mrf.mxu0
        %v7184 = vadd.f32 %v7015, %v7183
        %7185 = vmatmul.bf16.gmra.mxu0 %v6722
        %v7186 = vpop.f32.mrf.mxu0
        %v7187 = vadd.f32 %v7018, %v7186
        %v7188 = vpop.f32.mrf.mxu0
        %v7189 = vadd.f32 %v7020, %v7188
        %7190 = vdwg.mxu0
        %7191 = vmatpush.bf16.msra.mxu0 %v5820
        %7192 = vmatpush.bf16.msra.mxu0 %v5819
        %7193 = vmatpush.bf16.msra.mxu0 %v5818
        %7194 = vmatpush.bf16.msra.mxu0 %v5817
        %7195 = vmatpush.bf16.msra.mxu0 %v5816
        %7196 = vmatpush.bf16.msra.mxu0 %v5815
        %7197 = vmatpush.bf16.msra.mxu0 %v5814
        %7198 = vmatpush.bf16.msra.mxu0 %v5813
        %7199 = vmatmul.bf16.gmra.mxu0 %v6599
        %v7200 = vpop.f32.mrf.mxu0
        %v7201 = vadd.f32 %v7032, %v7200
        %v7202 = vpop.f32.mrf.mxu0
        %v7203 = vadd.f32 %v7034, %v7202
        %7204 = vmatmul.bf16.gmra.mxu0 %v6603
        %v7205 = vpop.f32.mrf.mxu0
        %v7206 = vadd.f32 %v7037, %v7205
        %v7207 = vpop.f32.mrf.mxu0
        %v7208 = vadd.f32 %v7039, %v7207
        %7209 = vmatmul.bf16.gmra.mxu0 %v6607
        %v7210 = vpop.f32.mrf.mxu0
        %v7211 = vadd.f32 %v7042, %v7210
        %v7212 = vpop.f32.mrf.mxu0
        %v7213 = vadd.f32 %v7044, %v7212
        %7214 = vmatmul.bf16.gmra.mxu0 %v6611
        %v7215 = vpop.f32.mrf.mxu0
        %v7216 = vadd.f32 %v7047, %v7215
        %v7217 = vpop.f32.mrf.mxu0
        %v7218 = vadd.f32 %v7049, %v7217
        %7219 = vmatmul.bf16.gmra.mxu0 %v6615
        %v7220 = vpop.f32.mrf.mxu0
        %v7221 = vadd.f32 %v7052, %v7220
        %v7222 = vpop.f32.mrf.mxu0
        %v7223 = vadd.f32 %v7054, %v7222
        %7224 = vmatmul.bf16.gmra.mxu0 %v6619
        %v7225 = vpop.f32.mrf.mxu0
        %v7226 = vadd.f32 %v7057, %v7225
        %v7227 = vpop.f32.mrf.mxu0
        %v7228 = vadd.f32 %v7059, %v7227
        %7229 = vmatmul.bf16.gmra.mxu0 %v6623
        %v7230 = vpop.f32.mrf.mxu0
        %v7231 = vadd.f32 %v7062, %v7230
        %v7232 = vpop.f32.mrf.mxu0
        %v7233 = vadd.f32 %v7064, %v7232
        %7234 = vmatmul.bf16.gmra.mxu0 %v6627
        %v7235 = vpop.f32.mrf.mxu0
        %v7236 = vadd.f32 %v7067, %v7235
        %v7237 = vpop.f32.mrf.mxu0
        %v7238 = vadd.f32 %v7069, %v7237
        %7239 = vmatmul.bf16.gmra.mxu0 %v6631
        %v7240 = vpop.f32.mrf.mxu0
        %v7241 = vadd.f32 %v7072, %v7240
        %v7242 = vpop.f32.mrf.mxu0
        %v7243 = vadd.f32 %v7074, %v7242
        %7244 = vmatmul.bf16.gmra.mxu0 %v6635
        %v7245 = vpop.f32.mrf.mxu0
        %v7246 = vadd.f32 %v7077, %v7245
        %v7247 = vpop.f32.mrf.mxu0
        %v7248 = vadd.f32 %v7079, %v7247
        %7249 = vmatmul.bf16.gmra.mxu0 %v6639
        %v7250 = vpop.f32.mrf.mxu0
        %v7251 = vadd.f32 %v7082, %v7250
        %v7252 = vpop.f32.mrf.mxu0
        %v7253 = vadd.f32 %v7084, %v7252
        %7254 = vmatmul.bf16.gmra.mxu0 %v6643
        %v7255 = vpop.f32.mrf.mxu0
        %v7256 = vadd.f32 %v7087, %v7255
        %v7257 = vpop.f32.mrf.mxu0
        %v7258 = vadd.f32 %v7089, %v7257
        %7259 = vmatmul.bf16.gmra.mxu0 %v6647
        %v7260 = vpop.f32.mrf.mxu0
        %v7261 = vadd.f32 %v7092, %v7260
        %v7262 = vpop.f32.mrf.mxu0
        %v7263 = vadd.f32 %v7094, %v7262
        %7264 = vmatmul.bf16.gmra.mxu0 %v6651
        %v7265 = vpop.f32.mrf.mxu0
        %v7266 = vadd.f32 %v7097, %v7265
        %v7267 = vpop.f32.mrf.mxu0
        %v7268 = vadd.f32 %v7099, %v7267
        %7269 = vmatmul.bf16.gmra.mxu0 %v6655
        %v7270 = vpop.f32.mrf.mxu0
        %v7271 = vadd.f32 %v7102, %v7270
        %v7272 = vpop.f32.mrf.mxu0
        %v7273 = vadd.f32 %v7104, %v7272
        %7274 = vmatmul.bf16.gmra.mxu0 %v6659
        %v7275 = vpop.f32.mrf.mxu0
        %v7276 = vadd.f32 %v7107, %v7275
        %v7277 = vpop.f32.mrf.mxu0
        %v7278 = vadd.f32 %v7109, %v7277
        %7279 = vmatmul.bf16.gmra.mxu0 %v6663
        %v7280 = vpop.f32.mrf.mxu0
        %v7281 = vadd.f32 %v7112, %v7280
        %v7282 = vpop.f32.mrf.mxu0
        %v7283 = vadd.f32 %v7114, %v7282
        %7284 = vmatmul.bf16.gmra.mxu0 %v6667
        %v7285 = vpop.f32.mrf.mxu0
        %v7286 = vadd.f32 %v7117, %v7285
        %v7287 = vpop.f32.mrf.mxu0
        %v7288 = vadd.f32 %v7119, %v7287
        %7289 = vmatmul.bf16.gmra.mxu0 %v6671
        %v7290 = vpop.f32.mrf.mxu0
        %v7291 = vadd.f32 %v7122, %v7290
        %v7292 = vpop.f32.mrf.mxu0
        %v7293 = vadd.f32 %v7124, %v7292
        %7294 = vmatmul.bf16.gmra.mxu0 %v6675
        %v7295 = vpop.f32.mrf.mxu0
        %v7296 = vadd.f32 %v7127, %v7295
        %v7297 = vpop.f32.mrf.mxu0
        %v7298 = vadd.f32 %v7129, %v7297
        %7299 = vmatmul.bf16.gmra.mxu0 %v6679
        %v7300 = vpop.f32.mrf.mxu0
        %v7301 = vadd.f32 %v7132, %v7300
        %v7302 = vpop.f32.mrf.mxu0
        %v7303 = vadd.f32 %v7134, %v7302
        %7304 = vmatmul.bf16.gmra.mxu0 %v6683
        %v7305 = vpop.f32.mrf.mxu0
        %v7306 = vadd.f32 %v7137, %v7305
        %v7307 = vpop.f32.mrf.mxu0
        %v7308 = vadd.f32 %v7139, %v7307
        %7309 = vmatmul.bf16.gmra.mxu0 %v6687
        %v7310 = vpop.f32.mrf.mxu0
        %v7311 = vadd.f32 %v7142, %v7310
        %v7312 = vpop.f32.mrf.mxu0
        %v7313 = vadd.f32 %v7144, %v7312
        %7314 = vmatmul.bf16.gmra.mxu0 %v6691
        %v7315 = vpop.f32.mrf.mxu0
        %v7316 = vadd.f32 %v7147, %v7315
        %v7317 = vpop.f32.mrf.mxu0
        %v7318 = vadd.f32 %v7149, %v7317
        %7319 = vmatmul.bf16.gmra.mxu0 %v6695
        %v7320 = vpop.f32.mrf.mxu0
        %v7321 = vadd.f32 %v7152, %v7320
        %v7322 = vpop.f32.mrf.mxu0
        %v7323 = vadd.f32 %v7154, %v7322
        %7324 = vmatmul.bf16.gmra.mxu0 %v6699
        %v7325 = vpop.f32.mrf.mxu0
        %v7326 = vadd.f32 %v7157, %v7325
        %v7327 = vpop.f32.mrf.mxu0
        %v7328 = vadd.f32 %v7159, %v7327
        %7329 = vmatmul.bf16.gmra.mxu0 %v6703
        %v7330 = vpop.f32.mrf.mxu0
        %v7331 = vadd.f32 %v7162, %v7330
        %v7332 = vpop.f32.mrf.mxu0
        %v7333 = vadd.f32 %v7164, %v7332
        %7334 = vmatmul.bf16.gmra.mxu0 %v6707
        %v7335 = vpop.f32.mrf.mxu0
        %v7336 = vadd.f32 %v7167, %v7335
        %v7337 = vpop.f32.mrf.mxu0
        %v7338 = vadd.f32 %v7169, %v7337
        %7339 = vmatmul.bf16.gmra.mxu0 %v6711
        %v7340 = vpop.f32.mrf.mxu0
        %v7341 = vadd.f32 %v7172, %v7340
        %v7342 = vpop.f32.mrf.mxu0
        %v7343 = vadd.f32 %v7174, %v7342
        %7344 = vmatmul.bf16.gmra.mxu0 %v6715
        %v7345 = vpop.f32.mrf.mxu0
        %v7346 = vadd.f32 %v7177, %v7345
        %v7347 = vpop.f32.mrf.mxu0
        %v7348 = vadd.f32 %v7179, %v7347
        %7349 = vmatmul.bf16.gmra.mxu0 %v6719
        %v7350 = vpop.f32.mrf.mxu0
        %v7351 = vadd.f32 %v7182, %v7350
        %v7352 = vpop.f32.mrf.mxu0
        %v7353 = vadd.f32 %v7184, %v7352
        %7354 = vmatmul.bf16.gmra.mxu0 %v6723
        %v7355 = vpop.f32.mrf.mxu0
        %v7356 = vadd.f32 %v7187, %v7355
        %v7357 = vpop.f32.mrf.mxu0
        %v7358 = vadd.f32 %v7189, %v7357
        %7359 = vdwg.mxu0
        %7360 = vmatpush.bf16.msra.mxu0 %v5828
        %7361 = vmatpush.bf16.msra.mxu0 %v5827
        %7362 = vmatpush.bf16.msra.mxu0 %v5826
        %7363 = vmatpush.bf16.msra.mxu0 %v5825
        %7364 = vmatpush.bf16.msra.mxu0 %v5824
        %7365 = vmatpush.bf16.msra.mxu0 %v5823
        %7366 = vmatpush.bf16.msra.mxu0 %v5822
        %7367 = vmatpush.bf16.msra.mxu0 %v5821
        %7368 = vmatmul.bf16.gmra.mxu0 %v6600
        %v7369 = vpop.f32.mrf.mxu0
        %v7370 = vadd.f32 %v7201, %v7369
        %v7371 = vpop.f32.mrf.mxu0
        %v7372 = vadd.f32 %v7203, %v7371
        %7373 = vmatmul.bf16.gmra.mxu0 %v6604
        %v7374 = vpop.f32.mrf.mxu0
        %v7375 = vadd.f32 %v7206, %v7374
        %v7376 = vpop.f32.mrf.mxu0
        %v7377 = vadd.f32 %v7208, %v7376
        %7378 = vmatmul.bf16.gmra.mxu0 %v6608
        %v7379 = vpop.f32.mrf.mxu0
        %v7380 = vadd.f32 %v7211, %v7379
        %v7381 = vpop.f32.mrf.mxu0
        %v7382 = vadd.f32 %v7213, %v7381
        %7383 = vmatmul.bf16.gmra.mxu0 %v6612
        %v7384 = vpop.f32.mrf.mxu0
        %v7385 = vadd.f32 %v7216, %v7384
        %v7386 = vpop.f32.mrf.mxu0
        %v7387 = vadd.f32 %v7218, %v7386
        %7388 = vmatmul.bf16.gmra.mxu0 %v6616
        %v7389 = vpop.f32.mrf.mxu0
        %v7390 = vadd.f32 %v7221, %v7389
        %v7391 = vpop.f32.mrf.mxu0
        %v7392 = vadd.f32 %v7223, %v7391
        %7393 = vmatmul.bf16.gmra.mxu0 %v6620
        %v7394 = vpop.f32.mrf.mxu0
        %v7395 = vadd.f32 %v7226, %v7394
        %v7396 = vpop.f32.mrf.mxu0
        %v7397 = vadd.f32 %v7228, %v7396
        %7398 = vmatmul.bf16.gmra.mxu0 %v6624
        %v7399 = vpop.f32.mrf.mxu0
        %v7400 = vadd.f32 %v7231, %v7399
        %v7401 = vpop.f32.mrf.mxu0
        %v7402 = vadd.f32 %v7233, %v7401
        %7403 = vmatmul.bf16.gmra.mxu0 %v6628
        %v7404 = vpop.f32.mrf.mxu0
        %v7405 = vadd.f32 %v7236, %v7404
        %v7406 = vpop.f32.mrf.mxu0
        %v7407 = vadd.f32 %v7238, %v7406
        %7408 = vmatmul.bf16.gmra.mxu0 %v6632
        %v7409 = vpop.f32.mrf.mxu0
        %v7410 = vadd.f32 %v7241, %v7409
        %v7411 = vpop.f32.mrf.mxu0
        %v7412 = vadd.f32 %v7243, %v7411
        %7413 = vmatmul.bf16.gmra.mxu0 %v6636
        %v7414 = vpop.f32.mrf.mxu0
        %v7415 = vadd.f32 %v7246, %v7414
        %v7416 = vpop.f32.mrf.mxu0
        %v7417 = vadd.f32 %v7248, %v7416
        %7418 = vmatmul.bf16.gmra.mxu0 %v6640
        %v7419 = vpop.f32.mrf.mxu0
        %v7420 = vadd.f32 %v7251, %v7419
        %v7421 = vpop.f32.mrf.mxu0
        %v7422 = vadd.f32 %v7253, %v7421
        %7423 = vmatmul.bf16.gmra.mxu0 %v6644
        %v7424 = vpop.f32.mrf.mxu0
        %v7425 = vadd.f32 %v7256, %v7424
        %v7426 = vpop.f32.mrf.mxu0
        %v7427 = vadd.f32 %v7258, %v7426
        %7428 = vmatmul.bf16.gmra.mxu0 %v6648
        %v7429 = vpop.f32.mrf.mxu0
        %v7430 = vadd.f32 %v7261, %v7429
        %v7431 = vpop.f32.mrf.mxu0
        %v7432 = vadd.f32 %v7263, %v7431
        %7433 = vmatmul.bf16.gmra.mxu0 %v6652
        %v7434 = vpop.f32.mrf.mxu0
        %v7435 = vadd.f32 %v7266, %v7434
        %v7436 = vpop.f32.mrf.mxu0
        %v7437 = vadd.f32 %v7268, %v7436
        %7438 = vmatmul.bf16.gmra.mxu0 %v6656
        %v7439 = vpop.f32.mrf.mxu0
        %v7440 = vadd.f32 %v7271, %v7439
        %v7441 = vpop.f32.mrf.mxu0
        %v7442 = vadd.f32 %v7273, %v7441
        %7443 = vmatmul.bf16.gmra.mxu0 %v6660
        %v7444 = vpop.f32.mrf.mxu0
        %v7445 = vadd.f32 %v7276, %v7444
        %v7446 = vpop.f32.mrf.mxu0
        %v7447 = vadd.f32 %v7278, %v7446
        %7448 = vmatmul.bf16.gmra.mxu0 %v6664
        %v7449 = vpop.f32.mrf.mxu0
        %v7450 = vadd.f32 %v7281, %v7449
        %v7451 = vpop.f32.mrf.mxu0
        %v7452 = vadd.f32 %v7283, %v7451
        %7453 = vmatmul.bf16.gmra.mxu0 %v6668
        %v7454 = vpop.f32.mrf.mxu0
        %v7455 = vadd.f32 %v7286, %v7454
        %v7456 = vpop.f32.mrf.mxu0
        %v7457 = vadd.f32 %v7288, %v7456
        %7458 = vmatmul.bf16.gmra.mxu0 %v6672
        %v7459 = vpop.f32.mrf.mxu0
        %v7460 = vadd.f32 %v7291, %v7459
        %v7461 = vpop.f32.mrf.mxu0
        %v7462 = vadd.f32 %v7293, %v7461
        %7463 = vmatmul.bf16.gmra.mxu0 %v6676
        %v7464 = vpop.f32.mrf.mxu0
        %v7465 = vadd.f32 %v7296, %v7464
        %v7466 = vpop.f32.mrf.mxu0
        %v7467 = vadd.f32 %v7298, %v7466
        %7468 = vmatmul.bf16.gmra.mxu0 %v6680
        %v7469 = vpop.f32.mrf.mxu0
        %v7470 = vadd.f32 %v7301, %v7469
        %v7471 = vpop.f32.mrf.mxu0
        %v7472 = vadd.f32 %v7303, %v7471
        %7473 = vmatmul.bf16.gmra.mxu0 %v6684
        %v7474 = vpop.f32.mrf.mxu0
        %v7475 = vadd.f32 %v7306, %v7474
        %v7476 = vpop.f32.mrf.mxu0
        %v7477 = vadd.f32 %v7308, %v7476
        %7478 = vmatmul.bf16.gmra.mxu0 %v6688
        %v7479 = vpop.f32.mrf.mxu0
        %v7480 = vadd.f32 %v7311, %v7479
        %v7481 = vpop.f32.mrf.mxu0
        %v7482 = vadd.f32 %v7313, %v7481
        %7483 = vmatmul.bf16.gmra.mxu0 %v6692
        %v7484 = vpop.f32.mrf.mxu0
        %v7485 = vadd.f32 %v7316, %v7484
        %v7486 = vpop.f32.mrf.mxu0
        %v7487 = vadd.f32 %v7318, %v7486
        %7488 = vmatmul.bf16.gmra.mxu0 %v6696
        %v7489 = vpop.f32.mrf.mxu0
        %v7490 = vadd.f32 %v7321, %v7489
        %v7491 = vpop.f32.mrf.mxu0
        %v7492 = vadd.f32 %v7323, %v7491
        %7493 = vmatmul.bf16.gmra.mxu0 %v6700
        %v7494 = vpop.f32.mrf.mxu0
        %v7495 = vadd.f32 %v7326, %v7494
        %v7496 = vpop.f32.mrf.mxu0
        %v7497 = vadd.f32 %v7328, %v7496
        %7498 = vmatmul.bf16.gmra.mxu0 %v6704
        %v7499 = vpop.f32.mrf.mxu0
        %v7500 = vadd.f32 %v7331, %v7499
        %v7501 = vpop.f32.mrf.mxu0
        %v7502 = vadd.f32 %v7333, %v7501
        %7503 = vmatmul.bf16.gmra.mxu0 %v6708
        %v7504 = vpop.f32.mrf.mxu0
        %v7505 = vadd.f32 %v7336, %v7504
        %v7506 = vpop.f32.mrf.mxu0
        %v7507 = vadd.f32 %v7338, %v7506
        %7508 = vmatmul.bf16.gmra.mxu0 %v6712
        %v7509 = vpop.f32.mrf.mxu0
        %v7510 = vadd.f32 %v7341, %v7509
        %v7511 = vpop.f32.mrf.mxu0
        %v7512 = vadd.f32 %v7343, %v7511
        %7513 = vmatmul.bf16.gmra.mxu0 %v6716
        %v7514 = vpop.f32.mrf.mxu0
        %v7515 = vadd.f32 %v7346, %v7514
        %v7516 = vpop.f32.mrf.mxu0
        %v7517 = vadd.f32 %v7348, %v7516
        %7518 = vmatmul.bf16.gmra.mxu0 %v6720
        %v7519 = vpop.f32.mrf.mxu0
        %v7520 = vadd.f32 %v7351, %v7519
        %v7521 = vpop.f32.mrf.mxu0
        %v7522 = vadd.f32 %v7353, %v7521
        %7523 = vmatmul.bf16.gmra.mxu0 %v6724
        %v7524 = vpop.f32.mrf.mxu0
        %v7525 = vadd.f32 %v7356, %v7524
        %v7526 = vpop.f32.mrf.mxu0
        %v7527 = vadd.f32 %v7358, %v7526
        %7528 = vdwg.mxu0
        %v7529 = vmax.f32 %v7370, 0.0
        %v7530 = vmax.f32 %v7372, 0.0
        %v7531 = vmax.f32 %v7375, 0.0
        %v7532 = vmax.f32 %v7377, 0.0
        %v7533 = vmax.f32 %v7380, 0.0
        %v7534 = vmax.f32 %v7382, 0.0
        %v7535 = vmax.f32 %v7385, 0.0
        %v7536 = vmax.f32 %v7387, 0.0
        %v7537 = vmax.f32 %v7390, 0.0
        %v7538 = vmax.f32 %v7392, 0.0
        %v7539 = vmax.f32 %v7395, 0.0
        %v7540 = vmax.f32 %v7397, 0.0
        %v7541 = vmax.f32 %v7400, 0.0
        %v7542 = vmax.f32 %v7402, 0.0
        %v7543 = vmax.f32 %v7405, 0.0
        %v7544 = vmax.f32 %v7407, 0.0
        %v7545 = vmax.f32 %v7410, 0.0
        %v7546 = vmax.f32 %v7412, 0.0
        %v7547 = vmax.f32 %v7415, 0.0
        %v7548 = vmax.f32 %v7417, 0.0
        %v7549 = vmax.f32 %v7420, 0.0
        %v7550 = vmax.f32 %v7422, 0.0
        %v7551 = vmax.f32 %v7425, 0.0
        %v7552 = vmax.f32 %v7427, 0.0
        %v7553 = vmax.f32 %v7430, 0.0
        %v7554 = vmax.f32 %v7432, 0.0
        %v7555 = vmax.f32 %v7435, 0.0
        %v7556 = vmax.f32 %v7437, 0.0
        %v7557 = vmax.f32 %v7440, 0.0
        %v7558 = vmax.f32 %v7442, 0.0
        %v7559 = vmax.f32 %v7445, 0.0
        %v7560 = vmax.f32 %v7447, 0.0
        %v7561 = vmax.f32 %v7450, 0.0
        %v7562 = vmax.f32 %v7452, 0.0
        %v7563 = vmax.f32 %v7455, 0.0
        %v7564 = vmax.f32 %v7457, 0.0
        %v7565 = vmax.f32 %v7460, 0.0
        %v7566 = vmax.f32 %v7462, 0.0
        %v7567 = vmax.f32 %v7465, 0.0
        %v7568 = vmax.f32 %v7467, 0.0
        %v7569 = vmax.f32 %v7470, 0.0
        %v7570 = vmax.f32 %v7472, 0.0
        %v7571 = vmax.f32 %v7475, 0.0
        %v7572 = vmax.f32 %v7477, 0.0
        %v7573 = vmax.f32 %v7480, 0.0
        %v7574 = vmax.f32 %v7482, 0.0
        %v7575 = vmax.f32 %v7485, 0.0
        %v7576 = vmax.f32 %v7487, 0.0
        %v7577 = vmax.f32 %v7490, 0.0
        %v7578 = vmax.f32 %v7492, 0.0
        %v7579 = vmax.f32 %v7495, 0.0
        %v7580 = vmax.f32 %v7497, 0.0
        %v7581 = vmax.f32 %v7500, 0.0
        %v7582 = vmax.f32 %v7502, 0.0
        %v7583 = vmax.f32 %v7505, 0.0
        %v7584 = vmax.f32 %v7507, 0.0
        %v7585 = vmax.f32 %v7510, 0.0
        %v7586 = vmax.f32 %v7512, 0.0
        %v7587 = vmax.f32 %v7515, 0.0
        %v7588 = vmax.f32 %v7517, 0.0
        %v7589 = vmax.f32 %v7520, 0.0
        %v7590 = vmax.f32 %v7522, 0.0
        %v7591 = vmax.f32 %v7525, 0.0
        %v7592 = vmax.f32 %v7527, 0.0
        %v7593 = vld [vmem:[%s9] sm:$0xff]
        %v7594 = vld [vmem:[%s9 + $0x8] sm:$0xff]
        %v7595 = vld [vmem:[%s9 + $0x10] sm:$0xff]
        %v7596 = vld [vmem:[%s9 + $0x18] sm:$0xff]
        %v7597 = vld [vmem:[%s9 + $0x20] sm:$0xff]
        %v7598 = vld [vmem:[%s9 + $0x28] sm:$0xff]
        %v7599 = vld [vmem:[%s9 + $0x30] sm:$0xff]
        %v7600 = vld [vmem:[%s9 + $0x38] sm:$0xff]
        %v7601 = vld [vmem:[%s9 + $0x40] sm:$0xff]
        %v7602 = vld [vmem:[%s9 + $0x48] sm:$0xff]
        %v7603 = vld [vmem:[%s9 + $0x50] sm:$0xff]
        %v7604 = vld [vmem:[%s9 + $0x58] sm:$0xff]
        %v7605 = vld [vmem:[%s9 + $0x60] sm:$0xff]
        %v7606 = vld [vmem:[%s9 + $0x68] sm:$0xff]
        %v7607 = vld [vmem:[%s9 + $0x70] sm:$0xff]
        %v7608 = vld [vmem:[%s9 + $0x78] sm:$0xff]
        %v7609 = vld [vmem:[%s9 + $0x80] sm:$0xff]
        %v7610 = vld [vmem:[%s9 + $0x88] sm:$0xff]
        %v7611 = vld [vmem:[%s9 + $0x90] sm:$0xff]
        %v7612 = vld [vmem:[%s9 + $0x98] sm:$0xff]
        %v7613 = vld [vmem:[%s9 + $0xa0] sm:$0xff]
        %v7614 = vld [vmem:[%s9 + $0xa8] sm:$0xff]
        %v7615 = vld [vmem:[%s9 + $0xb0] sm:$0xff]
        %v7616 = vld [vmem:[%s9 + $0xb8] sm:$0xff]
        %v7617 = vld [vmem:[%s9 + $0xc0] sm:$0xff]
        %v7618 = vld [vmem:[%s9 + $0xc8] sm:$0xff]
        %v7619 = vld [vmem:[%s9 + $0xd0] sm:$0xff]
        %v7620 = vld [vmem:[%s9 + $0xd8] sm:$0xff]
        %v7621 = vld [vmem:[%s9 + $0xe0] sm:$0xff]
        %v7622 = vld [vmem:[%s9 + $0xe8] sm:$0xff]
        %v7623 = vld [vmem:[%s9 + $0xf0] sm:$0xff]
        %v7624 = vld [vmem:[%s9 + $0xf8] sm:$0xff]
        %v7625 = vld [vmem:[%s9 + $0x100] sm:$0xff]
        %v7626 = vld [vmem:[%s9 + $0x108] sm:$0xff]
        %v7627 = vld [vmem:[%s9 + $0x110] sm:$0xff]
        %v7628 = vld [vmem:[%s9 + $0x118] sm:$0xff]
        %v7629 = vld [vmem:[%s9 + $0x120] sm:$0xff]
        %v7630 = vld [vmem:[%s9 + $0x128] sm:$0xff]
        %v7631 = vld [vmem:[%s9 + $0x130] sm:$0xff]
        %v7632 = vld [vmem:[%s9 + $0x138] sm:$0xff]
        %v7633 = vld [vmem:[%s9 + $0x140] sm:$0xff]
        %v7634 = vld [vmem:[%s9 + $0x148] sm:$0xff]
        %v7635 = vld [vmem:[%s9 + $0x150] sm:$0xff]
        %v7636 = vld [vmem:[%s9 + $0x158] sm:$0xff]
        %v7637 = vld [vmem:[%s9 + $0x160] sm:$0xff]
        %v7638 = vld [vmem:[%s9 + $0x168] sm:$0xff]
        %v7639 = vld [vmem:[%s9 + $0x170] sm:$0xff]
        %v7640 = vld [vmem:[%s9 + $0x178] sm:$0xff]
        %v7641 = vld [vmem:[%s9 + $0x180] sm:$0xff]
        %v7642 = vld [vmem:[%s9 + $0x188] sm:$0xff]
        %v7643 = vld [vmem:[%s9 + $0x190] sm:$0xff]
        %v7644 = vld [vmem:[%s9 + $0x198] sm:$0xff]
        %v7645 = vld [vmem:[%s9 + $0x1a0] sm:$0xff]
        %v7646 = vld [vmem:[%s9 + $0x1a8] sm:$0xff]
        %v7647 = vld [vmem:[%s9 + $0x1b0] sm:$0xff]
        %v7648 = vld [vmem:[%s9 + $0x1b8] sm:$0xff]
        %v7649 = vld [vmem:[%s9 + $0x1c0] sm:$0xff]
        %v7650 = vld [vmem:[%s9 + $0x1c8] sm:$0xff]
        %v7651 = vld [vmem:[%s9 + $0x1d0] sm:$0xff]
        %v7652 = vld [vmem:[%s9 + $0x1d8] sm:$0xff]
        %v7653 = vld [vmem:[%s9 + $0x1e0] sm:$0xff]
        %v7654 = vld [vmem:[%s9 + $0x1e8] sm:$0xff]
        %v7655 = vld [vmem:[%s9 + $0x1f0] sm:$0xff]
        %v7656 = vld [vmem:[%s9 + $0x1f8] sm:$0xff]
        %7658 = vset.pattern.permute.xlu0 0
        %7659 = vperm.xlu0 %7658, %v7593
        %v7660 = vpop.permute.xlu0 %7659
        %7663 = vset.pattern.permute.xlu0 0
        %7664 = vperm.xlu0 %7663, %v7594
        %v7665 = vpop.permute.xlu0 %7664
        %7668 = vset.pattern.permute.xlu0 0
        %7669 = vperm.xlu0 %7668, %v7595
        %v7670 = vpop.permute.xlu0 %7669
        %7673 = vset.pattern.permute.xlu0 0
        %7674 = vperm.xlu0 %7673, %v7596
        %v7675 = vpop.permute.xlu0 %7674
        %7678 = vset.pattern.permute.xlu0 0
        %7679 = vperm.xlu0 %7678, %v7597
        %v7680 = vpop.permute.xlu0 %7679
        %7683 = vset.pattern.permute.xlu0 0
        %7684 = vperm.xlu0 %7683, %v7598
        %v7685 = vpop.permute.xlu0 %7684
        %7688 = vset.pattern.permute.xlu0 0
        %7689 = vperm.xlu0 %7688, %v7599
        %v7690 = vpop.permute.xlu0 %7689
        %7693 = vset.pattern.permute.xlu0 0
        %7694 = vperm.xlu0 %7693, %v7600
        %v7695 = vpop.permute.xlu0 %7694
        %7698 = vset.pattern.permute.xlu0 0
        %7699 = vperm.xlu0 %7698, %v7601
        %v7700 = vpop.permute.xlu0 %7699
        %7703 = vset.pattern.permute.xlu0 0
        %7704 = vperm.xlu0 %7703, %v7602
        %v7705 = vpop.permute.xlu0 %7704
        %7708 = vset.pattern.permute.xlu0 0
        %7709 = vperm.xlu0 %7708, %v7603
        %v7710 = vpop.permute.xlu0 %7709
        %7713 = vset.pattern.permute.xlu0 0
        %7714 = vperm.xlu0 %7713, %v7604
        %v7715 = vpop.permute.xlu0 %7714
        %7718 = vset.pattern.permute.xlu0 0
        %7719 = vperm.xlu0 %7718, %v7605
        %v7720 = vpop.permute.xlu0 %7719
        %7723 = vset.pattern.permute.xlu0 0
        %7724 = vperm.xlu0 %7723, %v7606
        %v7725 = vpop.permute.xlu0 %7724
        %7728 = vset.pattern.permute.xlu0 0
        %7729 = vperm.xlu0 %7728, %v7607
        %v7730 = vpop.permute.xlu0 %7729
        %7733 = vset.pattern.permute.xlu0 0
        %7734 = vperm.xlu0 %7733, %v7608
        %v7735 = vpop.permute.xlu0 %7734
        %7738 = vset.pattern.permute.xlu0 0
        %7739 = vperm.xlu0 %7738, %v7609
        %v7740 = vpop.permute.xlu0 %7739
        %7743 = vset.pattern.permute.xlu0 0
        %7744 = vperm.xlu0 %7743, %v7610
        %v7745 = vpop.permute.xlu0 %7744
        %7748 = vset.pattern.permute.xlu0 0
        %7749 = vperm.xlu0 %7748, %v7611
        %v7750 = vpop.permute.xlu0 %7749
        %7753 = vset.pattern.permute.xlu0 0
        %7754 = vperm.xlu0 %7753, %v7612
        %v7755 = vpop.permute.xlu0 %7754
        %7758 = vset.pattern.permute.xlu0 0
        %7759 = vperm.xlu0 %7758, %v7613
        %v7760 = vpop.permute.xlu0 %7759
        %7763 = vset.pattern.permute.xlu0 0
        %7764 = vperm.xlu0 %7763, %v7614
        %v7765 = vpop.permute.xlu0 %7764
        %7768 = vset.pattern.permute.xlu0 0
        %7769 = vperm.xlu0 %7768, %v7615
        %v7770 = vpop.permute.xlu0 %7769
        %7773 = vset.pattern.permute.xlu0 0
        %7774 = vperm.xlu0 %7773, %v7616
        %v7775 = vpop.permute.xlu0 %7774
        %7778 = vset.pattern.permute.xlu0 0
        %7779 = vperm.xlu0 %7778, %v7617
        %v7780 = vpop.permute.xlu0 %7779
        %7783 = vset.pattern.permute.xlu0 0
        %7784 = vperm.xlu0 %7783, %v7618
        %v7785 = vpop.permute.xlu0 %7784
        %7788 = vset.pattern.permute.xlu0 0
        %7789 = vperm.xlu0 %7788, %v7619
        %v7790 = vpop.permute.xlu0 %7789
        %7793 = vset.pattern.permute.xlu0 0
        %7794 = vperm.xlu0 %7793, %v7620
        %v7795 = vpop.permute.xlu0 %7794
        %7798 = vset.pattern.permute.xlu0 0
        %7799 = vperm.xlu0 %7798, %v7621
        %v7800 = vpop.permute.xlu0 %7799
        %7803 = vset.pattern.permute.xlu0 0
        %7804 = vperm.xlu0 %7803, %v7622
        %v7805 = vpop.permute.xlu0 %7804
        %7808 = vset.pattern.permute.xlu0 0
        %7809 = vperm.xlu0 %7808, %v7623
        %v7810 = vpop.permute.xlu0 %7809
        %7813 = vset.pattern.permute.xlu0 0
        %7814 = vperm.xlu0 %7813, %v7624
        %v7815 = vpop.permute.xlu0 %7814
        %7818 = vset.pattern.permute.xlu0 0
        %7819 = vperm.xlu0 %7818, %v7625
        %v7820 = vpop.permute.xlu0 %7819
        %7823 = vset.pattern.permute.xlu0 0
        %7824 = vperm.xlu0 %7823, %v7626
        %v7825 = vpop.permute.xlu0 %7824
        %7828 = vset.pattern.permute.xlu0 0
        %7829 = vperm.xlu0 %7828, %v7627
        %v7830 = vpop.permute.xlu0 %7829
        %7833 = vset.pattern.permute.xlu0 0
        %7834 = vperm.xlu0 %7833, %v7628
        %v7835 = vpop.permute.xlu0 %7834
        %7838 = vset.pattern.permute.xlu0 0
        %7839 = vperm.xlu0 %7838, %v7629
        %v7840 = vpop.permute.xlu0 %7839
        %7843 = vset.pattern.permute.xlu0 0
        %7844 = vperm.xlu0 %7843, %v7630
        %v7845 = vpop.permute.xlu0 %7844
        %7848 = vset.pattern.permute.xlu0 0
        %7849 = vperm.xlu0 %7848, %v7631
        %v7850 = vpop.permute.xlu0 %7849
        %7853 = vset.pattern.permute.xlu0 0
        %7854 = vperm.xlu0 %7853, %v7632
        %v7855 = vpop.permute.xlu0 %7854
        %7858 = vset.pattern.permute.xlu0 0
        %7859 = vperm.xlu0 %7858, %v7633
        %v7860 = vpop.permute.xlu0 %7859
        %7863 = vset.pattern.permute.xlu0 0
        %7864 = vperm.xlu0 %7863, %v7634
        %v7865 = vpop.permute.xlu0 %7864
        %7868 = vset.pattern.permute.xlu0 0
        %7869 = vperm.xlu0 %7868, %v7635
        %v7870 = vpop.permute.xlu0 %7869
        %7873 = vset.pattern.permute.xlu0 0
        %7874 = vperm.xlu0 %7873, %v7636
        %v7875 = vpop.permute.xlu0 %7874
        %7878 = vset.pattern.permute.xlu0 0
        %7879 = vperm.xlu0 %7878, %v7637
        %v7880 = vpop.permute.xlu0 %7879
        %7883 = vset.pattern.permute.xlu0 0
        %7884 = vperm.xlu0 %7883, %v7638
        %v7885 = vpop.permute.xlu0 %7884
        %7888 = vset.pattern.permute.xlu0 0
        %7889 = vperm.xlu0 %7888, %v7639
        %v7890 = vpop.permute.xlu0 %7889
        %7893 = vset.pattern.permute.xlu0 0
        %7894 = vperm.xlu0 %7893, %v7640
        %v7895 = vpop.permute.xlu0 %7894
        %7898 = vset.pattern.permute.xlu0 0
        %7899 = vperm.xlu0 %7898, %v7641
        %v7900 = vpop.permute.xlu0 %7899
        %7903 = vset.pattern.permute.xlu0 0
        %7904 = vperm.xlu0 %7903, %v7642
        %v7905 = vpop.permute.xlu0 %7904
        %7908 = vset.pattern.permute.xlu0 0
        %7909 = vperm.xlu0 %7908, %v7643
        %v7910 = vpop.permute.xlu0 %7909
        %7913 = vset.pattern.permute.xlu0 0
        %7914 = vperm.xlu0 %7913, %v7644
        %v7915 = vpop.permute.xlu0 %7914
        %7918 = vset.pattern.permute.xlu0 0
        %7919 = vperm.xlu0 %7918, %v7645
        %v7920 = vpop.permute.xlu0 %7919
        %7923 = vset.pattern.permute.xlu0 0
        %7924 = vperm.xlu0 %7923, %v7646
        %v7925 = vpop.permute.xlu0 %7924
        %7928 = vset.pattern.permute.xlu0 0
        %7929 = vperm.xlu0 %7928, %v7647
        %v7930 = vpop.permute.xlu0 %7929
        %7933 = vset.pattern.permute.xlu0 0
        %7934 = vperm.xlu0 %7933, %v7648
        %v7935 = vpop.permute.xlu0 %7934
        %7938 = vset.pattern.permute.xlu0 0
        %7939 = vperm.xlu0 %7938, %v7649
        %v7940 = vpop.permute.xlu0 %7939
        %7943 = vset.pattern.permute.xlu0 0
        %7944 = vperm.xlu0 %7943, %v7650
        %v7945 = vpop.permute.xlu0 %7944
        %7948 = vset.pattern.permute.xlu0 0
        %7949 = vperm.xlu0 %7948, %v7651
        %v7950 = vpop.permute.xlu0 %7949
        %7953 = vset.pattern.permute.xlu0 0
        %7954 = vperm.xlu0 %7953, %v7652
        %v7955 = vpop.permute.xlu0 %7954
        %7958 = vset.pattern.permute.xlu0 0
        %7959 = vperm.xlu0 %7958, %v7653
        %v7960 = vpop.permute.xlu0 %7959
        %7963 = vset.pattern.permute.xlu0 0
        %7964 = vperm.xlu0 %7963, %v7654
        %v7965 = vpop.permute.xlu0 %7964
        %7968 = vset.pattern.permute.xlu0 0
        %7969 = vperm.xlu0 %7968, %v7655
        %v7970 = vpop.permute.xlu0 %7969
        %7973 = vset.pattern.permute.xlu0 0
        %7974 = vperm.xlu0 %7973, %v7656
        %v7975 = vpop.permute.xlu0 %7974
        %v7977 = vmul.f32 %v7529, %v7660
        %v7978 = vmul.f32 %v7530, %v7665
        %v7979 = vmul.f32 %v7531, %v7670
        %v7980 = vmul.f32 %v7532, %v7675
        %v7981 = vmul.f32 %v7533, %v7680
        %v7982 = vmul.f32 %v7534, %v7685
        %v7983 = vmul.f32 %v7535, %v7690
        %v7984 = vmul.f32 %v7536, %v7695
        %v7985 = vmul.f32 %v7537, %v7700
        %v7986 = vmul.f32 %v7538, %v7705
        %v7987 = vmul.f32 %v7539, %v7710
        %v7988 = vmul.f32 %v7540, %v7715
        %v7989 = vmul.f32 %v7541, %v7720
        %v7990 = vmul.f32 %v7542, %v7725
        %v7991 = vmul.f32 %v7543, %v7730
        %v7992 = vmul.f32 %v7544, %v7735
        %v7993 = vmul.f32 %v7545, %v7740
        %v7994 = vmul.f32 %v7546, %v7745
        %v7995 = vmul.f32 %v7547, %v7750
        %v7996 = vmul.f32 %v7548, %v7755
        %v7997 = vmul.f32 %v7549, %v7760
        %v7998 = vmul.f32 %v7550, %v7765
        %v7999 = vmul.f32 %v7551, %v7770
        %v8000 = vmul.f32 %v7552, %v7775
        %v8001 = vmul.f32 %v7553, %v7780
        %v8002 = vmul.f32 %v7554, %v7785
        %v8003 = vmul.f32 %v7555, %v7790
        %v8004 = vmul.f32 %v7556, %v7795
        %v8005 = vmul.f32 %v7557, %v7800
        %v8006 = vmul.f32 %v7558, %v7805
        %v8007 = vmul.f32 %v7559, %v7810
        %v8008 = vmul.f32 %v7560, %v7815
        %v8009 = vmul.f32 %v7561, %v7820
        %v8010 = vmul.f32 %v7562, %v7825
        %v8011 = vmul.f32 %v7563, %v7830
        %v8012 = vmul.f32 %v7564, %v7835
        %v8013 = vmul.f32 %v7565, %v7840
        %v8014 = vmul.f32 %v7566, %v7845
        %v8015 = vmul.f32 %v7567, %v7850
        %v8016 = vmul.f32 %v7568, %v7855
        %v8017 = vmul.f32 %v7569, %v7860
        %v8018 = vmul.f32 %v7570, %v7865
        %v8019 = vmul.f32 %v7571, %v7870
        %v8020 = vmul.f32 %v7572, %v7875
        %v8021 = vmul.f32 %v7573, %v7880
        %v8022 = vmul.f32 %v7574, %v7885
        %v8023 = vmul.f32 %v7575, %v7890
        %v8024 = vmul.f32 %v7576, %v7895
        %v8025 = vmul.f32 %v7577, %v7900
        %v8026 = vmul.f32 %v7578, %v7905
        %v8027 = vmul.f32 %v7579, %v7910
        %v8028 = vmul.f32 %v7580, %v7915
        %v8029 = vmul.f32 %v7581, %v7920
        %v8030 = vmul.f32 %v7582, %v7925
        %v8031 = vmul.f32 %v7583, %v7930
        %v8032 = vmul.f32 %v7584, %v7935
        %v8033 = vmul.f32 %v7585, %v7940
        %v8034 = vmul.f32 %v7586, %v7945
        %v8035 = vmul.f32 %v7587, %v7950
        %v8036 = vmul.f32 %v7588, %v7955
        %v8037 = vmul.f32 %v7589, %v7960
        %v8038 = vmul.f32 %v7590, %v7965
        %v8039 = vmul.f32 %v7591, %v7970
        %v8040 = vmul.f32 %v7592, %v7975
        %vm8041 = vcmask 31744
        %v8042 = vsel %vm8041, %v7977, 0.0
        %v8043 = vsel %vm8041, %v7978, 0.0
        %v8044 = vadd.f32 %v8042, %v8043
        %v8045 = vsel %vm8041, %v7979, 0.0
        %v8046 = vadd.f32 %v8044, %v8045
        %v8047 = vsel %vm8041, %v7980, 0.0
        %v8048 = vadd.f32 %v8046, %v8047
        %v8049 = vsel %vm8041, %v7981, 0.0
        %v8050 = vadd.f32 %v8048, %v8049
        %v8051 = vsel %vm8041, %v7982, 0.0
        %v8052 = vadd.f32 %v8050, %v8051
        %v8053 = vsel %vm8041, %v7983, 0.0
        %v8054 = vadd.f32 %v8052, %v8053
        %v8055 = vsel %vm8041, %v7984, 0.0
        %v8056 = vadd.f32 %v8054, %v8055
        %v8057 = vsel %vm8041, %v7985, 0.0
        %v8058 = vadd.f32 %v8056, %v8057
        %v8059 = vsel %vm8041, %v7986, 0.0
        %v8060 = vadd.f32 %v8058, %v8059
        %v8061 = vsel %vm8041, %v7987, 0.0
        %v8062 = vadd.f32 %v8060, %v8061
        %v8063 = vsel %vm8041, %v7988, 0.0
        %v8064 = vadd.f32 %v8062, %v8063
        %v8065 = vsel %vm8041, %v7989, 0.0
        %v8066 = vadd.f32 %v8064, %v8065
        %v8067 = vsel %vm8041, %v7990, 0.0
        %v8068 = vadd.f32 %v8066, %v8067
        %v8069 = vsel %vm8041, %v7991, 0.0
        %v8070 = vadd.f32 %v8068, %v8069
        %v8071 = vsel %vm8041, %v7992, 0.0
        %v8072 = vadd.f32 %v8070, %v8071
        %v8073 = vsel %vm8041, %v7993, 0.0
        %v8074 = vadd.f32 %v8072, %v8073
        %v8075 = vsel %vm8041, %v7994, 0.0
        %v8076 = vadd.f32 %v8074, %v8075
        %v8077 = vsel %vm8041, %v7995, 0.0
        %v8078 = vadd.f32 %v8076, %v8077
        %v8079 = vsel %vm8041, %v7996, 0.0
        %v8080 = vadd.f32 %v8078, %v8079
        %v8081 = vsel %vm8041, %v7997, 0.0
        %v8082 = vadd.f32 %v8080, %v8081
        %v8083 = vsel %vm8041, %v7998, 0.0
        %v8084 = vadd.f32 %v8082, %v8083
        %v8085 = vsel %vm8041, %v7999, 0.0
        %v8086 = vadd.f32 %v8084, %v8085
        %v8087 = vsel %vm8041, %v8000, 0.0
        %v8088 = vadd.f32 %v8086, %v8087
        %v8089 = vsel %vm8041, %v8001, 0.0
        %v8090 = vadd.f32 %v8088, %v8089
        %v8091 = vsel %vm8041, %v8002, 0.0
        %v8092 = vadd.f32 %v8090, %v8091
        %v8093 = vsel %vm8041, %v8003, 0.0
        %v8094 = vadd.f32 %v8092, %v8093
        %v8095 = vsel %vm8041, %v8004, 0.0
        %v8096 = vadd.f32 %v8094, %v8095
        %v8097 = vsel %vm8041, %v8005, 0.0
        %v8098 = vadd.f32 %v8096, %v8097
        %v8099 = vsel %vm8041, %v8006, 0.0
        %v8100 = vadd.f32 %v8098, %v8099
        %v8101 = vsel %vm8041, %v8007, 0.0
        %v8102 = vadd.f32 %v8100, %v8101
        %v8103 = vsel %vm8041, %v8008, 0.0
        %v8104 = vadd.f32 %v8102, %v8103
        %v8105 = vsel %vm8041, %v8009, 0.0
        %v8106 = vadd.f32 %v8104, %v8105
        %v8107 = vsel %vm8041, %v8010, 0.0
        %v8108 = vadd.f32 %v8106, %v8107
        %v8109 = vsel %vm8041, %v8011, 0.0
        %v8110 = vadd.f32 %v8108, %v8109
        %v8111 = vsel %vm8041, %v8012, 0.0
        %v8112 = vadd.f32 %v8110, %v8111
        %v8113 = vsel %vm8041, %v8013, 0.0
        %v8114 = vadd.f32 %v8112, %v8113
        %v8115 = vsel %vm8041, %v8014, 0.0
        %v8116 = vadd.f32 %v8114, %v8115
        %v8117 = vsel %vm8041, %v8015, 0.0
        %v8118 = vadd.f32 %v8116, %v8117
        %v8119 = vsel %vm8041, %v8016, 0.0
        %v8120 = vadd.f32 %v8118, %v8119
        %v8121 = vsel %vm8041, %v8017, 0.0
        %v8122 = vadd.f32 %v8120, %v8121
        %v8123 = vsel %vm8041, %v8018, 0.0
        %v8124 = vadd.f32 %v8122, %v8123
        %v8125 = vsel %vm8041, %v8019, 0.0
        %v8126 = vadd.f32 %v8124, %v8125
        %v8127 = vsel %vm8041, %v8020, 0.0
        %v8128 = vadd.f32 %v8126, %v8127
        %v8129 = vsel %vm8041, %v8021, 0.0
        %v8130 = vadd.f32 %v8128, %v8129
        %v8131 = vsel %vm8041, %v8022, 0.0
        %v8132 = vadd.f32 %v8130, %v8131
        %v8133 = vsel %vm8041, %v8023, 0.0
        %v8134 = vadd.f32 %v8132, %v8133
        %v8135 = vsel %vm8041, %v8024, 0.0
        %v8136 = vadd.f32 %v8134, %v8135
        %v8137 = vsel %vm8041, %v8025, 0.0
        %v8138 = vadd.f32 %v8136, %v8137
        %v8139 = vsel %vm8041, %v8026, 0.0
        %v8140 = vadd.f32 %v8138, %v8139
        %v8141 = vsel %vm8041, %v8027, 0.0
        %v8142 = vadd.f32 %v8140, %v8141
        %v8143 = vsel %vm8041, %v8028, 0.0
        %v8144 = vadd.f32 %v8142, %v8143
        %v8145 = vsel %vm8041, %v8029, 0.0
        %v8146 = vadd.f32 %v8144, %v8145
        %v8147 = vsel %vm8041, %v8030, 0.0
        %v8148 = vadd.f32 %v8146, %v8147
        %v8149 = vsel %vm8041, %v8031, 0.0
        %v8150 = vadd.f32 %v8148, %v8149
        %v8151 = vsel %vm8041, %v8032, 0.0
        %v8152 = vadd.f32 %v8150, %v8151
        %v8153 = vsel %vm8041, %v8033, 0.0
        %v8154 = vadd.f32 %v8152, %v8153
        %v8155 = vsel %vm8041, %v8034, 0.0
        %v8156 = vadd.f32 %v8154, %v8155
        %v8157 = vsel %vm8041, %v8035, 0.0
        %v8158 = vadd.f32 %v8156, %v8157
        %v8159 = vsel %vm8041, %v8036, 0.0
        %v8160 = vadd.f32 %v8158, %v8159
        %v8161 = vsel %vm8041, %v8037, 0.0
        %v8162 = vadd.f32 %v8160, %v8161
        %v8163 = vsel %vm8041, %v8038, 0.0
        %v8164 = vadd.f32 %v8162, %v8163
        %v8165 = vsel %vm8041, %v8039, 0.0
        %v8166 = vadd.f32 %v8164, %v8165
        %v8167 = vsel %vm8041, %v8040, 0.0
        %v8168 = vadd.f32 %v8166, %v8167
        %v8169 = vrot.slane %v8168, 4
        %v8170 = vadd.f32 %v8168, %v8169
        %v8171 = vrot.slane %v8170, 2
        %v8172 = vadd.f32 %v8170, %v8171
        %v8173 = vrot.slane %v8172, 1
        %v8174 = vadd.f32 %v8172, %v8173
        %v8175 = vld [vmem:[#allocation2] sm:$0x1]
        %8177 = vset.pattern.permute.xlu0 0
        %8178 = vperm.xlu0 %8177, %v8175
        %v8179 = vpop.permute.xlu0 %8178
        %v8181 = vperm.slane %v8179, 0
        %v8182 = vadd.f32 %v8174, %v8181
        %v8183 = vtanh.pop %v8182
        %vm8184 = vcmask 24576
        %8185 = vst.msk [vmem:[%s448] sm:$0x1] %vm8184, %v8183
        %s8186 = sand.u32 %s301, 1
        %s8187 = scalar_lea.sflag [#allocation4], %s8186
        %s8188 = sand.u32 %s301, 1
        %s8189 = scalar_lea.vmem [#allocation3], %s8188
        // Predicated region
        $region65: #{tpu_custom_call.1} parent=63 // pred_check
          %p8190 = pneg %p311
        $region66: #{tpu_custom_call.1} parent=63 // pred_check_branch
          %8192 = sbr.rel (%p8190) target = $region68
        $region67: #{tpu_custom_call.1} parent=63 // pred_region
          %8194 = vsyncadd %s8187, 0
          %s8195 = sadd.s32 %s32, %s31
          %s8196 = scalar_lea.hbm %s11, %s8195
          %s8198 = sshll.u32 %s8189, 4
          %s8199 = int_to_ptr.vmem [resolvable:$true] %s8198
          %s8200 = sshll.u32 %s8196, 4
          %s8201 = int_to_ptr.hbm [resolvable:$true] %s8200
          %8203 = dma.vmem_to_hbm [thread:$0]  %s8199, 16, %s8201, %s8187
        $region68: #{tpu_custom_call.1} parent=63 // pred_fallthru
          _
      $region64: #{tpu_custom_call.1} parent=5 // pred_fallthru
        _
      %p8204 = scmp.le.s32.totalorder 2, %s22
      // Predicated region
      $region69: #{tpu_custom_call.1} parent=5 // pred_check
        %p8205 = pneg %p8204
      $region70: #{tpu_custom_call.1} parent=5 // pred_check_branch
        %8207 = sbr.rel (%p8205) target = $region72
      $region71: #{tpu_custom_call.1} parent=5 // pred_region
        %s8208 = ssub.s32 %s22, 2
        // Predicated region
        $region73: #{tpu_custom_call.1} parent=71 // pred_check
          %p8209 = pneg %p317
        $region74: #{tpu_custom_call.1} parent=71 // pred_check_branch
          %8211 = sbr.rel (%p8209) target = $region76
        $region75: #{tpu_custom_call.1} parent=71 // pred_region
          %s8212 = sand.u32 %s302, 1
          %s8213 = scalar_lea.sflag [#allocation4], %s8212
          %s8214 = sand.u32 %s302, 1
          %s8215 = scalar_lea.vmem [#allocation3], %s8214
          %8217 = dma.done %s8213, 16
        $region76: #{tpu_custom_call.1} parent=71 // pred_fallthru
          _
      $region72: #{tpu_custom_call.1} parent=5 // pred_fallthru
        _
    $region6: #{tpu_custom_call.1} parent=1 // loop_footer
      %s26 = sadd.s32 1, %s22
    $region7: #{tpu_custom_call.1} parent=1 // loop_footer_branch
      %21 = sbr.rel target = $region3
    $region8: #{tpu_custom_call.1} parent=1 // loop_exit
      _
    %8218 = vsyncpa [#allocation4], 1
    %s8219 = scalar_lea.sflag [#allocation4], 1
    %8220 = vsyncpa %s8219, 1

</llo_original>
